<compile_context>
chip_gen: v6e
topology: v6e:2x2x1
jax: 0.10.0
libtpu: 0.0.40
codegen_flags: <defaults>
</compile_context>

<pallas_src>
import functools

import jax
import jax.numpy as jnp
from jax import lax
from jax.experimental import pallas as pl
from jax.experimental.pallas import tpu as pltpu


def _fused_kernel(x_ref, m_ref, w1_ref, b1_ref, gam_ref, bet_ref, A_ref,
                  w2_ref, b2_ref,
                  out_ref, mout_ref,
                  xpad_ref, x2pad_ref, x2s_ref, m2s_ref,
                  *, H, W, Cin, Cout, eps, pooling):
    f32 = jnp.float32
    HW = H * W

    def fill_padded(pad_ref, img, mask_col, cin):
        # pad_ref: (H+2, W+2, cin+1) f32 scratch.  Interior = [img*mask | mask],
        # 1-pixel border = 0 (handles the conv padding; no HBM jnp.pad needed).
        pad_ref[...] = jnp.zeros((H + 2, W + 2, cin + 1), f32)
        interior = jnp.concatenate([img * mask_col, mask_col], axis=-1)
        pad_ref[1:H + 1, 1:W + 1, :] = interior

    def partial_conv(pad_ref, w_ref, b_ref, cin):
        # One im2col matmul computes both the conv (channels 0..Cout-1) and the
        # 3x3 mask count (channel Cout) thanks to the extended weight.
        cols = []
        for dh in range(3):
            for dw in range(3):
                win = pad_ref[dh:dh + H, dw:dw + W, :]          # (H, W, cin+1)
                cols.append(win.reshape(HW, cin + 1))
        patches = jnp.concatenate(cols, axis=1).astype(jnp.bfloat16)
        acc = jnp.dot(patches, w_ref[...],
                      preferred_element_type=f32)               # (HW, Cout+1) f32
        conv = acc[:, :Cout]                                    # raw conv, no bias
        msum = acc[:, Cout:Cout + 1]                            # 3x3 window mask sum

        update = msum * (1.0 / 9.0)                             # slide_winsize = 9
        binary = (update >= 0.01).astype(f32)                   # (HW, 1)
        u = update + 1e-8
        r = pl.reciprocal(u, approx=True)                       # EUP slot
        r = r * (2.0 - u * r)                                   # Newton -> ~f32 accurate
        # ((raw - b)/(update+1e-8) + b) * binary == conv*r*binary + b*binary
        out = conv * (r * binary) + b_ref[...] * binary         # (HW, Cout)
        return out, binary

    # ---------------- conv1 (partial) ----------------
    x = x_ref[0].astype(f32)                                    # (H, W, Cin)
    m = m_ref[0].astype(f32)                                    # (H, W, 1)
    fill_padded(xpad_ref, x, m, Cin)
    x1, bin1 = partial_conv(xpad_ref, w1_ref, b1_ref, Cin)      # (HW, Cout), (HW, 1)

    # ---------------- GroupNorm (affine) + ReLU ----------------
    mu = jnp.mean(x1, axis=0, keepdims=True)                          # (1, C)
    gmu = jnp.dot(mu, A_ref[...], preferred_element_type=f32)         # group mean
    xc = x1 - gmu
    var = jnp.mean(xc * xc, axis=0, keepdims=True)                    # (1, C)
    gvar = jnp.dot(var, A_ref[...], preferred_element_type=f32)       # group var (biased)
    x1n = xc * lax.rsqrt(gvar + eps) * gam_ref[...] + bet_ref[...]
    x1n = jnp.maximum(x1n, 0.0)                                       # (HW, Cout)

    # ---------------- conv2 (partial) + ReLU ----------------
    fill_padded(x2pad_ref, x1n.reshape(H, W, Cout), bin1.reshape(H, W, 1), Cout)
    x2, bin2 = partial_conv(x2pad_ref, w2_ref, b2_ref, Cout)
    x2 = jnp.maximum(x2, 0.0)                                         # (HW, Cout)

    # ---------------- 2x2 MaxPool on x and mask ----------------
    if pooling:
        Ho, Wo = H // 2, W // 2
        x2s_ref[...] = x2
        m2s_ref[...] = bin2
        # adjacent rows of the (H*W, C) flat layout are adjacent W pixels
        xw = jnp.maximum(x2s_ref[pl.ds(0, H * Wo, 2), :],
                         x2s_ref[pl.ds(1, H * Wo, 2), :])             # (H*Wo, C)
        mw = jnp.maximum(m2s_ref[pl.ds(0, H * Wo, 2), :],
                         m2s_ref[pl.ds(1, H * Wo, 2), :])             # (H*Wo, 1)
        xw = xw.reshape(Ho, 2, Wo, Cout)
        mw = mw.reshape(Ho, 2, Wo, 1)
        out_ref[0] = jnp.maximum(xw[:, 0], xw[:, 1]).astype(out_ref.dtype)
        mout_ref[0] = jnp.maximum(mw[:, 0], mw[:, 1]).astype(mout_ref.dtype)
    else:
        out_ref[0] = x2.reshape(H, W, Cout).astype(out_ref.dtype)
        mout_ref[0] = bin2.reshape(H, W, 1).astype(mout_ref.dtype)


def _extend_weight_im2col(w_hwio):
    """(3,3,Cin,Cout) HWIO -> (9*(Cin+1), Cout+1) bf16 with an extra mask channel
    (input) and mask-sum channel (output, weight 1 on the mask channel)."""
    kh, kw, cin, cout = w_hwio.shape
    we = jnp.zeros((kh, kw, cin + 1, cout + 1), jnp.float32)
    we = we.at[:, :, :cin, :cout].set(w_hwio.astype(jnp.float32))
    we = we.at[:, :, cin, cout].set(1.0)
    return we.reshape(kh * kw * (cin + 1), cout + 1).astype(jnp.bfloat16)


def partial_down_conv_no_pre(x, mask, params, *, ngroups, pooling=True, eps=1e-5):
    # x: (N, H, W, Cin) f32, mask: (N, H, W, 1) f32
    N, H, W, Cin = x.shape
    Cout = params["w1"].shape[-1]
    if pooling:
        assert H % 2 == 0 and W % 2 == 0
        Ho, Wo = H // 2, W // 2
    else:
        Ho, Wo = H, W

    w1r = _extend_weight_im2col(params["w1"])       # (9*(Cin+1), Cout+1) bf16
    w2r = _extend_weight_im2col(params["w2"])       # (9*(Cout+1), Cout+1) bf16
    b1 = params["b1"].reshape(1, Cout).astype(jnp.float32)
    b2 = params["b2"].reshape(1, Cout).astype(jnp.float32)
    gamma = params["gamma"].reshape(1, Cout).astype(jnp.float32)
    beta = params["beta"].reshape(1, Cout).astype(jnp.float32)

    # GroupNorm group-average matrix, hoisted out of the kernel body.
    gs = Cout // ngroups
    gidx = jnp.arange(Cout) // gs
    A = jnp.where(gidx[:, None] == gidx[None, :], 1.0 / gs, 0.0).astype(jnp.float32)

    kern = functools.partial(_fused_kernel, H=H, W=W, Cin=Cin, Cout=Cout,
                             eps=eps, pooling=pooling)

    out, mout = pl.pallas_call(
        kern,
        out_shape=(jax.ShapeDtypeStruct((N, Ho, Wo, Cout), jnp.float32),
                   jax.ShapeDtypeStruct((N, Ho, Wo, 1), jnp.float32)),
        grid_spec=pltpu.PrefetchScalarGridSpec(
            num_scalar_prefetch=0,
            grid=(N,),
            in_specs=[
                pl.BlockSpec((1, H, W, Cin), lambda n: (n, 0, 0, 0)),
                pl.BlockSpec((1, H, W, 1), lambda n: (n, 0, 0, 0)),
                pl.BlockSpec((9 * (Cin + 1), Cout + 1), lambda n: (0, 0)),
                pl.BlockSpec((1, Cout), lambda n: (0, 0)),
                pl.BlockSpec((1, Cout), lambda n: (0, 0)),
                pl.BlockSpec((1, Cout), lambda n: (0, 0)),
                pl.BlockSpec((Cout, Cout), lambda n: (0, 0)),
                pl.BlockSpec((9 * (Cout + 1), Cout + 1), lambda n: (0, 0)),
                pl.BlockSpec((1, Cout), lambda n: (0, 0)),
            ],
            out_specs=[
                pl.BlockSpec((1, Ho, Wo, Cout), lambda n: (n, 0, 0, 0)),
                pl.BlockSpec((1, Ho, Wo, 1), lambda n: (n, 0, 0, 0)),
            ],
            scratch_shapes=[
                pltpu.VMEM((H + 2, W + 2, Cin + 1), jnp.float32),   # padded [x*m | m]
                pltpu.VMEM((H + 2, W + 2, Cout + 1), jnp.float32),  # padded [x1*m1 | m1]
                pltpu.VMEM((H * W, Cout), jnp.float32),             # pre-pool x2
                pltpu.VMEM((H * W, 1), jnp.float32),                # pre-pool mask2
            ],
        ),
        compiler_params=pltpu.CompilerParams(
            dimension_semantics=("parallel",),
            vmem_limit_bytes=64 * 1024 * 1024),
    )(x.astype(jnp.float32), mask.astype(jnp.float32),
      w1r, b1, gamma, beta, A, w2r, b2)
    return out, mout


if __name__ == "__main__":
    N, H, W = 2, 16, 16
    Cin, Cout = 4, 8
    group_size = 4
    ngroups = max(1, Cout // group_size)

    key = jax.random.PRNGKey(0)
    ks = jax.random.split(key, 8)
    params = {
        "w1": 0.1 * jax.random.normal(ks[0], (3, 3, Cin, Cout), jnp.float32),
        "b1": 0.1 * jax.random.normal(ks[1], (1, Cout), jnp.float32),
        "w2": 0.1 * jax.random.normal(ks[2], (3, 3, Cout, Cout), jnp.float32),
        "b2": 0.1 * jax.random.normal(ks[3], (1, Cout), jnp.float32),
        "gamma": 1.0 + 0.1 * jax.random.normal(ks[4], (1, Cout), jnp.float32),
        "beta": 0.1 * jax.random.normal(ks[5], (1, Cout), jnp.float32),
    }
    x = jax.random.normal(ks[6], (N, H, W, Cin), jnp.float32)
    mask = (jax.random.uniform(ks[7], (N, H, W, 1)) > 0.3).astype(jnp.float32)

    out, out_mask = partial_down_conv_no_pre(x, mask, params, ngroups=ngroups)
    jax.block_until_ready((out, out_mask))

    assert out.shape == (N, H // 2, W // 2, Cout), out.shape
    assert out_mask.shape == (N, H // 2, W // 2, 1), out_mask.shape
    assert bool(jnp.all(jnp.isfinite(out)))
    assert bool(jnp.all(jnp.isfinite(out_mask)))
    print("KERNEL_OK")
</pallas_src>

<mosaic_0001>
module attributes {stable_mosaic.version = 11 : i64} {
  func.func @_fused_kernel(%arg0: i32, %arg1: memref<1x16x16x4xf32, #tpu.memory_space<vmem>>, %arg2: memref<1x16x16x1xf32, #tpu.memory_space<vmem>>, %arg3: memref<45x9xbf16, #tpu.memory_space<vmem>>, %arg4: memref<1x8xf32, #tpu.memory_space<vmem>>, %arg5: memref<1x8xf32, #tpu.memory_space<vmem>>, %arg6: memref<1x8xf32, #tpu.memory_space<vmem>>, %arg7: memref<8x8xf32, #tpu.memory_space<vmem>>, %arg8: memref<81x9xbf16, #tpu.memory_space<vmem>>, %arg9: memref<1x8xf32, #tpu.memory_space<vmem>>, %arg10: memref<1x8x8x8xf32, #tpu.memory_space<vmem>>, %arg11: memref<1x8x8x1xf32, #tpu.memory_space<vmem>>, %arg12: memref<18x18x5xf32, #tpu.memory_space<vmem>>, %arg13: memref<18x18x9xf32, #tpu.memory_space<vmem>>, %arg14: memref<256x8xf32, #tpu.memory_space<vmem>>, %arg15: memref<256x1xf32, #tpu.memory_space<vmem>>) attributes {dimension_semantics = [#tpu.dimension_semantics<parallel>], iteration_bounds = array<i64: 2>, scalar_prefetch = 0 : i64, scratch_operands = 4 : i64, tpu.core_type = #tpu.core_type<tc>, window_params = [{transform_indices = @transform_0, window_bounds = array<i64: 1, 16, 16, 4>}, {transform_indices = @transform_1, window_bounds = array<i64: 1, 16, 16, 1>}, {pipeline_mode = #tpu.pipeline_mode<synchronous>, transform_indices = @transform_2, window_bounds = array<i64: 45, 9>}, {pipeline_mode = #tpu.pipeline_mode<synchronous>, transform_indices = @transform_3, window_bounds = array<i64: 1, 8>}, {pipeline_mode = #tpu.pipeline_mode<synchronous>, transform_indices = @transform_4, window_bounds = array<i64: 1, 8>}, {pipeline_mode = #tpu.pipeline_mode<synchronous>, transform_indices = @transform_5, window_bounds = array<i64: 1, 8>}, {pipeline_mode = #tpu.pipeline_mode<synchronous>, transform_indices = @transform_6, window_bounds = array<i64: 8, 8>}, {pipeline_mode = #tpu.pipeline_mode<synchronous>, transform_indices = @transform_7, window_bounds = array<i64: 81, 9>}, {pipeline_mode = #tpu.pipeline_mode<synchronous>, transform_indices = @transform_8, window_bounds = array<i64: 1, 8>}, {transform_indices = @transform_9, window_bounds = array<i64: 1, 8, 8, 8>}, {transform_indices = @transform_10, window_bounds = array<i64: 1, 8, 8, 1>}]} {
    %c0 = arith.constant 0 : index
    %c0_0 = arith.constant 0 : index
    %c0_1 = arith.constant 0 : index
    %c0_2 = arith.constant 0 : index
    %0 = vector.load %arg1[%c0, %c0_0, %c0_1, %c0_2] : memref<1x16x16x4xf32, #tpu.memory_space<vmem>>, vector<1x16x16x4xf32>
    %1 = vector.shape_cast %0 : vector<1x16x16x4xf32> to vector<16x16x4xf32>
    %c0_3 = arith.constant 0 : index
    %c0_4 = arith.constant 0 : index
    %c0_5 = arith.constant 0 : index
    %c0_6 = arith.constant 0 : index
    %2 = vector.load %arg2[%c0_3, %c0_4, %c0_5, %c0_6] : memref<1x16x16x1xf32, #tpu.memory_space<vmem>>, vector<1x16x16x1xf32>
    %3 = vector.shape_cast %2 : vector<1x16x16x1xf32> to vector<16x16x1xf32>
    %cst = arith.constant 0.000000e+00 : f32
    %4 = vector.broadcast %cst : f32 to vector<18x18x5xf32>
    %c0_7 = arith.constant 0 : index
    %c0_8 = arith.constant 0 : index
    %c0_9 = arith.constant 0 : index
    %5 = vector.load %arg12[%c0_7, %c0_8, %c0_9] : memref<18x18x5xf32, #tpu.memory_space<vmem>>, vector<18x18x5xf32>
    tpu.vector_store %arg12[%c0_7, %c0_8, %c0_9], %4 {strides = array<i32>} : memref<18x18x5xf32, #tpu.memory_space<vmem>>, vector<18x18x5xf32>,
    %6 = vector.broadcast %3 : vector<16x16x1xf32> to vector<16x16x4xf32>
    %7 = arith.mulf %1, %6 : vector<16x16x4xf32>
    %8 = tpu.concatenate %7, %3 in 2 : vector<16x16x4xf32>, vector<16x16x1xf32> -> vector<16x16x5xf32>
    %c1 = arith.constant 1 : index
    %c1_10 = arith.constant 1 : index
    %c0_11 = arith.constant 0 : index
    %9 = vector.load %arg12[%c1, %c1_10, %c0_11] : memref<18x18x5xf32, #tpu.memory_space<vmem>>, vector<16x16x5xf32>
    tpu.vector_store %arg12[%c1, %c1_10, %c0_11], %8 {strides = array<i32>} : memref<18x18x5xf32, #tpu.memory_space<vmem>>, vector<16x16x5xf32>,
    %c0_12 = arith.constant 0 : index
    %c0_13 = arith.constant 0 : index
    %c0_14 = arith.constant 0 : index
    %10 = vector.load %arg12[%c0_12, %c0_13, %c0_14] : memref<18x18x5xf32, #tpu.memory_space<vmem>>, vector<16x16x5xf32>
    %11 = vector.shape_cast %10 : vector<16x16x5xf32> to vector<256x5xf32>
    %c0_15 = arith.constant 0 : index
    %c1_16 = arith.constant 1 : index
    %c0_17 = arith.constant 0 : index
    %12 = vector.load %arg12[%c0_15, %c1_16, %c0_17] : memref<18x18x5xf32, #tpu.memory_space<vmem>>, vector<16x16x5xf32>
    %13 = vector.shape_cast %12 : vector<16x16x5xf32> to vector<256x5xf32>
    %c0_18 = arith.constant 0 : index
    %c2 = arith.constant 2 : index
    %c0_19 = arith.constant 0 : index
    %14 = vector.load %arg12[%c0_18, %c2, %c0_19] : memref<18x18x5xf32, #tpu.memory_space<vmem>>, vector<16x16x5xf32>
    %15 = vector.shape_cast %14 : vector<16x16x5xf32> to vector<256x5xf32>
    %c1_20 = arith.constant 1 : index
    %c0_21 = arith.constant 0 : index
    %c0_22 = arith.constant 0 : index
    %16 = vector.load %arg12[%c1_20, %c0_21, %c0_22] : memref<18x18x5xf32, #tpu.memory_space<vmem>>, vector<16x16x5xf32>
    %17 = vector.shape_cast %16 : vector<16x16x5xf32> to vector<256x5xf32>
    %c1_23 = arith.constant 1 : index
    %c1_24 = arith.constant 1 : index
    %c0_25 = arith.constant 0 : index
    %18 = vector.load %arg12[%c1_23, %c1_24, %c0_25] : memref<18x18x5xf32, #tpu.memory_space<vmem>>, vector<16x16x5xf32>
    %19 = vector.shape_cast %18 : vector<16x16x5xf32> to vector<256x5xf32>
    %c1_26 = arith.constant 1 : index
    %c2_27 = arith.constant 2 : index
    %c0_28 = arith.constant 0 : index
    %20 = vector.load %arg12[%c1_26, %c2_27, %c0_28] : memref<18x18x5xf32, #tpu.memory_space<vmem>>, vector<16x16x5xf32>
    %21 = vector.shape_cast %20 : vector<16x16x5xf32> to vector<256x5xf32>
    %c2_29 = arith.constant 2 : index
    %c0_30 = arith.constant 0 : index
    %c0_31 = arith.constant 0 : index
    %22 = vector.load %arg12[%c2_29, %c0_30, %c0_31] : memref<18x18x5xf32, #tpu.memory_space<vmem>>, vector<16x16x5xf32>
    %23 = vector.shape_cast %22 : vector<16x16x5xf32> to vector<256x5xf32>
    %c2_32 = arith.constant 2 : index
    %c1_33 = arith.constant 1 : index
    %c0_34 = arith.constant 0 : index
    %24 = vector.load %arg12[%c2_32, %c1_33, %c0_34] : memref<18x18x5xf32, #tpu.memory_space<vmem>>, vector<16x16x5xf32>
    %25 = vector.shape_cast %24 : vector<16x16x5xf32> to vector<256x5xf32>
    %c2_35 = arith.constant 2 : index
    %c2_36 = arith.constant 2 : index
    %c0_37 = arith.constant 0 : index
    %26 = vector.load %arg12[%c2_35, %c2_36, %c0_37] : memref<18x18x5xf32, #tpu.memory_space<vmem>>, vector<16x16x5xf32>
    %27 = vector.shape_cast %26 : vector<16x16x5xf32> to vector<256x5xf32>
    %28 = tpu.concatenate %11, %13, %15, %17, %19, %21, %23, %25, %27 in 1 : vector<256x5xf32>, vector<256x5xf32>, vector<256x5xf32>, vector<256x5xf32>, vector<256x5xf32>, vector<256x5xf32>, vector<256x5xf32>, vector<256x5xf32>, vector<256x5xf32> -> vector<256x45xf32>
    %29 = arith.truncf %28 : vector<256x45xf32> to vector<256x45xbf16>
    %c0_38 = arith.constant 0 : index
    %c0_39 = arith.constant 0 : index
    %30 = vector.load %arg3[%c0_38, %c0_39] : memref<45x9xbf16, #tpu.memory_space<vmem>>, vector<45x9xbf16>
    %cst_40 = arith.constant dense<0.000000e+00> : vector<256x9xf32>
    %31 = tpu.matmul %29, %30, %cst_40 {dimension_numbers = #tpu.dot_dimension_numbers<[1], [0], [0], [1], [0, 0, 1, 1], [], []>} : vector<256x45xbf16>, vector<45x9xbf16>, vector<256x9xf32> -> vector<256x9xf32>
    %32 = vector.extract_strided_slice %31 {offsets = [0, 0], sizes = [256, 8], strides = [1, 1]} : vector<256x9xf32> to vector<256x8xf32>
    %33 = vector.extract_strided_slice %31 {offsets = [0, 8], sizes = [256, 1], strides = [1, 1]} : vector<256x9xf32> to vector<256x1xf32>
    %cst_41 = arith.constant 0.111111112 : f32
    %34 = vector.broadcast %cst_41 : f32 to vector<256x1xf32>
    %35 = arith.mulf %33, %34 : vector<256x1xf32>
    %cst_42 = arith.constant 0.00999999977 : f32
    %36 = vector.broadcast %cst_42 : f32 to vector<256x1xf32>
    %37 = arith.cmpf oge, %35, %36 : vector<256x1xf32>
    %38 = arith.extui %37 : vector<256x1xi1> to vector<256x1xi32>
    %39 = arith.sitofp %38 : vector<256x1xi32> to vector<256x1xf32>
    %cst_43 = arith.constant 9.99999993E-9 : f32
    %40 = vector.broadcast %cst_43 : f32 to vector<256x1xf32>
    %41 = arith.addf %35, %40 : vector<256x1xf32>
    %42 = tpu.reciprocal %41 {approx = true} : vector<256x1xf32> -> vector<256x1xf32>
    %43 = arith.mulf %41, %42 : vector<256x1xf32>
    %cst_44 = arith.constant 2.000000e+00 : f32
    %44 = vector.broadcast %cst_44 : f32 to vector<256x1xf32>
    %45 = arith.subf %44, %43 : vector<256x1xf32>
    %46 = arith.mulf %42, %45 : vector<256x1xf32>
    %47 = arith.mulf %46, %39 : vector<256x1xf32>
    %48 = vector.broadcast %47 : vector<256x1xf32> to vector<256x8xf32>
    %49 = arith.mulf %32, %48 : vector<256x8xf32>
    %c0_45 = arith.constant 0 : index
    %c0_46 = arith.constant 0 : index
    %50 = vector.load %arg4[%c0_45, %c0_46] : memref<1x8xf32, #tpu.memory_space<vmem>>, vector<1x8xf32>
    %51 = vector.broadcast %50 : vector<1x8xf32> to vector<256x8xf32>
    %52 = vector.broadcast %39 : vector<256x1xf32> to vector<256x8xf32>
    %53 = arith.mulf %51, %52 : vector<256x8xf32>
    %54 = arith.addf %49, %53 : vector<256x8xf32>
    %cst_47 = arith.constant dense<0.000000e+00> : vector<8xf32>
    %55 = vector.multi_reduction <add>, %54, %cst_47 [0] : vector<256x8xf32> to vector<8xf32>
    %56 = vector.shape_cast %55 : vector<8xf32> to vector<1x8xf32>
    %cst_48 = arith.constant 2.560000e+02 : f32
    %57 = vector.broadcast %cst_48 : f32 to vector<1x8xf32>
    %58 = arith.divf %56, %57 : vector<1x8xf32>
    %c0_49 = arith.constant 0 : index
    %c0_50 = arith.constant 0 : index
    %59 = vector.load %arg7[%c0_49, %c0_50] : memref<8x8xf32, #tpu.memory_space<vmem>>, vector<8x8xf32>
    %cst_51 = arith.constant dense<0.000000e+00> : vector<1x8xf32>
    %60 = tpu.matmul %58, %59, %cst_51 {dimension_numbers = #tpu.dot_dimension_numbers<[1], [0], [0], [1], [0, 0, 1, 1], [], []>} : vector<1x8xf32>, vector<8x8xf32>, vector<1x8xf32> -> vector<1x8xf32>
    %61 = vector.broadcast %60 : vector<1x8xf32> to vector<256x8xf32>
    %62 = arith.subf %54, %61 : vector<256x8xf32>
    %63 = arith.mulf %62, %62 : vector<256x8xf32>
    %cst_52 = arith.constant dense<0.000000e+00> : vector<8xf32>
    %64 = vector.multi_reduction <add>, %63, %cst_52 [0] : vector<256x8xf32> to vector<8xf32>
    %65 = vector.shape_cast %64 : vector<8xf32> to vector<1x8xf32>
    %cst_53 = arith.constant 2.560000e+02 : f32
    %66 = vector.broadcast %cst_53 : f32 to vector<1x8xf32>
    %67 = arith.divf %65, %66 : vector<1x8xf32>
    %c0_54 = arith.constant 0 : index
    %c0_55 = arith.constant 0 : index
    %68 = vector.load %arg7[%c0_54, %c0_55] : memref<8x8xf32, #tpu.memory_space<vmem>>, vector<8x8xf32>
    %cst_56 = arith.constant dense<0.000000e+00> : vector<1x8xf32>
    %69 = tpu.matmul %67, %68, %cst_56 {dimension_numbers = #tpu.dot_dimension_numbers<[1], [0], [0], [1], [0, 0, 1, 1], [], []>} : vector<1x8xf32>, vector<8x8xf32>, vector<1x8xf32> -> vector<1x8xf32>
    %cst_57 = arith.constant 9.99999974E-6 : f32
    %70 = vector.broadcast %cst_57 : f32 to vector<1x8xf32>
    %71 = arith.addf %69, %70 : vector<1x8xf32>
    %72 = math.rsqrt %71 : vector<1x8xf32>
    %73 = vector.broadcast %72 : vector<1x8xf32> to vector<256x8xf32>
    %74 = arith.mulf %62, %73 : vector<256x8xf32>
    %c0_58 = arith.constant 0 : index
    %c0_59 = arith.constant 0 : index
    %75 = vector.load %arg5[%c0_58, %c0_59] : memref<1x8xf32, #tpu.memory_space<vmem>>, vector<1x8xf32>
    %76 = vector.broadcast %75 : vector<1x8xf32> to vector<256x8xf32>
    %77 = arith.mulf %74, %76 : vector<256x8xf32>
    %c0_60 = arith.constant 0 : index
    %c0_61 = arith.constant 0 : index
    %78 = vector.load %arg6[%c0_60, %c0_61] : memref<1x8xf32, #tpu.memory_space<vmem>>, vector<1x8xf32>
    %79 = vector.broadcast %78 : vector<1x8xf32> to vector<256x8xf32>
    %80 = arith.addf %77, %79 : vector<256x8xf32>
    %cst_62 = arith.constant 0.000000e+00 : f32
    %81 = vector.broadcast %cst_62 : f32 to vector<256x8xf32>
    %82 = arith.maximumf %80, %81 : vector<256x8xf32>
    %83 = vector.shape_cast %82 : vector<256x8xf32> to vector<16x16x8xf32>
    %84 = vector.shape_cast %39 : vector<256x1xf32> to vector<16x16x1xf32>
    %cst_63 = arith.constant 0.000000e+00 : f32
    %85 = vector.broadcast %cst_63 : f32 to vector<18x18x9xf32>
    %c0_64 = arith.constant 0 : index
    %c0_65 = arith.constant 0 : index
    %c0_66 = arith.constant 0 : index
    %86 = vector.load %arg13[%c0_64, %c0_65, %c0_66] : memref<18x18x9xf32, #tpu.memory_space<vmem>>, vector<18x18x9xf32>
    tpu.vector_store %arg13[%c0_64, %c0_65, %c0_66], %85 {strides = array<i32>} : memref<18x18x9xf32, #tpu.memory_space<vmem>>, vector<18x18x9xf32>,
    %87 = vector.broadcast %84 : vector<16x16x1xf32> to vector<16x16x8xf32>
    %88 = arith.mulf %83, %87 : vector<16x16x8xf32>
    %89 = tpu.concatenate %88, %84 in 2 : vector<16x16x8xf32>, vector<16x16x1xf32> -> vector<16x16x9xf32>
    %c1_67 = arith.constant 1 : index
    %c1_68 = arith.constant 1 : index
    %c0_69 = arith.constant 0 : index
    %90 = vector.load %arg13[%c1_67, %c1_68, %c0_69] : memref<18x18x9xf32, #tpu.memory_space<vmem>>, vector<16x16x9xf32>
    tpu.vector_store %arg13[%c1_67, %c1_68, %c0_69], %89 {strides = array<i32>} : memref<18x18x9xf32, #tpu.memory_space<vmem>>, vector<16x16x9xf32>,
    %c0_70 = arith.constant 0 : index
    %c0_71 = arith.constant 0 : index
    %c0_72 = arith.constant 0 : index
    %91 = vector.load %arg13[%c0_70, %c0_71, %c0_72] : memref<18x18x9xf32, #tpu.memory_space<vmem>>, vector<16x16x9xf32>
    %92 = vector.shape_cast %91 : vector<16x16x9xf32> to vector<256x9xf32>
    %c0_73 = arith.constant 0 : index
    %c1_74 = arith.constant 1 : index
    %c0_75 = arith.constant 0 : index
    %93 = vector.load %arg13[%c0_73, %c1_74, %c0_75] : memref<18x18x9xf32, #tpu.memory_space<vmem>>, vector<16x16x9xf32>
    %94 = vector.shape_cast %93 : vector<16x16x9xf32> to vector<256x9xf32>
    %c0_76 = arith.constant 0 : index
    %c2_77 = arith.constant 2 : index
    %c0_78 = arith.constant 0 : index
    %95 = vector.load %arg13[%c0_76, %c2_77, %c0_78] : memref<18x18x9xf32, #tpu.memory_space<vmem>>, vector<16x16x9xf32>
    %96 = vector.shape_cast %95 : vector<16x16x9xf32> to vector<256x9xf32>
    %c1_79 = arith.constant 1 : index
    %c0_80 = arith.constant 0 : index
    %c0_81 = arith.constant 0 : index
    %97 = vector.load %arg13[%c1_79, %c0_80, %c0_81] : memref<18x18x9xf32, #tpu.memory_space<vmem>>, vector<16x16x9xf32>
    %98 = vector.shape_cast %97 : vector<16x16x9xf32> to vector<256x9xf32>
    %c1_82 = arith.constant 1 : index
    %c1_83 = arith.constant 1 : index
    %c0_84 = arith.constant 0 : index
    %99 = vector.load %arg13[%c1_82, %c1_83, %c0_84] : memref<18x18x9xf32, #tpu.memory_space<vmem>>, vector<16x16x9xf32>
    %100 = vector.shape_cast %99 : vector<16x16x9xf32> to vector<256x9xf32>
    %c1_85 = arith.constant 1 : index
    %c2_86 = arith.constant 2 : index
    %c0_87 = arith.constant 0 : index
    %101 = vector.load %arg13[%c1_85, %c2_86, %c0_87] : memref<18x18x9xf32, #tpu.memory_space<vmem>>, vector<16x16x9xf32>
    %102 = vector.shape_cast %101 : vector<16x16x9xf32> to vector<256x9xf32>
    %c2_88 = arith.constant 2 : index
    %c0_89 = arith.constant 0 : index
    %c0_90 = arith.constant 0 : index
    %103 = vector.load %arg13[%c2_88, %c0_89, %c0_90] : memref<18x18x9xf32, #tpu.memory_space<vmem>>, vector<16x16x9xf32>
    %104 = vector.shape_cast %103 : vector<16x16x9xf32> to vector<256x9xf32>
    %c2_91 = arith.constant 2 : index
    %c1_92 = arith.constant 1 : index
    %c0_93 = arith.constant 0 : index
    %105 = vector.load %arg13[%c2_91, %c1_92, %c0_93] : memref<18x18x9xf32, #tpu.memory_space<vmem>>, vector<16x16x9xf32>
    %106 = vector.shape_cast %105 : vector<16x16x9xf32> to vector<256x9xf32>
    %c2_94 = arith.constant 2 : index
    %c2_95 = arith.constant 2 : index
    %c0_96 = arith.constant 0 : index
    %107 = vector.load %arg13[%c2_94, %c2_95, %c0_96] : memref<18x18x9xf32, #tpu.memory_space<vmem>>, vector<16x16x9xf32>
    %108 = vector.shape_cast %107 : vector<16x16x9xf32> to vector<256x9xf32>
    %109 = tpu.concatenate %92, %94, %96, %98, %100, %102, %104, %106, %108 in 1 : vector<256x9xf32>, vector<256x9xf32>, vector<256x9xf32>, vector<256x9xf32>, vector<256x9xf32>, vector<256x9xf32>, vector<256x9xf32>, vector<256x9xf32>, vector<256x9xf32> -> vector<256x81xf32>
    %110 = arith.truncf %109 : vector<256x81xf32> to vector<256x81xbf16>
    %c0_97 = arith.constant 0 : index
    %c0_98 = arith.constant 0 : index
    %111 = vector.load %arg8[%c0_97, %c0_98] : memref<81x9xbf16, #tpu.memory_space<vmem>>, vector<81x9xbf16>
    %cst_99 = arith.constant dense<0.000000e+00> : vector<256x9xf32>
    %112 = tpu.matmul %110, %111, %cst_99 {dimension_numbers = #tpu.dot_dimension_numbers<[1], [0], [0], [1], [0, 0, 1, 1], [], []>} : vector<256x81xbf16>, vector<81x9xbf16>, vector<256x9xf32> -> vector<256x9xf32>
    %113 = vector.extract_strided_slice %112 {offsets = [0, 0], sizes = [256, 8], strides = [1, 1]} : vector<256x9xf32> to vector<256x8xf32>
    %114 = vector.extract_strided_slice %112 {offsets = [0, 8], sizes = [256, 1], strides = [1, 1]} : vector<256x9xf32> to vector<256x1xf32>
    %cst_100 = arith.constant 0.111111112 : f32
    %115 = vector.broadcast %cst_100 : f32 to vector<256x1xf32>
    %116 = arith.mulf %114, %115 : vector<256x1xf32>
    %cst_101 = arith.constant 0.00999999977 : f32
    %117 = vector.broadcast %cst_101 : f32 to vector<256x1xf32>
    %118 = arith.cmpf oge, %116, %117 : vector<256x1xf32>
    %119 = arith.extui %118 : vector<256x1xi1> to vector<256x1xi32>
    %120 = arith.sitofp %119 : vector<256x1xi32> to vector<256x1xf32>
    %cst_102 = arith.constant 9.99999993E-9 : f32
    %121 = vector.broadcast %cst_102 : f32 to vector<256x1xf32>
    %122 = arith.addf %116, %121 : vector<256x1xf32>
    %123 = tpu.reciprocal %122 {approx = true} : vector<256x1xf32> -> vector<256x1xf32>
    %124 = arith.mulf %122, %123 : vector<256x1xf32>
    %cst_103 = arith.constant 2.000000e+00 : f32
    %125 = vector.broadcast %cst_103 : f32 to vector<256x1xf32>
    %126 = arith.subf %125, %124 : vector<256x1xf32>
    %127 = arith.mulf %123, %126 : vector<256x1xf32>
    %128 = arith.mulf %127, %120 : vector<256x1xf32>
    %129 = vector.broadcast %128 : vector<256x1xf32> to vector<256x8xf32>
    %130 = arith.mulf %113, %129 : vector<256x8xf32>
    %c0_104 = arith.constant 0 : index
    %c0_105 = arith.constant 0 : index
    %131 = vector.load %arg9[%c0_104, %c0_105] : memref<1x8xf32, #tpu.memory_space<vmem>>, vector<1x8xf32>
    %132 = vector.broadcast %131 : vector<1x8xf32> to vector<256x8xf32>
    %133 = vector.broadcast %120 : vector<256x1xf32> to vector<256x8xf32>
    %134 = arith.mulf %132, %133 : vector<256x8xf32>
    %135 = arith.addf %130, %134 : vector<256x8xf32>
    %cst_106 = arith.constant 0.000000e+00 : f32
    %136 = vector.broadcast %cst_106 : f32 to vector<256x8xf32>
    %137 = arith.maximumf %135, %136 : vector<256x8xf32>
    %c0_107 = arith.constant 0 : index
    %c0_108 = arith.constant 0 : index
    %138 = vector.load %arg14[%c0_107, %c0_108] : memref<256x8xf32, #tpu.memory_space<vmem>>, vector<256x8xf32>
    tpu.vector_store %arg14[%c0_107, %c0_108], %137 {strides = array<i32>} : memref<256x8xf32, #tpu.memory_space<vmem>>, vector<256x8xf32>,
    %c0_109 = arith.constant 0 : index
    %c0_110 = arith.constant 0 : index
    %139 = vector.load %arg15[%c0_109, %c0_110] : memref<256x1xf32, #tpu.memory_space<vmem>>, vector<256x1xf32>
    tpu.vector_store %arg15[%c0_109, %c0_110], %120 {strides = array<i32>} : memref<256x1xf32, #tpu.memory_space<vmem>>, vector<256x1xf32>,
    %c0_111 = arith.constant 0 : index
    %c0_112 = arith.constant 0 : index
    %140 = tpu.strided_load %arg14[%c0_111, %c0_112] {strides = array<i32: 2, 1>} : memref<256x8xf32, #tpu.memory_space<vmem>>, vector<128x8xf32>
    %c1_113 = arith.constant 1 : index
    %c0_114 = arith.constant 0 : index
    %141 = tpu.strided_load %arg14[%c1_113, %c0_114] {strides = array<i32: 2, 1>} : memref<256x8xf32, #tpu.memory_space<vmem>>, vector<128x8xf32>
    %142 = arith.maximumf %140, %141 : vector<128x8xf32>
    %c0_115 = arith.constant 0 : index
    %c0_116 = arith.constant 0 : index
    %143 = tpu.strided_load %arg15[%c0_115, %c0_116] {strides = array<i32: 2, 1>} : memref<256x1xf32, #tpu.memory_space<vmem>>, vector<128x1xf32>
    %c1_117 = arith.constant 1 : index
    %c0_118 = arith.constant 0 : index
    %144 = tpu.strided_load %arg15[%c1_117, %c0_118] {strides = array<i32: 2, 1>} : memref<256x1xf32, #tpu.memory_space<vmem>>, vector<128x1xf32>
    %145 = arith.maximumf %143, %144 : vector<128x1xf32>
    %146 = vector.shape_cast %142 : vector<128x8xf32> to vector<8x2x8x8xf32>
    %147 = vector.shape_cast %145 : vector<128x1xf32> to vector<8x2x8x1xf32>
    %148 = vector.extract_strided_slice %146 {offsets = [0, 0, 0, 0], sizes = [8, 1, 8, 8], strides = [1, 1, 1, 1]} : vector<8x2x8x8xf32> to vector<8x1x8x8xf32>
    %149 = vector.shape_cast %148 : vector<8x1x8x8xf32> to vector<8x8x8xf32>
    %150 = vector.extract_strided_slice %146 {offsets = [0, 1, 0, 0], sizes = [8, 1, 8, 8], strides = [1, 1, 1, 1]} : vector<8x2x8x8xf32> to vector<8x1x8x8xf32>
    %151 = vector.shape_cast %150 : vector<8x1x8x8xf32> to vector<8x8x8xf32>
    %152 = arith.maximumf %149, %151 : vector<8x8x8xf32>
    %c0_119 = arith.constant 0 : index
    %c0_120 = arith.constant 0 : index
    %c0_121 = arith.constant 0 : index
    %c0_122 = arith.constant 0 : index
    %153 = vector.load %arg10[%c0_119, %c0_120, %c0_121, %c0_122] : memref<1x8x8x8xf32, #tpu.memory_space<vmem>>, vector<1x8x8x8xf32>
    %154 = vector.shape_cast %153 : vector<1x8x8x8xf32> to vector<8x8x8xf32>
    %155 = vector.shape_cast %152 : vector<8x8x8xf32> to vector<1x8x8x8xf32>
    tpu.vector_store %arg10[%c0_119, %c0_120, %c0_121, %c0_122], %155 {strides = array<i32>} : memref<1x8x8x8xf32, #tpu.memory_space<vmem>>, vector<1x8x8x8xf32>,
    %156 = vector.extract_strided_slice %147 {offsets = [0, 0, 0, 0], sizes = [8, 1, 8, 1], strides = [1, 1, 1, 1]} : vector<8x2x8x1xf32> to vector<8x1x8x1xf32>
    %157 = vector.shape_cast %156 : vector<8x1x8x1xf32> to vector<8x8x1xf32>
    %158 = vector.extract_strided_slice %147 {offsets = [0, 1, 0, 0], sizes = [8, 1, 8, 1], strides = [1, 1, 1, 1]} : vector<8x2x8x1xf32> to vector<8x1x8x1xf32>
    %159 = vector.shape_cast %158 : vector<8x1x8x1xf32> to vector<8x8x1xf32>
    %160 = arith.maximumf %157, %159 : vector<8x8x1xf32>
    %c0_123 = arith.constant 0 : index
    %c0_124 = arith.constant 0 : index
    %c0_125 = arith.constant 0 : index
    %c0_126 = arith.constant 0 : index
    %161 = vector.load %arg11[%c0_123, %c0_124, %c0_125, %c0_126] : memref<1x8x8x1xf32, #tpu.memory_space<vmem>>, vector<1x8x8x1xf32>
    %162 = vector.shape_cast %161 : vector<1x8x8x1xf32> to vector<8x8x1xf32>
    %163 = vector.shape_cast %160 : vector<8x8x1xf32> to vector<1x8x8x1xf32>
    tpu.vector_store %arg11[%c0_123, %c0_124, %c0_125, %c0_126], %163 {strides = array<i32>} : memref<1x8x8x1xf32, #tpu.memory_space<vmem>>, vector<1x8x8x1xf32>,
    return
  }
  func.func @transform_0(%arg0: i32) -> (i32, i32, i32, i32) {
    %c0_i32 = arith.constant 0 : i32
    %c0_i32_0 = arith.constant 0 : i32
    %c0_i32_1 = arith.constant 0 : i32
    %c0_i32_2 = arith.constant 0 : i32
    return %arg0, %c0_i32, %c0_i32_0, %c0_i32_1 : i32, i32, i32, i32
  }
  func.func @transform_1(%arg0: i32) -> (i32, i32, i32, i32) {
    %c0_i32 = arith.constant 0 : i32
    %c0_i32_0 = arith.constant 0 : i32
    %c0_i32_1 = arith.constant 0 : i32
    %c0_i32_2 = arith.constant 0 : i32
    return %arg0, %c0_i32, %c0_i32_0, %c0_i32_1 : i32, i32, i32, i32
  }
  func.func @transform_2(%arg0: i32) -> (i32, i32) {
    %c0_i32 = arith.constant 0 : i32
    %c0_i32_0 = arith.constant 0 : i32
    %c0_i32_1 = arith.constant 0 : i32
    return %c0_i32, %c0_i32_0 : i32, i32
  }
  func.func @transform_3(%arg0: i32) -> (i32, i32) {
    %c0_i32 = arith.constant 0 : i32
    %c0_i32_0 = arith.constant 0 : i32
    %c0_i32_1 = arith.constant 0 : i32
    return %c0_i32, %c0_i32_0 : i32, i32
  }
  func.func @transform_4(%arg0: i32) -> (i32, i32) {
    %c0_i32 = arith.constant 0 : i32
    %c0_i32_0 = arith.constant 0 : i32
    %c0_i32_1 = arith.constant 0 : i32
    return %c0_i32, %c0_i32_0 : i32, i32
  }
  func.func @transform_5(%arg0: i32) -> (i32, i32) {
    %c0_i32 = arith.constant 0 : i32
    %c0_i32_0 = arith.constant 0 : i32
    %c0_i32_1 = arith.constant 0 : i32
    return %c0_i32, %c0_i32_0 : i32, i32
  }
  func.func @transform_6(%arg0: i32) -> (i32, i32) {
    %c0_i32 = arith.constant 0 : i32
    %c0_i32_0 = arith.constant 0 : i32
    %c0_i32_1 = arith.constant 0 : i32
    return %c0_i32, %c0_i32_0 : i32, i32
  }
  func.func @transform_7(%arg0: i32) -> (i32, i32) {
    %c0_i32 = arith.constant 0 : i32
    %c0_i32_0 = arith.constant 0 : i32
    %c0_i32_1 = arith.constant 0 : i32
    return %c0_i32, %c0_i32_0 : i32, i32
  }
  func.func @transform_8(%arg0: i32) -> (i32, i32) {
    %c0_i32 = arith.constant 0 : i32
    %c0_i32_0 = arith.constant 0 : i32
    %c0_i32_1 = arith.constant 0 : i32
    return %c0_i32, %c0_i32_0 : i32, i32
  }
  func.func @transform_9(%arg0: i32) -> (i32, i32, i32, i32) {
    %c0_i32 = arith.constant 0 : i32
    %c0_i32_0 = arith.constant 0 : i32
    %c0_i32_1 = arith.constant 0 : i32
    %c0_i32_2 = arith.constant 0 : i32
    return %arg0, %c0_i32, %c0_i32_0, %c0_i32_1 : i32, i32, i32, i32
  }
  func.func @transform_10(%arg0: i32) -> (i32, i32, i32, i32) {
    %c0_i32 = arith.constant 0 : i32
    %c0_i32_0 = arith.constant 0 : i32
    %c0_i32_1 = arith.constant 0 : i32
    %c0_i32_2 = arith.constant 0 : i32
    return %arg0, %c0_i32, %c0_i32_0, %c0_i32_1 : i32, i32, i32, i32
  }
}

</mosaic_0001>

<llo_original>
// kernel: tpu_custom_call.1
$region0: #{tpu_custom_call.1}
  #allocation0 [shape = 'u32[]', space=smem, size = 0x4, offset = 0x4, fixed_abs, tag = 'smem constant byte address 0x4 - core index']
  #allocation1 [shape = 'u32[144,128]{1,0:T(1,128)}', space=vmem, size = 0x12000, scoped, tag = 'internal scratch']
  #allocation2 [shape = 'f32[18,18,5]{2,1,0:T(8,128)}', space=vmem, size = 0x36000, scoped, tag = 'scratch operand']
  #allocation3 [shape = 'f32[18,18,9]{2,1,0:T(8,128)}', space=vmem, size = 0x36000, scoped, tag = 'scratch operand']
  #allocation4 [shape = 'f32[256,8]{1,0:T(8,128)}', space=vmem, size = 0x20000, scoped, tag = 'scratch operand']
  #allocation5 [shape = 'f32[256,1]{1,0:T(8,128)}', space=vmem, size = 0x20000, scoped, tag = 'scratch operand']
  %s0 = inlined_call_operand.vmem [shape: f32[2,16,16,4], index: 0, kind: input, shape index: {}]
  %s1 = inlined_call_operand.vmem [shape: f32[2,16,16,1], index: 1, kind: input, shape index: {}]
  %s2 = inlined_call_operand.vmem [shape: bf16[45,9], index: 2, kind: input, shape index: {}]
  %s3 = inlined_call_operand.vmem [shape: f32[1,8], index: 3, kind: input, shape index: {}]
  %s4 = inlined_call_operand.vmem [shape: f32[1,8], index: 4, kind: input, shape index: {}]
  %s5 = inlined_call_operand.vmem [shape: f32[1,8], index: 5, kind: input, shape index: {}]
  %s6 = inlined_call_operand.vmem [shape: f32[8,8], index: 6, kind: input, shape index: {}]
  %s7 = inlined_call_operand.vmem [shape: bf16[81,9], index: 7, kind: input, shape index: {}]
  %s8 = inlined_call_operand.vmem [shape: f32[1,8], index: 8, kind: input, shape index: {}]
  %s9 = inlined_call_operand.hbm [shape: f32[2,8,8,8], index: 9, kind: output, shape index: {0}]
  %s10 = inlined_call_operand.vmem [shape: f32[2,8,8,1], index: 10, kind: output, shape index: {1}]
  %11 = xla_tuple %s9, %s10
  %s12 = sld [smem:[#allocation0]]
  $region77: #{tpu_custom_call.1} parent=0
    _
  %s14 = ssub.s32 1, %s12
  %s15 = scalar_select 0, %s14, %s12
  $region1: #{tpu_custom_call.1} parent=0
    #allocation6 [shape = 'u8[65536]{0}', space=vmem, size = 0x10000, scoped, tag = 'output window, operand 0']
    #allocation7 [shape = 's32[2]{0}', space=sflag, size = 0x8, scoped, tag = 'scoped memory for tpu_custom_call.1']
    %16 = vsyncpa [#allocation7], 0
    %s17 = scalar_lea.sflag [#allocation7], 1
    %18 = vsyncpa %s17, 0
    loop: start=0, step=1, limit=4
    $region2: #{tpu_custom_call.1} parent=1 // loop_pre_header
      _
    $region3: #{tpu_custom_call.1} parent=1 // loop_header
      %s20 = sphi 0, %s24
      %p21 = scmp.ge.s32.totalorder %s20, 4
      %s30 = sphi 0, %s32
      %s33 = sphi 0, %s30
      %s34 = sphi 0, %s33
      %s50 = sphi 0, %s34
      %s56 = sphi 0, %s58
      %s59 = sphi 0, %s56
      %s60 = sphi 0, %s59
      %s76 = sphi 0, %s60
      %s80 = sphi 0, %s80
      %s82 = sphi 0, %s80
      %s83 = sphi 0, %s82
      %s97 = sphi 0, %s83
      %s101 = sphi 0, %s101
      %s103 = sphi 0, %s101
      %s104 = sphi 0, %s103
      %s118 = sphi 0, %s104
      %s122 = sphi 0, %s122
      %s124 = sphi 0, %s122
      %s125 = sphi 0, %s124
      %s139 = sphi 0, %s125
      %s143 = sphi 0, %s143
      %s145 = sphi 0, %s143
      %s146 = sphi 0, %s145
      %s160 = sphi 0, %s146
      %s164 = sphi 0, %s164
      %s166 = sphi 0, %s164
      %s167 = sphi 0, %s166
      %s181 = sphi 0, %s167
      %s185 = sphi 0, %s185
      %s187 = sphi 0, %s185
      %s188 = sphi 0, %s187
      %s202 = sphi 0, %s188
      %s206 = sphi 0, %s206
      %s208 = sphi 0, %s206
      %s209 = sphi 0, %s208
      %s223 = sphi 0, %s209
      %s229 = sphi 0, %s231
      %s232 = sphi 0, %s229
      %s233 = sphi 0, %s232
      %s249 = sphi 0, %s233
      %s255 = sphi 0, %s257
      %s258 = sphi 0, %s255
      %s259 = sphi 0, %s258
      %s275 = sphi 0, %s259
    $region4: #{tpu_custom_call.1} parent=1 // loop_header_branch
      %23 = sbr.rel (%p21) target = $region8
    $region5: #{tpu_custom_call.1} parent=1 // loop_body
      %s25 = ssub.s32 %s20, 1
      %s26 = ssub.s32 %s20, 2
      %s27 = sadd.s32 %s20, 1
      %s28 = ssub.s32 %s20, %s27
      %p29 = scmp.eq.s32.totalorder %s28, 0
      %s31 = sadd.s32 %s30, 1
      %s32 = scalar_select %p29, %s30, %s31
      %p35 = pneg %p29
      %p36 = scmp.eq.s32.totalorder %s20, 1
      %p37 = por %p35, %p36
      %p38 = scmp.ne.s32.totalorder %s30, %s33
      %p39 = scmp.eq.s32.totalorder %s20, 0
      %p40 = por %p38, %p39
      %p41 = scmp.ne.s32.totalorder %s30, %s33
      %p42 = scmp.eq.s32.totalorder %s25, 1
      %p43 = por %p41, %p42
      %p44 = scmp.ne.s32.totalorder %s33, %s34
      %p45 = scmp.eq.s32.totalorder %s25, 0
      %p46 = por %p44, %p45
      %p47 = scmp.ne.s32.totalorder %s33, %s34
      %p48 = scmp.eq.s32.totalorder %s26, 1
      %p49 = por %p47, %p48
      %p51 = scmp.ne.s32.totalorder %s34, %s50
      %p52 = scmp.eq.s32.totalorder %s26, 0
      %p53 = por %p51, %p52
      %s54 = ssub.s32 %s20, %s27
      %p55 = scmp.eq.s32.totalorder %s54, 0
      %s57 = sadd.s32 %s56, 1
      %s58 = scalar_select %p55, %s56, %s57
      %p61 = pneg %p55
      %p62 = scmp.eq.s32.totalorder %s20, 1
      %p63 = por %p61, %p62
      %p64 = scmp.ne.s32.totalorder %s56, %s59
      %p65 = scmp.eq.s32.totalorder %s20, 0
      %p66 = por %p64, %p65
      %p67 = scmp.ne.s32.totalorder %s56, %s59
      %p68 = scmp.eq.s32.totalorder %s25, 1
      %p69 = por %p67, %p68
      %p70 = scmp.ne.s32.totalorder %s59, %s60
      %p71 = scmp.eq.s32.totalorder %s25, 0
      %p72 = por %p70, %p71
      %p73 = scmp.ne.s32.totalorder %s59, %s60
      %p74 = scmp.eq.s32.totalorder %s26, 1
      %p75 = por %p73, %p74
      %p77 = scmp.ne.s32.totalorder %s60, %s76
      %p78 = scmp.eq.s32.totalorder %s26, 0
      %p79 = por %p77, %p78
      %s81 = sadd.s32 %s80, 1
      %p84 = scmp.eq.s32.totalorder %s20, 1
      %p85 = scmp.ne.s32.totalorder %s80, %s82
      %p86 = scmp.eq.s32.totalorder %s20, 0
      %p87 = por %p85, %p86
      %p88 = scmp.ne.s32.totalorder %s80, %s82
      %p89 = scmp.eq.s32.totalorder %s25, 1
      %p90 = por %p88, %p89
      %p91 = scmp.ne.s32.totalorder %s82, %s83
      %p92 = scmp.eq.s32.totalorder %s25, 0
      %p93 = por %p91, %p92
      %p94 = scmp.ne.s32.totalorder %s82, %s83
      %p95 = scmp.eq.s32.totalorder %s26, 1
      %p96 = por %p94, %p95
      %p98 = scmp.ne.s32.totalorder %s83, %s97
      %p99 = scmp.eq.s32.totalorder %s26, 0
      %p100 = por %p98, %p99
      %s102 = sadd.s32 %s101, 1
      %p105 = scmp.eq.s32.totalorder %s20, 1
      %p106 = scmp.ne.s32.totalorder %s101, %s103
      %p107 = scmp.eq.s32.totalorder %s20, 0
      %p108 = por %p106, %p107
      %p109 = scmp.ne.s32.totalorder %s101, %s103
      %p110 = scmp.eq.s32.totalorder %s25, 1
      %p111 = por %p109, %p110
      %p112 = scmp.ne.s32.totalorder %s103, %s104
      %p113 = scmp.eq.s32.totalorder %s25, 0
      %p114 = por %p112, %p113
      %p115 = scmp.ne.s32.totalorder %s103, %s104
      %p116 = scmp.eq.s32.totalorder %s26, 1
      %p117 = por %p115, %p116
      %p119 = scmp.ne.s32.totalorder %s104, %s118
      %p120 = scmp.eq.s32.totalorder %s26, 0
      %p121 = por %p119, %p120
      %s123 = sadd.s32 %s122, 1
      %p126 = scmp.eq.s32.totalorder %s20, 1
      %p127 = scmp.ne.s32.totalorder %s122, %s124
      %p128 = scmp.eq.s32.totalorder %s20, 0
      %p129 = por %p127, %p128
      %p130 = scmp.ne.s32.totalorder %s122, %s124
      %p131 = scmp.eq.s32.totalorder %s25, 1
      %p132 = por %p130, %p131
      %p133 = scmp.ne.s32.totalorder %s124, %s125
      %p134 = scmp.eq.s32.totalorder %s25, 0
      %p135 = por %p133, %p134
      %p136 = scmp.ne.s32.totalorder %s124, %s125
      %p137 = scmp.eq.s32.totalorder %s26, 1
      %p138 = por %p136, %p137
      %p140 = scmp.ne.s32.totalorder %s125, %s139
      %p141 = scmp.eq.s32.totalorder %s26, 0
      %p142 = por %p140, %p141
      %s144 = sadd.s32 %s143, 1
      %p147 = scmp.eq.s32.totalorder %s20, 1
      %p148 = scmp.ne.s32.totalorder %s143, %s145
      %p149 = scmp.eq.s32.totalorder %s20, 0
      %p150 = por %p148, %p149
      %p151 = scmp.ne.s32.totalorder %s143, %s145
      %p152 = scmp.eq.s32.totalorder %s25, 1
      %p153 = por %p151, %p152
      %p154 = scmp.ne.s32.totalorder %s145, %s146
      %p155 = scmp.eq.s32.totalorder %s25, 0
      %p156 = por %p154, %p155
      %p157 = scmp.ne.s32.totalorder %s145, %s146
      %p158 = scmp.eq.s32.totalorder %s26, 1
      %p159 = por %p157, %p158
      %p161 = scmp.ne.s32.totalorder %s146, %s160
      %p162 = scmp.eq.s32.totalorder %s26, 0
      %p163 = por %p161, %p162
      %s165 = sadd.s32 %s164, 1
      %p168 = scmp.eq.s32.totalorder %s20, 1
      %p169 = scmp.ne.s32.totalorder %s164, %s166
      %p170 = scmp.eq.s32.totalorder %s20, 0
      %p171 = por %p169, %p170
      %p172 = scmp.ne.s32.totalorder %s164, %s166
      %p173 = scmp.eq.s32.totalorder %s25, 1
      %p174 = por %p172, %p173
      %p175 = scmp.ne.s32.totalorder %s166, %s167
      %p176 = scmp.eq.s32.totalorder %s25, 0
      %p177 = por %p175, %p176
      %p178 = scmp.ne.s32.totalorder %s166, %s167
      %p179 = scmp.eq.s32.totalorder %s26, 1
      %p180 = por %p178, %p179
      %p182 = scmp.ne.s32.totalorder %s167, %s181
      %p183 = scmp.eq.s32.totalorder %s26, 0
      %p184 = por %p182, %p183
      %s186 = sadd.s32 %s185, 1
      %p189 = scmp.eq.s32.totalorder %s20, 1
      %p190 = scmp.ne.s32.totalorder %s185, %s187
      %p191 = scmp.eq.s32.totalorder %s20, 0
      %p192 = por %p190, %p191
      %p193 = scmp.ne.s32.totalorder %s185, %s187
      %p194 = scmp.eq.s32.totalorder %s25, 1
      %p195 = por %p193, %p194
      %p196 = scmp.ne.s32.totalorder %s187, %s188
      %p197 = scmp.eq.s32.totalorder %s25, 0
      %p198 = por %p196, %p197
      %p199 = scmp.ne.s32.totalorder %s187, %s188
      %p200 = scmp.eq.s32.totalorder %s26, 1
      %p201 = por %p199, %p200
      %p203 = scmp.ne.s32.totalorder %s188, %s202
      %p204 = scmp.eq.s32.totalorder %s26, 0
      %p205 = por %p203, %p204
      %s207 = sadd.s32 %s206, 1
      %p210 = scmp.eq.s32.totalorder %s20, 1
      %p211 = scmp.ne.s32.totalorder %s206, %s208
      %p212 = scmp.eq.s32.totalorder %s20, 0
      %p213 = por %p211, %p212
      %p214 = scmp.ne.s32.totalorder %s206, %s208
      %p215 = scmp.eq.s32.totalorder %s25, 1
      %p216 = por %p214, %p215
      %p217 = scmp.ne.s32.totalorder %s208, %s209
      %p218 = scmp.eq.s32.totalorder %s25, 0
      %p219 = por %p217, %p218
      %p220 = scmp.ne.s32.totalorder %s208, %s209
      %p221 = scmp.eq.s32.totalorder %s26, 1
      %p222 = por %p220, %p221
      %p224 = scmp.ne.s32.totalorder %s209, %s223
      %p225 = scmp.eq.s32.totalorder %s26, 0
      %p226 = por %p224, %p225
      %s227 = ssub.s32 %s20, %s27
      %p228 = scmp.eq.s32.totalorder %s227, 0
      %s230 = sadd.s32 %s229, 1
      %s231 = scalar_select %p228, %s229, %s230
      %p234 = pneg %p228
      %p235 = scmp.eq.s32.totalorder %s20, 1
      %p236 = por %p234, %p235
      %p237 = scmp.ne.s32.totalorder %s229, %s232
      %p238 = scmp.eq.s32.totalorder %s20, 0
      %p239 = por %p237, %p238
      %p240 = scmp.ne.s32.totalorder %s229, %s232
      %p241 = scmp.eq.s32.totalorder %s25, 1
      %p242 = por %p240, %p241
      %p243 = scmp.ne.s32.totalorder %s232, %s233
      %p244 = scmp.eq.s32.totalorder %s25, 0
      %p245 = por %p243, %p244
      %p246 = scmp.ne.s32.totalorder %s232, %s233
      %p247 = scmp.eq.s32.totalorder %s26, 1
      %p248 = por %p246, %p247
      %p250 = scmp.ne.s32.totalorder %s233, %s249
      %p251 = scmp.eq.s32.totalorder %s26, 0
      %p252 = por %p250, %p251
      %s253 = ssub.s32 %s20, %s27
      %p254 = scmp.eq.s32.totalorder %s253, 0
      %s256 = sadd.s32 %s255, 1
      %s257 = scalar_select %p254, %s255, %s256
      %p260 = pneg %p254
      %p261 = scmp.eq.s32.totalorder %s20, 1
      %p262 = por %p260, %p261
      %p263 = scmp.ne.s32.totalorder %s255, %s258
      %p264 = scmp.eq.s32.totalorder %s20, 0
      %p265 = por %p263, %p264
      %p266 = scmp.ne.s32.totalorder %s255, %s258
      %p267 = scmp.eq.s32.totalorder %s25, 1
      %p268 = por %p266, %p267
      %p269 = scmp.ne.s32.totalorder %s258, %s259
      %p270 = scmp.eq.s32.totalorder %s25, 0
      %p271 = por %p269, %p270
      %p272 = scmp.ne.s32.totalorder %s258, %s259
      %p273 = scmp.eq.s32.totalorder %s26, 1
      %p274 = por %p272, %p273
      %p276 = scmp.ne.s32.totalorder %s259, %s275
      %p277 = scmp.eq.s32.totalorder %s26, 0
      %p278 = por %p276, %p277
      %p279 = scmp.le.s32.totalorder 1, %s20
      %p280 = scmp.lt.s32.totalorder %s20, 3
      %p281 = pnand %p279, %p280
      %p282 = pneg %p281
      // Predicated region
      $region9: #{tpu_custom_call.1} parent=5 // pred_check
        _
      $region10: #{tpu_custom_call.1} parent=5 // pred_check_branch
        %284 = sbr.rel (%p281) target = $region12
      $region11: #{tpu_custom_call.1} parent=5 // pred_region
        %s285 = ssub.s32 %s20, 1
        // Predicated region
        $region13: #{tpu_custom_call.1} parent=11 // pred_check
          %p286 = pneg %p93
        $region14: #{tpu_custom_call.1} parent=11 // pred_check_branch
          %288 = sbr.rel (%p286) target = $region16
        $region15: #{tpu_custom_call.1} parent=11 // pred_region
          _
        $region16: #{tpu_custom_call.1} parent=11 // pred_fallthru
          _
        // Predicated region
        $region17: #{tpu_custom_call.1} parent=11 // pred_check
          %p289 = pneg %p114
        $region18: #{tpu_custom_call.1} parent=11 // pred_check_branch
          %291 = sbr.rel (%p289) target = $region20
        $region19: #{tpu_custom_call.1} parent=11 // pred_region
          _
        $region20: #{tpu_custom_call.1} parent=11 // pred_fallthru
          _
        // Predicated region
        $region21: #{tpu_custom_call.1} parent=11 // pred_check
          %p292 = pneg %p135
        $region22: #{tpu_custom_call.1} parent=11 // pred_check_branch
          %294 = sbr.rel (%p292) target = $region24
        $region23: #{tpu_custom_call.1} parent=11 // pred_region
          _
        $region24: #{tpu_custom_call.1} parent=11 // pred_fallthru
          _
        // Predicated region
        $region25: #{tpu_custom_call.1} parent=11 // pred_check
          %p295 = pneg %p156
        $region26: #{tpu_custom_call.1} parent=11 // pred_check_branch
          %297 = sbr.rel (%p295) target = $region28
        $region27: #{tpu_custom_call.1} parent=11 // pred_region
          _
        $region28: #{tpu_custom_call.1} parent=11 // pred_fallthru
          _
        // Predicated region
        $region29: #{tpu_custom_call.1} parent=11 // pred_check
          %p298 = pneg %p177
        $region30: #{tpu_custom_call.1} parent=11 // pred_check_branch
          %300 = sbr.rel (%p298) target = $region32
        $region31: #{tpu_custom_call.1} parent=11 // pred_region
          _
        $region32: #{tpu_custom_call.1} parent=11 // pred_fallthru
          _
        // Predicated region
        $region33: #{tpu_custom_call.1} parent=11 // pred_check
          %p301 = pneg %p198
        $region34: #{tpu_custom_call.1} parent=11 // pred_check_branch
          %303 = sbr.rel (%p301) target = $region36
        $region35: #{tpu_custom_call.1} parent=11 // pred_region
          _
        $region36: #{tpu_custom_call.1} parent=11 // pred_fallthru
          _
        // Predicated region
        $region37: #{tpu_custom_call.1} parent=11 // pred_check
          %p304 = pneg %p219
        $region38: #{tpu_custom_call.1} parent=11 // pred_check_branch
          %306 = sbr.rel (%p304) target = $region40
        $region39: #{tpu_custom_call.1} parent=11 // pred_region
          _
        $region40: #{tpu_custom_call.1} parent=11 // pred_fallthru
          _
      $region12: #{tpu_custom_call.1} parent=5 // pred_fallthru
        _
      %p307 = scmp.lt.s32.totalorder %s20, 2
      // Predicated region
      $region41: #{tpu_custom_call.1} parent=5 // pred_check
        %p308 = pneg %p307
      $region42: #{tpu_custom_call.1} parent=5 // pred_check_branch
        %310 = sbr.rel (%p308) target = $region44
      $region43: #{tpu_custom_call.1} parent=5 // pred_region
        // Predicated region
        $region45: #{tpu_custom_call.1} parent=43 // pred_check
          %p311 = pneg %p40
        $region46: #{tpu_custom_call.1} parent=43 // pred_check_branch
          %313 = sbr.rel (%p311) target = $region48
        $region47: #{tpu_custom_call.1} parent=43 // pred_region
          %p314 = scmp.lt.s32.totalorder %s20, 1
          %s315 = scalar_select %p314, %s20, 1
          %s316 = smul.addr %s315, 32
          %s317 = smul.addr %s316, 8
          %s318 = scalar_lea.vmem %s0, %s317
        $region48: #{tpu_custom_call.1} parent=43 // pred_fallthru
          _
        // Predicated region
        $region49: #{tpu_custom_call.1} parent=43 // pred_check
          %p319 = pneg %p66
        $region50: #{tpu_custom_call.1} parent=43 // pred_check_branch
          %321 = sbr.rel (%p319) target = $region52
        $region51: #{tpu_custom_call.1} parent=43 // pred_region
          %p322 = scmp.lt.s32.totalorder %s20, 1
          %s323 = scalar_select %p322, %s20, 1
          %s324 = smul.addr %s323, 32
          %s325 = smul.addr %s324, 8
          %s326 = scalar_lea.vmem %s1, %s325
        $region52: #{tpu_custom_call.1} parent=43 // pred_fallthru
          _
      $region44: #{tpu_custom_call.1} parent=5 // pred_fallthru
        _
      %p327 = scmp.le.s32.totalorder 1, %s20
      %p328 = scmp.lt.s32.totalorder %s20, 3
      %p329 = pnand %p327, %p328
      %p330 = pneg %p329
      // Predicated region
      $region53: #{tpu_custom_call.1} parent=5 // pred_check
        _
      $region54: #{tpu_custom_call.1} parent=5 // pred_check_branch
        %332 = sbr.rel (%p329) target = $region56
      $region55: #{tpu_custom_call.1} parent=5 // pred_region
        %s333 = ssub.s32 %s20, 1
        %p334 = scmp.lt.s32.totalorder %s25, 1
        %s335 = scalar_select %p334, %s25, 1
        %s336 = smul.addr %s335, 32
        %s337 = smul.addr %s336, 8
        %s338 = scalar_lea.vmem %s0, %s337
        %p339 = pneg %p46
        %p340 = pneg %p43
        %p341 = scmp.lt.s32.totalorder %s25, 1
        %s342 = scalar_select %p341, %s25, 1
        %s343 = smul.addr %s342, 32
        %s344 = smul.addr %s343, 8
        %s345 = scalar_lea.vmem %s1, %s344
        %p346 = pneg %p72
        %p347 = pneg %p69
        %p348 = pneg %p93
        %p349 = pneg %p90
        %p350 = pneg %p114
        %p351 = pneg %p111
        %p352 = pneg %p135
        %p353 = pneg %p132
        %p354 = pneg %p156
        %p355 = pneg %p153
        %p356 = pneg %p177
        %p357 = pneg %p174
        %p358 = pneg %p198
        %p359 = pneg %p195
        %p360 = pneg %p219
        %p361 = pneg %p216
        %p362 = pneg %p245
        %p363 = pneg %p242
        %s364 = sand.u32 %s232, 1
        %s365 = scalar_lea.sflag [#allocation7], %s364
        %s366 = sand.u32 %s232, 1
        %s367 = smul.addr %s366, 64
        %s368 = scalar_lea.vmem [#allocation6], %s367
        %p369 = pneg %p271
        %p370 = pneg %p268
        %p371 = scmp.lt.s32.totalorder %s25, 1
        %s372 = scalar_select %p371, %s25, 1
        %s373 = smul.addr %s372, 8
        %s374 = smul.addr %s373, 8
        %s375 = scalar_lea.vmem %s10, %s374
        %p376 = scmp.lt.s32.totalorder %s25, 1
        %s377 = scalar_select %p376, %s25, 1
        %s378 = smul.addr %s377, 32
        %s379 = smul.addr %s378, 8
        %s380 = scalar_lea.vmem %s0, %s379
        %p381 = scmp.lt.s32.totalorder %s25, 1
        %s382 = scalar_select %p381, %s25, 1
        %s383 = smul.addr %s382, 32
        %s384 = smul.addr %s383, 8
        %s385 = scalar_lea.vmem %s1, %s384
        %p386 = scmp.lt.s32.totalorder %s25, 1
        %s387 = scalar_select %p386, %s25, 1
        %s388 = smul.addr %s387, 8
        %s389 = smul.addr %s388, 8
        %s390 = scalar_lea.vmem %s10, %s389
        %v392 = vld [vmem:[%s380] sm:$0xff]
        %v393 = vld [vmem:[%s380 + $0x8] sm:$0xff]
        %v394 = vld [vmem:[%s380 + $0x10] sm:$0xff]
        %v395 = vld [vmem:[%s380 + $0x18] sm:$0xff]
        %v396 = vld [vmem:[%s380 + $0x20] sm:$0xff]
        %v397 = vld [vmem:[%s380 + $0x28] sm:$0xff]
        %v398 = vld [vmem:[%s380 + $0x30] sm:$0xff]
        %v399 = vld [vmem:[%s380 + $0x38] sm:$0xff]
        %v400 = vld [vmem:[%s380 + $0x40] sm:$0xff]
        %v401 = vld [vmem:[%s380 + $0x48] sm:$0xff]
        %v402 = vld [vmem:[%s380 + $0x50] sm:$0xff]
        %v403 = vld [vmem:[%s380 + $0x58] sm:$0xff]
        %v404 = vld [vmem:[%s380 + $0x60] sm:$0xff]
        %v405 = vld [vmem:[%s380 + $0x68] sm:$0xff]
        %v406 = vld [vmem:[%s380 + $0x70] sm:$0xff]
        %v407 = vld [vmem:[%s380 + $0x78] sm:$0xff]
        %v408 = vld [vmem:[%s380 + $0x80] sm:$0xff]
        %v409 = vld [vmem:[%s380 + $0x88] sm:$0xff]
        %v410 = vld [vmem:[%s380 + $0x90] sm:$0xff]
        %v411 = vld [vmem:[%s380 + $0x98] sm:$0xff]
        %v412 = vld [vmem:[%s380 + $0xa0] sm:$0xff]
        %v413 = vld [vmem:[%s380 + $0xa8] sm:$0xff]
        %v414 = vld [vmem:[%s380 + $0xb0] sm:$0xff]
        %v415 = vld [vmem:[%s380 + $0xb8] sm:$0xff]
        %v416 = vld [vmem:[%s380 + $0xc0] sm:$0xff]
        %v417 = vld [vmem:[%s380 + $0xc8] sm:$0xff]
        %v418 = vld [vmem:[%s380 + $0xd0] sm:$0xff]
        %v419 = vld [vmem:[%s380 + $0xd8] sm:$0xff]
        %v420 = vld [vmem:[%s380 + $0xe0] sm:$0xff]
        %v421 = vld [vmem:[%s380 + $0xe8] sm:$0xff]
        %v422 = vld [vmem:[%s380 + $0xf0] sm:$0xff]
        %v423 = vld [vmem:[%s380 + $0xf8] sm:$0xff]
        %v424 = vld [vmem:[%s385] sm:$0xff]
        %v425 = vld [vmem:[%s385 + $0x8] sm:$0xff]
        %v426 = vld [vmem:[%s385 + $0x10] sm:$0xff]
        %v427 = vld [vmem:[%s385 + $0x18] sm:$0xff]
        %v428 = vld [vmem:[%s385 + $0x20] sm:$0xff]
        %v429 = vld [vmem:[%s385 + $0x28] sm:$0xff]
        %v430 = vld [vmem:[%s385 + $0x30] sm:$0xff]
        %v431 = vld [vmem:[%s385 + $0x38] sm:$0xff]
        %v432 = vld [vmem:[%s385 + $0x40] sm:$0xff]
        %v433 = vld [vmem:[%s385 + $0x48] sm:$0xff]
        %v434 = vld [vmem:[%s385 + $0x50] sm:$0xff]
        %v435 = vld [vmem:[%s385 + $0x58] sm:$0xff]
        %v436 = vld [vmem:[%s385 + $0x60] sm:$0xff]
        %v437 = vld [vmem:[%s385 + $0x68] sm:$0xff]
        %v438 = vld [vmem:[%s385 + $0x70] sm:$0xff]
        %v439 = vld [vmem:[%s385 + $0x78] sm:$0xff]
        %v440 = vld [vmem:[%s385 + $0x80] sm:$0xff]
        %v441 = vld [vmem:[%s385 + $0x88] sm:$0xff]
        %v442 = vld [vmem:[%s385 + $0x90] sm:$0xff]
        %v443 = vld [vmem:[%s385 + $0x98] sm:$0xff]
        %v444 = vld [vmem:[%s385 + $0xa0] sm:$0xff]
        %v445 = vld [vmem:[%s385 + $0xa8] sm:$0xff]
        %v446 = vld [vmem:[%s385 + $0xb0] sm:$0xff]
        %v447 = vld [vmem:[%s385 + $0xb8] sm:$0xff]
        %v448 = vld [vmem:[%s385 + $0xc0] sm:$0xff]
        %v449 = vld [vmem:[%s385 + $0xc8] sm:$0xff]
        %v450 = vld [vmem:[%s385 + $0xd0] sm:$0xff]
        %v451 = vld [vmem:[%s385 + $0xd8] sm:$0xff]
        %v452 = vld [vmem:[%s385 + $0xe0] sm:$0xff]
        %v453 = vld [vmem:[%s385 + $0xe8] sm:$0xff]
        %v454 = vld [vmem:[%s385 + $0xf0] sm:$0xff]
        %v455 = vld [vmem:[%s385 + $0xf8] sm:$0xff]
        %vm456 = vcmask 39936
        %457 = vst.msk [vmem:[#allocation2] sm:$0xff] %vm456, 0.0
        %458 = vst.msk [vmem:[#allocation2 + $0x8] sm:$0xff] %vm456, 0.0
        %vm459 = vcmask 33792
        %460 = vst.msk [vmem:[#allocation2 + $0x10] sm:$0x3] %vm459, 0.0
        %461 = vst.msk [vmem:[#allocation2 + $0x18] sm:$0xff] %vm456, 0.0
        %462 = vst.msk [vmem:[#allocation2 + $0x20] sm:$0xff] %vm456, 0.0
        %463 = vst.msk [vmem:[#allocation2 + $0x28] sm:$0x3] %vm459, 0.0
        %464 = vst.msk [vmem:[#allocation2 + $0x30] sm:$0xff] %vm456, 0.0
        %465 = vst.msk [vmem:[#allocation2 + $0x38] sm:$0xff] %vm456, 0.0
        %466 = vst.msk [vmem:[#allocation2 + $0x40] sm:$0x3] %vm459, 0.0
        %467 = vst.msk [vmem:[#allocation2 + $0x48] sm:$0xff] %vm456, 0.0
        %468 = vst.msk [vmem:[#allocation2 + $0x50] sm:$0xff] %vm456, 0.0
        %469 = vst.msk [vmem:[#allocation2 + $0x58] sm:$0x3] %vm459, 0.0
        %470 = vst.msk [vmem:[#allocation2 + $0x60] sm:$0xff] %vm456, 0.0
        %471 = vst.msk [vmem:[#allocation2 + $0x68] sm:$0xff] %vm456, 0.0
        %472 = vst.msk [vmem:[#allocation2 + $0x70] sm:$0x3] %vm459, 0.0
        %473 = vst.msk [vmem:[#allocation2 + $0x78] sm:$0xff] %vm456, 0.0
        %474 = vst.msk [vmem:[#allocation2 + $0x80] sm:$0xff] %vm456, 0.0
        %475 = vst.msk [vmem:[#allocation2 + $0x88] sm:$0x3] %vm459, 0.0
        %476 = vst.msk [vmem:[#allocation2 + $0x90] sm:$0xff] %vm456, 0.0
        %477 = vst.msk [vmem:[#allocation2 + $0x98] sm:$0xff] %vm456, 0.0
        %478 = vst.msk [vmem:[#allocation2 + $0xa0] sm:$0x3] %vm459, 0.0
        %479 = vst.msk [vmem:[#allocation2 + $0xa8] sm:$0xff] %vm456, 0.0
        %480 = vst.msk [vmem:[#allocation2 + $0xb0] sm:$0xff] %vm456, 0.0
        %481 = vst.msk [vmem:[#allocation2 + $0xb8] sm:$0x3] %vm459, 0.0
        %482 = vst.msk [vmem:[#allocation2 + $0xc0] sm:$0xff] %vm456, 0.0
        %483 = vst.msk [vmem:[#allocation2 + $0xc8] sm:$0xff] %vm456, 0.0
        %484 = vst.msk [vmem:[#allocation2 + $0xd0] sm:$0x3] %vm459, 0.0
        %485 = vst.msk [vmem:[#allocation2 + $0xd8] sm:$0xff] %vm456, 0.0
        %486 = vst.msk [vmem:[#allocation2 + $0xe0] sm:$0xff] %vm456, 0.0
        %487 = vst.msk [vmem:[#allocation2 + $0xe8] sm:$0x3] %vm459, 0.0
        %488 = vst.msk [vmem:[#allocation2 + $0xf0] sm:$0xff] %vm456, 0.0
        %489 = vst.msk [vmem:[#allocation2 + $0xf8] sm:$0xff] %vm456, 0.0
        %490 = vst.msk [vmem:[#allocation2 + $0x100] sm:$0x3] %vm459, 0.0
        %491 = vst.msk [vmem:[#allocation2 + $0x108] sm:$0xff] %vm456, 0.0
        %492 = vst.msk [vmem:[#allocation2 + $0x110] sm:$0xff] %vm456, 0.0
        %493 = vst.msk [vmem:[#allocation2 + $0x118] sm:$0x3] %vm459, 0.0
        %494 = vst.msk [vmem:[#allocation2 + $0x120] sm:$0xff] %vm456, 0.0
        %495 = vst.msk [vmem:[#allocation2 + $0x128] sm:$0xff] %vm456, 0.0
        %496 = vst.msk [vmem:[#allocation2 + $0x130] sm:$0x3] %vm459, 0.0
        %497 = vst.msk [vmem:[#allocation2 + $0x138] sm:$0xff] %vm456, 0.0
        %498 = vst.msk [vmem:[#allocation2 + $0x140] sm:$0xff] %vm456, 0.0
        %499 = vst.msk [vmem:[#allocation2 + $0x148] sm:$0x3] %vm459, 0.0
        %500 = vst.msk [vmem:[#allocation2 + $0x150] sm:$0xff] %vm456, 0.0
        %501 = vst.msk [vmem:[#allocation2 + $0x158] sm:$0xff] %vm456, 0.0
        %502 = vst.msk [vmem:[#allocation2 + $0x160] sm:$0x3] %vm459, 0.0
        %503 = vst.msk [vmem:[#allocation2 + $0x168] sm:$0xff] %vm456, 0.0
        %504 = vst.msk [vmem:[#allocation2 + $0x170] sm:$0xff] %vm456, 0.0
        %505 = vst.msk [vmem:[#allocation2 + $0x178] sm:$0x3] %vm459, 0.0
        %506 = vst.msk [vmem:[#allocation2 + $0x180] sm:$0xff] %vm456, 0.0
        %507 = vst.msk [vmem:[#allocation2 + $0x188] sm:$0xff] %vm456, 0.0
        %508 = vst.msk [vmem:[#allocation2 + $0x190] sm:$0x3] %vm459, 0.0
        %509 = vst.msk [vmem:[#allocation2 + $0x198] sm:$0xff] %vm456, 0.0
        %510 = vst.msk [vmem:[#allocation2 + $0x1a0] sm:$0xff] %vm456, 0.0
        %511 = vst.msk [vmem:[#allocation2 + $0x1a8] sm:$0x3] %vm459, 0.0
        %513 = vset.pattern.permute.xlu0 0
        %514 = vperm.xlu0 %513, %v424
        %v515 = vpop.permute.xlu0 %514
        %518 = vset.pattern.permute.xlu0 0
        %519 = vperm.xlu0 %518, %v425
        %v520 = vpop.permute.xlu0 %519
        %523 = vset.pattern.permute.xlu0 0
        %524 = vperm.xlu0 %523, %v426
        %v525 = vpop.permute.xlu0 %524
        %528 = vset.pattern.permute.xlu0 0
        %529 = vperm.xlu0 %528, %v427
        %v530 = vpop.permute.xlu0 %529
        %533 = vset.pattern.permute.xlu0 0
        %534 = vperm.xlu0 %533, %v428
        %v535 = vpop.permute.xlu0 %534
        %538 = vset.pattern.permute.xlu0 0
        %539 = vperm.xlu0 %538, %v429
        %v540 = vpop.permute.xlu0 %539
        %543 = vset.pattern.permute.xlu0 0
        %544 = vperm.xlu0 %543, %v430
        %v545 = vpop.permute.xlu0 %544
        %548 = vset.pattern.permute.xlu0 0
        %549 = vperm.xlu0 %548, %v431
        %v550 = vpop.permute.xlu0 %549
        %553 = vset.pattern.permute.xlu0 0
        %554 = vperm.xlu0 %553, %v432
        %v555 = vpop.permute.xlu0 %554
        %558 = vset.pattern.permute.xlu0 0
        %559 = vperm.xlu0 %558, %v433
        %v560 = vpop.permute.xlu0 %559
        %563 = vset.pattern.permute.xlu0 0
        %564 = vperm.xlu0 %563, %v434
        %v565 = vpop.permute.xlu0 %564
        %568 = vset.pattern.permute.xlu0 0
        %569 = vperm.xlu0 %568, %v435
        %v570 = vpop.permute.xlu0 %569
        %573 = vset.pattern.permute.xlu0 0
        %574 = vperm.xlu0 %573, %v436
        %v575 = vpop.permute.xlu0 %574
        %578 = vset.pattern.permute.xlu0 0
        %579 = vperm.xlu0 %578, %v437
        %v580 = vpop.permute.xlu0 %579
        %583 = vset.pattern.permute.xlu0 0
        %584 = vperm.xlu0 %583, %v438
        %v585 = vpop.permute.xlu0 %584
        %588 = vset.pattern.permute.xlu0 0
        %589 = vperm.xlu0 %588, %v439
        %v590 = vpop.permute.xlu0 %589
        %593 = vset.pattern.permute.xlu0 0
        %594 = vperm.xlu0 %593, %v440
        %v595 = vpop.permute.xlu0 %594
        %598 = vset.pattern.permute.xlu0 0
        %599 = vperm.xlu0 %598, %v441
        %v600 = vpop.permute.xlu0 %599
        %603 = vset.pattern.permute.xlu0 0
        %604 = vperm.xlu0 %603, %v442
        %v605 = vpop.permute.xlu0 %604
        %608 = vset.pattern.permute.xlu0 0
        %609 = vperm.xlu0 %608, %v443
        %v610 = vpop.permute.xlu0 %609
        %613 = vset.pattern.permute.xlu0 0
        %614 = vperm.xlu0 %613, %v444
        %v615 = vpop.permute.xlu0 %614
        %618 = vset.pattern.permute.xlu0 0
        %619 = vperm.xlu0 %618, %v445
        %v620 = vpop.permute.xlu0 %619
        %623 = vset.pattern.permute.xlu0 0
        %624 = vperm.xlu0 %623, %v446
        %v625 = vpop.permute.xlu0 %624
        %628 = vset.pattern.permute.xlu0 0
        %629 = vperm.xlu0 %628, %v447
        %v630 = vpop.permute.xlu0 %629
        %633 = vset.pattern.permute.xlu0 0
        %634 = vperm.xlu0 %633, %v448
        %v635 = vpop.permute.xlu0 %634
        %638 = vset.pattern.permute.xlu0 0
        %639 = vperm.xlu0 %638, %v449
        %v640 = vpop.permute.xlu0 %639
        %643 = vset.pattern.permute.xlu0 0
        %644 = vperm.xlu0 %643, %v450
        %v645 = vpop.permute.xlu0 %644
        %648 = vset.pattern.permute.xlu0 0
        %649 = vperm.xlu0 %648, %v451
        %v650 = vpop.permute.xlu0 %649
        %653 = vset.pattern.permute.xlu0 0
        %654 = vperm.xlu0 %653, %v452
        %v655 = vpop.permute.xlu0 %654
        %658 = vset.pattern.permute.xlu0 0
        %659 = vperm.xlu0 %658, %v453
        %v660 = vpop.permute.xlu0 %659
        %663 = vset.pattern.permute.xlu0 0
        %664 = vperm.xlu0 %663, %v454
        %v665 = vpop.permute.xlu0 %664
        %668 = vset.pattern.permute.xlu0 0
        %669 = vperm.xlu0 %668, %v455
        %v670 = vpop.permute.xlu0 %669
        %v672 = vmul.f32 %v392, %v515
        %v673 = vmul.f32 %v393, %v520
        %v674 = vmul.f32 %v394, %v525
        %v675 = vmul.f32 %v395, %v530
        %v676 = vmul.f32 %v396, %v535
        %v677 = vmul.f32 %v397, %v540
        %v678 = vmul.f32 %v398, %v545
        %v679 = vmul.f32 %v399, %v550
        %v680 = vmul.f32 %v400, %v555
        %v681 = vmul.f32 %v401, %v560
        %v682 = vmul.f32 %v402, %v565
        %v683 = vmul.f32 %v403, %v570
        %v684 = vmul.f32 %v404, %v575
        %v685 = vmul.f32 %v405, %v580
        %v686 = vmul.f32 %v406, %v585
        %v687 = vmul.f32 %v407, %v590
        %v688 = vmul.f32 %v408, %v595
        %v689 = vmul.f32 %v409, %v600
        %v690 = vmul.f32 %v410, %v605
        %v691 = vmul.f32 %v411, %v610
        %v692 = vmul.f32 %v412, %v615
        %v693 = vmul.f32 %v413, %v620
        %v694 = vmul.f32 %v414, %v625
        %v695 = vmul.f32 %v415, %v630
        %v696 = vmul.f32 %v416, %v635
        %v697 = vmul.f32 %v417, %v640
        %v698 = vmul.f32 %v418, %v645
        %v699 = vmul.f32 %v419, %v650
        %v700 = vmul.f32 %v420, %v655
        %v701 = vmul.f32 %v421, %v660
        %v702 = vmul.f32 %v422, %v665
        %v703 = vmul.f32 %v423, %v670
        %704 = vrot.lane.b32.xlu0 %v424, 4
        %v705 = vpop.permute.xlu0 %704
        %706 = vrot.lane.b32.xlu0 %v425, 4
        %v707 = vpop.permute.xlu0 %706
        %708 = vrot.lane.b32.xlu0 %v426, 4
        %v709 = vpop.permute.xlu0 %708
        %710 = vrot.lane.b32.xlu0 %v427, 4
        %v711 = vpop.permute.xlu0 %710
        %712 = vrot.lane.b32.xlu0 %v428, 4
        %v713 = vpop.permute.xlu0 %712
        %714 = vrot.lane.b32.xlu0 %v429, 4
        %v715 = vpop.permute.xlu0 %714
        %716 = vrot.lane.b32.xlu0 %v430, 4
        %v717 = vpop.permute.xlu0 %716
        %718 = vrot.lane.b32.xlu0 %v431, 4
        %v719 = vpop.permute.xlu0 %718
        %720 = vrot.lane.b32.xlu0 %v432, 4
        %v721 = vpop.permute.xlu0 %720
        %722 = vrot.lane.b32.xlu0 %v433, 4
        %v723 = vpop.permute.xlu0 %722
        %724 = vrot.lane.b32.xlu0 %v434, 4
        %v725 = vpop.permute.xlu0 %724
        %726 = vrot.lane.b32.xlu0 %v435, 4
        %v727 = vpop.permute.xlu0 %726
        %728 = vrot.lane.b32.xlu0 %v436, 4
        %v729 = vpop.permute.xlu0 %728
        %730 = vrot.lane.b32.xlu0 %v437, 4
        %v731 = vpop.permute.xlu0 %730
        %732 = vrot.lane.b32.xlu0 %v438, 4
        %v733 = vpop.permute.xlu0 %732
        %734 = vrot.lane.b32.xlu0 %v439, 4
        %v735 = vpop.permute.xlu0 %734
        %736 = vrot.lane.b32.xlu0 %v440, 4
        %v737 = vpop.permute.xlu0 %736
        %738 = vrot.lane.b32.xlu0 %v441, 4
        %v739 = vpop.permute.xlu0 %738
        %740 = vrot.lane.b32.xlu0 %v442, 4
        %v741 = vpop.permute.xlu0 %740
        %742 = vrot.lane.b32.xlu0 %v443, 4
        %v743 = vpop.permute.xlu0 %742
        %744 = vrot.lane.b32.xlu0 %v444, 4
        %v745 = vpop.permute.xlu0 %744
        %746 = vrot.lane.b32.xlu0 %v445, 4
        %v747 = vpop.permute.xlu0 %746
        %748 = vrot.lane.b32.xlu0 %v446, 4
        %v749 = vpop.permute.xlu0 %748
        %750 = vrot.lane.b32.xlu0 %v447, 4
        %v751 = vpop.permute.xlu0 %750
        %752 = vrot.lane.b32.xlu0 %v448, 4
        %v753 = vpop.permute.xlu0 %752
        %754 = vrot.lane.b32.xlu0 %v449, 4
        %v755 = vpop.permute.xlu0 %754
        %756 = vrot.lane.b32.xlu0 %v450, 4
        %v757 = vpop.permute.xlu0 %756
        %758 = vrot.lane.b32.xlu0 %v451, 4
        %v759 = vpop.permute.xlu0 %758
        %760 = vrot.lane.b32.xlu0 %v452, 4
        %v761 = vpop.permute.xlu0 %760
        %762 = vrot.lane.b32.xlu0 %v453, 4
        %v763 = vpop.permute.xlu0 %762
        %764 = vrot.lane.b32.xlu0 %v454, 4
        %v765 = vpop.permute.xlu0 %764
        %766 = vrot.lane.b32.xlu0 %v455, 4
        %v767 = vpop.permute.xlu0 %766
        %vm800 = vcmask 31744
        %v801 = vsel %vm800, %v672, %v705
        %v802 = vsel %vm800, %v673, %v707
        %v803 = vsel %vm800, %v674, %v709
        %v804 = vsel %vm800, %v675, %v711
        %v805 = vsel %vm800, %v676, %v713
        %v806 = vsel %vm800, %v677, %v715
        %v807 = vsel %vm800, %v678, %v717
        %v808 = vsel %vm800, %v679, %v719
        %v809 = vsel %vm800, %v680, %v721
        %v810 = vsel %vm800, %v681, %v723
        %v811 = vsel %vm800, %v682, %v725
        %v812 = vsel %vm800, %v683, %v727
        %v813 = vsel %vm800, %v684, %v729
        %v814 = vsel %vm800, %v685, %v731
        %v815 = vsel %vm800, %v686, %v733
        %v816 = vsel %vm800, %v687, %v735
        %v817 = vsel %vm800, %v688, %v737
        %v818 = vsel %vm800, %v689, %v739
        %v819 = vsel %vm800, %v690, %v741
        %v820 = vsel %vm800, %v691, %v743
        %v821 = vsel %vm800, %v692, %v745
        %v822 = vsel %vm800, %v693, %v747
        %v823 = vsel %vm800, %v694, %v749
        %v824 = vsel %vm800, %v695, %v751
        %v825 = vsel %vm800, %v696, %v753
        %v826 = vsel %vm800, %v697, %v755
        %v827 = vsel %vm800, %v698, %v757
        %v828 = vsel %vm800, %v699, %v759
        %v829 = vsel %vm800, %v700, %v761
        %v830 = vsel %vm800, %v701, %v763
        %v831 = vsel %vm800, %v702, %v765
        %v832 = vsel %vm800, %v703, %v767
        %s833 = scalar_lea.vmem [#allocation2], 24
        %834 = vst.msk [vmem:[%s833 + $0x1] sm:$0xff] %vm456, %v801
        %835 = vst.msk [vmem:[%s833 + $0x9] sm:$0xff] %vm456, %v802
        %836 = vst.msk [vmem:[%s833 + $0x19] sm:$0xff] %vm456, %v803
        %837 = vst.msk [vmem:[%s833 + $0x21] sm:$0xff] %vm456, %v804
        %838 = vst.msk [vmem:[%s833 + $0x31] sm:$0xff] %vm456, %v805
        %839 = vst.msk [vmem:[%s833 + $0x39] sm:$0xff] %vm456, %v806
        %840 = vst.msk [vmem:[%s833 + $0x49] sm:$0xff] %vm456, %v807
        %841 = vst.msk [vmem:[%s833 + $0x51] sm:$0xff] %vm456, %v808
        %842 = vst.msk [vmem:[%s833 + $0x61] sm:$0xff] %vm456, %v809
        %843 = vst.msk [vmem:[%s833 + $0x69] sm:$0xff] %vm456, %v810
        %844 = vst.msk [vmem:[%s833 + $0x79] sm:$0xff] %vm456, %v811
        %845 = vst.msk [vmem:[%s833 + $0x81] sm:$0xff] %vm456, %v812
        %846 = vst.msk [vmem:[%s833 + $0x91] sm:$0xff] %vm456, %v813
        %847 = vst.msk [vmem:[%s833 + $0x99] sm:$0xff] %vm456, %v814
        %848 = vst.msk [vmem:[%s833 + $0xa9] sm:$0xff] %vm456, %v815
        %849 = vst.msk [vmem:[%s833 + $0xb1] sm:$0xff] %vm456, %v816
        %850 = vst.msk [vmem:[%s833 + $0xc1] sm:$0xff] %vm456, %v817
        %851 = vst.msk [vmem:[%s833 + $0xc9] sm:$0xff] %vm456, %v818
        %852 = vst.msk [vmem:[%s833 + $0xd9] sm:$0xff] %vm456, %v819
        %853 = vst.msk [vmem:[%s833 + $0xe1] sm:$0xff] %vm456, %v820
        %854 = vst.msk [vmem:[%s833 + $0xf1] sm:$0xff] %vm456, %v821
        %855 = vst.msk [vmem:[%s833 + $0xf9] sm:$0xff] %vm456, %v822
        %856 = vst.msk [vmem:[%s833 + $0x109] sm:$0xff] %vm456, %v823
        %857 = vst.msk [vmem:[%s833 + $0x111] sm:$0xff] %vm456, %v824
        %858 = vst.msk [vmem:[%s833 + $0x121] sm:$0xff] %vm456, %v825
        %859 = vst.msk [vmem:[%s833 + $0x129] sm:$0xff] %vm456, %v826
        %860 = vst.msk [vmem:[%s833 + $0x139] sm:$0xff] %vm456, %v827
        %861 = vst.msk [vmem:[%s833 + $0x141] sm:$0xff] %vm456, %v828
        %862 = vst.msk [vmem:[%s833 + $0x151] sm:$0xff] %vm456, %v829
        %863 = vst.msk [vmem:[%s833 + $0x159] sm:$0xff] %vm456, %v830
        %864 = vst.msk [vmem:[%s833 + $0x169] sm:$0xff] %vm456, %v831
        %865 = vst.msk [vmem:[%s833 + $0x171] sm:$0xff] %vm456, %v832
        %v866 = vld [vmem:[#allocation2] sm:$0xff]
        %v867 = vld [vmem:[#allocation2 + $0x8] sm:$0xff]
        %v868 = vld [vmem:[#allocation2 + $0x18] sm:$0xff]
        %v869 = vld [vmem:[#allocation2 + $0x20] sm:$0xff]
        %v870 = vld [vmem:[#allocation2 + $0x30] sm:$0xff]
        %v871 = vld [vmem:[#allocation2 + $0x38] sm:$0xff]
        %v872 = vld [vmem:[#allocation2 + $0x48] sm:$0xff]
        %v873 = vld [vmem:[#allocation2 + $0x50] sm:$0xff]
        %v874 = vld [vmem:[#allocation2 + $0x60] sm:$0xff]
        %v875 = vld [vmem:[#allocation2 + $0x68] sm:$0xff]
        %v876 = vld [vmem:[#allocation2 + $0x78] sm:$0xff]
        %v877 = vld [vmem:[#allocation2 + $0x80] sm:$0xff]
        %v878 = vld [vmem:[#allocation2 + $0x90] sm:$0xff]
        %v879 = vld [vmem:[#allocation2 + $0x98] sm:$0xff]
        %v880 = vld [vmem:[#allocation2 + $0xa8] sm:$0xff]
        %v881 = vld [vmem:[#allocation2 + $0xb0] sm:$0xff]
        %v882 = vld [vmem:[#allocation2 + $0xc0] sm:$0xff]
        %v883 = vld [vmem:[#allocation2 + $0xc8] sm:$0xff]
        %v884 = vld [vmem:[#allocation2 + $0xd8] sm:$0xff]
        %v885 = vld [vmem:[#allocation2 + $0xe0] sm:$0xff]
        %v886 = vld [vmem:[#allocation2 + $0xf0] sm:$0xff]
        %v887 = vld [vmem:[#allocation2 + $0xf8] sm:$0xff]
        %v888 = vld [vmem:[#allocation2 + $0x108] sm:$0xff]
        %v889 = vld [vmem:[#allocation2 + $0x110] sm:$0xff]
        %v890 = vld [vmem:[#allocation2 + $0x120] sm:$0xff]
        %v891 = vld [vmem:[#allocation2 + $0x128] sm:$0xff]
        %v892 = vld [vmem:[#allocation2 + $0x138] sm:$0xff]
        %v893 = vld [vmem:[#allocation2 + $0x140] sm:$0xff]
        %v894 = vld [vmem:[#allocation2 + $0x150] sm:$0xff]
        %v895 = vld [vmem:[#allocation2 + $0x158] sm:$0xff]
        %v896 = vld [vmem:[#allocation2 + $0x168] sm:$0xff]
        %v897 = vld [vmem:[#allocation2 + $0x170] sm:$0xff]
        %v898 = vld [vmem:[#allocation2 + $0x1] sm:$0xff]
        %v899 = vld [vmem:[#allocation2 + $0x9] sm:$0xff]
        %v900 = vld [vmem:[#allocation2 + $0x19] sm:$0xff]
        %v901 = vld [vmem:[#allocation2 + $0x21] sm:$0xff]
        %v902 = vld [vmem:[#allocation2 + $0x31] sm:$0xff]
        %v903 = vld [vmem:[#allocation2 + $0x39] sm:$0xff]
        %v904 = vld [vmem:[#allocation2 + $0x49] sm:$0xff]
        %v905 = vld [vmem:[#allocation2 + $0x51] sm:$0xff]
        %v906 = vld [vmem:[#allocation2 + $0x61] sm:$0xff]
        %v907 = vld [vmem:[#allocation2 + $0x69] sm:$0xff]
        %v908 = vld [vmem:[#allocation2 + $0x79] sm:$0xff]
        %v909 = vld [vmem:[#allocation2 + $0x81] sm:$0xff]
        %v910 = vld [vmem:[#allocation2 + $0x91] sm:$0xff]
        %v911 = vld [vmem:[#allocation2 + $0x99] sm:$0xff]
        %v912 = vld [vmem:[#allocation2 + $0xa9] sm:$0xff]
        %v913 = vld [vmem:[#allocation2 + $0xb1] sm:$0xff]
        %v914 = vld [vmem:[#allocation2 + $0xc1] sm:$0xff]
        %v915 = vld [vmem:[#allocation2 + $0xc9] sm:$0xff]
        %v916 = vld [vmem:[#allocation2 + $0xd9] sm:$0xff]
        %v917 = vld [vmem:[#allocation2 + $0xe1] sm:$0xff]
        %v918 = vld [vmem:[#allocation2 + $0xf1] sm:$0xff]
        %v919 = vld [vmem:[#allocation2 + $0xf9] sm:$0xff]
        %v920 = vld [vmem:[#allocation2 + $0x109] sm:$0xff]
        %v921 = vld [vmem:[#allocation2 + $0x111] sm:$0xff]
        %v922 = vld [vmem:[#allocation2 + $0x121] sm:$0xff]
        %v923 = vld [vmem:[#allocation2 + $0x129] sm:$0xff]
        %v924 = vld [vmem:[#allocation2 + $0x139] sm:$0xff]
        %v925 = vld [vmem:[#allocation2 + $0x141] sm:$0xff]
        %v926 = vld [vmem:[#allocation2 + $0x151] sm:$0xff]
        %v927 = vld [vmem:[#allocation2 + $0x159] sm:$0xff]
        %v928 = vld [vmem:[#allocation2 + $0x169] sm:$0xff]
        %v929 = vld [vmem:[#allocation2 + $0x171] sm:$0xff]
        %v930 = vld [vmem:[#allocation2 + $0x2] sm:$0xff]
        %v931 = vld [vmem:[#allocation2 + $0xa] sm:$0xff]
        %v932 = vld [vmem:[#allocation2 + $0x1a] sm:$0xff]
        %v933 = vld [vmem:[#allocation2 + $0x22] sm:$0xff]
        %v934 = vld [vmem:[#allocation2 + $0x32] sm:$0xff]
        %v935 = vld [vmem:[#allocation2 + $0x3a] sm:$0xff]
        %v936 = vld [vmem:[#allocation2 + $0x4a] sm:$0xff]
        %v937 = vld [vmem:[#allocation2 + $0x52] sm:$0xff]
        %v938 = vld [vmem:[#allocation2 + $0x62] sm:$0xff]
        %v939 = vld [vmem:[#allocation2 + $0x6a] sm:$0xff]
        %v940 = vld [vmem:[#allocation2 + $0x7a] sm:$0xff]
        %v941 = vld [vmem:[#allocation2 + $0x82] sm:$0xff]
        %v942 = vld [vmem:[#allocation2 + $0x92] sm:$0xff]
        %v943 = vld [vmem:[#allocation2 + $0x9a] sm:$0xff]
        %v944 = vld [vmem:[#allocation2 + $0xaa] sm:$0xff]
        %v945 = vld [vmem:[#allocation2 + $0xb2] sm:$0xff]
        %v946 = vld [vmem:[#allocation2 + $0xc2] sm:$0xff]
        %v947 = vld [vmem:[#allocation2 + $0xca] sm:$0xff]
        %v948 = vld [vmem:[#allocation2 + $0xda] sm:$0xff]
        %v949 = vld [vmem:[#allocation2 + $0xe2] sm:$0xff]
        %v950 = vld [vmem:[#allocation2 + $0xf2] sm:$0xff]
        %v951 = vld [vmem:[#allocation2 + $0xfa] sm:$0xff]
        %v952 = vld [vmem:[#allocation2 + $0x10a] sm:$0xff]
        %v953 = vld [vmem:[#allocation2 + $0x112] sm:$0xff]
        %v954 = vld [vmem:[#allocation2 + $0x122] sm:$0xff]
        %v955 = vld [vmem:[#allocation2 + $0x12a] sm:$0xff]
        %v956 = vld [vmem:[#allocation2 + $0x13a] sm:$0xff]
        %v957 = vld [vmem:[#allocation2 + $0x142] sm:$0xff]
        %v958 = vld [vmem:[#allocation2 + $0x152] sm:$0xff]
        %v959 = vld [vmem:[#allocation2 + $0x15a] sm:$0xff]
        %v960 = vld [vmem:[#allocation2 + $0x16a] sm:$0xff]
        %v961 = vld [vmem:[#allocation2 + $0x172] sm:$0xff]
        %v962 = vld [vmem:[%s833] sm:$0xff]
        %v963 = vld [vmem:[%s833 + $0x8] sm:$0xff]
        %v964 = vld [vmem:[%s833 + $0x18] sm:$0xff]
        %v965 = vld [vmem:[%s833 + $0x20] sm:$0xff]
        %v966 = vld [vmem:[%s833 + $0x30] sm:$0xff]
        %v967 = vld [vmem:[%s833 + $0x38] sm:$0xff]
        %v968 = vld [vmem:[%s833 + $0x48] sm:$0xff]
        %v969 = vld [vmem:[%s833 + $0x50] sm:$0xff]
        %v970 = vld [vmem:[%s833 + $0x60] sm:$0xff]
        %v971 = vld [vmem:[%s833 + $0x68] sm:$0xff]
        %v972 = vld [vmem:[%s833 + $0x78] sm:$0xff]
        %v973 = vld [vmem:[%s833 + $0x80] sm:$0xff]
        %v974 = vld [vmem:[%s833 + $0x90] sm:$0xff]
        %v975 = vld [vmem:[%s833 + $0x98] sm:$0xff]
        %v976 = vld [vmem:[%s833 + $0xa8] sm:$0xff]
        %v977 = vld [vmem:[%s833 + $0xb0] sm:$0xff]
        %v978 = vld [vmem:[%s833 + $0xc0] sm:$0xff]
        %v979 = vld [vmem:[%s833 + $0xc8] sm:$0xff]
        %v980 = vld [vmem:[%s833 + $0xd8] sm:$0xff]
        %v981 = vld [vmem:[%s833 + $0xe0] sm:$0xff]
        %v982 = vld [vmem:[%s833 + $0xf0] sm:$0xff]
        %v983 = vld [vmem:[%s833 + $0xf8] sm:$0xff]
        %v984 = vld [vmem:[%s833 + $0x108] sm:$0xff]
        %v985 = vld [vmem:[%s833 + $0x110] sm:$0xff]
        %v986 = vld [vmem:[%s833 + $0x120] sm:$0xff]
        %v987 = vld [vmem:[%s833 + $0x128] sm:$0xff]
        %v988 = vld [vmem:[%s833 + $0x138] sm:$0xff]
        %v989 = vld [vmem:[%s833 + $0x140] sm:$0xff]
        %v990 = vld [vmem:[%s833 + $0x150] sm:$0xff]
        %v991 = vld [vmem:[%s833 + $0x158] sm:$0xff]
        %v992 = vld [vmem:[%s833 + $0x168] sm:$0xff]
        %v993 = vld [vmem:[%s833 + $0x170] sm:$0xff]
        %v994 = vld [vmem:[%s833 + $0x1] sm:$0xff]
        %v995 = vld [vmem:[%s833 + $0x9] sm:$0xff]
        %v996 = vld [vmem:[%s833 + $0x19] sm:$0xff]
        %v997 = vld [vmem:[%s833 + $0x21] sm:$0xff]
        %v998 = vld [vmem:[%s833 + $0x31] sm:$0xff]
        %v999 = vld [vmem:[%s833 + $0x39] sm:$0xff]
        %v1000 = vld [vmem:[%s833 + $0x49] sm:$0xff]
        %v1001 = vld [vmem:[%s833 + $0x51] sm:$0xff]
        %v1002 = vld [vmem:[%s833 + $0x61] sm:$0xff]
        %v1003 = vld [vmem:[%s833 + $0x69] sm:$0xff]
        %v1004 = vld [vmem:[%s833 + $0x79] sm:$0xff]
        %v1005 = vld [vmem:[%s833 + $0x81] sm:$0xff]
        %v1006 = vld [vmem:[%s833 + $0x91] sm:$0xff]
        %v1007 = vld [vmem:[%s833 + $0x99] sm:$0xff]
        %v1008 = vld [vmem:[%s833 + $0xa9] sm:$0xff]
        %v1009 = vld [vmem:[%s833 + $0xb1] sm:$0xff]
        %v1010 = vld [vmem:[%s833 + $0xc1] sm:$0xff]
        %v1011 = vld [vmem:[%s833 + $0xc9] sm:$0xff]
        %v1012 = vld [vmem:[%s833 + $0xd9] sm:$0xff]
        %v1013 = vld [vmem:[%s833 + $0xe1] sm:$0xff]
        %v1014 = vld [vmem:[%s833 + $0xf1] sm:$0xff]
        %v1015 = vld [vmem:[%s833 + $0xf9] sm:$0xff]
        %v1016 = vld [vmem:[%s833 + $0x109] sm:$0xff]
        %v1017 = vld [vmem:[%s833 + $0x111] sm:$0xff]
        %v1018 = vld [vmem:[%s833 + $0x121] sm:$0xff]
        %v1019 = vld [vmem:[%s833 + $0x129] sm:$0xff]
        %v1020 = vld [vmem:[%s833 + $0x139] sm:$0xff]
        %v1021 = vld [vmem:[%s833 + $0x141] sm:$0xff]
        %v1022 = vld [vmem:[%s833 + $0x151] sm:$0xff]
        %v1023 = vld [vmem:[%s833 + $0x159] sm:$0xff]
        %v1024 = vld [vmem:[%s833 + $0x169] sm:$0xff]
        %v1025 = vld [vmem:[%s833 + $0x171] sm:$0xff]
        %v1026 = vld [vmem:[%s833 + $0x2] sm:$0xff]
        %v1027 = vld [vmem:[%s833 + $0xa] sm:$0xff]
        %v1028 = vld [vmem:[%s833 + $0x1a] sm:$0xff]
        %v1029 = vld [vmem:[%s833 + $0x22] sm:$0xff]
        %v1030 = vld [vmem:[%s833 + $0x32] sm:$0xff]
        %v1031 = vld [vmem:[%s833 + $0x3a] sm:$0xff]
        %v1032 = vld [vmem:[%s833 + $0x4a] sm:$0xff]
        %v1033 = vld [vmem:[%s833 + $0x52] sm:$0xff]
        %v1034 = vld [vmem:[%s833 + $0x62] sm:$0xff]
        %v1035 = vld [vmem:[%s833 + $0x6a] sm:$0xff]
        %v1036 = vld [vmem:[%s833 + $0x7a] sm:$0xff]
        %v1037 = vld [vmem:[%s833 + $0x82] sm:$0xff]
        %v1038 = vld [vmem:[%s833 + $0x92] sm:$0xff]
        %v1039 = vld [vmem:[%s833 + $0x9a] sm:$0xff]
        %v1040 = vld [vmem:[%s833 + $0xaa] sm:$0xff]
        %v1041 = vld [vmem:[%s833 + $0xb2] sm:$0xff]
        %v1042 = vld [vmem:[%s833 + $0xc2] sm:$0xff]
        %v1043 = vld [vmem:[%s833 + $0xca] sm:$0xff]
        %v1044 = vld [vmem:[%s833 + $0xda] sm:$0xff]
        %v1045 = vld [vmem:[%s833 + $0xe2] sm:$0xff]
        %v1046 = vld [vmem:[%s833 + $0xf2] sm:$0xff]
        %v1047 = vld [vmem:[%s833 + $0xfa] sm:$0xff]
        %v1048 = vld [vmem:[%s833 + $0x10a] sm:$0xff]
        %v1049 = vld [vmem:[%s833 + $0x112] sm:$0xff]
        %v1050 = vld [vmem:[%s833 + $0x122] sm:$0xff]
        %v1051 = vld [vmem:[%s833 + $0x12a] sm:$0xff]
        %v1052 = vld [vmem:[%s833 + $0x13a] sm:$0xff]
        %v1053 = vld [vmem:[%s833 + $0x142] sm:$0xff]
        %v1054 = vld [vmem:[%s833 + $0x152] sm:$0xff]
        %v1055 = vld [vmem:[%s833 + $0x15a] sm:$0xff]
        %v1056 = vld [vmem:[%s833 + $0x16a] sm:$0xff]
        %v1057 = vld [vmem:[%s833 + $0x172] sm:$0xff]
        %s1058 = scalar_lea.vmem [#allocation2], 48
        %v1059 = vld [vmem:[%s1058] sm:$0xff]
        %v1060 = vld [vmem:[%s1058 + $0x8] sm:$0xff]
        %v1061 = vld [vmem:[%s1058 + $0x18] sm:$0xff]
        %v1062 = vld [vmem:[%s1058 + $0x20] sm:$0xff]
        %v1063 = vld [vmem:[%s1058 + $0x30] sm:$0xff]
        %v1064 = vld [vmem:[%s1058 + $0x38] sm:$0xff]
        %v1065 = vld [vmem:[%s1058 + $0x48] sm:$0xff]
        %v1066 = vld [vmem:[%s1058 + $0x50] sm:$0xff]
        %v1067 = vld [vmem:[%s1058 + $0x60] sm:$0xff]
        %v1068 = vld [vmem:[%s1058 + $0x68] sm:$0xff]
        %v1069 = vld [vmem:[%s1058 + $0x78] sm:$0xff]
        %v1070 = vld [vmem:[%s1058 + $0x80] sm:$0xff]
        %v1071 = vld [vmem:[%s1058 + $0x90] sm:$0xff]
        %v1072 = vld [vmem:[%s1058 + $0x98] sm:$0xff]
        %v1073 = vld [vmem:[%s1058 + $0xa8] sm:$0xff]
        %v1074 = vld [vmem:[%s1058 + $0xb0] sm:$0xff]
        %v1075 = vld [vmem:[%s1058 + $0xc0] sm:$0xff]
        %v1076 = vld [vmem:[%s1058 + $0xc8] sm:$0xff]
        %v1077 = vld [vmem:[%s1058 + $0xd8] sm:$0xff]
        %v1078 = vld [vmem:[%s1058 + $0xe0] sm:$0xff]
        %v1079 = vld [vmem:[%s1058 + $0xf0] sm:$0xff]
        %v1080 = vld [vmem:[%s1058 + $0xf8] sm:$0xff]
        %v1081 = vld [vmem:[%s1058 + $0x108] sm:$0xff]
        %v1082 = vld [vmem:[%s1058 + $0x110] sm:$0xff]
        %v1083 = vld [vmem:[%s1058 + $0x120] sm:$0xff]
        %v1084 = vld [vmem:[%s1058 + $0x128] sm:$0xff]
        %v1085 = vld [vmem:[%s1058 + $0x138] sm:$0xff]
        %v1086 = vld [vmem:[%s1058 + $0x140] sm:$0xff]
        %v1087 = vld [vmem:[%s1058 + $0x150] sm:$0xff]
        %v1088 = vld [vmem:[%s1058 + $0x158] sm:$0xff]
        %v1089 = vld [vmem:[%s1058 + $0x168] sm:$0xff]
        %v1090 = vld [vmem:[%s1058 + $0x170] sm:$0xff]
        %v1091 = vld [vmem:[%s1058 + $0x1] sm:$0xff]
        %v1092 = vld [vmem:[%s1058 + $0x9] sm:$0xff]
        %v1093 = vld [vmem:[%s1058 + $0x19] sm:$0xff]
        %v1094 = vld [vmem:[%s1058 + $0x21] sm:$0xff]
        %v1095 = vld [vmem:[%s1058 + $0x31] sm:$0xff]
        %v1096 = vld [vmem:[%s1058 + $0x39] sm:$0xff]
        %v1097 = vld [vmem:[%s1058 + $0x49] sm:$0xff]
        %v1098 = vld [vmem:[%s1058 + $0x51] sm:$0xff]
        %v1099 = vld [vmem:[%s1058 + $0x61] sm:$0xff]
        %v1100 = vld [vmem:[%s1058 + $0x69] sm:$0xff]
        %v1101 = vld [vmem:[%s1058 + $0x79] sm:$0xff]
        %v1102 = vld [vmem:[%s1058 + $0x81] sm:$0xff]
        %v1103 = vld [vmem:[%s1058 + $0x91] sm:$0xff]
        %v1104 = vld [vmem:[%s1058 + $0x99] sm:$0xff]
        %v1105 = vld [vmem:[%s1058 + $0xa9] sm:$0xff]
        %v1106 = vld [vmem:[%s1058 + $0xb1] sm:$0xff]
        %v1107 = vld [vmem:[%s1058 + $0xc1] sm:$0xff]
        %v1108 = vld [vmem:[%s1058 + $0xc9] sm:$0xff]
        %v1109 = vld [vmem:[%s1058 + $0xd9] sm:$0xff]
        %v1110 = vld [vmem:[%s1058 + $0xe1] sm:$0xff]
        %v1111 = vld [vmem:[%s1058 + $0xf1] sm:$0xff]
        %v1112 = vld [vmem:[%s1058 + $0xf9] sm:$0xff]
        %v1113 = vld [vmem:[%s1058 + $0x109] sm:$0xff]
        %v1114 = vld [vmem:[%s1058 + $0x111] sm:$0xff]
        %v1115 = vld [vmem:[%s1058 + $0x121] sm:$0xff]
        %v1116 = vld [vmem:[%s1058 + $0x129] sm:$0xff]
        %v1117 = vld [vmem:[%s1058 + $0x139] sm:$0xff]
        %v1118 = vld [vmem:[%s1058 + $0x141] sm:$0xff]
        %v1119 = vld [vmem:[%s1058 + $0x151] sm:$0xff]
        %v1120 = vld [vmem:[%s1058 + $0x159] sm:$0xff]
        %v1121 = vld [vmem:[%s1058 + $0x169] sm:$0xff]
        %v1122 = vld [vmem:[%s1058 + $0x171] sm:$0xff]
        %v1123 = vld [vmem:[%s1058 + $0x2] sm:$0xff]
        %v1124 = vld [vmem:[%s1058 + $0xa] sm:$0xff]
        %v1125 = vld [vmem:[%s1058 + $0x1a] sm:$0xff]
        %v1126 = vld [vmem:[%s1058 + $0x22] sm:$0xff]
        %v1127 = vld [vmem:[%s1058 + $0x32] sm:$0xff]
        %v1128 = vld [vmem:[%s1058 + $0x3a] sm:$0xff]
        %v1129 = vld [vmem:[%s1058 + $0x4a] sm:$0xff]
        %v1130 = vld [vmem:[%s1058 + $0x52] sm:$0xff]
        %v1131 = vld [vmem:[%s1058 + $0x62] sm:$0xff]
        %v1132 = vld [vmem:[%s1058 + $0x6a] sm:$0xff]
        %v1133 = vld [vmem:[%s1058 + $0x7a] sm:$0xff]
        %v1134 = vld [vmem:[%s1058 + $0x82] sm:$0xff]
        %v1135 = vld [vmem:[%s1058 + $0x92] sm:$0xff]
        %v1136 = vld [vmem:[%s1058 + $0x9a] sm:$0xff]
        %v1137 = vld [vmem:[%s1058 + $0xaa] sm:$0xff]
        %v1138 = vld [vmem:[%s1058 + $0xb2] sm:$0xff]
        %v1139 = vld [vmem:[%s1058 + $0xc2] sm:$0xff]
        %v1140 = vld [vmem:[%s1058 + $0xca] sm:$0xff]
        %v1141 = vld [vmem:[%s1058 + $0xda] sm:$0xff]
        %v1142 = vld [vmem:[%s1058 + $0xe2] sm:$0xff]
        %v1143 = vld [vmem:[%s1058 + $0xf2] sm:$0xff]
        %v1144 = vld [vmem:[%s1058 + $0xfa] sm:$0xff]
        %v1145 = vld [vmem:[%s1058 + $0x10a] sm:$0xff]
        %v1146 = vld [vmem:[%s1058 + $0x112] sm:$0xff]
        %v1147 = vld [vmem:[%s1058 + $0x122] sm:$0xff]
        %v1148 = vld [vmem:[%s1058 + $0x12a] sm:$0xff]
        %v1149 = vld [vmem:[%s1058 + $0x13a] sm:$0xff]
        %v1150 = vld [vmem:[%s1058 + $0x142] sm:$0xff]
        %v1151 = vld [vmem:[%s1058 + $0x152] sm:$0xff]
        %v1152 = vld [vmem:[%s1058 + $0x15a] sm:$0xff]
        %v1153 = vld [vmem:[%s1058 + $0x16a] sm:$0xff]
        %v1154 = vld [vmem:[%s1058 + $0x172] sm:$0xff]
        %1187 = vrot.lane.b32.xlu0 %v898, 5
        %v1188 = vpop.permute.xlu0 %1187
        %1189 = vrot.lane.b32.xlu0 %v899, 5
        %v1190 = vpop.permute.xlu0 %1189
        %1191 = vrot.lane.b32.xlu0 %v900, 5
        %v1192 = vpop.permute.xlu0 %1191
        %1193 = vrot.lane.b32.xlu0 %v901, 5
        %v1194 = vpop.permute.xlu0 %1193
        %1195 = vrot.lane.b32.xlu0 %v902, 5
        %v1196 = vpop.permute.xlu0 %1195
        %1197 = vrot.lane.b32.xlu0 %v903, 5
        %v1198 = vpop.permute.xlu0 %1197
        %1199 = vrot.lane.b32.xlu0 %v904, 5
        %v1200 = vpop.permute.xlu0 %1199
        %1201 = vrot.lane.b32.xlu0 %v905, 5
        %v1202 = vpop.permute.xlu0 %1201
        %1203 = vrot.lane.b32.xlu0 %v906, 5
        %v1204 = vpop.permute.xlu0 %1203
        %1205 = vrot.lane.b32.xlu0 %v907, 5
        %v1206 = vpop.permute.xlu0 %1205
        %1207 = vrot.lane.b32.xlu0 %v908, 5
        %v1208 = vpop.permute.xlu0 %1207
        %1209 = vrot.lane.b32.xlu0 %v909, 5
        %v1210 = vpop.permute.xlu0 %1209
        %1211 = vrot.lane.b32.xlu0 %v910, 5
        %v1212 = vpop.permute.xlu0 %1211
        %1213 = vrot.lane.b32.xlu0 %v911, 5
        %v1214 = vpop.permute.xlu0 %1213
        %1215 = vrot.lane.b32.xlu0 %v912, 5
        %v1216 = vpop.permute.xlu0 %1215
        %1217 = vrot.lane.b32.xlu0 %v913, 5
        %v1218 = vpop.permute.xlu0 %1217
        %1219 = vrot.lane.b32.xlu0 %v914, 5
        %v1220 = vpop.permute.xlu0 %1219
        %1221 = vrot.lane.b32.xlu0 %v915, 5
        %v1222 = vpop.permute.xlu0 %1221
        %1223 = vrot.lane.b32.xlu0 %v916, 5
        %v1224 = vpop.permute.xlu0 %1223
        %1225 = vrot.lane.b32.xlu0 %v917, 5
        %v1226 = vpop.permute.xlu0 %1225
        %1227 = vrot.lane.b32.xlu0 %v918, 5
        %v1228 = vpop.permute.xlu0 %1227
        %1229 = vrot.lane.b32.xlu0 %v919, 5
        %v1230 = vpop.permute.xlu0 %1229
        %1231 = vrot.lane.b32.xlu0 %v920, 5
        %v1232 = vpop.permute.xlu0 %1231
        %1233 = vrot.lane.b32.xlu0 %v921, 5
        %v1234 = vpop.permute.xlu0 %1233
        %1235 = vrot.lane.b32.xlu0 %v922, 5
        %v1236 = vpop.permute.xlu0 %1235
        %1237 = vrot.lane.b32.xlu0 %v923, 5
        %v1238 = vpop.permute.xlu0 %1237
        %1239 = vrot.lane.b32.xlu0 %v924, 5
        %v1240 = vpop.permute.xlu0 %1239
        %1241 = vrot.lane.b32.xlu0 %v925, 5
        %v1242 = vpop.permute.xlu0 %1241
        %1243 = vrot.lane.b32.xlu0 %v926, 5
        %v1244 = vpop.permute.xlu0 %1243
        %1245 = vrot.lane.b32.xlu0 %v927, 5
        %v1246 = vpop.permute.xlu0 %1245
        %1247 = vrot.lane.b32.xlu0 %v928, 5
        %v1248 = vpop.permute.xlu0 %1247
        %1249 = vrot.lane.b32.xlu0 %v929, 5
        %v1250 = vpop.permute.xlu0 %1249
        %1315 = vrot.lane.b32.xlu0 %v930, 10
        %v1316 = vpop.permute.xlu0 %1315
        %1317 = vrot.lane.b32.xlu0 %v931, 10
        %v1318 = vpop.permute.xlu0 %1317
        %1319 = vrot.lane.b32.xlu0 %v932, 10
        %v1320 = vpop.permute.xlu0 %1319
        %1321 = vrot.lane.b32.xlu0 %v933, 10
        %v1322 = vpop.permute.xlu0 %1321
        %1323 = vrot.lane.b32.xlu0 %v934, 10
        %v1324 = vpop.permute.xlu0 %1323
        %1325 = vrot.lane.b32.xlu0 %v935, 10
        %v1326 = vpop.permute.xlu0 %1325
        %1327 = vrot.lane.b32.xlu0 %v936, 10
        %v1328 = vpop.permute.xlu0 %1327
        %1329 = vrot.lane.b32.xlu0 %v937, 10
        %v1330 = vpop.permute.xlu0 %1329
        %1331 = vrot.lane.b32.xlu0 %v938, 10
        %v1332 = vpop.permute.xlu0 %1331
        %1333 = vrot.lane.b32.xlu0 %v939, 10
        %v1334 = vpop.permute.xlu0 %1333
        %1335 = vrot.lane.b32.xlu0 %v940, 10
        %v1336 = vpop.permute.xlu0 %1335
        %1337 = vrot.lane.b32.xlu0 %v941, 10
        %v1338 = vpop.permute.xlu0 %1337
        %1339 = vrot.lane.b32.xlu0 %v942, 10
        %v1340 = vpop.permute.xlu0 %1339
        %1341 = vrot.lane.b32.xlu0 %v943, 10
        %v1342 = vpop.permute.xlu0 %1341
        %1343 = vrot.lane.b32.xlu0 %v944, 10
        %v1344 = vpop.permute.xlu0 %1343
        %1345 = vrot.lane.b32.xlu0 %v945, 10
        %v1346 = vpop.permute.xlu0 %1345
        %1347 = vrot.lane.b32.xlu0 %v946, 10
        %v1348 = vpop.permute.xlu0 %1347
        %1349 = vrot.lane.b32.xlu0 %v947, 10
        %v1350 = vpop.permute.xlu0 %1349
        %1351 = vrot.lane.b32.xlu0 %v948, 10
        %v1352 = vpop.permute.xlu0 %1351
        %1353 = vrot.lane.b32.xlu0 %v949, 10
        %v1354 = vpop.permute.xlu0 %1353
        %1355 = vrot.lane.b32.xlu0 %v950, 10
        %v1356 = vpop.permute.xlu0 %1355
        %1357 = vrot.lane.b32.xlu0 %v951, 10
        %v1358 = vpop.permute.xlu0 %1357
        %1359 = vrot.lane.b32.xlu0 %v952, 10
        %v1360 = vpop.permute.xlu0 %1359
        %1361 = vrot.lane.b32.xlu0 %v953, 10
        %v1362 = vpop.permute.xlu0 %1361
        %1363 = vrot.lane.b32.xlu0 %v954, 10
        %v1364 = vpop.permute.xlu0 %1363
        %1365 = vrot.lane.b32.xlu0 %v955, 10
        %v1366 = vpop.permute.xlu0 %1365
        %1367 = vrot.lane.b32.xlu0 %v956, 10
        %v1368 = vpop.permute.xlu0 %1367
        %1369 = vrot.lane.b32.xlu0 %v957, 10
        %v1370 = vpop.permute.xlu0 %1369
        %1371 = vrot.lane.b32.xlu0 %v958, 10
        %v1372 = vpop.permute.xlu0 %1371
        %1373 = vrot.lane.b32.xlu0 %v959, 10
        %v1374 = vpop.permute.xlu0 %1373
        %1375 = vrot.lane.b32.xlu0 %v960, 10
        %v1376 = vpop.permute.xlu0 %1375
        %1377 = vrot.lane.b32.xlu0 %v961, 10
        %v1378 = vpop.permute.xlu0 %1377
        %1443 = vrot.lane.b32.xlu0 %v962, 15
        %v1444 = vpop.permute.xlu0 %1443
        %1445 = vrot.lane.b32.xlu0 %v963, 15
        %v1446 = vpop.permute.xlu0 %1445
        %1447 = vrot.lane.b32.xlu0 %v964, 15
        %v1448 = vpop.permute.xlu0 %1447
        %1449 = vrot.lane.b32.xlu0 %v965, 15
        %v1450 = vpop.permute.xlu0 %1449
        %1451 = vrot.lane.b32.xlu0 %v966, 15
        %v1452 = vpop.permute.xlu0 %1451
        %1453 = vrot.lane.b32.xlu0 %v967, 15
        %v1454 = vpop.permute.xlu0 %1453
        %1455 = vrot.lane.b32.xlu0 %v968, 15
        %v1456 = vpop.permute.xlu0 %1455
        %1457 = vrot.lane.b32.xlu0 %v969, 15
        %v1458 = vpop.permute.xlu0 %1457
        %1459 = vrot.lane.b32.xlu0 %v970, 15
        %v1460 = vpop.permute.xlu0 %1459
        %1461 = vrot.lane.b32.xlu0 %v971, 15
        %v1462 = vpop.permute.xlu0 %1461
        %1463 = vrot.lane.b32.xlu0 %v972, 15
        %v1464 = vpop.permute.xlu0 %1463
        %1465 = vrot.lane.b32.xlu0 %v973, 15
        %v1466 = vpop.permute.xlu0 %1465
        %1467 = vrot.lane.b32.xlu0 %v974, 15
        %v1468 = vpop.permute.xlu0 %1467
        %1469 = vrot.lane.b32.xlu0 %v975, 15
        %v1470 = vpop.permute.xlu0 %1469
        %1471 = vrot.lane.b32.xlu0 %v976, 15
        %v1472 = vpop.permute.xlu0 %1471
        %1473 = vrot.lane.b32.xlu0 %v977, 15
        %v1474 = vpop.permute.xlu0 %1473
        %1475 = vrot.lane.b32.xlu0 %v978, 15
        %v1476 = vpop.permute.xlu0 %1475
        %1477 = vrot.lane.b32.xlu0 %v979, 15
        %v1478 = vpop.permute.xlu0 %1477
        %1479 = vrot.lane.b32.xlu0 %v980, 15
        %v1480 = vpop.permute.xlu0 %1479
        %1481 = vrot.lane.b32.xlu0 %v981, 15
        %v1482 = vpop.permute.xlu0 %1481
        %1483 = vrot.lane.b32.xlu0 %v982, 15
        %v1484 = vpop.permute.xlu0 %1483
        %1485 = vrot.lane.b32.xlu0 %v983, 15
        %v1486 = vpop.permute.xlu0 %1485
        %1487 = vrot.lane.b32.xlu0 %v984, 15
        %v1488 = vpop.permute.xlu0 %1487
        %1489 = vrot.lane.b32.xlu0 %v985, 15
        %v1490 = vpop.permute.xlu0 %1489
        %1491 = vrot.lane.b32.xlu0 %v986, 15
        %v1492 = vpop.permute.xlu0 %1491
        %1493 = vrot.lane.b32.xlu0 %v987, 15
        %v1494 = vpop.permute.xlu0 %1493
        %1495 = vrot.lane.b32.xlu0 %v988, 15
        %v1496 = vpop.permute.xlu0 %1495
        %1497 = vrot.lane.b32.xlu0 %v989, 15
        %v1498 = vpop.permute.xlu0 %1497
        %1499 = vrot.lane.b32.xlu0 %v990, 15
        %v1500 = vpop.permute.xlu0 %1499
        %1501 = vrot.lane.b32.xlu0 %v991, 15
        %v1502 = vpop.permute.xlu0 %1501
        %1503 = vrot.lane.b32.xlu0 %v992, 15
        %v1504 = vpop.permute.xlu0 %1503
        %1505 = vrot.lane.b32.xlu0 %v993, 15
        %v1506 = vpop.permute.xlu0 %1505
        %1571 = vrot.lane.b32.xlu0 %v994, 20
        %v1572 = vpop.permute.xlu0 %1571
        %1573 = vrot.lane.b32.xlu0 %v995, 20
        %v1574 = vpop.permute.xlu0 %1573
        %1575 = vrot.lane.b32.xlu0 %v996, 20
        %v1576 = vpop.permute.xlu0 %1575
        %1577 = vrot.lane.b32.xlu0 %v997, 20
        %v1578 = vpop.permute.xlu0 %1577
        %1579 = vrot.lane.b32.xlu0 %v998, 20
        %v1580 = vpop.permute.xlu0 %1579
        %1581 = vrot.lane.b32.xlu0 %v999, 20
        %v1582 = vpop.permute.xlu0 %1581
        %1583 = vrot.lane.b32.xlu0 %v1000, 20
        %v1584 = vpop.permute.xlu0 %1583
        %1585 = vrot.lane.b32.xlu0 %v1001, 20
        %v1586 = vpop.permute.xlu0 %1585
        %1587 = vrot.lane.b32.xlu0 %v1002, 20
        %v1588 = vpop.permute.xlu0 %1587
        %1589 = vrot.lane.b32.xlu0 %v1003, 20
        %v1590 = vpop.permute.xlu0 %1589
        %1591 = vrot.lane.b32.xlu0 %v1004, 20
        %v1592 = vpop.permute.xlu0 %1591
        %1593 = vrot.lane.b32.xlu0 %v1005, 20
        %v1594 = vpop.permute.xlu0 %1593
        %1595 = vrot.lane.b32.xlu0 %v1006, 20
        %v1596 = vpop.permute.xlu0 %1595
        %1597 = vrot.lane.b32.xlu0 %v1007, 20
        %v1598 = vpop.permute.xlu0 %1597
        %1599 = vrot.lane.b32.xlu0 %v1008, 20
        %v1600 = vpop.permute.xlu0 %1599
        %1601 = vrot.lane.b32.xlu0 %v1009, 20
        %v1602 = vpop.permute.xlu0 %1601
        %1603 = vrot.lane.b32.xlu0 %v1010, 20
        %v1604 = vpop.permute.xlu0 %1603
        %1605 = vrot.lane.b32.xlu0 %v1011, 20
        %v1606 = vpop.permute.xlu0 %1605
        %1607 = vrot.lane.b32.xlu0 %v1012, 20
        %v1608 = vpop.permute.xlu0 %1607
        %1609 = vrot.lane.b32.xlu0 %v1013, 20
        %v1610 = vpop.permute.xlu0 %1609
        %1611 = vrot.lane.b32.xlu0 %v1014, 20
        %v1612 = vpop.permute.xlu0 %1611
        %1613 = vrot.lane.b32.xlu0 %v1015, 20
        %v1614 = vpop.permute.xlu0 %1613
        %1615 = vrot.lane.b32.xlu0 %v1016, 20
        %v1616 = vpop.permute.xlu0 %1615
        %1617 = vrot.lane.b32.xlu0 %v1017, 20
        %v1618 = vpop.permute.xlu0 %1617
        %1619 = vrot.lane.b32.xlu0 %v1018, 20
        %v1620 = vpop.permute.xlu0 %1619
        %1621 = vrot.lane.b32.xlu0 %v1019, 20
        %v1622 = vpop.permute.xlu0 %1621
        %1623 = vrot.lane.b32.xlu0 %v1020, 20
        %v1624 = vpop.permute.xlu0 %1623
        %1625 = vrot.lane.b32.xlu0 %v1021, 20
        %v1626 = vpop.permute.xlu0 %1625
        %1627 = vrot.lane.b32.xlu0 %v1022, 20
        %v1628 = vpop.permute.xlu0 %1627
        %1629 = vrot.lane.b32.xlu0 %v1023, 20
        %v1630 = vpop.permute.xlu0 %1629
        %1631 = vrot.lane.b32.xlu0 %v1024, 20
        %v1632 = vpop.permute.xlu0 %1631
        %1633 = vrot.lane.b32.xlu0 %v1025, 20
        %v1634 = vpop.permute.xlu0 %1633
        %1699 = vrot.lane.b32.xlu0 %v1026, 25
        %v1700 = vpop.permute.xlu0 %1699
        %1701 = vrot.lane.b32.xlu0 %v1027, 25
        %v1702 = vpop.permute.xlu0 %1701
        %1703 = vrot.lane.b32.xlu0 %v1028, 25
        %v1704 = vpop.permute.xlu0 %1703
        %1705 = vrot.lane.b32.xlu0 %v1029, 25
        %v1706 = vpop.permute.xlu0 %1705
        %1707 = vrot.lane.b32.xlu0 %v1030, 25
        %v1708 = vpop.permute.xlu0 %1707
        %1709 = vrot.lane.b32.xlu0 %v1031, 25
        %v1710 = vpop.permute.xlu0 %1709
        %1711 = vrot.lane.b32.xlu0 %v1032, 25
        %v1712 = vpop.permute.xlu0 %1711
        %1713 = vrot.lane.b32.xlu0 %v1033, 25
        %v1714 = vpop.permute.xlu0 %1713
        %1715 = vrot.lane.b32.xlu0 %v1034, 25
        %v1716 = vpop.permute.xlu0 %1715
        %1717 = vrot.lane.b32.xlu0 %v1035, 25
        %v1718 = vpop.permute.xlu0 %1717
        %1719 = vrot.lane.b32.xlu0 %v1036, 25
        %v1720 = vpop.permute.xlu0 %1719
        %1721 = vrot.lane.b32.xlu0 %v1037, 25
        %v1722 = vpop.permute.xlu0 %1721
        %1723 = vrot.lane.b32.xlu0 %v1038, 25
        %v1724 = vpop.permute.xlu0 %1723
        %1725 = vrot.lane.b32.xlu0 %v1039, 25
        %v1726 = vpop.permute.xlu0 %1725
        %1727 = vrot.lane.b32.xlu0 %v1040, 25
        %v1728 = vpop.permute.xlu0 %1727
        %1729 = vrot.lane.b32.xlu0 %v1041, 25
        %v1730 = vpop.permute.xlu0 %1729
        %1731 = vrot.lane.b32.xlu0 %v1042, 25
        %v1732 = vpop.permute.xlu0 %1731
        %1733 = vrot.lane.b32.xlu0 %v1043, 25
        %v1734 = vpop.permute.xlu0 %1733
        %1735 = vrot.lane.b32.xlu0 %v1044, 25
        %v1736 = vpop.permute.xlu0 %1735
        %1737 = vrot.lane.b32.xlu0 %v1045, 25
        %v1738 = vpop.permute.xlu0 %1737
        %1739 = vrot.lane.b32.xlu0 %v1046, 25
        %v1740 = vpop.permute.xlu0 %1739
        %1741 = vrot.lane.b32.xlu0 %v1047, 25
        %v1742 = vpop.permute.xlu0 %1741
        %1743 = vrot.lane.b32.xlu0 %v1048, 25
        %v1744 = vpop.permute.xlu0 %1743
        %1745 = vrot.lane.b32.xlu0 %v1049, 25
        %v1746 = vpop.permute.xlu0 %1745
        %1747 = vrot.lane.b32.xlu0 %v1050, 25
        %v1748 = vpop.permute.xlu0 %1747
        %1749 = vrot.lane.b32.xlu0 %v1051, 25
        %v1750 = vpop.permute.xlu0 %1749
        %1751 = vrot.lane.b32.xlu0 %v1052, 25
        %v1752 = vpop.permute.xlu0 %1751
        %1753 = vrot.lane.b32.xlu0 %v1053, 25
        %v1754 = vpop.permute.xlu0 %1753
        %1755 = vrot.lane.b32.xlu0 %v1054, 25
        %v1756 = vpop.permute.xlu0 %1755
        %1757 = vrot.lane.b32.xlu0 %v1055, 25
        %v1758 = vpop.permute.xlu0 %1757
        %1759 = vrot.lane.b32.xlu0 %v1056, 25
        %v1760 = vpop.permute.xlu0 %1759
        %1761 = vrot.lane.b32.xlu0 %v1057, 25
        %v1762 = vpop.permute.xlu0 %1761
        %1827 = vrot.lane.b32.xlu0 %v1059, 30
        %v1828 = vpop.permute.xlu0 %1827
        %1829 = vrot.lane.b32.xlu0 %v1060, 30
        %v1830 = vpop.permute.xlu0 %1829
        %1831 = vrot.lane.b32.xlu0 %v1061, 30
        %v1832 = vpop.permute.xlu0 %1831
        %1833 = vrot.lane.b32.xlu0 %v1062, 30
        %v1834 = vpop.permute.xlu0 %1833
        %1835 = vrot.lane.b32.xlu0 %v1063, 30
        %v1836 = vpop.permute.xlu0 %1835
        %1837 = vrot.lane.b32.xlu0 %v1064, 30
        %v1838 = vpop.permute.xlu0 %1837
        %1839 = vrot.lane.b32.xlu0 %v1065, 30
        %v1840 = vpop.permute.xlu0 %1839
        %1841 = vrot.lane.b32.xlu0 %v1066, 30
        %v1842 = vpop.permute.xlu0 %1841
        %1843 = vrot.lane.b32.xlu0 %v1067, 30
        %v1844 = vpop.permute.xlu0 %1843
        %1845 = vrot.lane.b32.xlu0 %v1068, 30
        %v1846 = vpop.permute.xlu0 %1845
        %1847 = vrot.lane.b32.xlu0 %v1069, 30
        %v1848 = vpop.permute.xlu0 %1847
        %1849 = vrot.lane.b32.xlu0 %v1070, 30
        %v1850 = vpop.permute.xlu0 %1849
        %1851 = vrot.lane.b32.xlu0 %v1071, 30
        %v1852 = vpop.permute.xlu0 %1851
        %1853 = vrot.lane.b32.xlu0 %v1072, 30
        %v1854 = vpop.permute.xlu0 %1853
        %1855 = vrot.lane.b32.xlu0 %v1073, 30
        %v1856 = vpop.permute.xlu0 %1855
        %1857 = vrot.lane.b32.xlu0 %v1074, 30
        %v1858 = vpop.permute.xlu0 %1857
        %1859 = vrot.lane.b32.xlu0 %v1075, 30
        %v1860 = vpop.permute.xlu0 %1859
        %1861 = vrot.lane.b32.xlu0 %v1076, 30
        %v1862 = vpop.permute.xlu0 %1861
        %1863 = vrot.lane.b32.xlu0 %v1077, 30
        %v1864 = vpop.permute.xlu0 %1863
        %1865 = vrot.lane.b32.xlu0 %v1078, 30
        %v1866 = vpop.permute.xlu0 %1865
        %1867 = vrot.lane.b32.xlu0 %v1079, 30
        %v1868 = vpop.permute.xlu0 %1867
        %1869 = vrot.lane.b32.xlu0 %v1080, 30
        %v1870 = vpop.permute.xlu0 %1869
        %1871 = vrot.lane.b32.xlu0 %v1081, 30
        %v1872 = vpop.permute.xlu0 %1871
        %1873 = vrot.lane.b32.xlu0 %v1082, 30
        %v1874 = vpop.permute.xlu0 %1873
        %1875 = vrot.lane.b32.xlu0 %v1083, 30
        %v1876 = vpop.permute.xlu0 %1875
        %1877 = vrot.lane.b32.xlu0 %v1084, 30
        %v1878 = vpop.permute.xlu0 %1877
        %1879 = vrot.lane.b32.xlu0 %v1085, 30
        %v1880 = vpop.permute.xlu0 %1879
        %1881 = vrot.lane.b32.xlu0 %v1086, 30
        %v1882 = vpop.permute.xlu0 %1881
        %1883 = vrot.lane.b32.xlu0 %v1087, 30
        %v1884 = vpop.permute.xlu0 %1883
        %1885 = vrot.lane.b32.xlu0 %v1088, 30
        %v1886 = vpop.permute.xlu0 %1885
        %1887 = vrot.lane.b32.xlu0 %v1089, 30
        %v1888 = vpop.permute.xlu0 %1887
        %1889 = vrot.lane.b32.xlu0 %v1090, 30
        %v1890 = vpop.permute.xlu0 %1889
        %1955 = vrot.lane.b32.xlu0 %v1091, 35
        %v1956 = vpop.permute.xlu0 %1955
        %1957 = vrot.lane.b32.xlu0 %v1092, 35
        %v1958 = vpop.permute.xlu0 %1957
        %1959 = vrot.lane.b32.xlu0 %v1093, 35
        %v1960 = vpop.permute.xlu0 %1959
        %1961 = vrot.lane.b32.xlu0 %v1094, 35
        %v1962 = vpop.permute.xlu0 %1961
        %1963 = vrot.lane.b32.xlu0 %v1095, 35
        %v1964 = vpop.permute.xlu0 %1963
        %1965 = vrot.lane.b32.xlu0 %v1096, 35
        %v1966 = vpop.permute.xlu0 %1965
        %1967 = vrot.lane.b32.xlu0 %v1097, 35
        %v1968 = vpop.permute.xlu0 %1967
        %1969 = vrot.lane.b32.xlu0 %v1098, 35
        %v1970 = vpop.permute.xlu0 %1969
        %1971 = vrot.lane.b32.xlu0 %v1099, 35
        %v1972 = vpop.permute.xlu0 %1971
        %1973 = vrot.lane.b32.xlu0 %v1100, 35
        %v1974 = vpop.permute.xlu0 %1973
        %1975 = vrot.lane.b32.xlu0 %v1101, 35
        %v1976 = vpop.permute.xlu0 %1975
        %1977 = vrot.lane.b32.xlu0 %v1102, 35
        %v1978 = vpop.permute.xlu0 %1977
        %1979 = vrot.lane.b32.xlu0 %v1103, 35
        %v1980 = vpop.permute.xlu0 %1979
        %1981 = vrot.lane.b32.xlu0 %v1104, 35
        %v1982 = vpop.permute.xlu0 %1981
        %1983 = vrot.lane.b32.xlu0 %v1105, 35
        %v1984 = vpop.permute.xlu0 %1983
        %1985 = vrot.lane.b32.xlu0 %v1106, 35
        %v1986 = vpop.permute.xlu0 %1985
        %1987 = vrot.lane.b32.xlu0 %v1107, 35
        %v1988 = vpop.permute.xlu0 %1987
        %1989 = vrot.lane.b32.xlu0 %v1108, 35
        %v1990 = vpop.permute.xlu0 %1989
        %1991 = vrot.lane.b32.xlu0 %v1109, 35
        %v1992 = vpop.permute.xlu0 %1991
        %1993 = vrot.lane.b32.xlu0 %v1110, 35
        %v1994 = vpop.permute.xlu0 %1993
        %1995 = vrot.lane.b32.xlu0 %v1111, 35
        %v1996 = vpop.permute.xlu0 %1995
        %1997 = vrot.lane.b32.xlu0 %v1112, 35
        %v1998 = vpop.permute.xlu0 %1997
        %1999 = vrot.lane.b32.xlu0 %v1113, 35
        %v2000 = vpop.permute.xlu0 %1999
        %2001 = vrot.lane.b32.xlu0 %v1114, 35
        %v2002 = vpop.permute.xlu0 %2001
        %2003 = vrot.lane.b32.xlu0 %v1115, 35
        %v2004 = vpop.permute.xlu0 %2003
        %2005 = vrot.lane.b32.xlu0 %v1116, 35
        %v2006 = vpop.permute.xlu0 %2005
        %2007 = vrot.lane.b32.xlu0 %v1117, 35
        %v2008 = vpop.permute.xlu0 %2007
        %2009 = vrot.lane.b32.xlu0 %v1118, 35
        %v2010 = vpop.permute.xlu0 %2009
        %2011 = vrot.lane.b32.xlu0 %v1119, 35
        %v2012 = vpop.permute.xlu0 %2011
        %2013 = vrot.lane.b32.xlu0 %v1120, 35
        %v2014 = vpop.permute.xlu0 %2013
        %2015 = vrot.lane.b32.xlu0 %v1121, 35
        %v2016 = vpop.permute.xlu0 %2015
        %2017 = vrot.lane.b32.xlu0 %v1122, 35
        %v2018 = vpop.permute.xlu0 %2017
        %2083 = vrot.lane.b32.xlu0 %v1123, 40
        %v2084 = vpop.permute.xlu0 %2083
        %2085 = vrot.lane.b32.xlu0 %v1124, 40
        %v2086 = vpop.permute.xlu0 %2085
        %2087 = vrot.lane.b32.xlu0 %v1125, 40
        %v2088 = vpop.permute.xlu0 %2087
        %2089 = vrot.lane.b32.xlu0 %v1126, 40
        %v2090 = vpop.permute.xlu0 %2089
        %2091 = vrot.lane.b32.xlu0 %v1127, 40
        %v2092 = vpop.permute.xlu0 %2091
        %2093 = vrot.lane.b32.xlu0 %v1128, 40
        %v2094 = vpop.permute.xlu0 %2093
        %2095 = vrot.lane.b32.xlu0 %v1129, 40
        %v2096 = vpop.permute.xlu0 %2095
        %2097 = vrot.lane.b32.xlu0 %v1130, 40
        %v2098 = vpop.permute.xlu0 %2097
        %2099 = vrot.lane.b32.xlu0 %v1131, 40
        %v2100 = vpop.permute.xlu0 %2099
        %2101 = vrot.lane.b32.xlu0 %v1132, 40
        %v2102 = vpop.permute.xlu0 %2101
        %2103 = vrot.lane.b32.xlu0 %v1133, 40
        %v2104 = vpop.permute.xlu0 %2103
        %2105 = vrot.lane.b32.xlu0 %v1134, 40
        %v2106 = vpop.permute.xlu0 %2105
        %2107 = vrot.lane.b32.xlu0 %v1135, 40
        %v2108 = vpop.permute.xlu0 %2107
        %2109 = vrot.lane.b32.xlu0 %v1136, 40
        %v2110 = vpop.permute.xlu0 %2109
        %2111 = vrot.lane.b32.xlu0 %v1137, 40
        %v2112 = vpop.permute.xlu0 %2111
        %2113 = vrot.lane.b32.xlu0 %v1138, 40
        %v2114 = vpop.permute.xlu0 %2113
        %2115 = vrot.lane.b32.xlu0 %v1139, 40
        %v2116 = vpop.permute.xlu0 %2115
        %2117 = vrot.lane.b32.xlu0 %v1140, 40
        %v2118 = vpop.permute.xlu0 %2117
        %2119 = vrot.lane.b32.xlu0 %v1141, 40
        %v2120 = vpop.permute.xlu0 %2119
        %2121 = vrot.lane.b32.xlu0 %v1142, 40
        %v2122 = vpop.permute.xlu0 %2121
        %2123 = vrot.lane.b32.xlu0 %v1143, 40
        %v2124 = vpop.permute.xlu0 %2123
        %2125 = vrot.lane.b32.xlu0 %v1144, 40
        %v2126 = vpop.permute.xlu0 %2125
        %2127 = vrot.lane.b32.xlu0 %v1145, 40
        %v2128 = vpop.permute.xlu0 %2127
        %2129 = vrot.lane.b32.xlu0 %v1146, 40
        %v2130 = vpop.permute.xlu0 %2129
        %2131 = vrot.lane.b32.xlu0 %v1147, 40
        %v2132 = vpop.permute.xlu0 %2131
        %2133 = vrot.lane.b32.xlu0 %v1148, 40
        %v2134 = vpop.permute.xlu0 %2133
        %2135 = vrot.lane.b32.xlu0 %v1149, 40
        %v2136 = vpop.permute.xlu0 %2135
        %2137 = vrot.lane.b32.xlu0 %v1150, 40
        %v2138 = vpop.permute.xlu0 %2137
        %2139 = vrot.lane.b32.xlu0 %v1151, 40
        %v2140 = vpop.permute.xlu0 %2139
        %2141 = vrot.lane.b32.xlu0 %v1152, 40
        %v2142 = vpop.permute.xlu0 %2141
        %2143 = vrot.lane.b32.xlu0 %v1153, 40
        %v2144 = vpop.permute.xlu0 %2143
        %2145 = vrot.lane.b32.xlu0 %v1154, 40
        %v2146 = vpop.permute.xlu0 %2145
        %v2179 = vsel %vm456, %v866, %v1188
        %v2180 = vsel %vm456, %v867, %v1190
        %v2181 = vsel %vm456, %v868, %v1192
        %v2182 = vsel %vm456, %v869, %v1194
        %v2183 = vsel %vm456, %v870, %v1196
        %v2184 = vsel %vm456, %v871, %v1198
        %v2185 = vsel %vm456, %v872, %v1200
        %v2186 = vsel %vm456, %v873, %v1202
        %v2187 = vsel %vm456, %v874, %v1204
        %v2188 = vsel %vm456, %v875, %v1206
        %v2189 = vsel %vm456, %v876, %v1208
        %v2190 = vsel %vm456, %v877, %v1210
        %v2191 = vsel %vm456, %v878, %v1212
        %v2192 = vsel %vm456, %v879, %v1214
        %v2193 = vsel %vm456, %v880, %v1216
        %v2194 = vsel %vm456, %v881, %v1218
        %v2195 = vsel %vm456, %v882, %v1220
        %v2196 = vsel %vm456, %v883, %v1222
        %v2197 = vsel %vm456, %v884, %v1224
        %v2198 = vsel %vm456, %v885, %v1226
        %v2199 = vsel %vm456, %v886, %v1228
        %v2200 = vsel %vm456, %v887, %v1230
        %v2201 = vsel %vm456, %v888, %v1232
        %v2202 = vsel %vm456, %v889, %v1234
        %v2203 = vsel %vm456, %v890, %v1236
        %v2204 = vsel %vm456, %v891, %v1238
        %v2205 = vsel %vm456, %v892, %v1240
        %v2206 = vsel %vm456, %v893, %v1242
        %v2207 = vsel %vm456, %v894, %v1244
        %v2208 = vsel %vm456, %v895, %v1246
        %v2209 = vsel %vm456, %v896, %v1248
        %v2210 = vsel %vm456, %v897, %v1250
        %vm2211 = vcmask 80896
        %v2212 = vsel %vm2211, %v2179, %v1316
        %v2213 = vsel %vm2211, %v2180, %v1318
        %v2214 = vsel %vm2211, %v2181, %v1320
        %v2215 = vsel %vm2211, %v2182, %v1322
        %v2216 = vsel %vm2211, %v2183, %v1324
        %v2217 = vsel %vm2211, %v2184, %v1326
        %v2218 = vsel %vm2211, %v2185, %v1328
        %v2219 = vsel %vm2211, %v2186, %v1330
        %v2220 = vsel %vm2211, %v2187, %v1332
        %v2221 = vsel %vm2211, %v2188, %v1334
        %v2222 = vsel %vm2211, %v2189, %v1336
        %v2223 = vsel %vm2211, %v2190, %v1338
        %v2224 = vsel %vm2211, %v2191, %v1340
        %v2225 = vsel %vm2211, %v2192, %v1342
        %v2226 = vsel %vm2211, %v2193, %v1344
        %v2227 = vsel %vm2211, %v2194, %v1346
        %v2228 = vsel %vm2211, %v2195, %v1348
        %v2229 = vsel %vm2211, %v2196, %v1350
        %v2230 = vsel %vm2211, %v2197, %v1352
        %v2231 = vsel %vm2211, %v2198, %v1354
        %v2232 = vsel %vm2211, %v2199, %v1356
        %v2233 = vsel %vm2211, %v2200, %v1358
        %v2234 = vsel %vm2211, %v2201, %v1360
        %v2235 = vsel %vm2211, %v2202, %v1362
        %v2236 = vsel %vm2211, %v2203, %v1364
        %v2237 = vsel %vm2211, %v2204, %v1366
        %v2238 = vsel %vm2211, %v2205, %v1368
        %v2239 = vsel %vm2211, %v2206, %v1370
        %v2240 = vsel %vm2211, %v2207, %v1372
        %v2241 = vsel %vm2211, %v2208, %v1374
        %v2242 = vsel %vm2211, %v2209, %v1376
        %v2243 = vsel %vm2211, %v2210, %v1378
        %vm2244 = vcmask 121856
        %v2245 = vsel %vm2244, %v2212, %v1444
        %v2246 = vsel %vm2244, %v2213, %v1446
        %v2247 = vsel %vm2244, %v2214, %v1448
        %v2248 = vsel %vm2244, %v2215, %v1450
        %v2249 = vsel %vm2244, %v2216, %v1452
        %v2250 = vsel %vm2244, %v2217, %v1454
        %v2251 = vsel %vm2244, %v2218, %v1456
        %v2252 = vsel %vm2244, %v2219, %v1458
        %v2253 = vsel %vm2244, %v2220, %v1460
        %v2254 = vsel %vm2244, %v2221, %v1462
        %v2255 = vsel %vm2244, %v2222, %v1464
        %v2256 = vsel %vm2244, %v2223, %v1466
        %v2257 = vsel %vm2244, %v2224, %v1468
        %v2258 = vsel %vm2244, %v2225, %v1470
        %v2259 = vsel %vm2244, %v2226, %v1472
        %v2260 = vsel %vm2244, %v2227, %v1474
        %v2261 = vsel %vm2244, %v2228, %v1476
        %v2262 = vsel %vm2244, %v2229, %v1478
        %v2263 = vsel %vm2244, %v2230, %v1480
        %v2264 = vsel %vm2244, %v2231, %v1482
        %v2265 = vsel %vm2244, %v2232, %v1484
        %v2266 = vsel %vm2244, %v2233, %v1486
        %v2267 = vsel %vm2244, %v2234, %v1488
        %v2268 = vsel %vm2244, %v2235, %v1490
        %v2269 = vsel %vm2244, %v2236, %v1492
        %v2270 = vsel %vm2244, %v2237, %v1494
        %v2271 = vsel %vm2244, %v2238, %v1496
        %v2272 = vsel %vm2244, %v2239, %v1498
        %v2273 = vsel %vm2244, %v2240, %v1500
        %v2274 = vsel %vm2244, %v2241, %v1502
        %v2275 = vsel %vm2244, %v2242, %v1504
        %v2276 = vsel %vm2244, %v2243, %v1506
        %vm2277 = vcmask 162816
        %v2278 = vsel %vm2277, %v2245, %v1572
        %v2279 = vsel %vm2277, %v2246, %v1574
        %v2280 = vsel %vm2277, %v2247, %v1576
        %v2281 = vsel %vm2277, %v2248, %v1578
        %v2282 = vsel %vm2277, %v2249, %v1580
        %v2283 = vsel %vm2277, %v2250, %v1582
        %v2284 = vsel %vm2277, %v2251, %v1584
        %v2285 = vsel %vm2277, %v2252, %v1586
        %v2286 = vsel %vm2277, %v2253, %v1588
        %v2287 = vsel %vm2277, %v2254, %v1590
        %v2288 = vsel %vm2277, %v2255, %v1592
        %v2289 = vsel %vm2277, %v2256, %v1594
        %v2290 = vsel %vm2277, %v2257, %v1596
        %v2291 = vsel %vm2277, %v2258, %v1598
        %v2292 = vsel %vm2277, %v2259, %v1600
        %v2293 = vsel %vm2277, %v2260, %v1602
        %v2294 = vsel %vm2277, %v2261, %v1604
        %v2295 = vsel %vm2277, %v2262, %v1606
        %v2296 = vsel %vm2277, %v2263, %v1608
        %v2297 = vsel %vm2277, %v2264, %v1610
        %v2298 = vsel %vm2277, %v2265, %v1612
        %v2299 = vsel %vm2277, %v2266, %v1614
        %v2300 = vsel %vm2277, %v2267, %v1616
        %v2301 = vsel %vm2277, %v2268, %v1618
        %v2302 = vsel %vm2277, %v2269, %v1620
        %v2303 = vsel %vm2277, %v2270, %v1622
        %v2304 = vsel %vm2277, %v2271, %v1624
        %v2305 = vsel %vm2277, %v2272, %v1626
        %v2306 = vsel %vm2277, %v2273, %v1628
        %v2307 = vsel %vm2277, %v2274, %v1630
        %v2308 = vsel %vm2277, %v2275, %v1632
        %v2309 = vsel %vm2277, %v2276, %v1634
        %vm2310 = vcmask 203776
        %v2311 = vsel %vm2310, %v2278, %v1700
        %v2312 = vsel %vm2310, %v2279, %v1702
        %v2313 = vsel %vm2310, %v2280, %v1704
        %v2314 = vsel %vm2310, %v2281, %v1706
        %v2315 = vsel %vm2310, %v2282, %v1708
        %v2316 = vsel %vm2310, %v2283, %v1710
        %v2317 = vsel %vm2310, %v2284, %v1712
        %v2318 = vsel %vm2310, %v2285, %v1714
        %v2319 = vsel %vm2310, %v2286, %v1716
        %v2320 = vsel %vm2310, %v2287, %v1718
        %v2321 = vsel %vm2310, %v2288, %v1720
        %v2322 = vsel %vm2310, %v2289, %v1722
        %v2323 = vsel %vm2310, %v2290, %v1724
        %v2324 = vsel %vm2310, %v2291, %v1726
        %v2325 = vsel %vm2310, %v2292, %v1728
        %v2326 = vsel %vm2310, %v2293, %v1730
        %v2327 = vsel %vm2310, %v2294, %v1732
        %v2328 = vsel %vm2310, %v2295, %v1734
        %v2329 = vsel %vm2310, %v2296, %v1736
        %v2330 = vsel %vm2310, %v2297, %v1738
        %v2331 = vsel %vm2310, %v2298, %v1740
        %v2332 = vsel %vm2310, %v2299, %v1742
        %v2333 = vsel %vm2310, %v2300, %v1744
        %v2334 = vsel %vm2310, %v2301, %v1746
        %v2335 = vsel %vm2310, %v2302, %v1748
        %v2336 = vsel %vm2310, %v2303, %v1750
        %v2337 = vsel %vm2310, %v2304, %v1752
        %v2338 = vsel %vm2310, %v2305, %v1754
        %v2339 = vsel %vm2310, %v2306, %v1756
        %v2340 = vsel %vm2310, %v2307, %v1758
        %v2341 = vsel %vm2310, %v2308, %v1760
        %v2342 = vsel %vm2310, %v2309, %v1762
        %vm2343 = vcmask 244736
        %v2344 = vsel %vm2343, %v2311, %v1828
        %v2345 = vsel %vm2343, %v2312, %v1830
        %v2346 = vsel %vm2343, %v2313, %v1832
        %v2347 = vsel %vm2343, %v2314, %v1834
        %v2348 = vsel %vm2343, %v2315, %v1836
        %v2349 = vsel %vm2343, %v2316, %v1838
        %v2350 = vsel %vm2343, %v2317, %v1840
        %v2351 = vsel %vm2343, %v2318, %v1842
        %v2352 = vsel %vm2343, %v2319, %v1844
        %v2353 = vsel %vm2343, %v2320, %v1846
        %v2354 = vsel %vm2343, %v2321, %v1848
        %v2355 = vsel %vm2343, %v2322, %v1850
        %v2356 = vsel %vm2343, %v2323, %v1852
        %v2357 = vsel %vm2343, %v2324, %v1854
        %v2358 = vsel %vm2343, %v2325, %v1856
        %v2359 = vsel %vm2343, %v2326, %v1858
        %v2360 = vsel %vm2343, %v2327, %v1860
        %v2361 = vsel %vm2343, %v2328, %v1862
        %v2362 = vsel %vm2343, %v2329, %v1864
        %v2363 = vsel %vm2343, %v2330, %v1866
        %v2364 = vsel %vm2343, %v2331, %v1868
        %v2365 = vsel %vm2343, %v2332, %v1870
        %v2366 = vsel %vm2343, %v2333, %v1872
        %v2367 = vsel %vm2343, %v2334, %v1874
        %v2368 = vsel %vm2343, %v2335, %v1876
        %v2369 = vsel %vm2343, %v2336, %v1878
        %v2370 = vsel %vm2343, %v2337, %v1880
        %v2371 = vsel %vm2343, %v2338, %v1882
        %v2372 = vsel %vm2343, %v2339, %v1884
        %v2373 = vsel %vm2343, %v2340, %v1886
        %v2374 = vsel %vm2343, %v2341, %v1888
        %v2375 = vsel %vm2343, %v2342, %v1890
        %vm2376 = vcmask 285696
        %v2377 = vsel %vm2376, %v2344, %v1956
        %v2378 = vsel %vm2376, %v2345, %v1958
        %v2379 = vsel %vm2376, %v2346, %v1960
        %v2380 = vsel %vm2376, %v2347, %v1962
        %v2381 = vsel %vm2376, %v2348, %v1964
        %v2382 = vsel %vm2376, %v2349, %v1966
        %v2383 = vsel %vm2376, %v2350, %v1968
        %v2384 = vsel %vm2376, %v2351, %v1970
        %v2385 = vsel %vm2376, %v2352, %v1972
        %v2386 = vsel %vm2376, %v2353, %v1974
        %v2387 = vsel %vm2376, %v2354, %v1976
        %v2388 = vsel %vm2376, %v2355, %v1978
        %v2389 = vsel %vm2376, %v2356, %v1980
        %v2390 = vsel %vm2376, %v2357, %v1982
        %v2391 = vsel %vm2376, %v2358, %v1984
        %v2392 = vsel %vm2376, %v2359, %v1986
        %v2393 = vsel %vm2376, %v2360, %v1988
        %v2394 = vsel %vm2376, %v2361, %v1990
        %v2395 = vsel %vm2376, %v2362, %v1992
        %v2396 = vsel %vm2376, %v2363, %v1994
        %v2397 = vsel %vm2376, %v2364, %v1996
        %v2398 = vsel %vm2376, %v2365, %v1998
        %v2399 = vsel %vm2376, %v2366, %v2000
        %v2400 = vsel %vm2376, %v2367, %v2002
        %v2401 = vsel %vm2376, %v2368, %v2004
        %v2402 = vsel %vm2376, %v2369, %v2006
        %v2403 = vsel %vm2376, %v2370, %v2008
        %v2404 = vsel %vm2376, %v2371, %v2010
        %v2405 = vsel %vm2376, %v2372, %v2012
        %v2406 = vsel %vm2376, %v2373, %v2014
        %v2407 = vsel %vm2376, %v2374, %v2016
        %v2408 = vsel %vm2376, %v2375, %v2018
        %vm2409 = vcmask 326656
        %v2410 = vsel %vm2409, %v2377, %v2084
        %v2411 = vsel %vm2409, %v2378, %v2086
        %v2412 = vsel %vm2409, %v2379, %v2088
        %v2413 = vsel %vm2409, %v2380, %v2090
        %v2414 = vsel %vm2409, %v2381, %v2092
        %v2415 = vsel %vm2409, %v2382, %v2094
        %v2416 = vsel %vm2409, %v2383, %v2096
        %v2417 = vsel %vm2409, %v2384, %v2098
        %v2418 = vsel %vm2409, %v2385, %v2100
        %v2419 = vsel %vm2409, %v2386, %v2102
        %v2420 = vsel %vm2409, %v2387, %v2104
        %v2421 = vsel %vm2409, %v2388, %v2106
        %v2422 = vsel %vm2409, %v2389, %v2108
        %v2423 = vsel %vm2409, %v2390, %v2110
        %v2424 = vsel %vm2409, %v2391, %v2112
        %v2425 = vsel %vm2409, %v2392, %v2114
        %v2426 = vsel %vm2409, %v2393, %v2116
        %v2427 = vsel %vm2409, %v2394, %v2118
        %v2428 = vsel %vm2409, %v2395, %v2120
        %v2429 = vsel %vm2409, %v2396, %v2122
        %v2430 = vsel %vm2409, %v2397, %v2124
        %v2431 = vsel %vm2409, %v2398, %v2126
        %v2432 = vsel %vm2409, %v2399, %v2128
        %v2433 = vsel %vm2409, %v2400, %v2130
        %v2434 = vsel %vm2409, %v2401, %v2132
        %v2435 = vsel %vm2409, %v2402, %v2134
        %v2436 = vsel %vm2409, %v2403, %v2136
        %v2437 = vsel %vm2409, %v2404, %v2138
        %v2438 = vsel %vm2409, %v2405, %v2140
        %v2439 = vsel %vm2409, %v2406, %v2142
        %v2440 = vsel %vm2409, %v2407, %v2144
        %v2441 = vsel %vm2409, %v2408, %v2146
        %v2442 = vpack.c.bf16 %v2411, %v2410
        %v2443 = vpack.c.bf16 %v2413, %v2412
        %v2444 = vpack.c.bf16 %v2415, %v2414
        %v2445 = vpack.c.bf16 %v2417, %v2416
        %v2446 = vpack.c.bf16 %v2419, %v2418
        %v2447 = vpack.c.bf16 %v2421, %v2420
        %v2448 = vpack.c.bf16 %v2423, %v2422
        %v2449 = vpack.c.bf16 %v2425, %v2424
        %v2450 = vpack.c.bf16 %v2427, %v2426
        %v2451 = vpack.c.bf16 %v2429, %v2428
        %v2452 = vpack.c.bf16 %v2431, %v2430
        %v2453 = vpack.c.bf16 %v2433, %v2432
        %v2454 = vpack.c.bf16 %v2435, %v2434
        %v2455 = vpack.c.bf16 %v2437, %v2436
        %v2456 = vpack.c.bf16 %v2439, %v2438
        %v2457 = vpack.c.bf16 %v2441, %v2440
        %v2458 = vld [vmem:[%s2] sm:$0xf]
        %v2459 = vld [vmem:[%s2 + $0x4] sm:$0xf]
        %v2460 = vld [vmem:[%s2 + $0x8] sm:$0xf]
        %v2461 = vld [vmem:[%s2 + $0xc] sm:$0xf]
        %v2462 = vld [vmem:[%s2 + $0x10] sm:$0xf]
        %v2463 = vld [vmem:[%s2 + $0x14] sm:$0x7]
        %v2470 = vunpack.c.l.b16 %v2458
        %v2471 = vunpack.c.l.b16 %v2459
        %v2472 = vunpack.c.l.b16 %v2460
        %v2473 = vunpack.c.l.b16 %v2461
        %v2474 = vunpack.c.l.b16 %v2462
        %v2475 = vunpack.c.l.b16 %v2463
        %v2476 = vpack.c.b16 %v2471, %v2470
        %v2477 = vpack.c.b16 %v2473, %v2472
        %v2478 = vpack.c.b16 %v2475, %v2474
        %vm2481 = vcmask 367616
        %v2483 = vsel %vm2481, %v2442, 0
        %v2486 = vsel %vm2481, %v2443, 0
        %v2489 = vsel %vm2481, %v2444, 0
        %v2492 = vsel %vm2481, %v2445, 0
        %v2495 = vsel %vm2481, %v2446, 0
        %v2498 = vsel %vm2481, %v2447, 0
        %v2501 = vsel %vm2481, %v2448, 0
        %v2504 = vsel %vm2481, %v2449, 0
        %v2507 = vsel %vm2481, %v2450, 0
        %v2510 = vsel %vm2481, %v2451, 0
        %v2513 = vsel %vm2481, %v2452, 0
        %v2516 = vsel %vm2481, %v2453, 0
        %v2519 = vsel %vm2481, %v2454, 0
        %v2522 = vsel %vm2481, %v2455, 0
        %v2525 = vsel %vm2481, %v2456, 0
        %v2528 = vsel %vm2481, %v2457, 0
        %vm2530 = vcmask 1045504
        %vm2531 = vcmask 1046528
        %v2532 = vsel %vm2530, 4294967295, 65535
        %v2533 = vsel %vm2531, %v2532, 0
        %v2535 = vand.u32 %v2478, %v2533
        %2537 = vmatprep.subr.bf16.mxu0 0
        %2538 = vmatpush1.bf16.msra.mxu0 0
        %2539 = vmatprep.subr.bf16.mxu0 0
        %2540 = vmatpush1.bf16.msra.mxu0 0
        %2541 = vmatprep.subr.bf16.mxu0 0
        %2542 = vmatpush1.bf16.msra.mxu0 0
        %2543 = vmatprep.subr.bf16.mxu0 0
        %2544 = vmatpush1.bf16.msra.mxu0 0
        %2545 = vmatprep.subr.bf16.mxu0 0
        %2546 = vmatpush1.bf16.msra.mxu0 0
        %2547 = vmatprep.subr.bf16.mxu0 0
        %2548 = vmatpush1.bf16.msra.mxu0 %v2535
        %2549 = vmatprep.subr.bf16.mxu0 0
        %2550 = vmatpush1.bf16.msra.mxu0 %v2477
        %2551 = vmatprep.subr.bf16.mxu0 0
        %2552 = vmatpush1.bf16.msra.mxu0 %v2476
        %2553 = vmatprep.subr.bf16.mxu0 0
        %2554 = vmatpush2.bf16.msra.mxu0 0
        %2555 = vmatprep.subr.bf16.mxu0 0
        %2556 = vmatpush2.bf16.msra.mxu0 0
        %2557 = vmatprep.subr.bf16.mxu0 0
        %2558 = vmatpush2.bf16.msra.mxu0 0
        %2559 = vmatprep.subr.bf16.mxu0 0
        %2560 = vmatpush2.bf16.msra.mxu0 0
        %2561 = vmatprep.subr.bf16.mxu0 0
        %2562 = vmatpush2.bf16.msra.mxu0 0
        %2563 = vmatprep.subr.bf16.mxu0 0
        %2564 = vmatpush2.bf16.msra.mxu0 0
        %2565 = vmatprep.subr.bf16.mxu0 0
        %2566 = vmatpush2.bf16.msra.mxu0 0
        %2567 = vmatprep.subr.bf16.mxu0 0
        %2568 = vmatpush2.bf16.msra.mxu0 0
        %2569 = vmatprep.mubr.bf16.mxu0 0
        %2570 = vmatmul.mubr.bf16.gmra.mxu0 %v2483
        %v2571 = vpop.f32.mrf.mxu0
        %v2572 = vadd.f32 0.0, %v2571
        %v2573 = vpop.f32.mrf.mxu0
        %v2574 = vpop.f32.mrf.mxu0
        %v2575 = vadd.f32 0.0, %v2574
        %v2576 = vpop.f32.mrf.mxu0
        %2577 = vmatprep.mubr.bf16.mxu0 0
        %2578 = vmatmul.mubr.bf16.gmra.mxu0 %v2486
        %v2579 = vpop.f32.mrf.mxu0
        %v2580 = vadd.f32 0.0, %v2579
        %v2581 = vpop.f32.mrf.mxu0
        %v2582 = vpop.f32.mrf.mxu0
        %v2583 = vadd.f32 0.0, %v2582
        %v2584 = vpop.f32.mrf.mxu0
        %2585 = vmatprep.mubr.bf16.mxu0 0
        %2586 = vmatmul.mubr.bf16.gmra.mxu0 %v2489
        %v2587 = vpop.f32.mrf.mxu0
        %v2588 = vadd.f32 0.0, %v2587
        %v2589 = vpop.f32.mrf.mxu0
        %v2590 = vpop.f32.mrf.mxu0
        %v2591 = vadd.f32 0.0, %v2590
        %v2592 = vpop.f32.mrf.mxu0
        %2593 = vmatprep.mubr.bf16.mxu0 0
        %2594 = vmatmul.mubr.bf16.gmra.mxu0 %v2492
        %v2595 = vpop.f32.mrf.mxu0
        %v2596 = vadd.f32 0.0, %v2595
        %v2597 = vpop.f32.mrf.mxu0
        %v2598 = vpop.f32.mrf.mxu0
        %v2599 = vadd.f32 0.0, %v2598
        %v2600 = vpop.f32.mrf.mxu0
        %2601 = vmatprep.mubr.bf16.mxu0 0
        %2602 = vmatmul.mubr.bf16.gmra.mxu0 %v2495
        %v2603 = vpop.f32.mrf.mxu0
        %v2604 = vadd.f32 0.0, %v2603
        %v2605 = vpop.f32.mrf.mxu0
        %v2606 = vpop.f32.mrf.mxu0
        %v2607 = vadd.f32 0.0, %v2606
        %v2608 = vpop.f32.mrf.mxu0
        %2609 = vmatprep.mubr.bf16.mxu0 0
        %2610 = vmatmul.mubr.bf16.gmra.mxu0 %v2498
        %v2611 = vpop.f32.mrf.mxu0
        %v2612 = vadd.f32 0.0, %v2611
        %v2613 = vpop.f32.mrf.mxu0
        %v2614 = vpop.f32.mrf.mxu0
        %v2615 = vadd.f32 0.0, %v2614
        %v2616 = vpop.f32.mrf.mxu0
        %2617 = vmatprep.mubr.bf16.mxu0 0
        %2618 = vmatmul.mubr.bf16.gmra.mxu0 %v2501
        %v2619 = vpop.f32.mrf.mxu0
        %v2620 = vadd.f32 0.0, %v2619
        %v2621 = vpop.f32.mrf.mxu0
        %v2622 = vpop.f32.mrf.mxu0
        %v2623 = vadd.f32 0.0, %v2622
        %v2624 = vpop.f32.mrf.mxu0
        %2625 = vmatprep.mubr.bf16.mxu0 0
        %2626 = vmatmul.mubr.bf16.gmra.mxu0 %v2504
        %v2627 = vpop.f32.mrf.mxu0
        %v2628 = vadd.f32 0.0, %v2627
        %v2629 = vpop.f32.mrf.mxu0
        %v2630 = vpop.f32.mrf.mxu0
        %v2631 = vadd.f32 0.0, %v2630
        %v2632 = vpop.f32.mrf.mxu0
        %2633 = vmatprep.mubr.bf16.mxu0 0
        %2634 = vmatmul.mubr.bf16.gmra.mxu0 %v2507
        %v2635 = vpop.f32.mrf.mxu0
        %v2636 = vadd.f32 0.0, %v2635
        %v2637 = vpop.f32.mrf.mxu0
        %v2638 = vpop.f32.mrf.mxu0
        %v2639 = vadd.f32 0.0, %v2638
        %v2640 = vpop.f32.mrf.mxu0
        %2641 = vmatprep.mubr.bf16.mxu0 0
        %2642 = vmatmul.mubr.bf16.gmra.mxu0 %v2510
        %v2643 = vpop.f32.mrf.mxu0
        %v2644 = vadd.f32 0.0, %v2643
        %v2645 = vpop.f32.mrf.mxu0
        %v2646 = vpop.f32.mrf.mxu0
        %v2647 = vadd.f32 0.0, %v2646
        %v2648 = vpop.f32.mrf.mxu0
        %2649 = vmatprep.mubr.bf16.mxu0 0
        %2650 = vmatmul.mubr.bf16.gmra.mxu0 %v2513
        %v2651 = vpop.f32.mrf.mxu0
        %v2652 = vadd.f32 0.0, %v2651
        %v2653 = vpop.f32.mrf.mxu0
        %v2654 = vpop.f32.mrf.mxu0
        %v2655 = vadd.f32 0.0, %v2654
        %v2656 = vpop.f32.mrf.mxu0
        %2657 = vmatprep.mubr.bf16.mxu0 0
        %2658 = vmatmul.mubr.bf16.gmra.mxu0 %v2516
        %v2659 = vpop.f32.mrf.mxu0
        %v2660 = vadd.f32 0.0, %v2659
        %v2661 = vpop.f32.mrf.mxu0
        %v2662 = vpop.f32.mrf.mxu0
        %v2663 = vadd.f32 0.0, %v2662
        %v2664 = vpop.f32.mrf.mxu0
        %2665 = vmatprep.mubr.bf16.mxu0 0
        %2666 = vmatmul.mubr.bf16.gmra.mxu0 %v2519
        %v2667 = vpop.f32.mrf.mxu0
        %v2668 = vadd.f32 0.0, %v2667
        %v2669 = vpop.f32.mrf.mxu0
        %v2670 = vpop.f32.mrf.mxu0
        %v2671 = vadd.f32 0.0, %v2670
        %v2672 = vpop.f32.mrf.mxu0
        %2673 = vmatprep.mubr.bf16.mxu0 0
        %2674 = vmatmul.mubr.bf16.gmra.mxu0 %v2522
        %v2675 = vpop.f32.mrf.mxu0
        %v2676 = vadd.f32 0.0, %v2675
        %v2677 = vpop.f32.mrf.mxu0
        %v2678 = vpop.f32.mrf.mxu0
        %v2679 = vadd.f32 0.0, %v2678
        %v2680 = vpop.f32.mrf.mxu0
        %2681 = vmatprep.mubr.bf16.mxu0 0
        %2682 = vmatmul.mubr.bf16.gmra.mxu0 %v2525
        %v2683 = vpop.f32.mrf.mxu0
        %v2684 = vadd.f32 0.0, %v2683
        %v2685 = vpop.f32.mrf.mxu0
        %v2686 = vpop.f32.mrf.mxu0
        %v2687 = vadd.f32 0.0, %v2686
        %v2688 = vpop.f32.mrf.mxu0
        %2689 = vmatprep.mubr.bf16.mxu0 0
        %2690 = vmatmul.mubr.bf16.gmra.mxu0 %v2528
        %v2691 = vpop.f32.mrf.mxu0
        %v2692 = vadd.f32 0.0, %v2691
        %v2693 = vpop.f32.mrf.mxu0
        %v2694 = vpop.f32.mrf.mxu0
        %v2695 = vadd.f32 0.0, %v2694
        %v2696 = vpop.f32.mrf.mxu0
        %2697 = vdwg.mxu0
        %v2698 = vmul.f32 %v2572, 0.11111111
        %v2699 = vmul.f32 %v2575, 0.11111111
        %v2700 = vmul.f32 %v2580, 0.11111111
        %v2701 = vmul.f32 %v2583, 0.11111111
        %v2702 = vmul.f32 %v2588, 0.11111111
        %v2703 = vmul.f32 %v2591, 0.11111111
        %v2704 = vmul.f32 %v2596, 0.11111111
        %v2705 = vmul.f32 %v2599, 0.11111111
        %v2706 = vmul.f32 %v2604, 0.11111111
        %v2707 = vmul.f32 %v2607, 0.11111111
        %v2708 = vmul.f32 %v2612, 0.11111111
        %v2709 = vmul.f32 %v2615, 0.11111111
        %v2710 = vmul.f32 %v2620, 0.11111111
        %v2711 = vmul.f32 %v2623, 0.11111111
        %v2712 = vmul.f32 %v2628, 0.11111111
        %v2713 = vmul.f32 %v2631, 0.11111111
        %v2714 = vmul.f32 %v2636, 0.11111111
        %v2715 = vmul.f32 %v2639, 0.11111111
        %v2716 = vmul.f32 %v2644, 0.11111111
        %v2717 = vmul.f32 %v2647, 0.11111111
        %v2718 = vmul.f32 %v2652, 0.11111111
        %v2719 = vmul.f32 %v2655, 0.11111111
        %v2720 = vmul.f32 %v2660, 0.11111111
        %v2721 = vmul.f32 %v2663, 0.11111111
        %v2722 = vmul.f32 %v2668, 0.11111111
        %v2723 = vmul.f32 %v2671, 0.11111111
        %v2724 = vmul.f32 %v2676, 0.11111111
        %v2725 = vmul.f32 %v2679, 0.11111111
        %v2726 = vmul.f32 %v2684, 0.11111111
        %v2727 = vmul.f32 %v2687, 0.11111111
        %v2728 = vmul.f32 %v2692, 0.11111111
        %v2729 = vmul.f32 %v2695, 0.11111111
        %vm2730 = vcmp.ge.f32.partialorder %v2698, 0.01
        %vm2731 = vcmp.ge.f32.partialorder %v2699, 0.01
        %vm2732 = vcmp.ge.f32.partialorder %v2700, 0.01
        %vm2733 = vcmp.ge.f32.partialorder %v2701, 0.01
        %vm2734 = vcmp.ge.f32.partialorder %v2702, 0.01
        %vm2735 = vcmp.ge.f32.partialorder %v2703, 0.01
        %vm2736 = vcmp.ge.f32.partialorder %v2704, 0.01
        %vm2737 = vcmp.ge.f32.partialorder %v2705, 0.01
        %vm2738 = vcmp.ge.f32.partialorder %v2706, 0.01
        %vm2739 = vcmp.ge.f32.partialorder %v2707, 0.01
        %vm2740 = vcmp.ge.f32.partialorder %v2708, 0.01
        %vm2741 = vcmp.ge.f32.partialorder %v2709, 0.01
        %vm2742 = vcmp.ge.f32.partialorder %v2710, 0.01
        %vm2743 = vcmp.ge.f32.partialorder %v2711, 0.01
        %vm2744 = vcmp.ge.f32.partialorder %v2712, 0.01
        %vm2745 = vcmp.ge.f32.partialorder %v2713, 0.01
        %vm2746 = vcmp.ge.f32.partialorder %v2714, 0.01
        %vm2747 = vcmp.ge.f32.partialorder %v2715, 0.01
        %vm2748 = vcmp.ge.f32.partialorder %v2716, 0.01
        %vm2749 = vcmp.ge.f32.partialorder %v2717, 0.01
        %vm2750 = vcmp.ge.f32.partialorder %v2718, 0.01
        %vm2751 = vcmp.ge.f32.partialorder %v2719, 0.01
        %vm2752 = vcmp.ge.f32.partialorder %v2720, 0.01
        %vm2753 = vcmp.ge.f32.partialorder %v2721, 0.01
        %vm2754 = vcmp.ge.f32.partialorder %v2722, 0.01
        %vm2755 = vcmp.ge.f32.partialorder %v2723, 0.01
        %vm2756 = vcmp.ge.f32.partialorder %v2724, 0.01
        %vm2757 = vcmp.ge.f32.partialorder %v2725, 0.01
        %vm2758 = vcmp.ge.f32.partialorder %v2726, 0.01
        %vm2759 = vcmp.ge.f32.partialorder %v2727, 0.01
        %vm2760 = vcmp.ge.f32.partialorder %v2728, 0.01
        %vm2761 = vcmp.ge.f32.partialorder %v2729, 0.01
        %v2762 = vsel %vm2730, 1, 0
        %v2763 = vsel %vm2731, 1, 0
        %v2764 = vsel %vm2732, 1, 0
        %v2765 = vsel %vm2733, 1, 0
        %v2766 = vsel %vm2734, 1, 0
        %v2767 = vsel %vm2735, 1, 0
        %v2768 = vsel %vm2736, 1, 0
        %v2769 = vsel %vm2737, 1, 0
        %v2770 = vsel %vm2738, 1, 0
        %v2771 = vsel %vm2739, 1, 0
        %v2772 = vsel %vm2740, 1, 0
        %v2773 = vsel %vm2741, 1, 0
        %v2774 = vsel %vm2742, 1, 0
        %v2775 = vsel %vm2743, 1, 0
        %v2776 = vsel %vm2744, 1, 0
        %v2777 = vsel %vm2745, 1, 0
        %v2778 = vsel %vm2746, 1, 0
        %v2779 = vsel %vm2747, 1, 0
        %v2780 = vsel %vm2748, 1, 0
        %v2781 = vsel %vm2749, 1, 0
        %v2782 = vsel %vm2750, 1, 0
        %v2783 = vsel %vm2751, 1, 0
        %v2784 = vsel %vm2752, 1, 0
        %v2785 = vsel %vm2753, 1, 0
        %v2786 = vsel %vm2754, 1, 0
        %v2787 = vsel %vm2755, 1, 0
        %v2788 = vsel %vm2756, 1, 0
        %v2789 = vsel %vm2757, 1, 0
        %v2790 = vsel %vm2758, 1, 0
        %v2791 = vsel %vm2759, 1, 0
        %v2792 = vsel %vm2760, 1, 0
        %v2793 = vsel %vm2761, 1, 0
        %v2794 = vcvt.s32.f32 %v2762
        %v2795 = vcvt.s32.f32 %v2763
        %v2796 = vcvt.s32.f32 %v2764
        %v2797 = vcvt.s32.f32 %v2765
        %v2798 = vcvt.s32.f32 %v2766
        %v2799 = vcvt.s32.f32 %v2767
        %v2800 = vcvt.s32.f32 %v2768
        %v2801 = vcvt.s32.f32 %v2769
        %v2802 = vcvt.s32.f32 %v2770
        %v2803 = vcvt.s32.f32 %v2771
        %v2804 = vcvt.s32.f32 %v2772
        %v2805 = vcvt.s32.f32 %v2773
        %v2806 = vcvt.s32.f32 %v2774
        %v2807 = vcvt.s32.f32 %v2775
        %v2808 = vcvt.s32.f32 %v2776
        %v2809 = vcvt.s32.f32 %v2777
        %v2810 = vcvt.s32.f32 %v2778
        %v2811 = vcvt.s32.f32 %v2779
        %v2812 = vcvt.s32.f32 %v2780
        %v2813 = vcvt.s32.f32 %v2781
        %v2814 = vcvt.s32.f32 %v2782
        %v2815 = vcvt.s32.f32 %v2783
        %v2816 = vcvt.s32.f32 %v2784
        %v2817 = vcvt.s32.f32 %v2785
        %v2818 = vcvt.s32.f32 %v2786
        %v2819 = vcvt.s32.f32 %v2787
        %v2820 = vcvt.s32.f32 %v2788
        %v2821 = vcvt.s32.f32 %v2789
        %v2822 = vcvt.s32.f32 %v2790
        %v2823 = vcvt.s32.f32 %v2791
        %v2824 = vcvt.s32.f32 %v2792
        %v2825 = vcvt.s32.f32 %v2793
        %v2826 = vadd.f32 %v2698, 1e-08
        %v2827 = vadd.f32 %v2699, 1e-08
        %v2828 = vadd.f32 %v2700, 1e-08
        %v2829 = vadd.f32 %v2701, 1e-08
        %v2830 = vadd.f32 %v2702, 1e-08
        %v2831 = vadd.f32 %v2703, 1e-08
        %v2832 = vadd.f32 %v2704, 1e-08
        %v2833 = vadd.f32 %v2705, 1e-08
        %v2834 = vadd.f32 %v2706, 1e-08
        %v2835 = vadd.f32 %v2707, 1e-08
        %v2836 = vadd.f32 %v2708, 1e-08
        %v2837 = vadd.f32 %v2709, 1e-08
        %v2838 = vadd.f32 %v2710, 1e-08
        %v2839 = vadd.f32 %v2711, 1e-08
        %v2840 = vadd.f32 %v2712, 1e-08
        %v2841 = vadd.f32 %v2713, 1e-08
        %v2842 = vadd.f32 %v2714, 1e-08
        %v2843 = vadd.f32 %v2715, 1e-08
        %v2844 = vadd.f32 %v2716, 1e-08
        %v2845 = vadd.f32 %v2717, 1e-08
        %v2846 = vadd.f32 %v2718, 1e-08
        %v2847 = vadd.f32 %v2719, 1e-08
        %v2848 = vadd.f32 %v2720, 1e-08
        %v2849 = vadd.f32 %v2721, 1e-08
        %v2850 = vadd.f32 %v2722, 1e-08
        %v2851 = vadd.f32 %v2723, 1e-08
        %v2852 = vadd.f32 %v2724, 1e-08
        %v2853 = vadd.f32 %v2725, 1e-08
        %v2854 = vadd.f32 %v2726, 1e-08
        %v2855 = vadd.f32 %v2727, 1e-08
        %v2856 = vadd.f32 %v2728, 1e-08
        %v2857 = vadd.f32 %v2729, 1e-08
        %v2858 = vrcp.pop %v2826
        %v2859 = vrcp.pop %v2827
        %v2860 = vrcp.pop %v2828
        %v2861 = vrcp.pop %v2829
        %v2862 = vrcp.pop %v2830
        %v2863 = vrcp.pop %v2831
        %v2864 = vrcp.pop %v2832
        %v2865 = vrcp.pop %v2833
        %v2866 = vrcp.pop %v2834
        %v2867 = vrcp.pop %v2835
        %v2868 = vrcp.pop %v2836
        %v2869 = vrcp.pop %v2837
        %v2870 = vrcp.pop %v2838
        %v2871 = vrcp.pop %v2839
        %v2872 = vrcp.pop %v2840
        %v2873 = vrcp.pop %v2841
        %v2874 = vrcp.pop %v2842
        %v2875 = vrcp.pop %v2843
        %v2876 = vrcp.pop %v2844
        %v2877 = vrcp.pop %v2845
        %v2878 = vrcp.pop %v2846
        %v2879 = vrcp.pop %v2847
        %v2880 = vrcp.pop %v2848
        %v2881 = vrcp.pop %v2849
        %v2882 = vrcp.pop %v2850
        %v2883 = vrcp.pop %v2851
        %v2884 = vrcp.pop %v2852
        %v2885 = vrcp.pop %v2853
        %v2886 = vrcp.pop %v2854
        %v2887 = vrcp.pop %v2855
        %v2888 = vrcp.pop %v2856
        %v2889 = vrcp.pop %v2857
        %v2890 = vmul.f32 %v2826, %v2858
        %v2891 = vmul.f32 %v2827, %v2859
        %v2892 = vmul.f32 %v2828, %v2860
        %v2893 = vmul.f32 %v2829, %v2861
        %v2894 = vmul.f32 %v2830, %v2862
        %v2895 = vmul.f32 %v2831, %v2863
        %v2896 = vmul.f32 %v2832, %v2864
        %v2897 = vmul.f32 %v2833, %v2865
        %v2898 = vmul.f32 %v2834, %v2866
        %v2899 = vmul.f32 %v2835, %v2867
        %v2900 = vmul.f32 %v2836, %v2868
        %v2901 = vmul.f32 %v2837, %v2869
        %v2902 = vmul.f32 %v2838, %v2870
        %v2903 = vmul.f32 %v2839, %v2871
        %v2904 = vmul.f32 %v2840, %v2872
        %v2905 = vmul.f32 %v2841, %v2873
        %v2906 = vmul.f32 %v2842, %v2874
        %v2907 = vmul.f32 %v2843, %v2875
        %v2908 = vmul.f32 %v2844, %v2876
        %v2909 = vmul.f32 %v2845, %v2877
        %v2910 = vmul.f32 %v2846, %v2878
        %v2911 = vmul.f32 %v2847, %v2879
        %v2912 = vmul.f32 %v2848, %v2880
        %v2913 = vmul.f32 %v2849, %v2881
        %v2914 = vmul.f32 %v2850, %v2882
        %v2915 = vmul.f32 %v2851, %v2883
        %v2916 = vmul.f32 %v2852, %v2884
        %v2917 = vmul.f32 %v2853, %v2885
        %v2918 = vmul.f32 %v2854, %v2886
        %v2919 = vmul.f32 %v2855, %v2887
        %v2920 = vmul.f32 %v2856, %v2888
        %v2921 = vmul.f32 %v2857, %v2889
        %v2922 = vsub.f32 2.0, %v2890
        %v2923 = vsub.f32 2.0, %v2891
        %v2924 = vsub.f32 2.0, %v2892
        %v2925 = vsub.f32 2.0, %v2893
        %v2926 = vsub.f32 2.0, %v2894
        %v2927 = vsub.f32 2.0, %v2895
        %v2928 = vsub.f32 2.0, %v2896
        %v2929 = vsub.f32 2.0, %v2897
        %v2930 = vsub.f32 2.0, %v2898
        %v2931 = vsub.f32 2.0, %v2899
        %v2932 = vsub.f32 2.0, %v2900
        %v2933 = vsub.f32 2.0, %v2901
        %v2934 = vsub.f32 2.0, %v2902
        %v2935 = vsub.f32 2.0, %v2903
        %v2936 = vsub.f32 2.0, %v2904
        %v2937 = vsub.f32 2.0, %v2905
        %v2938 = vsub.f32 2.0, %v2906
        %v2939 = vsub.f32 2.0, %v2907
        %v2940 = vsub.f32 2.0, %v2908
        %v2941 = vsub.f32 2.0, %v2909
        %v2942 = vsub.f32 2.0, %v2910
        %v2943 = vsub.f32 2.0, %v2911
        %v2944 = vsub.f32 2.0, %v2912
        %v2945 = vsub.f32 2.0, %v2913
        %v2946 = vsub.f32 2.0, %v2914
        %v2947 = vsub.f32 2.0, %v2915
        %v2948 = vsub.f32 2.0, %v2916
        %v2949 = vsub.f32 2.0, %v2917
        %v2950 = vsub.f32 2.0, %v2918
        %v2951 = vsub.f32 2.0, %v2919
        %v2952 = vsub.f32 2.0, %v2920
        %v2953 = vsub.f32 2.0, %v2921
        %v2954 = vmul.f32 %v2858, %v2922
        %v2955 = vmul.f32 %v2859, %v2923
        %v2956 = vmul.f32 %v2860, %v2924
        %v2957 = vmul.f32 %v2861, %v2925
        %v2958 = vmul.f32 %v2862, %v2926
        %v2959 = vmul.f32 %v2863, %v2927
        %v2960 = vmul.f32 %v2864, %v2928
        %v2961 = vmul.f32 %v2865, %v2929
        %v2962 = vmul.f32 %v2866, %v2930
        %v2963 = vmul.f32 %v2867, %v2931
        %v2964 = vmul.f32 %v2868, %v2932
        %v2965 = vmul.f32 %v2869, %v2933
        %v2966 = vmul.f32 %v2870, %v2934
        %v2967 = vmul.f32 %v2871, %v2935
        %v2968 = vmul.f32 %v2872, %v2936
        %v2969 = vmul.f32 %v2873, %v2937
        %v2970 = vmul.f32 %v2874, %v2938
        %v2971 = vmul.f32 %v2875, %v2939
        %v2972 = vmul.f32 %v2876, %v2940
        %v2973 = vmul.f32 %v2877, %v2941
        %v2974 = vmul.f32 %v2878, %v2942
        %v2975 = vmul.f32 %v2879, %v2943
        %v2976 = vmul.f32 %v2880, %v2944
        %v2977 = vmul.f32 %v2881, %v2945
        %v2978 = vmul.f32 %v2882, %v2946
        %v2979 = vmul.f32 %v2883, %v2947
        %v2980 = vmul.f32 %v2884, %v2948
        %v2981 = vmul.f32 %v2885, %v2949
        %v2982 = vmul.f32 %v2886, %v2950
        %v2983 = vmul.f32 %v2887, %v2951
        %v2984 = vmul.f32 %v2888, %v2952
        %v2985 = vmul.f32 %v2889, %v2953
        %v2986 = vmul.f32 %v2954, %v2794
        %v2987 = vmul.f32 %v2955, %v2795
        %v2988 = vmul.f32 %v2956, %v2796
        %v2989 = vmul.f32 %v2957, %v2797
        %v2990 = vmul.f32 %v2958, %v2798
        %v2991 = vmul.f32 %v2959, %v2799
        %v2992 = vmul.f32 %v2960, %v2800
        %v2993 = vmul.f32 %v2961, %v2801
        %v2994 = vmul.f32 %v2962, %v2802
        %v2995 = vmul.f32 %v2963, %v2803
        %v2996 = vmul.f32 %v2964, %v2804
        %v2997 = vmul.f32 %v2965, %v2805
        %v2998 = vmul.f32 %v2966, %v2806
        %v2999 = vmul.f32 %v2967, %v2807
        %v3000 = vmul.f32 %v2968, %v2808
        %v3001 = vmul.f32 %v2969, %v2809
        %v3002 = vmul.f32 %v2970, %v2810
        %v3003 = vmul.f32 %v2971, %v2811
        %v3004 = vmul.f32 %v2972, %v2812
        %v3005 = vmul.f32 %v2973, %v2813
        %v3006 = vmul.f32 %v2974, %v2814
        %v3007 = vmul.f32 %v2975, %v2815
        %v3008 = vmul.f32 %v2976, %v2816
        %v3009 = vmul.f32 %v2977, %v2817
        %v3010 = vmul.f32 %v2978, %v2818
        %v3011 = vmul.f32 %v2979, %v2819
        %v3012 = vmul.f32 %v2980, %v2820
        %v3013 = vmul.f32 %v2981, %v2821
        %v3014 = vmul.f32 %v2982, %v2822
        %v3015 = vmul.f32 %v2983, %v2823
        %v3016 = vmul.f32 %v2984, %v2824
        %v3017 = vmul.f32 %v2985, %v2825
        %3019 = vset.pattern.permute.xlu0 8
        %3020 = vperm.xlu0 %3019, %v2986
        %v3021 = vpop.permute.xlu0 %3020
        %3024 = vset.pattern.permute.xlu0 8
        %3025 = vperm.xlu0 %3024, %v2987
        %v3026 = vpop.permute.xlu0 %3025
        %3029 = vset.pattern.permute.xlu0 8
        %3030 = vperm.xlu0 %3029, %v2988
        %v3031 = vpop.permute.xlu0 %3030
        %3034 = vset.pattern.permute.xlu0 8
        %3035 = vperm.xlu0 %3034, %v2989
        %v3036 = vpop.permute.xlu0 %3035
        %3039 = vset.pattern.permute.xlu0 8
        %3040 = vperm.xlu0 %3039, %v2990
        %v3041 = vpop.permute.xlu0 %3040
        %3044 = vset.pattern.permute.xlu0 8
        %3045 = vperm.xlu0 %3044, %v2991
        %v3046 = vpop.permute.xlu0 %3045
        %3049 = vset.pattern.permute.xlu0 8
        %3050 = vperm.xlu0 %3049, %v2992
        %v3051 = vpop.permute.xlu0 %3050
        %3054 = vset.pattern.permute.xlu0 8
        %3055 = vperm.xlu0 %3054, %v2993
        %v3056 = vpop.permute.xlu0 %3055
        %3059 = vset.pattern.permute.xlu0 8
        %3060 = vperm.xlu0 %3059, %v2994
        %v3061 = vpop.permute.xlu0 %3060
        %3064 = vset.pattern.permute.xlu0 8
        %3065 = vperm.xlu0 %3064, %v2995
        %v3066 = vpop.permute.xlu0 %3065
        %3069 = vset.pattern.permute.xlu0 8
        %3070 = vperm.xlu0 %3069, %v2996
        %v3071 = vpop.permute.xlu0 %3070
        %3074 = vset.pattern.permute.xlu0 8
        %3075 = vperm.xlu0 %3074, %v2997
        %v3076 = vpop.permute.xlu0 %3075
        %3079 = vset.pattern.permute.xlu0 8
        %3080 = vperm.xlu0 %3079, %v2998
        %v3081 = vpop.permute.xlu0 %3080
        %3084 = vset.pattern.permute.xlu0 8
        %3085 = vperm.xlu0 %3084, %v2999
        %v3086 = vpop.permute.xlu0 %3085
        %3089 = vset.pattern.permute.xlu0 8
        %3090 = vperm.xlu0 %3089, %v3000
        %v3091 = vpop.permute.xlu0 %3090
        %3094 = vset.pattern.permute.xlu0 8
        %3095 = vperm.xlu0 %3094, %v3001
        %v3096 = vpop.permute.xlu0 %3095
        %3099 = vset.pattern.permute.xlu0 8
        %3100 = vperm.xlu0 %3099, %v3002
        %v3101 = vpop.permute.xlu0 %3100
        %3104 = vset.pattern.permute.xlu0 8
        %3105 = vperm.xlu0 %3104, %v3003
        %v3106 = vpop.permute.xlu0 %3105
        %3109 = vset.pattern.permute.xlu0 8
        %3110 = vperm.xlu0 %3109, %v3004
        %v3111 = vpop.permute.xlu0 %3110
        %3114 = vset.pattern.permute.xlu0 8
        %3115 = vperm.xlu0 %3114, %v3005
        %v3116 = vpop.permute.xlu0 %3115
        %3119 = vset.pattern.permute.xlu0 8
        %3120 = vperm.xlu0 %3119, %v3006
        %v3121 = vpop.permute.xlu0 %3120
        %3124 = vset.pattern.permute.xlu0 8
        %3125 = vperm.xlu0 %3124, %v3007
        %v3126 = vpop.permute.xlu0 %3125
        %3129 = vset.pattern.permute.xlu0 8
        %3130 = vperm.xlu0 %3129, %v3008
        %v3131 = vpop.permute.xlu0 %3130
        %3134 = vset.pattern.permute.xlu0 8
        %3135 = vperm.xlu0 %3134, %v3009
        %v3136 = vpop.permute.xlu0 %3135
        %3139 = vset.pattern.permute.xlu0 8
        %3140 = vperm.xlu0 %3139, %v3010
        %v3141 = vpop.permute.xlu0 %3140
        %3144 = vset.pattern.permute.xlu0 8
        %3145 = vperm.xlu0 %3144, %v3011
        %v3146 = vpop.permute.xlu0 %3145
        %3149 = vset.pattern.permute.xlu0 8
        %3150 = vperm.xlu0 %3149, %v3012
        %v3151 = vpop.permute.xlu0 %3150
        %3154 = vset.pattern.permute.xlu0 8
        %3155 = vperm.xlu0 %3154, %v3013
        %v3156 = vpop.permute.xlu0 %3155
        %3159 = vset.pattern.permute.xlu0 8
        %3160 = vperm.xlu0 %3159, %v3014
        %v3161 = vpop.permute.xlu0 %3160
        %3164 = vset.pattern.permute.xlu0 8
        %3165 = vperm.xlu0 %3164, %v3015
        %v3166 = vpop.permute.xlu0 %3165
        %3169 = vset.pattern.permute.xlu0 8
        %3170 = vperm.xlu0 %3169, %v3016
        %v3171 = vpop.permute.xlu0 %3170
        %3174 = vset.pattern.permute.xlu0 8
        %3175 = vperm.xlu0 %3174, %v3017
        %v3176 = vpop.permute.xlu0 %3175
        %v3178 = vmul.f32 %v2572, %v3021
        %v3179 = vmul.f32 %v2575, %v3026
        %v3180 = vmul.f32 %v2580, %v3031
        %v3181 = vmul.f32 %v2583, %v3036
        %v3182 = vmul.f32 %v2588, %v3041
        %v3183 = vmul.f32 %v2591, %v3046
        %v3184 = vmul.f32 %v2596, %v3051
        %v3185 = vmul.f32 %v2599, %v3056
        %v3186 = vmul.f32 %v2604, %v3061
        %v3187 = vmul.f32 %v2607, %v3066
        %v3188 = vmul.f32 %v2612, %v3071
        %v3189 = vmul.f32 %v2615, %v3076
        %v3190 = vmul.f32 %v2620, %v3081
        %v3191 = vmul.f32 %v2623, %v3086
        %v3192 = vmul.f32 %v2628, %v3091
        %v3193 = vmul.f32 %v2631, %v3096
        %v3194 = vmul.f32 %v2636, %v3101
        %v3195 = vmul.f32 %v2639, %v3106
        %v3196 = vmul.f32 %v2644, %v3111
        %v3197 = vmul.f32 %v2647, %v3116
        %v3198 = vmul.f32 %v2652, %v3121
        %v3199 = vmul.f32 %v2655, %v3126
        %v3200 = vmul.f32 %v2660, %v3131
        %v3201 = vmul.f32 %v2663, %v3136
        %v3202 = vmul.f32 %v2668, %v3141
        %v3203 = vmul.f32 %v2671, %v3146
        %v3204 = vmul.f32 %v2676, %v3151
        %v3205 = vmul.f32 %v2679, %v3156
        %v3206 = vmul.f32 %v2684, %v3161
        %v3207 = vmul.f32 %v2687, %v3166
        %v3208 = vmul.f32 %v2692, %v3171
        %v3209 = vmul.f32 %v2695, %v3176
        %v3210 = vld [vmem:[%s3] sm:$0x1]
        %v3212 = vlaneseq
        %v3213 = vshrl.u32 %v3212, 7
        %v3214 = vsub.s32 0, %v3213
        %v3215 = vrot.slane %v3210, %v3214
        %3218 = vset.pattern.permute.xlu0 8
        %3219 = vperm.xlu0 %3218, %v2794
        %v3220 = vpop.permute.xlu0 %3219
        %3223 = vset.pattern.permute.xlu0 8
        %3224 = vperm.xlu0 %3223, %v2795
        %v3225 = vpop.permute.xlu0 %3224
        %3228 = vset.pattern.permute.xlu0 8
        %3229 = vperm.xlu0 %3228, %v2796
        %v3230 = vpop.permute.xlu0 %3229
        %3233 = vset.pattern.permute.xlu0 8
        %3234 = vperm.xlu0 %3233, %v2797
        %v3235 = vpop.permute.xlu0 %3234
        %3238 = vset.pattern.permute.xlu0 8
        %3239 = vperm.xlu0 %3238, %v2798
        %v3240 = vpop.permute.xlu0 %3239
        %3243 = vset.pattern.permute.xlu0 8
        %3244 = vperm.xlu0 %3243, %v2799
        %v3245 = vpop.permute.xlu0 %3244
        %3248 = vset.pattern.permute.xlu0 8
        %3249 = vperm.xlu0 %3248, %v2800
        %v3250 = vpop.permute.xlu0 %3249
        %3253 = vset.pattern.permute.xlu0 8
        %3254 = vperm.xlu0 %3253, %v2801
        %v3255 = vpop.permute.xlu0 %3254
        %3258 = vset.pattern.permute.xlu0 8
        %3259 = vperm.xlu0 %3258, %v2802
        %v3260 = vpop.permute.xlu0 %3259
        %3263 = vset.pattern.permute.xlu0 8
        %3264 = vperm.xlu0 %3263, %v2803
        %v3265 = vpop.permute.xlu0 %3264
        %3268 = vset.pattern.permute.xlu0 8
        %3269 = vperm.xlu0 %3268, %v2804
        %v3270 = vpop.permute.xlu0 %3269
        %3273 = vset.pattern.permute.xlu0 8
        %3274 = vperm.xlu0 %3273, %v2805
        %v3275 = vpop.permute.xlu0 %3274
        %3278 = vset.pattern.permute.xlu0 8
        %3279 = vperm.xlu0 %3278, %v2806
        %v3280 = vpop.permute.xlu0 %3279
        %3283 = vset.pattern.permute.xlu0 8
        %3284 = vperm.xlu0 %3283, %v2807
        %v3285 = vpop.permute.xlu0 %3284
        %3288 = vset.pattern.permute.xlu0 8
        %3289 = vperm.xlu0 %3288, %v2808
        %v3290 = vpop.permute.xlu0 %3289
        %3293 = vset.pattern.permute.xlu0 8
        %3294 = vperm.xlu0 %3293, %v2809
        %v3295 = vpop.permute.xlu0 %3294
        %3298 = vset.pattern.permute.xlu0 8
        %3299 = vperm.xlu0 %3298, %v2810
        %v3300 = vpop.permute.xlu0 %3299
        %3303 = vset.pattern.permute.xlu0 8
        %3304 = vperm.xlu0 %3303, %v2811
        %v3305 = vpop.permute.xlu0 %3304
        %3308 = vset.pattern.permute.xlu0 8
        %3309 = vperm.xlu0 %3308, %v2812
        %v3310 = vpop.permute.xlu0 %3309
        %3313 = vset.pattern.permute.xlu0 8
        %3314 = vperm.xlu0 %3313, %v2813
        %v3315 = vpop.permute.xlu0 %3314
        %3318 = vset.pattern.permute.xlu0 8
        %3319 = vperm.xlu0 %3318, %v2814
        %v3320 = vpop.permute.xlu0 %3319
        %3323 = vset.pattern.permute.xlu0 8
        %3324 = vperm.xlu0 %3323, %v2815
        %v3325 = vpop.permute.xlu0 %3324
        %3328 = vset.pattern.permute.xlu0 8
        %3329 = vperm.xlu0 %3328, %v2816
        %v3330 = vpop.permute.xlu0 %3329
        %3333 = vset.pattern.permute.xlu0 8
        %3334 = vperm.xlu0 %3333, %v2817
        %v3335 = vpop.permute.xlu0 %3334
        %3338 = vset.pattern.permute.xlu0 8
        %3339 = vperm.xlu0 %3338, %v2818
        %v3340 = vpop.permute.xlu0 %3339
        %3343 = vset.pattern.permute.xlu0 8
        %3344 = vperm.xlu0 %3343, %v2819
        %v3345 = vpop.permute.xlu0 %3344
        %3348 = vset.pattern.permute.xlu0 8
        %3349 = vperm.xlu0 %3348, %v2820
        %v3350 = vpop.permute.xlu0 %3349
        %3353 = vset.pattern.permute.xlu0 8
        %3354 = vperm.xlu0 %3353, %v2821
        %v3355 = vpop.permute.xlu0 %3354
        %3358 = vset.pattern.permute.xlu0 8
        %3359 = vperm.xlu0 %3358, %v2822
        %v3360 = vpop.permute.xlu0 %3359
        %3363 = vset.pattern.permute.xlu0 8
        %3364 = vperm.xlu0 %3363, %v2823
        %v3365 = vpop.permute.xlu0 %3364
        %3368 = vset.pattern.permute.xlu0 8
        %3369 = vperm.xlu0 %3368, %v2824
        %v3370 = vpop.permute.xlu0 %3369
        %3373 = vset.pattern.permute.xlu0 8
        %3374 = vperm.xlu0 %3373, %v2825
        %v3375 = vpop.permute.xlu0 %3374
        %v3377 = vmul.f32 %v3215, %v3220
        %v3378 = vmul.f32 %v3215, %v3225
        %v3379 = vmul.f32 %v3215, %v3230
        %v3380 = vmul.f32 %v3215, %v3235
        %v3381 = vmul.f32 %v3215, %v3240
        %v3382 = vmul.f32 %v3215, %v3245
        %v3383 = vmul.f32 %v3215, %v3250
        %v3384 = vmul.f32 %v3215, %v3255
        %v3385 = vmul.f32 %v3215, %v3260
        %v3386 = vmul.f32 %v3215, %v3265
        %v3387 = vmul.f32 %v3215, %v3270
        %v3388 = vmul.f32 %v3215, %v3275
        %v3389 = vmul.f32 %v3215, %v3280
        %v3390 = vmul.f32 %v3215, %v3285
        %v3391 = vmul.f32 %v3215, %v3290
        %v3392 = vmul.f32 %v3215, %v3295
        %v3393 = vmul.f32 %v3215, %v3300
        %v3394 = vmul.f32 %v3215, %v3305
        %v3395 = vmul.f32 %v3215, %v3310
        %v3396 = vmul.f32 %v3215, %v3315
        %v3397 = vmul.f32 %v3215, %v3320
        %v3398 = vmul.f32 %v3215, %v3325
        %v3399 = vmul.f32 %v3215, %v3330
        %v3400 = vmul.f32 %v3215, %v3335
        %v3401 = vmul.f32 %v3215, %v3340
        %v3402 = vmul.f32 %v3215, %v3345
        %v3403 = vmul.f32 %v3215, %v3350
        %v3404 = vmul.f32 %v3215, %v3355
        %v3405 = vmul.f32 %v3215, %v3360
        %v3406 = vmul.f32 %v3215, %v3365
        %v3407 = vmul.f32 %v3215, %v3370
        %v3408 = vmul.f32 %v3215, %v3375
        %v3409 = vadd.f32 %v3178, %v3377
        %v3410 = vadd.f32 %v3179, %v3378
        %v3411 = vadd.f32 %v3180, %v3379
        %v3412 = vadd.f32 %v3181, %v3380
        %v3413 = vadd.f32 %v3182, %v3381
        %v3414 = vadd.f32 %v3183, %v3382
        %v3415 = vadd.f32 %v3184, %v3383
        %v3416 = vadd.f32 %v3185, %v3384
        %v3417 = vadd.f32 %v3186, %v3385
        %v3418 = vadd.f32 %v3187, %v3386
        %v3419 = vadd.f32 %v3188, %v3387
        %v3420 = vadd.f32 %v3189, %v3388
        %v3421 = vadd.f32 %v3190, %v3389
        %v3422 = vadd.f32 %v3191, %v3390
        %v3423 = vadd.f32 %v3192, %v3391
        %v3424 = vadd.f32 %v3193, %v3392
        %v3425 = vadd.f32 %v3194, %v3393
        %v3426 = vadd.f32 %v3195, %v3394
        %v3427 = vadd.f32 %v3196, %v3395
        %v3428 = vadd.f32 %v3197, %v3396
        %v3429 = vadd.f32 %v3198, %v3397
        %v3430 = vadd.f32 %v3199, %v3398
        %v3431 = vadd.f32 %v3200, %v3399
        %v3432 = vadd.f32 %v3201, %v3400
        %v3433 = vadd.f32 %v3202, %v3401
        %v3434 = vadd.f32 %v3203, %v3402
        %v3435 = vadd.f32 %v3204, %v3403
        %v3436 = vadd.f32 %v3205, %v3404
        %v3437 = vadd.f32 %v3206, %v3405
        %v3438 = vadd.f32 %v3207, %v3406
        %v3439 = vadd.f32 %v3208, %v3407
        %v3440 = vadd.f32 %v3209, %v3408
        %vm3441 = vcmask 64512
        %v3442 = vsel %vm3441, %v3409, 0.0
        %v3443 = vsel %vm3441, %v3410, 0.0
        %v3444 = vadd.f32 %v3442, %v3443
        %v3445 = vsel %vm3441, %v3411, 0.0
        %v3446 = vadd.f32 %v3444, %v3445
        %v3447 = vsel %vm3441, %v3412, 0.0
        %v3448 = vadd.f32 %v3446, %v3447
        %v3449 = vsel %vm3441, %v3413, 0.0
        %v3450 = vadd.f32 %v3448, %v3449
        %v3451 = vsel %vm3441, %v3414, 0.0
        %v3452 = vadd.f32 %v3450, %v3451
        %v3453 = vsel %vm3441, %v3415, 0.0
        %v3454 = vadd.f32 %v3452, %v3453
        %v3455 = vsel %vm3441, %v3416, 0.0
        %v3456 = vadd.f32 %v3454, %v3455
        %v3457 = vsel %vm3441, %v3417, 0.0
        %v3458 = vadd.f32 %v3456, %v3457
        %v3459 = vsel %vm3441, %v3418, 0.0
        %v3460 = vadd.f32 %v3458, %v3459
        %v3461 = vsel %vm3441, %v3419, 0.0
        %v3462 = vadd.f32 %v3460, %v3461
        %v3463 = vsel %vm3441, %v3420, 0.0
        %v3464 = vadd.f32 %v3462, %v3463
        %v3465 = vsel %vm3441, %v3421, 0.0
        %v3466 = vadd.f32 %v3464, %v3465
        %v3467 = vsel %vm3441, %v3422, 0.0
        %v3468 = vadd.f32 %v3466, %v3467
        %v3469 = vsel %vm3441, %v3423, 0.0
        %v3470 = vadd.f32 %v3468, %v3469
        %v3471 = vsel %vm3441, %v3424, 0.0
        %v3472 = vadd.f32 %v3470, %v3471
        %v3473 = vsel %vm3441, %v3425, 0.0
        %v3474 = vadd.f32 %v3472, %v3473
        %v3475 = vsel %vm3441, %v3426, 0.0
        %v3476 = vadd.f32 %v3474, %v3475
        %v3477 = vsel %vm3441, %v3427, 0.0
        %v3478 = vadd.f32 %v3476, %v3477
        %v3479 = vsel %vm3441, %v3428, 0.0
        %v3480 = vadd.f32 %v3478, %v3479
        %v3481 = vsel %vm3441, %v3429, 0.0
        %v3482 = vadd.f32 %v3480, %v3481
        %v3483 = vsel %vm3441, %v3430, 0.0
        %v3484 = vadd.f32 %v3482, %v3483
        %v3485 = vsel %vm3441, %v3431, 0.0
        %v3486 = vadd.f32 %v3484, %v3485
        %v3487 = vsel %vm3441, %v3432, 0.0
        %v3488 = vadd.f32 %v3486, %v3487
        %v3489 = vsel %vm3441, %v3433, 0.0
        %v3490 = vadd.f32 %v3488, %v3489
        %v3491 = vsel %vm3441, %v3434, 0.0
        %v3492 = vadd.f32 %v3490, %v3491
        %v3493 = vsel %vm3441, %v3435, 0.0
        %v3494 = vadd.f32 %v3492, %v3493
        %v3495 = vsel %vm3441, %v3436, 0.0
        %v3496 = vadd.f32 %v3494, %v3495
        %v3497 = vsel %vm3441, %v3437, 0.0
        %v3498 = vadd.f32 %v3496, %v3497
        %v3499 = vsel %vm3441, %v3438, 0.0
        %v3500 = vadd.f32 %v3498, %v3499
        %v3501 = vsel %vm3441, %v3439, 0.0
        %v3502 = vadd.f32 %v3500, %v3501
        %v3503 = vsel %vm3441, %v3440, 0.0
        %v3504 = vadd.f32 %v3502, %v3503
        %v3505 = vrot.slane %v3504, 4
        %v3506 = vadd.f32 %v3504, %v3505
        %v3507 = vrot.slane %v3506, 2
        %v3508 = vadd.f32 %v3506, %v3507
        %v3509 = vrot.slane %v3508, 1
        %v3510 = vadd.f32 %v3508, %v3509
        %v3511 = vrcp.pop 256.0
        %v3512 = vmul.f32 %v3510, %v3511
        %v3513 = vld [vmem:[%s6] sm:$0xff]
        %v3515 = vsel %vm3441, %v3512, 0
        %3517 = vmatprep.subr.mxu0 0.0
        %3518 = vmatpush1.msra.mxu0 0.0
        %3519 = vmatprep.subr.mxu0 0.0
        %3520 = vmatpush1.msra.mxu0 0.0
        %3521 = vmatprep.subr.mxu0 0.0
        %3522 = vmatpush1.msra.mxu0 0.0
        %3523 = vmatprep.subr.mxu0 0.0
        %3524 = vmatpush1.msra.mxu0 0.0
        %3525 = vmatprep.subr.mxu0 0.0
        %3526 = vmatpush1.msra.mxu0 0.0
        %3527 = vmatprep.subr.mxu0 0.0
        %3528 = vmatpush1.msra.mxu0 0.0
        %3529 = vmatprep.subr.mxu0 0.0
        %3530 = vmatpush1.msra.mxu0 0.0
        %3531 = vmatprep.subr.mxu0 0.0
        %3532 = vmatpush1.msra.mxu0 0.0
        %3533 = vmatprep.subr.mxu0 0.0
        %3534 = vmatpush1.msra.mxu0 0.0
        %3535 = vmatprep.subr.mxu0 0.0
        %3536 = vmatpush1.msra.mxu0 0.0
        %3537 = vmatprep.subr.mxu0 0.0
        %3538 = vmatpush1.msra.mxu0 0.0
        %3539 = vmatprep.subr.mxu0 0.0
        %3540 = vmatpush1.msra.mxu0 0.0
        %3541 = vmatprep.subr.mxu0 0.0
        %3542 = vmatpush1.msra.mxu0 0.0
        %3543 = vmatprep.subr.mxu0 0.0
        %3544 = vmatpush1.msra.mxu0 0.0
        %3545 = vmatprep.subr.mxu0 0.0
        %3546 = vmatpush1.msra.mxu0 0.0
        %3547 = vmatprep.subr.mxu0 0.0
        %3548 = vmatpush1.msra.mxu0 %v3513
        %3549 = vmatprep.subr.mxu0 0.0
        %3550 = vmatpush2.msra.mxu0 0.0
        %3551 = vmatprep.subr.mxu0 0.0
        %3552 = vmatpush2.msra.mxu0 0.0
        %3553 = vmatprep.subr.mxu0 0.0
        %3554 = vmatpush2.msra.mxu0 0.0
        %3555 = vmatprep.subr.mxu0 0.0
        %3556 = vmatpush2.msra.mxu0 0.0
        %3557 = vmatprep.subr.mxu0 0.0
        %3558 = vmatpush2.msra.mxu0 0.0
        %3559 = vmatprep.subr.mxu0 0.0
        %3560 = vmatpush2.msra.mxu0 0.0
        %3561 = vmatprep.subr.mxu0 0.0
        %3562 = vmatpush2.msra.mxu0 0.0
        %3563 = vmatprep.subr.mxu0 0.0
        %3564 = vmatpush2.msra.mxu0 0.0
        %3565 = vmatprep.subr.mxu0 0.0
        %3566 = vmatpush2.msra.mxu0 0.0
        %3567 = vmatprep.subr.mxu0 0.0
        %3568 = vmatpush2.msra.mxu0 0.0
        %3569 = vmatprep.subr.mxu0 0.0
        %3570 = vmatpush2.msra.mxu0 0.0
        %3571 = vmatprep.subr.mxu0 0.0
        %3572 = vmatpush2.msra.mxu0 0.0
        %3573 = vmatprep.subr.mxu0 0.0
        %3574 = vmatpush2.msra.mxu0 0.0
        %3575 = vmatprep.subr.mxu0 0.0
        %3576 = vmatpush2.msra.mxu0 0.0
        %3577 = vmatprep.subr.mxu0 0.0
        %3578 = vmatpush2.msra.mxu0 0.0
        %3579 = vmatprep.subr.mxu0 0.0
        %3580 = vmatpush2.msra.mxu0 0.0
        %3581 = vmatprep.mubr.f32.mxu0 0.0
        %3582 = vmatmul.mubr.f32.gmra.mxu0 %v3515
        %v3583 = vpop.f32.mrf.mxu0
        %v3584 = vadd.f32 0.0, %v3583
        %v3585 = vpop.f32.mrf.mxu0
        %3586 = vdwg.mxu0
        %v3587 = vlaneseq
        %v3588 = vshrl.u32 %v3587, 7
        %v3589 = vsub.s32 0, %v3588
        %v3590 = vrot.slane %v3584, %v3589
        %v3591 = vsub.f32 %v3409, %v3590
        %v3592 = vsub.f32 %v3410, %v3590
        %v3593 = vsub.f32 %v3411, %v3590
        %v3594 = vsub.f32 %v3412, %v3590
        %v3595 = vsub.f32 %v3413, %v3590
        %v3596 = vsub.f32 %v3414, %v3590
        %v3597 = vsub.f32 %v3415, %v3590
        %v3598 = vsub.f32 %v3416, %v3590
        %v3599 = vsub.f32 %v3417, %v3590
        %v3600 = vsub.f32 %v3418, %v3590
        %v3601 = vsub.f32 %v3419, %v3590
        %v3602 = vsub.f32 %v3420, %v3590
        %v3603 = vsub.f32 %v3421, %v3590
        %v3604 = vsub.f32 %v3422, %v3590
        %v3605 = vsub.f32 %v3423, %v3590
        %v3606 = vsub.f32 %v3424, %v3590
        %v3607 = vsub.f32 %v3425, %v3590
        %v3608 = vsub.f32 %v3426, %v3590
        %v3609 = vsub.f32 %v3427, %v3590
        %v3610 = vsub.f32 %v3428, %v3590
        %v3611 = vsub.f32 %v3429, %v3590
        %v3612 = vsub.f32 %v3430, %v3590
        %v3613 = vsub.f32 %v3431, %v3590
        %v3614 = vsub.f32 %v3432, %v3590
        %v3615 = vsub.f32 %v3433, %v3590
        %v3616 = vsub.f32 %v3434, %v3590
        %v3617 = vsub.f32 %v3435, %v3590
        %v3618 = vsub.f32 %v3436, %v3590
        %v3619 = vsub.f32 %v3437, %v3590
        %v3620 = vsub.f32 %v3438, %v3590
        %v3621 = vsub.f32 %v3439, %v3590
        %v3622 = vsub.f32 %v3440, %v3590
        %v3623 = vmul.f32 %v3591, %v3591
        %v3624 = vmul.f32 %v3592, %v3592
        %v3625 = vmul.f32 %v3593, %v3593
        %v3626 = vmul.f32 %v3594, %v3594
        %v3627 = vmul.f32 %v3595, %v3595
        %v3628 = vmul.f32 %v3596, %v3596
        %v3629 = vmul.f32 %v3597, %v3597
        %v3630 = vmul.f32 %v3598, %v3598
        %v3631 = vmul.f32 %v3599, %v3599
        %v3632 = vmul.f32 %v3600, %v3600
        %v3633 = vmul.f32 %v3601, %v3601
        %v3634 = vmul.f32 %v3602, %v3602
        %v3635 = vmul.f32 %v3603, %v3603
        %v3636 = vmul.f32 %v3604, %v3604
        %v3637 = vmul.f32 %v3605, %v3605
        %v3638 = vmul.f32 %v3606, %v3606
        %v3639 = vmul.f32 %v3607, %v3607
        %v3640 = vmul.f32 %v3608, %v3608
        %v3641 = vmul.f32 %v3609, %v3609
        %v3642 = vmul.f32 %v3610, %v3610
        %v3643 = vmul.f32 %v3611, %v3611
        %v3644 = vmul.f32 %v3612, %v3612
        %v3645 = vmul.f32 %v3613, %v3613
        %v3646 = vmul.f32 %v3614, %v3614
        %v3647 = vmul.f32 %v3615, %v3615
        %v3648 = vmul.f32 %v3616, %v3616
        %v3649 = vmul.f32 %v3617, %v3617
        %v3650 = vmul.f32 %v3618, %v3618
        %v3651 = vmul.f32 %v3619, %v3619
        %v3652 = vmul.f32 %v3620, %v3620
        %v3653 = vmul.f32 %v3621, %v3621
        %v3654 = vmul.f32 %v3622, %v3622
        %v3655 = vsel %vm3441, %v3623, 0.0
        %v3656 = vsel %vm3441, %v3624, 0.0
        %v3657 = vadd.f32 %v3655, %v3656
        %v3658 = vsel %vm3441, %v3625, 0.0
        %v3659 = vadd.f32 %v3657, %v3658
        %v3660 = vsel %vm3441, %v3626, 0.0
        %v3661 = vadd.f32 %v3659, %v3660
        %v3662 = vsel %vm3441, %v3627, 0.0
        %v3663 = vadd.f32 %v3661, %v3662
        %v3664 = vsel %vm3441, %v3628, 0.0
        %v3665 = vadd.f32 %v3663, %v3664
        %v3666 = vsel %vm3441, %v3629, 0.0
        %v3667 = vadd.f32 %v3665, %v3666
        %v3668 = vsel %vm3441, %v3630, 0.0
        %v3669 = vadd.f32 %v3667, %v3668
        %v3670 = vsel %vm3441, %v3631, 0.0
        %v3671 = vadd.f32 %v3669, %v3670
        %v3672 = vsel %vm3441, %v3632, 0.0
        %v3673 = vadd.f32 %v3671, %v3672
        %v3674 = vsel %vm3441, %v3633, 0.0
        %v3675 = vadd.f32 %v3673, %v3674
        %v3676 = vsel %vm3441, %v3634, 0.0
        %v3677 = vadd.f32 %v3675, %v3676
        %v3678 = vsel %vm3441, %v3635, 0.0
        %v3679 = vadd.f32 %v3677, %v3678
        %v3680 = vsel %vm3441, %v3636, 0.0
        %v3681 = vadd.f32 %v3679, %v3680
        %v3682 = vsel %vm3441, %v3637, 0.0
        %v3683 = vadd.f32 %v3681, %v3682
        %v3684 = vsel %vm3441, %v3638, 0.0
        %v3685 = vadd.f32 %v3683, %v3684
        %v3686 = vsel %vm3441, %v3639, 0.0
        %v3687 = vadd.f32 %v3685, %v3686
        %v3688 = vsel %vm3441, %v3640, 0.0
        %v3689 = vadd.f32 %v3687, %v3688
        %v3690 = vsel %vm3441, %v3641, 0.0
        %v3691 = vadd.f32 %v3689, %v3690
        %v3692 = vsel %vm3441, %v3642, 0.0
        %v3693 = vadd.f32 %v3691, %v3692
        %v3694 = vsel %vm3441, %v3643, 0.0
        %v3695 = vadd.f32 %v3693, %v3694
        %v3696 = vsel %vm3441, %v3644, 0.0
        %v3697 = vadd.f32 %v3695, %v3696
        %v3698 = vsel %vm3441, %v3645, 0.0
        %v3699 = vadd.f32 %v3697, %v3698
        %v3700 = vsel %vm3441, %v3646, 0.0
        %v3701 = vadd.f32 %v3699, %v3700
        %v3702 = vsel %vm3441, %v3647, 0.0
        %v3703 = vadd.f32 %v3701, %v3702
        %v3704 = vsel %vm3441, %v3648, 0.0
        %v3705 = vadd.f32 %v3703, %v3704
        %v3706 = vsel %vm3441, %v3649, 0.0
        %v3707 = vadd.f32 %v3705, %v3706
        %v3708 = vsel %vm3441, %v3650, 0.0
        %v3709 = vadd.f32 %v3707, %v3708
        %v3710 = vsel %vm3441, %v3651, 0.0
        %v3711 = vadd.f32 %v3709, %v3710
        %v3712 = vsel %vm3441, %v3652, 0.0
        %v3713 = vadd.f32 %v3711, %v3712
        %v3714 = vsel %vm3441, %v3653, 0.0
        %v3715 = vadd.f32 %v3713, %v3714
        %v3716 = vsel %vm3441, %v3654, 0.0
        %v3717 = vadd.f32 %v3715, %v3716
        %v3718 = vrot.slane %v3717, 4
        %v3719 = vadd.f32 %v3717, %v3718
        %v3720 = vrot.slane %v3719, 2
        %v3721 = vadd.f32 %v3719, %v3720
        %v3722 = vrot.slane %v3721, 1
        %v3723 = vadd.f32 %v3721, %v3722
        %v3724 = vmul.f32 %v3723, %v3511
        %v3726 = vsel %vm3441, %v3724, 0
        %3728 = vmatprep.subr.mxu0 0.0
        %3729 = vmatpush1.msra.mxu0 0.0
        %3730 = vmatprep.subr.mxu0 0.0
        %3731 = vmatpush1.msra.mxu0 0.0
        %3732 = vmatprep.subr.mxu0 0.0
        %3733 = vmatpush1.msra.mxu0 0.0
        %3734 = vmatprep.subr.mxu0 0.0
        %3735 = vmatpush1.msra.mxu0 0.0
        %3736 = vmatprep.subr.mxu0 0.0
        %3737 = vmatpush1.msra.mxu0 0.0
        %3738 = vmatprep.subr.mxu0 0.0
        %3739 = vmatpush1.msra.mxu0 0.0
        %3740 = vmatprep.subr.mxu0 0.0
        %3741 = vmatpush1.msra.mxu0 0.0
        %3742 = vmatprep.subr.mxu0 0.0
        %3743 = vmatpush1.msra.mxu0 0.0
        %3744 = vmatprep.subr.mxu0 0.0
        %3745 = vmatpush1.msra.mxu0 0.0
        %3746 = vmatprep.subr.mxu0 0.0
        %3747 = vmatpush1.msra.mxu0 0.0
        %3748 = vmatprep.subr.mxu0 0.0
        %3749 = vmatpush1.msra.mxu0 0.0
        %3750 = vmatprep.subr.mxu0 0.0
        %3751 = vmatpush1.msra.mxu0 0.0
        %3752 = vmatprep.subr.mxu0 0.0
        %3753 = vmatpush1.msra.mxu0 0.0
        %3754 = vmatprep.subr.mxu0 0.0
        %3755 = vmatpush1.msra.mxu0 0.0
        %3756 = vmatprep.subr.mxu0 0.0
        %3757 = vmatpush1.msra.mxu0 0.0
        %3758 = vmatprep.subr.mxu0 0.0
        %3759 = vmatpush1.msra.mxu0 %v3513
        %3760 = vmatprep.subr.mxu0 0.0
        %3761 = vmatpush2.msra.mxu0 0.0
        %3762 = vmatprep.subr.mxu0 0.0
        %3763 = vmatpush2.msra.mxu0 0.0
        %3764 = vmatprep.subr.mxu0 0.0
        %3765 = vmatpush2.msra.mxu0 0.0
        %3766 = vmatprep.subr.mxu0 0.0
        %3767 = vmatpush2.msra.mxu0 0.0
        %3768 = vmatprep.subr.mxu0 0.0
        %3769 = vmatpush2.msra.mxu0 0.0
        %3770 = vmatprep.subr.mxu0 0.0
        %3771 = vmatpush2.msra.mxu0 0.0
        %3772 = vmatprep.subr.mxu0 0.0
        %3773 = vmatpush2.msra.mxu0 0.0
        %3774 = vmatprep.subr.mxu0 0.0
        %3775 = vmatpush2.msra.mxu0 0.0
        %3776 = vmatprep.subr.mxu0 0.0
        %3777 = vmatpush2.msra.mxu0 0.0
        %3778 = vmatprep.subr.mxu0 0.0
        %3779 = vmatpush2.msra.mxu0 0.0
        %3780 = vmatprep.subr.mxu0 0.0
        %3781 = vmatpush2.msra.mxu0 0.0
        %3782 = vmatprep.subr.mxu0 0.0
        %3783 = vmatpush2.msra.mxu0 0.0
        %3784 = vmatprep.subr.mxu0 0.0
        %3785 = vmatpush2.msra.mxu0 0.0
        %3786 = vmatprep.subr.mxu0 0.0
        %3787 = vmatpush2.msra.mxu0 0.0
        %3788 = vmatprep.subr.mxu0 0.0
        %3789 = vmatpush2.msra.mxu0 0.0
        %3790 = vmatprep.subr.mxu0 0.0
        %3791 = vmatpush2.msra.mxu0 0.0
        %3792 = vmatprep.mubr.f32.mxu0 0.0
        %3793 = vmatmul.mubr.f32.gmra.mxu0 %v3726
        %v3794 = vpop.f32.mrf.mxu0
        %v3795 = vadd.f32 1e-05, %v3794
        %v3796 = vpop.f32.mrf.mxu0
        %3797 = vdwg.mxu0
        %v3798 = vrsqrt.pop %v3795
        %v3799 = vlaneseq
        %v3800 = vshrl.u32 %v3799, 7
        %v3801 = vsub.s32 0, %v3800
        %v3802 = vrot.slane %v3798, %v3801
        %v3803 = vmul.f32 %v3591, %v3802
        %v3804 = vmul.f32 %v3592, %v3802
        %v3805 = vmul.f32 %v3593, %v3802
        %v3806 = vmul.f32 %v3594, %v3802
        %v3807 = vmul.f32 %v3595, %v3802
        %v3808 = vmul.f32 %v3596, %v3802
        %v3809 = vmul.f32 %v3597, %v3802
        %v3810 = vmul.f32 %v3598, %v3802
        %v3811 = vmul.f32 %v3599, %v3802
        %v3812 = vmul.f32 %v3600, %v3802
        %v3813 = vmul.f32 %v3601, %v3802
        %v3814 = vmul.f32 %v3602, %v3802
        %v3815 = vmul.f32 %v3603, %v3802
        %v3816 = vmul.f32 %v3604, %v3802
        %v3817 = vmul.f32 %v3605, %v3802
        %v3818 = vmul.f32 %v3606, %v3802
        %v3819 = vmul.f32 %v3607, %v3802
        %v3820 = vmul.f32 %v3608, %v3802
        %v3821 = vmul.f32 %v3609, %v3802
        %v3822 = vmul.f32 %v3610, %v3802
        %v3823 = vmul.f32 %v3611, %v3802
        %v3824 = vmul.f32 %v3612, %v3802
        %v3825 = vmul.f32 %v3613, %v3802
        %v3826 = vmul.f32 %v3614, %v3802
        %v3827 = vmul.f32 %v3615, %v3802
        %v3828 = vmul.f32 %v3616, %v3802
        %v3829 = vmul.f32 %v3617, %v3802
        %v3830 = vmul.f32 %v3618, %v3802
        %v3831 = vmul.f32 %v3619, %v3802
        %v3832 = vmul.f32 %v3620, %v3802
        %v3833 = vmul.f32 %v3621, %v3802
        %v3834 = vmul.f32 %v3622, %v3802
        %v3835 = vld [vmem:[%s4] sm:$0x1]
        %v3837 = vlaneseq
        %v3838 = vshrl.u32 %v3837, 7
        %v3839 = vsub.s32 0, %v3838
        %v3840 = vrot.slane %v3835, %v3839
        %v3842 = vmul.f32 %v3803, %v3840
        %v3843 = vmul.f32 %v3804, %v3840
        %v3844 = vmul.f32 %v3805, %v3840
        %v3845 = vmul.f32 %v3806, %v3840
        %v3846 = vmul.f32 %v3807, %v3840
        %v3847 = vmul.f32 %v3808, %v3840
        %v3848 = vmul.f32 %v3809, %v3840
        %v3849 = vmul.f32 %v3810, %v3840
        %v3850 = vmul.f32 %v3811, %v3840
        %v3851 = vmul.f32 %v3812, %v3840
        %v3852 = vmul.f32 %v3813, %v3840
        %v3853 = vmul.f32 %v3814, %v3840
        %v3854 = vmul.f32 %v3815, %v3840
        %v3855 = vmul.f32 %v3816, %v3840
        %v3856 = vmul.f32 %v3817, %v3840
        %v3857 = vmul.f32 %v3818, %v3840
        %v3858 = vmul.f32 %v3819, %v3840
        %v3859 = vmul.f32 %v3820, %v3840
        %v3860 = vmul.f32 %v3821, %v3840
        %v3861 = vmul.f32 %v3822, %v3840
        %v3862 = vmul.f32 %v3823, %v3840
        %v3863 = vmul.f32 %v3824, %v3840
        %v3864 = vmul.f32 %v3825, %v3840
        %v3865 = vmul.f32 %v3826, %v3840
        %v3866 = vmul.f32 %v3827, %v3840
        %v3867 = vmul.f32 %v3828, %v3840
        %v3868 = vmul.f32 %v3829, %v3840
        %v3869 = vmul.f32 %v3830, %v3840
        %v3870 = vmul.f32 %v3831, %v3840
        %v3871 = vmul.f32 %v3832, %v3840
        %v3872 = vmul.f32 %v3833, %v3840
        %v3873 = vmul.f32 %v3834, %v3840
        %v3874 = vld [vmem:[%s5] sm:$0x1]
        %v3876 = vlaneseq
        %v3877 = vshrl.u32 %v3876, 7
        %v3878 = vsub.s32 0, %v3877
        %v3879 = vrot.slane %v3874, %v3878
        %v3881 = vadd.f32 %v3842, %v3879
        %v3882 = vadd.f32 %v3843, %v3879
        %v3883 = vadd.f32 %v3844, %v3879
        %v3884 = vadd.f32 %v3845, %v3879
        %v3885 = vadd.f32 %v3846, %v3879
        %v3886 = vadd.f32 %v3847, %v3879
        %v3887 = vadd.f32 %v3848, %v3879
        %v3888 = vadd.f32 %v3849, %v3879
        %v3889 = vadd.f32 %v3850, %v3879
        %v3890 = vadd.f32 %v3851, %v3879
        %v3891 = vadd.f32 %v3852, %v3879
        %v3892 = vadd.f32 %v3853, %v3879
        %v3893 = vadd.f32 %v3854, %v3879
        %v3894 = vadd.f32 %v3855, %v3879
        %v3895 = vadd.f32 %v3856, %v3879
        %v3896 = vadd.f32 %v3857, %v3879
        %v3897 = vadd.f32 %v3858, %v3879
        %v3898 = vadd.f32 %v3859, %v3879
        %v3899 = vadd.f32 %v3860, %v3879
        %v3900 = vadd.f32 %v3861, %v3879
        %v3901 = vadd.f32 %v3862, %v3879
        %v3902 = vadd.f32 %v3863, %v3879
        %v3903 = vadd.f32 %v3864, %v3879
        %v3904 = vadd.f32 %v3865, %v3879
        %v3905 = vadd.f32 %v3866, %v3879
        %v3906 = vadd.f32 %v3867, %v3879
        %v3907 = vadd.f32 %v3868, %v3879
        %v3908 = vadd.f32 %v3869, %v3879
        %v3909 = vadd.f32 %v3870, %v3879
        %v3910 = vadd.f32 %v3871, %v3879
        %v3911 = vadd.f32 %v3872, %v3879
        %v3912 = vadd.f32 %v3873, %v3879
        %v3913 = vmax.f32 %v3881, 0.0
        %v3914 = vmax.f32 %v3882, 0.0
        %v3915 = vmax.f32 %v3883, 0.0
        %v3916 = vmax.f32 %v3884, 0.0
        %v3917 = vmax.f32 %v3885, 0.0
        %v3918 = vmax.f32 %v3886, 0.0
        %v3919 = vmax.f32 %v3887, 0.0
        %v3920 = vmax.f32 %v3888, 0.0
        %v3921 = vmax.f32 %v3889, 0.0
        %v3922 = vmax.f32 %v3890, 0.0
        %v3923 = vmax.f32 %v3891, 0.0
        %v3924 = vmax.f32 %v3892, 0.0
        %v3925 = vmax.f32 %v3893, 0.0
        %v3926 = vmax.f32 %v3894, 0.0
        %v3927 = vmax.f32 %v3895, 0.0
        %v3928 = vmax.f32 %v3896, 0.0
        %v3929 = vmax.f32 %v3897, 0.0
        %v3930 = vmax.f32 %v3898, 0.0
        %v3931 = vmax.f32 %v3899, 0.0
        %v3932 = vmax.f32 %v3900, 0.0
        %v3933 = vmax.f32 %v3901, 0.0
        %v3934 = vmax.f32 %v3902, 0.0
        %v3935 = vmax.f32 %v3903, 0.0
        %v3936 = vmax.f32 %v3904, 0.0
        %v3937 = vmax.f32 %v3905, 0.0
        %v3938 = vmax.f32 %v3906, 0.0
        %v3939 = vmax.f32 %v3907, 0.0
        %v3940 = vmax.f32 %v3908, 0.0
        %v3941 = vmax.f32 %v3909, 0.0
        %v3942 = vmax.f32 %v3910, 0.0
        %v3943 = vmax.f32 %v3911, 0.0
        %v3944 = vmax.f32 %v3912, 0.0
        %vm3945 = vcmask 72704
        %3946 = vst.msk [vmem:[#allocation3] sm:$0xff] %vm3945, 0.0
        %3947 = vst.msk [vmem:[#allocation3 + $0x8] sm:$0xff] %vm3945, 0.0
        %vm3948 = vcmask 66560
        %3949 = vst.msk [vmem:[#allocation3 + $0x10] sm:$0x3] %vm3948, 0.0
        %3950 = vst.msk [vmem:[#allocation3 + $0x18] sm:$0xff] %vm3945, 0.0
        %3951 = vst.msk [vmem:[#allocation3 + $0x20] sm:$0xff] %vm3945, 0.0
        %3952 = vst.msk [vmem:[#allocation3 + $0x28] sm:$0x3] %vm3948, 0.0
        %3953 = vst.msk [vmem:[#allocation3 + $0x30] sm:$0xff] %vm3945, 0.0
        %3954 = vst.msk [vmem:[#allocation3 + $0x38] sm:$0xff] %vm3945, 0.0
        %3955 = vst.msk [vmem:[#allocation3 + $0x40] sm:$0x3] %vm3948, 0.0
        %3956 = vst.msk [vmem:[#allocation3 + $0x48] sm:$0xff] %vm3945, 0.0
        %3957 = vst.msk [vmem:[#allocation3 + $0x50] sm:$0xff] %vm3945, 0.0
        %3958 = vst.msk [vmem:[#allocation3 + $0x58] sm:$0x3] %vm3948, 0.0
        %3959 = vst.msk [vmem:[#allocation3 + $0x60] sm:$0xff] %vm3945, 0.0
        %3960 = vst.msk [vmem:[#allocation3 + $0x68] sm:$0xff] %vm3945, 0.0
        %3961 = vst.msk [vmem:[#allocation3 + $0x70] sm:$0x3] %vm3948, 0.0
        %3962 = vst.msk [vmem:[#allocation3 + $0x78] sm:$0xff] %vm3945, 0.0
        %3963 = vst.msk [vmem:[#allocation3 + $0x80] sm:$0xff] %vm3945, 0.0
        %3964 = vst.msk [vmem:[#allocation3 + $0x88] sm:$0x3] %vm3948, 0.0
        %3965 = vst.msk [vmem:[#allocation3 + $0x90] sm:$0xff] %vm3945, 0.0
        %3966 = vst.msk [vmem:[#allocation3 + $0x98] sm:$0xff] %vm3945, 0.0
        %3967 = vst.msk [vmem:[#allocation3 + $0xa0] sm:$0x3] %vm3948, 0.0
        %3968 = vst.msk [vmem:[#allocation3 + $0xa8] sm:$0xff] %vm3945, 0.0
        %3969 = vst.msk [vmem:[#allocation3 + $0xb0] sm:$0xff] %vm3945, 0.0
        %3970 = vst.msk [vmem:[#allocation3 + $0xb8] sm:$0x3] %vm3948, 0.0
        %3971 = vst.msk [vmem:[#allocation3 + $0xc0] sm:$0xff] %vm3945, 0.0
        %3972 = vst.msk [vmem:[#allocation3 + $0xc8] sm:$0xff] %vm3945, 0.0
        %3973 = vst.msk [vmem:[#allocation3 + $0xd0] sm:$0x3] %vm3948, 0.0
        %3974 = vst.msk [vmem:[#allocation3 + $0xd8] sm:$0xff] %vm3945, 0.0
        %3975 = vst.msk [vmem:[#allocation3 + $0xe0] sm:$0xff] %vm3945, 0.0
        %3976 = vst.msk [vmem:[#allocation3 + $0xe8] sm:$0x3] %vm3948, 0.0
        %3977 = vst.msk [vmem:[#allocation3 + $0xf0] sm:$0xff] %vm3945, 0.0
        %3978 = vst.msk [vmem:[#allocation3 + $0xf8] sm:$0xff] %vm3945, 0.0
        %3979 = vst.msk [vmem:[#allocation3 + $0x100] sm:$0x3] %vm3948, 0.0
        %3980 = vst.msk [vmem:[#allocation3 + $0x108] sm:$0xff] %vm3945, 0.0
        %3981 = vst.msk [vmem:[#allocation3 + $0x110] sm:$0xff] %vm3945, 0.0
        %3982 = vst.msk [vmem:[#allocation3 + $0x118] sm:$0x3] %vm3948, 0.0
        %3983 = vst.msk [vmem:[#allocation3 + $0x120] sm:$0xff] %vm3945, 0.0
        %3984 = vst.msk [vmem:[#allocation3 + $0x128] sm:$0xff] %vm3945, 0.0
        %3985 = vst.msk [vmem:[#allocation3 + $0x130] sm:$0x3] %vm3948, 0.0
        %3986 = vst.msk [vmem:[#allocation3 + $0x138] sm:$0xff] %vm3945, 0.0
        %3987 = vst.msk [vmem:[#allocation3 + $0x140] sm:$0xff] %vm3945, 0.0
        %3988 = vst.msk [vmem:[#allocation3 + $0x148] sm:$0x3] %vm3948, 0.0
        %3989 = vst.msk [vmem:[#allocation3 + $0x150] sm:$0xff] %vm3945, 0.0
        %3990 = vst.msk [vmem:[#allocation3 + $0x158] sm:$0xff] %vm3945, 0.0
        %3991 = vst.msk [vmem:[#allocation3 + $0x160] sm:$0x3] %vm3948, 0.0
        %3992 = vst.msk [vmem:[#allocation3 + $0x168] sm:$0xff] %vm3945, 0.0
        %3993 = vst.msk [vmem:[#allocation3 + $0x170] sm:$0xff] %vm3945, 0.0
        %3994 = vst.msk [vmem:[#allocation3 + $0x178] sm:$0x3] %vm3948, 0.0
        %3995 = vst.msk [vmem:[#allocation3 + $0x180] sm:$0xff] %vm3945, 0.0
        %3996 = vst.msk [vmem:[#allocation3 + $0x188] sm:$0xff] %vm3945, 0.0
        %3997 = vst.msk [vmem:[#allocation3 + $0x190] sm:$0x3] %vm3948, 0.0
        %3998 = vst.msk [vmem:[#allocation3 + $0x198] sm:$0xff] %vm3945, 0.0
        %3999 = vst.msk [vmem:[#allocation3 + $0x1a0] sm:$0xff] %vm3945, 0.0
        %4000 = vst.msk [vmem:[#allocation3 + $0x1a8] sm:$0x3] %vm3948, 0.0
        %v4001 = vmul.f32 %v3913, %v3220
        %v4002 = vmul.f32 %v3914, %v3225
        %v4003 = vmul.f32 %v3915, %v3230
        %v4004 = vmul.f32 %v3916, %v3235
        %v4005 = vmul.f32 %v3917, %v3240
        %v4006 = vmul.f32 %v3918, %v3245
        %v4007 = vmul.f32 %v3919, %v3250
        %v4008 = vmul.f32 %v3920, %v3255
        %v4009 = vmul.f32 %v3921, %v3260
        %v4010 = vmul.f32 %v3922, %v3265
        %v4011 = vmul.f32 %v3923, %v3270
        %v4012 = vmul.f32 %v3924, %v3275
        %v4013 = vmul.f32 %v3925, %v3280
        %v4014 = vmul.f32 %v3926, %v3285
        %v4015 = vmul.f32 %v3927, %v3290
        %v4016 = vmul.f32 %v3928, %v3295
        %v4017 = vmul.f32 %v3929, %v3300
        %v4018 = vmul.f32 %v3930, %v3305
        %v4019 = vmul.f32 %v3931, %v3310
        %v4020 = vmul.f32 %v3932, %v3315
        %v4021 = vmul.f32 %v3933, %v3320
        %v4022 = vmul.f32 %v3934, %v3325
        %v4023 = vmul.f32 %v3935, %v3330
        %v4024 = vmul.f32 %v3936, %v3335
        %v4025 = vmul.f32 %v3937, %v3340
        %v4026 = vmul.f32 %v3938, %v3345
        %v4027 = vmul.f32 %v3939, %v3350
        %v4028 = vmul.f32 %v3940, %v3355
        %v4029 = vmul.f32 %v3941, %v3360
        %v4030 = vmul.f32 %v3942, %v3365
        %v4031 = vmul.f32 %v3943, %v3370
        %v4032 = vmul.f32 %v3944, %v3375
        %v4033 = vsel %vm3441, %v4001, %v2794
        %v4034 = vsel %vm3441, %v4002, %v2795
        %v4035 = vsel %vm3441, %v4003, %v2796
        %v4036 = vsel %vm3441, %v4004, %v2797
        %v4037 = vsel %vm3441, %v4005, %v2798
        %v4038 = vsel %vm3441, %v4006, %v2799
        %v4039 = vsel %vm3441, %v4007, %v2800
        %v4040 = vsel %vm3441, %v4008, %v2801
        %v4041 = vsel %vm3441, %v4009, %v2802
        %v4042 = vsel %vm3441, %v4010, %v2803
        %v4043 = vsel %vm3441, %v4011, %v2804
        %v4044 = vsel %vm3441, %v4012, %v2805
        %v4045 = vsel %vm3441, %v4013, %v2806
        %v4046 = vsel %vm3441, %v4014, %v2807
        %v4047 = vsel %vm3441, %v4015, %v2808
        %v4048 = vsel %vm3441, %v4016, %v2809
        %v4049 = vsel %vm3441, %v4017, %v2810
        %v4050 = vsel %vm3441, %v4018, %v2811
        %v4051 = vsel %vm3441, %v4019, %v2812
        %v4052 = vsel %vm3441, %v4020, %v2813
        %v4053 = vsel %vm3441, %v4021, %v2814
        %v4054 = vsel %vm3441, %v4022, %v2815
        %v4055 = vsel %vm3441, %v4023, %v2816
        %v4056 = vsel %vm3441, %v4024, %v2817
        %v4057 = vsel %vm3441, %v4025, %v2818
        %v4058 = vsel %vm3441, %v4026, %v2819
        %v4059 = vsel %vm3441, %v4027, %v2820
        %v4060 = vsel %vm3441, %v4028, %v2821
        %v4061 = vsel %vm3441, %v4029, %v2822
        %v4062 = vsel %vm3441, %v4030, %v2823
        %v4063 = vsel %vm3441, %v4031, %v2824
        %v4064 = vsel %vm3441, %v4032, %v2825
        %s4065 = scalar_lea.vmem [#allocation3], 24
        %4066 = vst.msk [vmem:[%s4065 + $0x1] sm:$0xff] %vm3945, %v4033
        %4067 = vst.msk [vmem:[%s4065 + $0x9] sm:$0xff] %vm3945, %v4034
        %4068 = vst.msk [vmem:[%s4065 + $0x19] sm:$0xff] %vm3945, %v4035
        %4069 = vst.msk [vmem:[%s4065 + $0x21] sm:$0xff] %vm3945, %v4036
        %4070 = vst.msk [vmem:[%s4065 + $0x31] sm:$0xff] %vm3945, %v4037
        %4071 = vst.msk [vmem:[%s4065 + $0x39] sm:$0xff] %vm3945, %v4038
        %4072 = vst.msk [vmem:[%s4065 + $0x49] sm:$0xff] %vm3945, %v4039
        %4073 = vst.msk [vmem:[%s4065 + $0x51] sm:$0xff] %vm3945, %v4040
        %4074 = vst.msk [vmem:[%s4065 + $0x61] sm:$0xff] %vm3945, %v4041
        %4075 = vst.msk [vmem:[%s4065 + $0x69] sm:$0xff] %vm3945, %v4042
        %4076 = vst.msk [vmem:[%s4065 + $0x79] sm:$0xff] %vm3945, %v4043
        %4077 = vst.msk [vmem:[%s4065 + $0x81] sm:$0xff] %vm3945, %v4044
        %4078 = vst.msk [vmem:[%s4065 + $0x91] sm:$0xff] %vm3945, %v4045
        %4079 = vst.msk [vmem:[%s4065 + $0x99] sm:$0xff] %vm3945, %v4046
        %4080 = vst.msk [vmem:[%s4065 + $0xa9] sm:$0xff] %vm3945, %v4047
        %4081 = vst.msk [vmem:[%s4065 + $0xb1] sm:$0xff] %vm3945, %v4048
        %4082 = vst.msk [vmem:[%s4065 + $0xc1] sm:$0xff] %vm3945, %v4049
        %4083 = vst.msk [vmem:[%s4065 + $0xc9] sm:$0xff] %vm3945, %v4050
        %4084 = vst.msk [vmem:[%s4065 + $0xd9] sm:$0xff] %vm3945, %v4051
        %4085 = vst.msk [vmem:[%s4065 + $0xe1] sm:$0xff] %vm3945, %v4052
        %4086 = vst.msk [vmem:[%s4065 + $0xf1] sm:$0xff] %vm3945, %v4053
        %4087 = vst.msk [vmem:[%s4065 + $0xf9] sm:$0xff] %vm3945, %v4054
        %4088 = vst.msk [vmem:[%s4065 + $0x109] sm:$0xff] %vm3945, %v4055
        %4089 = vst.msk [vmem:[%s4065 + $0x111] sm:$0xff] %vm3945, %v4056
        %4090 = vst.msk [vmem:[%s4065 + $0x121] sm:$0xff] %vm3945, %v4057
        %4091 = vst.msk [vmem:[%s4065 + $0x129] sm:$0xff] %vm3945, %v4058
        %4092 = vst.msk [vmem:[%s4065 + $0x139] sm:$0xff] %vm3945, %v4059
        %4093 = vst.msk [vmem:[%s4065 + $0x141] sm:$0xff] %vm3945, %v4060
        %4094 = vst.msk [vmem:[%s4065 + $0x151] sm:$0xff] %vm3945, %v4061
        %4095 = vst.msk [vmem:[%s4065 + $0x159] sm:$0xff] %vm3945, %v4062
        %4096 = vst.msk [vmem:[%s4065 + $0x169] sm:$0xff] %vm3945, %v4063
        %4097 = vst.msk [vmem:[%s4065 + $0x171] sm:$0xff] %vm3945, %v4064
        %v4098 = vld [vmem:[#allocation3] sm:$0xff]
        %v4099 = vld [vmem:[#allocation3 + $0x8] sm:$0xff]
        %v4100 = vld [vmem:[#allocation3 + $0x18] sm:$0xff]
        %v4101 = vld [vmem:[#allocation3 + $0x20] sm:$0xff]
        %v4102 = vld [vmem:[#allocation3 + $0x30] sm:$0xff]
        %v4103 = vld [vmem:[#allocation3 + $0x38] sm:$0xff]
        %v4104 = vld [vmem:[#allocation3 + $0x48] sm:$0xff]
        %v4105 = vld [vmem:[#allocation3 + $0x50] sm:$0xff]
        %v4106 = vld [vmem:[#allocation3 + $0x60] sm:$0xff]
        %v4107 = vld [vmem:[#allocation3 + $0x68] sm:$0xff]
        %v4108 = vld [vmem:[#allocation3 + $0x78] sm:$0xff]
        %v4109 = vld [vmem:[#allocation3 + $0x80] sm:$0xff]
        %v4110 = vld [vmem:[#allocation3 + $0x90] sm:$0xff]
        %v4111 = vld [vmem:[#allocation3 + $0x98] sm:$0xff]
        %v4112 = vld [vmem:[#allocation3 + $0xa8] sm:$0xff]
        %v4113 = vld [vmem:[#allocation3 + $0xb0] sm:$0xff]
        %v4114 = vld [vmem:[#allocation3 + $0xc0] sm:$0xff]
        %v4115 = vld [vmem:[#allocation3 + $0xc8] sm:$0xff]
        %v4116 = vld [vmem:[#allocation3 + $0xd8] sm:$0xff]
        %v4117 = vld [vmem:[#allocation3 + $0xe0] sm:$0xff]
        %v4118 = vld [vmem:[#allocation3 + $0xf0] sm:$0xff]
        %v4119 = vld [vmem:[#allocation3 + $0xf8] sm:$0xff]
        %v4120 = vld [vmem:[#allocation3 + $0x108] sm:$0xff]
        %v4121 = vld [vmem:[#allocation3 + $0x110] sm:$0xff]
        %v4122 = vld [vmem:[#allocation3 + $0x120] sm:$0xff]
        %v4123 = vld [vmem:[#allocation3 + $0x128] sm:$0xff]
        %v4124 = vld [vmem:[#allocation3 + $0x138] sm:$0xff]
        %v4125 = vld [vmem:[#allocation3 + $0x140] sm:$0xff]
        %v4126 = vld [vmem:[#allocation3 + $0x150] sm:$0xff]
        %v4127 = vld [vmem:[#allocation3 + $0x158] sm:$0xff]
        %v4128 = vld [vmem:[#allocation3 + $0x168] sm:$0xff]
        %v4129 = vld [vmem:[#allocation3 + $0x170] sm:$0xff]
        %v4130 = vld [vmem:[#allocation3 + $0x1] sm:$0xff]
        %v4131 = vld [vmem:[#allocation3 + $0x9] sm:$0xff]
        %v4132 = vld [vmem:[#allocation3 + $0x19] sm:$0xff]
        %v4133 = vld [vmem:[#allocation3 + $0x21] sm:$0xff]
        %v4134 = vld [vmem:[#allocation3 + $0x31] sm:$0xff]
        %v4135 = vld [vmem:[#allocation3 + $0x39] sm:$0xff]
        %v4136 = vld [vmem:[#allocation3 + $0x49] sm:$0xff]
        %v4137 = vld [vmem:[#allocation3 + $0x51] sm:$0xff]
        %v4138 = vld [vmem:[#allocation3 + $0x61] sm:$0xff]
        %v4139 = vld [vmem:[#allocation3 + $0x69] sm:$0xff]
        %v4140 = vld [vmem:[#allocation3 + $0x79] sm:$0xff]
        %v4141 = vld [vmem:[#allocation3 + $0x81] sm:$0xff]
        %v4142 = vld [vmem:[#allocation3 + $0x91] sm:$0xff]
        %v4143 = vld [vmem:[#allocation3 + $0x99] sm:$0xff]
        %v4144 = vld [vmem:[#allocation3 + $0xa9] sm:$0xff]
        %v4145 = vld [vmem:[#allocation3 + $0xb1] sm:$0xff]
        %v4146 = vld [vmem:[#allocation3 + $0xc1] sm:$0xff]
        %v4147 = vld [vmem:[#allocation3 + $0xc9] sm:$0xff]
        %v4148 = vld [vmem:[#allocation3 + $0xd9] sm:$0xff]
        %v4149 = vld [vmem:[#allocation3 + $0xe1] sm:$0xff]
        %v4150 = vld [vmem:[#allocation3 + $0xf1] sm:$0xff]
        %v4151 = vld [vmem:[#allocation3 + $0xf9] sm:$0xff]
        %v4152 = vld [vmem:[#allocation3 + $0x109] sm:$0xff]
        %v4153 = vld [vmem:[#allocation3 + $0x111] sm:$0xff]
        %v4154 = vld [vmem:[#allocation3 + $0x121] sm:$0xff]
        %v4155 = vld [vmem:[#allocation3 + $0x129] sm:$0xff]
        %v4156 = vld [vmem:[#allocation3 + $0x139] sm:$0xff]
        %v4157 = vld [vmem:[#allocation3 + $0x141] sm:$0xff]
        %v4158 = vld [vmem:[#allocation3 + $0x151] sm:$0xff]
        %v4159 = vld [vmem:[#allocation3 + $0x159] sm:$0xff]
        %v4160 = vld [vmem:[#allocation3 + $0x169] sm:$0xff]
        %v4161 = vld [vmem:[#allocation3 + $0x171] sm:$0xff]
        %v4162 = vld [vmem:[#allocation3 + $0x2] sm:$0xff]
        %v4163 = vld [vmem:[#allocation3 + $0xa] sm:$0xff]
        %v4164 = vld [vmem:[#allocation3 + $0x1a] sm:$0xff]
        %v4165 = vld [vmem:[#allocation3 + $0x22] sm:$0xff]
        %v4166 = vld [vmem:[#allocation3 + $0x32] sm:$0xff]
        %v4167 = vld [vmem:[#allocation3 + $0x3a] sm:$0xff]
        %v4168 = vld [vmem:[#allocation3 + $0x4a] sm:$0xff]
        %v4169 = vld [vmem:[#allocation3 + $0x52] sm:$0xff]
        %v4170 = vld [vmem:[#allocation3 + $0x62] sm:$0xff]
        %v4171 = vld [vmem:[#allocation3 + $0x6a] sm:$0xff]
        %v4172 = vld [vmem:[#allocation3 + $0x7a] sm:$0xff]
        %v4173 = vld [vmem:[#allocation3 + $0x82] sm:$0xff]
        %v4174 = vld [vmem:[#allocation3 + $0x92] sm:$0xff]
        %v4175 = vld [vmem:[#allocation3 + $0x9a] sm:$0xff]
        %v4176 = vld [vmem:[#allocation3 + $0xaa] sm:$0xff]
        %v4177 = vld [vmem:[#allocation3 + $0xb2] sm:$0xff]
        %v4178 = vld [vmem:[#allocation3 + $0xc2] sm:$0xff]
        %v4179 = vld [vmem:[#allocation3 + $0xca] sm:$0xff]
        %v4180 = vld [vmem:[#allocation3 + $0xda] sm:$0xff]
        %v4181 = vld [vmem:[#allocation3 + $0xe2] sm:$0xff]
        %v4182 = vld [vmem:[#allocation3 + $0xf2] sm:$0xff]
        %v4183 = vld [vmem:[#allocation3 + $0xfa] sm:$0xff]
        %v4184 = vld [vmem:[#allocation3 + $0x10a] sm:$0xff]
        %v4185 = vld [vmem:[#allocation3 + $0x112] sm:$0xff]
        %v4186 = vld [vmem:[#allocation3 + $0x122] sm:$0xff]
        %v4187 = vld [vmem:[#allocation3 + $0x12a] sm:$0xff]
        %v4188 = vld [vmem:[#allocation3 + $0x13a] sm:$0xff]
        %v4189 = vld [vmem:[#allocation3 + $0x142] sm:$0xff]
        %v4190 = vld [vmem:[#allocation3 + $0x152] sm:$0xff]
        %v4191 = vld [vmem:[#allocation3 + $0x15a] sm:$0xff]
        %v4192 = vld [vmem:[#allocation3 + $0x16a] sm:$0xff]
        %v4193 = vld [vmem:[#allocation3 + $0x172] sm:$0xff]
        %v4194 = vld [vmem:[%s4065] sm:$0xff]
        %v4195 = vld [vmem:[%s4065 + $0x8] sm:$0xff]
        %v4196 = vld [vmem:[%s4065 + $0x18] sm:$0xff]
        %v4197 = vld [vmem:[%s4065 + $0x20] sm:$0xff]
        %v4198 = vld [vmem:[%s4065 + $0x30] sm:$0xff]
        %v4199 = vld [vmem:[%s4065 + $0x38] sm:$0xff]
        %v4200 = vld [vmem:[%s4065 + $0x48] sm:$0xff]
        %v4201 = vld [vmem:[%s4065 + $0x50] sm:$0xff]
        %v4202 = vld [vmem:[%s4065 + $0x60] sm:$0xff]
        %v4203 = vld [vmem:[%s4065 + $0x68] sm:$0xff]
        %v4204 = vld [vmem:[%s4065 + $0x78] sm:$0xff]
        %v4205 = vld [vmem:[%s4065 + $0x80] sm:$0xff]
        %v4206 = vld [vmem:[%s4065 + $0x90] sm:$0xff]
        %v4207 = vld [vmem:[%s4065 + $0x98] sm:$0xff]
        %v4208 = vld [vmem:[%s4065 + $0xa8] sm:$0xff]
        %v4209 = vld [vmem:[%s4065 + $0xb0] sm:$0xff]
        %v4210 = vld [vmem:[%s4065 + $0xc0] sm:$0xff]
        %v4211 = vld [vmem:[%s4065 + $0xc8] sm:$0xff]
        %v4212 = vld [vmem:[%s4065 + $0xd8] sm:$0xff]
        %v4213 = vld [vmem:[%s4065 + $0xe0] sm:$0xff]
        %v4214 = vld [vmem:[%s4065 + $0xf0] sm:$0xff]
        %v4215 = vld [vmem:[%s4065 + $0xf8] sm:$0xff]
        %v4216 = vld [vmem:[%s4065 + $0x108] sm:$0xff]
        %v4217 = vld [vmem:[%s4065 + $0x110] sm:$0xff]
        %v4218 = vld [vmem:[%s4065 + $0x120] sm:$0xff]
        %v4219 = vld [vmem:[%s4065 + $0x128] sm:$0xff]
        %v4220 = vld [vmem:[%s4065 + $0x138] sm:$0xff]
        %v4221 = vld [vmem:[%s4065 + $0x140] sm:$0xff]
        %v4222 = vld [vmem:[%s4065 + $0x150] sm:$0xff]
        %v4223 = vld [vmem:[%s4065 + $0x158] sm:$0xff]
        %v4224 = vld [vmem:[%s4065 + $0x168] sm:$0xff]
        %v4225 = vld [vmem:[%s4065 + $0x170] sm:$0xff]
        %v4226 = vld [vmem:[%s4065 + $0x1] sm:$0xff]
        %v4227 = vld [vmem:[%s4065 + $0x9] sm:$0xff]
        %v4228 = vld [vmem:[%s4065 + $0x19] sm:$0xff]
        %v4229 = vld [vmem:[%s4065 + $0x21] sm:$0xff]
        %v4230 = vld [vmem:[%s4065 + $0x31] sm:$0xff]
        %v4231 = vld [vmem:[%s4065 + $0x39] sm:$0xff]
        %v4232 = vld [vmem:[%s4065 + $0x49] sm:$0xff]
        %v4233 = vld [vmem:[%s4065 + $0x51] sm:$0xff]
        %v4234 = vld [vmem:[%s4065 + $0x61] sm:$0xff]
        %v4235 = vld [vmem:[%s4065 + $0x69] sm:$0xff]
        %v4236 = vld [vmem:[%s4065 + $0x79] sm:$0xff]
        %v4237 = vld [vmem:[%s4065 + $0x81] sm:$0xff]
        %v4238 = vld [vmem:[%s4065 + $0x91] sm:$0xff]
        %v4239 = vld [vmem:[%s4065 + $0x99] sm:$0xff]
        %v4240 = vld [vmem:[%s4065 + $0xa9] sm:$0xff]
        %v4241 = vld [vmem:[%s4065 + $0xb1] sm:$0xff]
        %v4242 = vld [vmem:[%s4065 + $0xc1] sm:$0xff]
        %v4243 = vld [vmem:[%s4065 + $0xc9] sm:$0xff]
        %v4244 = vld [vmem:[%s4065 + $0xd9] sm:$0xff]
        %v4245 = vld [vmem:[%s4065 + $0xe1] sm:$0xff]
        %v4246 = vld [vmem:[%s4065 + $0xf1] sm:$0xff]
        %v4247 = vld [vmem:[%s4065 + $0xf9] sm:$0xff]
        %v4248 = vld [vmem:[%s4065 + $0x109] sm:$0xff]
        %v4249 = vld [vmem:[%s4065 + $0x111] sm:$0xff]
        %v4250 = vld [vmem:[%s4065 + $0x121] sm:$0xff]
        %v4251 = vld [vmem:[%s4065 + $0x129] sm:$0xff]
        %v4252 = vld [vmem:[%s4065 + $0x139] sm:$0xff]
        %v4253 = vld [vmem:[%s4065 + $0x141] sm:$0xff]
        %v4254 = vld [vmem:[%s4065 + $0x151] sm:$0xff]
        %v4255 = vld [vmem:[%s4065 + $0x159] sm:$0xff]
        %v4256 = vld [vmem:[%s4065 + $0x169] sm:$0xff]
        %v4257 = vld [vmem:[%s4065 + $0x171] sm:$0xff]
        %v4258 = vld [vmem:[%s4065 + $0x2] sm:$0xff]
        %v4259 = vld [vmem:[%s4065 + $0xa] sm:$0xff]
        %v4260 = vld [vmem:[%s4065 + $0x1a] sm:$0xff]
        %v4261 = vld [vmem:[%s4065 + $0x22] sm:$0xff]
        %v4262 = vld [vmem:[%s4065 + $0x32] sm:$0xff]
        %v4263 = vld [vmem:[%s4065 + $0x3a] sm:$0xff]
        %v4264 = vld [vmem:[%s4065 + $0x4a] sm:$0xff]
        %v4265 = vld [vmem:[%s4065 + $0x52] sm:$0xff]
        %v4266 = vld [vmem:[%s4065 + $0x62] sm:$0xff]
        %v4267 = vld [vmem:[%s4065 + $0x6a] sm:$0xff]
        %v4268 = vld [vmem:[%s4065 + $0x7a] sm:$0xff]
        %v4269 = vld [vmem:[%s4065 + $0x82] sm:$0xff]
        %v4270 = vld [vmem:[%s4065 + $0x92] sm:$0xff]
        %v4271 = vld [vmem:[%s4065 + $0x9a] sm:$0xff]
        %v4272 = vld [vmem:[%s4065 + $0xaa] sm:$0xff]
        %v4273 = vld [vmem:[%s4065 + $0xb2] sm:$0xff]
        %v4274 = vld [vmem:[%s4065 + $0xc2] sm:$0xff]
        %v4275 = vld [vmem:[%s4065 + $0xca] sm:$0xff]
        %v4276 = vld [vmem:[%s4065 + $0xda] sm:$0xff]
        %v4277 = vld [vmem:[%s4065 + $0xe2] sm:$0xff]
        %v4278 = vld [vmem:[%s4065 + $0xf2] sm:$0xff]
        %v4279 = vld [vmem:[%s4065 + $0xfa] sm:$0xff]
        %v4280 = vld [vmem:[%s4065 + $0x10a] sm:$0xff]
        %v4281 = vld [vmem:[%s4065 + $0x112] sm:$0xff]
        %v4282 = vld [vmem:[%s4065 + $0x122] sm:$0xff]
        %v4283 = vld [vmem:[%s4065 + $0x12a] sm:$0xff]
        %v4284 = vld [vmem:[%s4065 + $0x13a] sm:$0xff]
        %v4285 = vld [vmem:[%s4065 + $0x142] sm:$0xff]
        %v4286 = vld [vmem:[%s4065 + $0x152] sm:$0xff]
        %v4287 = vld [vmem:[%s4065 + $0x15a] sm:$0xff]
        %v4288 = vld [vmem:[%s4065 + $0x16a] sm:$0xff]
        %v4289 = vld [vmem:[%s4065 + $0x172] sm:$0xff]
        %s4290 = scalar_lea.vmem [#allocation3], 48
        %v4291 = vld [vmem:[%s4290] sm:$0xff]
        %v4292 = vld [vmem:[%s4290 + $0x8] sm:$0xff]
        %v4293 = vld [vmem:[%s4290 + $0x18] sm:$0xff]
        %v4294 = vld [vmem:[%s4290 + $0x20] sm:$0xff]
        %v4295 = vld [vmem:[%s4290 + $0x30] sm:$0xff]
        %v4296 = vld [vmem:[%s4290 + $0x38] sm:$0xff]
        %v4297 = vld [vmem:[%s4290 + $0x48] sm:$0xff]
        %v4298 = vld [vmem:[%s4290 + $0x50] sm:$0xff]
        %v4299 = vld [vmem:[%s4290 + $0x60] sm:$0xff]
        %v4300 = vld [vmem:[%s4290 + $0x68] sm:$0xff]
        %v4301 = vld [vmem:[%s4290 + $0x78] sm:$0xff]
        %v4302 = vld [vmem:[%s4290 + $0x80] sm:$0xff]
        %v4303 = vld [vmem:[%s4290 + $0x90] sm:$0xff]
        %v4304 = vld [vmem:[%s4290 + $0x98] sm:$0xff]
        %v4305 = vld [vmem:[%s4290 + $0xa8] sm:$0xff]
        %v4306 = vld [vmem:[%s4290 + $0xb0] sm:$0xff]
        %v4307 = vld [vmem:[%s4290 + $0xc0] sm:$0xff]
        %v4308 = vld [vmem:[%s4290 + $0xc8] sm:$0xff]
        %v4309 = vld [vmem:[%s4290 + $0xd8] sm:$0xff]
        %v4310 = vld [vmem:[%s4290 + $0xe0] sm:$0xff]
        %v4311 = vld [vmem:[%s4290 + $0xf0] sm:$0xff]
        %v4312 = vld [vmem:[%s4290 + $0xf8] sm:$0xff]
        %v4313 = vld [vmem:[%s4290 + $0x108] sm:$0xff]
        %v4314 = vld [vmem:[%s4290 + $0x110] sm:$0xff]
        %v4315 = vld [vmem:[%s4290 + $0x120] sm:$0xff]
        %v4316 = vld [vmem:[%s4290 + $0x128] sm:$0xff]
        %v4317 = vld [vmem:[%s4290 + $0x138] sm:$0xff]
        %v4318 = vld [vmem:[%s4290 + $0x140] sm:$0xff]
        %v4319 = vld [vmem:[%s4290 + $0x150] sm:$0xff]
        %v4320 = vld [vmem:[%s4290 + $0x158] sm:$0xff]
        %v4321 = vld [vmem:[%s4290 + $0x168] sm:$0xff]
        %v4322 = vld [vmem:[%s4290 + $0x170] sm:$0xff]
        %v4323 = vld [vmem:[%s4290 + $0x1] sm:$0xff]
        %v4324 = vld [vmem:[%s4290 + $0x9] sm:$0xff]
        %v4325 = vld [vmem:[%s4290 + $0x19] sm:$0xff]
        %v4326 = vld [vmem:[%s4290 + $0x21] sm:$0xff]
        %v4327 = vld [vmem:[%s4290 + $0x31] sm:$0xff]
        %v4328 = vld [vmem:[%s4290 + $0x39] sm:$0xff]
        %v4329 = vld [vmem:[%s4290 + $0x49] sm:$0xff]
        %v4330 = vld [vmem:[%s4290 + $0x51] sm:$0xff]
        %v4331 = vld [vmem:[%s4290 + $0x61] sm:$0xff]
        %v4332 = vld [vmem:[%s4290 + $0x69] sm:$0xff]
        %v4333 = vld [vmem:[%s4290 + $0x79] sm:$0xff]
        %v4334 = vld [vmem:[%s4290 + $0x81] sm:$0xff]
        %v4335 = vld [vmem:[%s4290 + $0x91] sm:$0xff]
        %v4336 = vld [vmem:[%s4290 + $0x99] sm:$0xff]
        %v4337 = vld [vmem:[%s4290 + $0xa9] sm:$0xff]
        %v4338 = vld [vmem:[%s4290 + $0xb1] sm:$0xff]
        %v4339 = vld [vmem:[%s4290 + $0xc1] sm:$0xff]
        %v4340 = vld [vmem:[%s4290 + $0xc9] sm:$0xff]
        %v4341 = vld [vmem:[%s4290 + $0xd9] sm:$0xff]
        %v4342 = vld [vmem:[%s4290 + $0xe1] sm:$0xff]
        %v4343 = vld [vmem:[%s4290 + $0xf1] sm:$0xff]
        %v4344 = vld [vmem:[%s4290 + $0xf9] sm:$0xff]
        %v4345 = vld [vmem:[%s4290 + $0x109] sm:$0xff]
        %v4346 = vld [vmem:[%s4290 + $0x111] sm:$0xff]
        %v4347 = vld [vmem:[%s4290 + $0x121] sm:$0xff]
        %v4348 = vld [vmem:[%s4290 + $0x129] sm:$0xff]
        %v4349 = vld [vmem:[%s4290 + $0x139] sm:$0xff]
        %v4350 = vld [vmem:[%s4290 + $0x141] sm:$0xff]
        %v4351 = vld [vmem:[%s4290 + $0x151] sm:$0xff]
        %v4352 = vld [vmem:[%s4290 + $0x159] sm:$0xff]
        %v4353 = vld [vmem:[%s4290 + $0x169] sm:$0xff]
        %v4354 = vld [vmem:[%s4290 + $0x171] sm:$0xff]
        %v4355 = vld [vmem:[%s4290 + $0x2] sm:$0xff]
        %v4356 = vld [vmem:[%s4290 + $0xa] sm:$0xff]
        %v4357 = vld [vmem:[%s4290 + $0x1a] sm:$0xff]
        %v4358 = vld [vmem:[%s4290 + $0x22] sm:$0xff]
        %v4359 = vld [vmem:[%s4290 + $0x32] sm:$0xff]
        %v4360 = vld [vmem:[%s4290 + $0x3a] sm:$0xff]
        %v4361 = vld [vmem:[%s4290 + $0x4a] sm:$0xff]
        %v4362 = vld [vmem:[%s4290 + $0x52] sm:$0xff]
        %v4363 = vld [vmem:[%s4290 + $0x62] sm:$0xff]
        %v4364 = vld [vmem:[%s4290 + $0x6a] sm:$0xff]
        %v4365 = vld [vmem:[%s4290 + $0x7a] sm:$0xff]
        %v4366 = vld [vmem:[%s4290 + $0x82] sm:$0xff]
        %v4367 = vld [vmem:[%s4290 + $0x92] sm:$0xff]
        %v4368 = vld [vmem:[%s4290 + $0x9a] sm:$0xff]
        %v4369 = vld [vmem:[%s4290 + $0xaa] sm:$0xff]
        %v4370 = vld [vmem:[%s4290 + $0xb2] sm:$0xff]
        %v4371 = vld [vmem:[%s4290 + $0xc2] sm:$0xff]
        %v4372 = vld [vmem:[%s4290 + $0xca] sm:$0xff]
        %v4373 = vld [vmem:[%s4290 + $0xda] sm:$0xff]
        %v4374 = vld [vmem:[%s4290 + $0xe2] sm:$0xff]
        %v4375 = vld [vmem:[%s4290 + $0xf2] sm:$0xff]
        %v4376 = vld [vmem:[%s4290 + $0xfa] sm:$0xff]
        %v4377 = vld [vmem:[%s4290 + $0x10a] sm:$0xff]
        %v4378 = vld [vmem:[%s4290 + $0x112] sm:$0xff]
        %v4379 = vld [vmem:[%s4290 + $0x122] sm:$0xff]
        %v4380 = vld [vmem:[%s4290 + $0x12a] sm:$0xff]
        %v4381 = vld [vmem:[%s4290 + $0x13a] sm:$0xff]
        %v4382 = vld [vmem:[%s4290 + $0x142] sm:$0xff]
        %v4383 = vld [vmem:[%s4290 + $0x152] sm:$0xff]
        %v4384 = vld [vmem:[%s4290 + $0x15a] sm:$0xff]
        %v4385 = vld [vmem:[%s4290 + $0x16a] sm:$0xff]
        %v4386 = vld [vmem:[%s4290 + $0x172] sm:$0xff]
        %4419 = vrot.lane.b32.xlu0 %v4130, 9
        %v4420 = vpop.permute.xlu0 %4419
        %4421 = vrot.lane.b32.xlu0 %v4131, 9
        %v4422 = vpop.permute.xlu0 %4421
        %4423 = vrot.lane.b32.xlu0 %v4132, 9
        %v4424 = vpop.permute.xlu0 %4423
        %4425 = vrot.lane.b32.xlu0 %v4133, 9
        %v4426 = vpop.permute.xlu0 %4425
        %4427 = vrot.lane.b32.xlu0 %v4134, 9
        %v4428 = vpop.permute.xlu0 %4427
        %4429 = vrot.lane.b32.xlu0 %v4135, 9
        %v4430 = vpop.permute.xlu0 %4429
        %4431 = vrot.lane.b32.xlu0 %v4136, 9
        %v4432 = vpop.permute.xlu0 %4431
        %4433 = vrot.lane.b32.xlu0 %v4137, 9
        %v4434 = vpop.permute.xlu0 %4433
        %4435 = vrot.lane.b32.xlu0 %v4138, 9
        %v4436 = vpop.permute.xlu0 %4435
        %4437 = vrot.lane.b32.xlu0 %v4139, 9
        %v4438 = vpop.permute.xlu0 %4437
        %4439 = vrot.lane.b32.xlu0 %v4140, 9
        %v4440 = vpop.permute.xlu0 %4439
        %4441 = vrot.lane.b32.xlu0 %v4141, 9
        %v4442 = vpop.permute.xlu0 %4441
        %4443 = vrot.lane.b32.xlu0 %v4142, 9
        %v4444 = vpop.permute.xlu0 %4443
        %4445 = vrot.lane.b32.xlu0 %v4143, 9
        %v4446 = vpop.permute.xlu0 %4445
        %4447 = vrot.lane.b32.xlu0 %v4144, 9
        %v4448 = vpop.permute.xlu0 %4447
        %4449 = vrot.lane.b32.xlu0 %v4145, 9
        %v4450 = vpop.permute.xlu0 %4449
        %4451 = vrot.lane.b32.xlu0 %v4146, 9
        %v4452 = vpop.permute.xlu0 %4451
        %4453 = vrot.lane.b32.xlu0 %v4147, 9
        %v4454 = vpop.permute.xlu0 %4453
        %4455 = vrot.lane.b32.xlu0 %v4148, 9
        %v4456 = vpop.permute.xlu0 %4455
        %4457 = vrot.lane.b32.xlu0 %v4149, 9
        %v4458 = vpop.permute.xlu0 %4457
        %4459 = vrot.lane.b32.xlu0 %v4150, 9
        %v4460 = vpop.permute.xlu0 %4459
        %4461 = vrot.lane.b32.xlu0 %v4151, 9
        %v4462 = vpop.permute.xlu0 %4461
        %4463 = vrot.lane.b32.xlu0 %v4152, 9
        %v4464 = vpop.permute.xlu0 %4463
        %4465 = vrot.lane.b32.xlu0 %v4153, 9
        %v4466 = vpop.permute.xlu0 %4465
        %4467 = vrot.lane.b32.xlu0 %v4154, 9
        %v4468 = vpop.permute.xlu0 %4467
        %4469 = vrot.lane.b32.xlu0 %v4155, 9
        %v4470 = vpop.permute.xlu0 %4469
        %4471 = vrot.lane.b32.xlu0 %v4156, 9
        %v4472 = vpop.permute.xlu0 %4471
        %4473 = vrot.lane.b32.xlu0 %v4157, 9
        %v4474 = vpop.permute.xlu0 %4473
        %4475 = vrot.lane.b32.xlu0 %v4158, 9
        %v4476 = vpop.permute.xlu0 %4475
        %4477 = vrot.lane.b32.xlu0 %v4159, 9
        %v4478 = vpop.permute.xlu0 %4477
        %4479 = vrot.lane.b32.xlu0 %v4160, 9
        %v4480 = vpop.permute.xlu0 %4479
        %4481 = vrot.lane.b32.xlu0 %v4161, 9
        %v4482 = vpop.permute.xlu0 %4481
        %4547 = vrot.lane.b32.xlu0 %v4162, 18
        %v4548 = vpop.permute.xlu0 %4547
        %4549 = vrot.lane.b32.xlu0 %v4163, 18
        %v4550 = vpop.permute.xlu0 %4549
        %4551 = vrot.lane.b32.xlu0 %v4164, 18
        %v4552 = vpop.permute.xlu0 %4551
        %4553 = vrot.lane.b32.xlu0 %v4165, 18
        %v4554 = vpop.permute.xlu0 %4553
        %4555 = vrot.lane.b32.xlu0 %v4166, 18
        %v4556 = vpop.permute.xlu0 %4555
        %4557 = vrot.lane.b32.xlu0 %v4167, 18
        %v4558 = vpop.permute.xlu0 %4557
        %4559 = vrot.lane.b32.xlu0 %v4168, 18
        %v4560 = vpop.permute.xlu0 %4559
        %4561 = vrot.lane.b32.xlu0 %v4169, 18
        %v4562 = vpop.permute.xlu0 %4561
        %4563 = vrot.lane.b32.xlu0 %v4170, 18
        %v4564 = vpop.permute.xlu0 %4563
        %4565 = vrot.lane.b32.xlu0 %v4171, 18
        %v4566 = vpop.permute.xlu0 %4565
        %4567 = vrot.lane.b32.xlu0 %v4172, 18
        %v4568 = vpop.permute.xlu0 %4567
        %4569 = vrot.lane.b32.xlu0 %v4173, 18
        %v4570 = vpop.permute.xlu0 %4569
        %4571 = vrot.lane.b32.xlu0 %v4174, 18
        %v4572 = vpop.permute.xlu0 %4571
        %4573 = vrot.lane.b32.xlu0 %v4175, 18
        %v4574 = vpop.permute.xlu0 %4573
        %4575 = vrot.lane.b32.xlu0 %v4176, 18
        %v4576 = vpop.permute.xlu0 %4575
        %4577 = vrot.lane.b32.xlu0 %v4177, 18
        %v4578 = vpop.permute.xlu0 %4577
        %4579 = vrot.lane.b32.xlu0 %v4178, 18
        %v4580 = vpop.permute.xlu0 %4579
        %4581 = vrot.lane.b32.xlu0 %v4179, 18
        %v4582 = vpop.permute.xlu0 %4581
        %4583 = vrot.lane.b32.xlu0 %v4180, 18
        %v4584 = vpop.permute.xlu0 %4583
        %4585 = vrot.lane.b32.xlu0 %v4181, 18
        %v4586 = vpop.permute.xlu0 %4585
        %4587 = vrot.lane.b32.xlu0 %v4182, 18
        %v4588 = vpop.permute.xlu0 %4587
        %4589 = vrot.lane.b32.xlu0 %v4183, 18
        %v4590 = vpop.permute.xlu0 %4589
        %4591 = vrot.lane.b32.xlu0 %v4184, 18
        %v4592 = vpop.permute.xlu0 %4591
        %4593 = vrot.lane.b32.xlu0 %v4185, 18
        %v4594 = vpop.permute.xlu0 %4593
        %4595 = vrot.lane.b32.xlu0 %v4186, 18
        %v4596 = vpop.permute.xlu0 %4595
        %4597 = vrot.lane.b32.xlu0 %v4187, 18
        %v4598 = vpop.permute.xlu0 %4597
        %4599 = vrot.lane.b32.xlu0 %v4188, 18
        %v4600 = vpop.permute.xlu0 %4599
        %4601 = vrot.lane.b32.xlu0 %v4189, 18
        %v4602 = vpop.permute.xlu0 %4601
        %4603 = vrot.lane.b32.xlu0 %v4190, 18
        %v4604 = vpop.permute.xlu0 %4603
        %4605 = vrot.lane.b32.xlu0 %v4191, 18
        %v4606 = vpop.permute.xlu0 %4605
        %4607 = vrot.lane.b32.xlu0 %v4192, 18
        %v4608 = vpop.permute.xlu0 %4607
        %4609 = vrot.lane.b32.xlu0 %v4193, 18
        %v4610 = vpop.permute.xlu0 %4609
        %4675 = vrot.lane.b32.xlu0 %v4194, 27
        %v4676 = vpop.permute.xlu0 %4675
        %4677 = vrot.lane.b32.xlu0 %v4195, 27
        %v4678 = vpop.permute.xlu0 %4677
        %4679 = vrot.lane.b32.xlu0 %v4196, 27
        %v4680 = vpop.permute.xlu0 %4679
        %4681 = vrot.lane.b32.xlu0 %v4197, 27
        %v4682 = vpop.permute.xlu0 %4681
        %4683 = vrot.lane.b32.xlu0 %v4198, 27
        %v4684 = vpop.permute.xlu0 %4683
        %4685 = vrot.lane.b32.xlu0 %v4199, 27
        %v4686 = vpop.permute.xlu0 %4685
        %4687 = vrot.lane.b32.xlu0 %v4200, 27
        %v4688 = vpop.permute.xlu0 %4687
        %4689 = vrot.lane.b32.xlu0 %v4201, 27
        %v4690 = vpop.permute.xlu0 %4689
        %4691 = vrot.lane.b32.xlu0 %v4202, 27
        %v4692 = vpop.permute.xlu0 %4691
        %4693 = vrot.lane.b32.xlu0 %v4203, 27
        %v4694 = vpop.permute.xlu0 %4693
        %4695 = vrot.lane.b32.xlu0 %v4204, 27
        %v4696 = vpop.permute.xlu0 %4695
        %4697 = vrot.lane.b32.xlu0 %v4205, 27
        %v4698 = vpop.permute.xlu0 %4697
        %4699 = vrot.lane.b32.xlu0 %v4206, 27
        %v4700 = vpop.permute.xlu0 %4699
        %4701 = vrot.lane.b32.xlu0 %v4207, 27
        %v4702 = vpop.permute.xlu0 %4701
        %4703 = vrot.lane.b32.xlu0 %v4208, 27
        %v4704 = vpop.permute.xlu0 %4703
        %4705 = vrot.lane.b32.xlu0 %v4209, 27
        %v4706 = vpop.permute.xlu0 %4705
        %4707 = vrot.lane.b32.xlu0 %v4210, 27
        %v4708 = vpop.permute.xlu0 %4707
        %4709 = vrot.lane.b32.xlu0 %v4211, 27
        %v4710 = vpop.permute.xlu0 %4709
        %4711 = vrot.lane.b32.xlu0 %v4212, 27
        %v4712 = vpop.permute.xlu0 %4711
        %4713 = vrot.lane.b32.xlu0 %v4213, 27
        %v4714 = vpop.permute.xlu0 %4713
        %4715 = vrot.lane.b32.xlu0 %v4214, 27
        %v4716 = vpop.permute.xlu0 %4715
        %4717 = vrot.lane.b32.xlu0 %v4215, 27
        %v4718 = vpop.permute.xlu0 %4717
        %4719 = vrot.lane.b32.xlu0 %v4216, 27
        %v4720 = vpop.permute.xlu0 %4719
        %4721 = vrot.lane.b32.xlu0 %v4217, 27
        %v4722 = vpop.permute.xlu0 %4721
        %4723 = vrot.lane.b32.xlu0 %v4218, 27
        %v4724 = vpop.permute.xlu0 %4723
        %4725 = vrot.lane.b32.xlu0 %v4219, 27
        %v4726 = vpop.permute.xlu0 %4725
        %4727 = vrot.lane.b32.xlu0 %v4220, 27
        %v4728 = vpop.permute.xlu0 %4727
        %4729 = vrot.lane.b32.xlu0 %v4221, 27
        %v4730 = vpop.permute.xlu0 %4729
        %4731 = vrot.lane.b32.xlu0 %v4222, 27
        %v4732 = vpop.permute.xlu0 %4731
        %4733 = vrot.lane.b32.xlu0 %v4223, 27
        %v4734 = vpop.permute.xlu0 %4733
        %4735 = vrot.lane.b32.xlu0 %v4224, 27
        %v4736 = vpop.permute.xlu0 %4735
        %4737 = vrot.lane.b32.xlu0 %v4225, 27
        %v4738 = vpop.permute.xlu0 %4737
        %4803 = vrot.lane.b32.xlu0 %v4226, 36
        %v4804 = vpop.permute.xlu0 %4803
        %4805 = vrot.lane.b32.xlu0 %v4227, 36
        %v4806 = vpop.permute.xlu0 %4805
        %4807 = vrot.lane.b32.xlu0 %v4228, 36
        %v4808 = vpop.permute.xlu0 %4807
        %4809 = vrot.lane.b32.xlu0 %v4229, 36
        %v4810 = vpop.permute.xlu0 %4809
        %4811 = vrot.lane.b32.xlu0 %v4230, 36
        %v4812 = vpop.permute.xlu0 %4811
        %4813 = vrot.lane.b32.xlu0 %v4231, 36
        %v4814 = vpop.permute.xlu0 %4813
        %4815 = vrot.lane.b32.xlu0 %v4232, 36
        %v4816 = vpop.permute.xlu0 %4815
        %4817 = vrot.lane.b32.xlu0 %v4233, 36
        %v4818 = vpop.permute.xlu0 %4817
        %4819 = vrot.lane.b32.xlu0 %v4234, 36
        %v4820 = vpop.permute.xlu0 %4819
        %4821 = vrot.lane.b32.xlu0 %v4235, 36
        %v4822 = vpop.permute.xlu0 %4821
        %4823 = vrot.lane.b32.xlu0 %v4236, 36
        %v4824 = vpop.permute.xlu0 %4823
        %4825 = vrot.lane.b32.xlu0 %v4237, 36
        %v4826 = vpop.permute.xlu0 %4825
        %4827 = vrot.lane.b32.xlu0 %v4238, 36
        %v4828 = vpop.permute.xlu0 %4827
        %4829 = vrot.lane.b32.xlu0 %v4239, 36
        %v4830 = vpop.permute.xlu0 %4829
        %4831 = vrot.lane.b32.xlu0 %v4240, 36
        %v4832 = vpop.permute.xlu0 %4831
        %4833 = vrot.lane.b32.xlu0 %v4241, 36
        %v4834 = vpop.permute.xlu0 %4833
        %4835 = vrot.lane.b32.xlu0 %v4242, 36
        %v4836 = vpop.permute.xlu0 %4835
        %4837 = vrot.lane.b32.xlu0 %v4243, 36
        %v4838 = vpop.permute.xlu0 %4837
        %4839 = vrot.lane.b32.xlu0 %v4244, 36
        %v4840 = vpop.permute.xlu0 %4839
        %4841 = vrot.lane.b32.xlu0 %v4245, 36
        %v4842 = vpop.permute.xlu0 %4841
        %4843 = vrot.lane.b32.xlu0 %v4246, 36
        %v4844 = vpop.permute.xlu0 %4843
        %4845 = vrot.lane.b32.xlu0 %v4247, 36
        %v4846 = vpop.permute.xlu0 %4845
        %4847 = vrot.lane.b32.xlu0 %v4248, 36
        %v4848 = vpop.permute.xlu0 %4847
        %4849 = vrot.lane.b32.xlu0 %v4249, 36
        %v4850 = vpop.permute.xlu0 %4849
        %4851 = vrot.lane.b32.xlu0 %v4250, 36
        %v4852 = vpop.permute.xlu0 %4851
        %4853 = vrot.lane.b32.xlu0 %v4251, 36
        %v4854 = vpop.permute.xlu0 %4853
        %4855 = vrot.lane.b32.xlu0 %v4252, 36
        %v4856 = vpop.permute.xlu0 %4855
        %4857 = vrot.lane.b32.xlu0 %v4253, 36
        %v4858 = vpop.permute.xlu0 %4857
        %4859 = vrot.lane.b32.xlu0 %v4254, 36
        %v4860 = vpop.permute.xlu0 %4859
        %4861 = vrot.lane.b32.xlu0 %v4255, 36
        %v4862 = vpop.permute.xlu0 %4861
        %4863 = vrot.lane.b32.xlu0 %v4256, 36
        %v4864 = vpop.permute.xlu0 %4863
        %4865 = vrot.lane.b32.xlu0 %v4257, 36
        %v4866 = vpop.permute.xlu0 %4865
        %4931 = vrot.lane.b32.xlu0 %v4258, 45
        %v4932 = vpop.permute.xlu0 %4931
        %4933 = vrot.lane.b32.xlu0 %v4259, 45
        %v4934 = vpop.permute.xlu0 %4933
        %4935 = vrot.lane.b32.xlu0 %v4260, 45
        %v4936 = vpop.permute.xlu0 %4935
        %4937 = vrot.lane.b32.xlu0 %v4261, 45
        %v4938 = vpop.permute.xlu0 %4937
        %4939 = vrot.lane.b32.xlu0 %v4262, 45
        %v4940 = vpop.permute.xlu0 %4939
        %4941 = vrot.lane.b32.xlu0 %v4263, 45
        %v4942 = vpop.permute.xlu0 %4941
        %4943 = vrot.lane.b32.xlu0 %v4264, 45
        %v4944 = vpop.permute.xlu0 %4943
        %4945 = vrot.lane.b32.xlu0 %v4265, 45
        %v4946 = vpop.permute.xlu0 %4945
        %4947 = vrot.lane.b32.xlu0 %v4266, 45
        %v4948 = vpop.permute.xlu0 %4947
        %4949 = vrot.lane.b32.xlu0 %v4267, 45
        %v4950 = vpop.permute.xlu0 %4949
        %4951 = vrot.lane.b32.xlu0 %v4268, 45
        %v4952 = vpop.permute.xlu0 %4951
        %4953 = vrot.lane.b32.xlu0 %v4269, 45
        %v4954 = vpop.permute.xlu0 %4953
        %4955 = vrot.lane.b32.xlu0 %v4270, 45
        %v4956 = vpop.permute.xlu0 %4955
        %4957 = vrot.lane.b32.xlu0 %v4271, 45
        %v4958 = vpop.permute.xlu0 %4957
        %4959 = vrot.lane.b32.xlu0 %v4272, 45
        %v4960 = vpop.permute.xlu0 %4959
        %4961 = vrot.lane.b32.xlu0 %v4273, 45
        %v4962 = vpop.permute.xlu0 %4961
        %4963 = vrot.lane.b32.xlu0 %v4274, 45
        %v4964 = vpop.permute.xlu0 %4963
        %4965 = vrot.lane.b32.xlu0 %v4275, 45
        %v4966 = vpop.permute.xlu0 %4965
        %4967 = vrot.lane.b32.xlu0 %v4276, 45
        %v4968 = vpop.permute.xlu0 %4967
        %4969 = vrot.lane.b32.xlu0 %v4277, 45
        %v4970 = vpop.permute.xlu0 %4969
        %4971 = vrot.lane.b32.xlu0 %v4278, 45
        %v4972 = vpop.permute.xlu0 %4971
        %4973 = vrot.lane.b32.xlu0 %v4279, 45
        %v4974 = vpop.permute.xlu0 %4973
        %4975 = vrot.lane.b32.xlu0 %v4280, 45
        %v4976 = vpop.permute.xlu0 %4975
        %4977 = vrot.lane.b32.xlu0 %v4281, 45
        %v4978 = vpop.permute.xlu0 %4977
        %4979 = vrot.lane.b32.xlu0 %v4282, 45
        %v4980 = vpop.permute.xlu0 %4979
        %4981 = vrot.lane.b32.xlu0 %v4283, 45
        %v4982 = vpop.permute.xlu0 %4981
        %4983 = vrot.lane.b32.xlu0 %v4284, 45
        %v4984 = vpop.permute.xlu0 %4983
        %4985 = vrot.lane.b32.xlu0 %v4285, 45
        %v4986 = vpop.permute.xlu0 %4985
        %4987 = vrot.lane.b32.xlu0 %v4286, 45
        %v4988 = vpop.permute.xlu0 %4987
        %4989 = vrot.lane.b32.xlu0 %v4287, 45
        %v4990 = vpop.permute.xlu0 %4989
        %4991 = vrot.lane.b32.xlu0 %v4288, 45
        %v4992 = vpop.permute.xlu0 %4991
        %4993 = vrot.lane.b32.xlu0 %v4289, 45
        %v4994 = vpop.permute.xlu0 %4993
        %5059 = vrot.lane.b32.xlu0 %v4291, 54
        %v5060 = vpop.permute.xlu0 %5059
        %5061 = vrot.lane.b32.xlu0 %v4292, 54
        %v5062 = vpop.permute.xlu0 %5061
        %5063 = vrot.lane.b32.xlu0 %v4293, 54
        %v5064 = vpop.permute.xlu0 %5063
        %5065 = vrot.lane.b32.xlu0 %v4294, 54
        %v5066 = vpop.permute.xlu0 %5065
        %5067 = vrot.lane.b32.xlu0 %v4295, 54
        %v5068 = vpop.permute.xlu0 %5067
        %5069 = vrot.lane.b32.xlu0 %v4296, 54
        %v5070 = vpop.permute.xlu0 %5069
        %5071 = vrot.lane.b32.xlu0 %v4297, 54
        %v5072 = vpop.permute.xlu0 %5071
        %5073 = vrot.lane.b32.xlu0 %v4298, 54
        %v5074 = vpop.permute.xlu0 %5073
        %5075 = vrot.lane.b32.xlu0 %v4299, 54
        %v5076 = vpop.permute.xlu0 %5075
        %5077 = vrot.lane.b32.xlu0 %v4300, 54
        %v5078 = vpop.permute.xlu0 %5077
        %5079 = vrot.lane.b32.xlu0 %v4301, 54
        %v5080 = vpop.permute.xlu0 %5079
        %5081 = vrot.lane.b32.xlu0 %v4302, 54
        %v5082 = vpop.permute.xlu0 %5081
        %5083 = vrot.lane.b32.xlu0 %v4303, 54
        %v5084 = vpop.permute.xlu0 %5083
        %5085 = vrot.lane.b32.xlu0 %v4304, 54
        %v5086 = vpop.permute.xlu0 %5085
        %5087 = vrot.lane.b32.xlu0 %v4305, 54
        %v5088 = vpop.permute.xlu0 %5087
        %5089 = vrot.lane.b32.xlu0 %v4306, 54
        %v5090 = vpop.permute.xlu0 %5089
        %5091 = vrot.lane.b32.xlu0 %v4307, 54
        %v5092 = vpop.permute.xlu0 %5091
        %5093 = vrot.lane.b32.xlu0 %v4308, 54
        %v5094 = vpop.permute.xlu0 %5093
        %5095 = vrot.lane.b32.xlu0 %v4309, 54
        %v5096 = vpop.permute.xlu0 %5095
        %5097 = vrot.lane.b32.xlu0 %v4310, 54
        %v5098 = vpop.permute.xlu0 %5097
        %5099 = vrot.lane.b32.xlu0 %v4311, 54
        %v5100 = vpop.permute.xlu0 %5099
        %5101 = vrot.lane.b32.xlu0 %v4312, 54
        %v5102 = vpop.permute.xlu0 %5101
        %5103 = vrot.lane.b32.xlu0 %v4313, 54
        %v5104 = vpop.permute.xlu0 %5103
        %5105 = vrot.lane.b32.xlu0 %v4314, 54
        %v5106 = vpop.permute.xlu0 %5105
        %5107 = vrot.lane.b32.xlu0 %v4315, 54
        %v5108 = vpop.permute.xlu0 %5107
        %5109 = vrot.lane.b32.xlu0 %v4316, 54
        %v5110 = vpop.permute.xlu0 %5109
        %5111 = vrot.lane.b32.xlu0 %v4317, 54
        %v5112 = vpop.permute.xlu0 %5111
        %5113 = vrot.lane.b32.xlu0 %v4318, 54
        %v5114 = vpop.permute.xlu0 %5113
        %5115 = vrot.lane.b32.xlu0 %v4319, 54
        %v5116 = vpop.permute.xlu0 %5115
        %5117 = vrot.lane.b32.xlu0 %v4320, 54
        %v5118 = vpop.permute.xlu0 %5117
        %5119 = vrot.lane.b32.xlu0 %v4321, 54
        %v5120 = vpop.permute.xlu0 %5119
        %5121 = vrot.lane.b32.xlu0 %v4322, 54
        %v5122 = vpop.permute.xlu0 %5121
        %5187 = vrot.lane.b32.xlu0 %v4323, 63
        %v5188 = vpop.permute.xlu0 %5187
        %5189 = vrot.lane.b32.xlu0 %v4324, 63
        %v5190 = vpop.permute.xlu0 %5189
        %5191 = vrot.lane.b32.xlu0 %v4325, 63
        %v5192 = vpop.permute.xlu0 %5191
        %5193 = vrot.lane.b32.xlu0 %v4326, 63
        %v5194 = vpop.permute.xlu0 %5193
        %5195 = vrot.lane.b32.xlu0 %v4327, 63
        %v5196 = vpop.permute.xlu0 %5195
        %5197 = vrot.lane.b32.xlu0 %v4328, 63
        %v5198 = vpop.permute.xlu0 %5197
        %5199 = vrot.lane.b32.xlu0 %v4329, 63
        %v5200 = vpop.permute.xlu0 %5199
        %5201 = vrot.lane.b32.xlu0 %v4330, 63
        %v5202 = vpop.permute.xlu0 %5201
        %5203 = vrot.lane.b32.xlu0 %v4331, 63
        %v5204 = vpop.permute.xlu0 %5203
        %5205 = vrot.lane.b32.xlu0 %v4332, 63
        %v5206 = vpop.permute.xlu0 %5205
        %5207 = vrot.lane.b32.xlu0 %v4333, 63
        %v5208 = vpop.permute.xlu0 %5207
        %5209 = vrot.lane.b32.xlu0 %v4334, 63
        %v5210 = vpop.permute.xlu0 %5209
        %5211 = vrot.lane.b32.xlu0 %v4335, 63
        %v5212 = vpop.permute.xlu0 %5211
        %5213 = vrot.lane.b32.xlu0 %v4336, 63
        %v5214 = vpop.permute.xlu0 %5213
        %5215 = vrot.lane.b32.xlu0 %v4337, 63
        %v5216 = vpop.permute.xlu0 %5215
        %5217 = vrot.lane.b32.xlu0 %v4338, 63
        %v5218 = vpop.permute.xlu0 %5217
        %5219 = vrot.lane.b32.xlu0 %v4339, 63
        %v5220 = vpop.permute.xlu0 %5219
        %5221 = vrot.lane.b32.xlu0 %v4340, 63
        %v5222 = vpop.permute.xlu0 %5221
        %5223 = vrot.lane.b32.xlu0 %v4341, 63
        %v5224 = vpop.permute.xlu0 %5223
        %5225 = vrot.lane.b32.xlu0 %v4342, 63
        %v5226 = vpop.permute.xlu0 %5225
        %5227 = vrot.lane.b32.xlu0 %v4343, 63
        %v5228 = vpop.permute.xlu0 %5227
        %5229 = vrot.lane.b32.xlu0 %v4344, 63
        %v5230 = vpop.permute.xlu0 %5229
        %5231 = vrot.lane.b32.xlu0 %v4345, 63
        %v5232 = vpop.permute.xlu0 %5231
        %5233 = vrot.lane.b32.xlu0 %v4346, 63
        %v5234 = vpop.permute.xlu0 %5233
        %5235 = vrot.lane.b32.xlu0 %v4347, 63
        %v5236 = vpop.permute.xlu0 %5235
        %5237 = vrot.lane.b32.xlu0 %v4348, 63
        %v5238 = vpop.permute.xlu0 %5237
        %5239 = vrot.lane.b32.xlu0 %v4349, 63
        %v5240 = vpop.permute.xlu0 %5239
        %5241 = vrot.lane.b32.xlu0 %v4350, 63
        %v5242 = vpop.permute.xlu0 %5241
        %5243 = vrot.lane.b32.xlu0 %v4351, 63
        %v5244 = vpop.permute.xlu0 %5243
        %5245 = vrot.lane.b32.xlu0 %v4352, 63
        %v5246 = vpop.permute.xlu0 %5245
        %5247 = vrot.lane.b32.xlu0 %v4353, 63
        %v5248 = vpop.permute.xlu0 %5247
        %5249 = vrot.lane.b32.xlu0 %v4354, 63
        %v5250 = vpop.permute.xlu0 %5249
        %5315 = vrot.lane.b32.xlu0 %v4355, 72
        %v5316 = vpop.permute.xlu0 %5315
        %5317 = vrot.lane.b32.xlu0 %v4356, 72
        %v5318 = vpop.permute.xlu0 %5317
        %5319 = vrot.lane.b32.xlu0 %v4357, 72
        %v5320 = vpop.permute.xlu0 %5319
        %5321 = vrot.lane.b32.xlu0 %v4358, 72
        %v5322 = vpop.permute.xlu0 %5321
        %5323 = vrot.lane.b32.xlu0 %v4359, 72
        %v5324 = vpop.permute.xlu0 %5323
        %5325 = vrot.lane.b32.xlu0 %v4360, 72
        %v5326 = vpop.permute.xlu0 %5325
        %5327 = vrot.lane.b32.xlu0 %v4361, 72
        %v5328 = vpop.permute.xlu0 %5327
        %5329 = vrot.lane.b32.xlu0 %v4362, 72
        %v5330 = vpop.permute.xlu0 %5329
        %5331 = vrot.lane.b32.xlu0 %v4363, 72
        %v5332 = vpop.permute.xlu0 %5331
        %5333 = vrot.lane.b32.xlu0 %v4364, 72
        %v5334 = vpop.permute.xlu0 %5333
        %5335 = vrot.lane.b32.xlu0 %v4365, 72
        %v5336 = vpop.permute.xlu0 %5335
        %5337 = vrot.lane.b32.xlu0 %v4366, 72
        %v5338 = vpop.permute.xlu0 %5337
        %5339 = vrot.lane.b32.xlu0 %v4367, 72
        %v5340 = vpop.permute.xlu0 %5339
        %5341 = vrot.lane.b32.xlu0 %v4368, 72
        %v5342 = vpop.permute.xlu0 %5341
        %5343 = vrot.lane.b32.xlu0 %v4369, 72
        %v5344 = vpop.permute.xlu0 %5343
        %5345 = vrot.lane.b32.xlu0 %v4370, 72
        %v5346 = vpop.permute.xlu0 %5345
        %5347 = vrot.lane.b32.xlu0 %v4371, 72
        %v5348 = vpop.permute.xlu0 %5347
        %5349 = vrot.lane.b32.xlu0 %v4372, 72
        %v5350 = vpop.permute.xlu0 %5349
        %5351 = vrot.lane.b32.xlu0 %v4373, 72
        %v5352 = vpop.permute.xlu0 %5351
        %5353 = vrot.lane.b32.xlu0 %v4374, 72
        %v5354 = vpop.permute.xlu0 %5353
        %5355 = vrot.lane.b32.xlu0 %v4375, 72
        %v5356 = vpop.permute.xlu0 %5355
        %5357 = vrot.lane.b32.xlu0 %v4376, 72
        %v5358 = vpop.permute.xlu0 %5357
        %5359 = vrot.lane.b32.xlu0 %v4377, 72
        %v5360 = vpop.permute.xlu0 %5359
        %5361 = vrot.lane.b32.xlu0 %v4378, 72
        %v5362 = vpop.permute.xlu0 %5361
        %5363 = vrot.lane.b32.xlu0 %v4379, 72
        %v5364 = vpop.permute.xlu0 %5363
        %5365 = vrot.lane.b32.xlu0 %v4380, 72
        %v5366 = vpop.permute.xlu0 %5365
        %5367 = vrot.lane.b32.xlu0 %v4381, 72
        %v5368 = vpop.permute.xlu0 %5367
        %5369 = vrot.lane.b32.xlu0 %v4382, 72
        %v5370 = vpop.permute.xlu0 %5369
        %5371 = vrot.lane.b32.xlu0 %v4383, 72
        %v5372 = vpop.permute.xlu0 %5371
        %5373 = vrot.lane.b32.xlu0 %v4384, 72
        %v5374 = vpop.permute.xlu0 %5373
        %5375 = vrot.lane.b32.xlu0 %v4385, 72
        %v5376 = vpop.permute.xlu0 %5375
        %5377 = vrot.lane.b32.xlu0 %v4386, 72
        %v5378 = vpop.permute.xlu0 %5377
        %v5411 = vsel %vm3945, %v4098, %v4420
        %v5412 = vsel %vm3945, %v4099, %v4422
        %v5413 = vsel %vm3945, %v4100, %v4424
        %v5414 = vsel %vm3945, %v4101, %v4426
        %v5415 = vsel %vm3945, %v4102, %v4428
        %v5416 = vsel %vm3945, %v4103, %v4430
        %v5417 = vsel %vm3945, %v4104, %v4432
        %v5418 = vsel %vm3945, %v4105, %v4434
        %v5419 = vsel %vm3945, %v4106, %v4436
        %v5420 = vsel %vm3945, %v4107, %v4438
        %v5421 = vsel %vm3945, %v4108, %v4440
        %v5422 = vsel %vm3945, %v4109, %v4442
        %v5423 = vsel %vm3945, %v4110, %v4444
        %v5424 = vsel %vm3945, %v4111, %v4446
        %v5425 = vsel %vm3945, %v4112, %v4448
        %v5426 = vsel %vm3945, %v4113, %v4450
        %v5427 = vsel %vm3945, %v4114, %v4452
        %v5428 = vsel %vm3945, %v4115, %v4454
        %v5429 = vsel %vm3945, %v4116, %v4456
        %v5430 = vsel %vm3945, %v4117, %v4458
        %v5431 = vsel %vm3945, %v4118, %v4460
        %v5432 = vsel %vm3945, %v4119, %v4462
        %v5433 = vsel %vm3945, %v4120, %v4464
        %v5434 = vsel %vm3945, %v4121, %v4466
        %v5435 = vsel %vm3945, %v4122, %v4468
        %v5436 = vsel %vm3945, %v4123, %v4470
        %v5437 = vsel %vm3945, %v4124, %v4472
        %v5438 = vsel %vm3945, %v4125, %v4474
        %v5439 = vsel %vm3945, %v4126, %v4476
        %v5440 = vsel %vm3945, %v4127, %v4478
        %v5441 = vsel %vm3945, %v4128, %v4480
        %v5442 = vsel %vm3945, %v4129, %v4482
        %vm5443 = vcmask 146432
        %v5444 = vsel %vm5443, %v5411, %v4548
        %v5445 = vsel %vm5443, %v5412, %v4550
        %v5446 = vsel %vm5443, %v5413, %v4552
        %v5447 = vsel %vm5443, %v5414, %v4554
        %v5448 = vsel %vm5443, %v5415, %v4556
        %v5449 = vsel %vm5443, %v5416, %v4558
        %v5450 = vsel %vm5443, %v5417, %v4560
        %v5451 = vsel %vm5443, %v5418, %v4562
        %v5452 = vsel %vm5443, %v5419, %v4564
        %v5453 = vsel %vm5443, %v5420, %v4566
        %v5454 = vsel %vm5443, %v5421, %v4568
        %v5455 = vsel %vm5443, %v5422, %v4570
        %v5456 = vsel %vm5443, %v5423, %v4572
        %v5457 = vsel %vm5443, %v5424, %v4574
        %v5458 = vsel %vm5443, %v5425, %v4576
        %v5459 = vsel %vm5443, %v5426, %v4578
        %v5460 = vsel %vm5443, %v5427, %v4580
        %v5461 = vsel %vm5443, %v5428, %v4582
        %v5462 = vsel %vm5443, %v5429, %v4584
        %v5463 = vsel %vm5443, %v5430, %v4586
        %v5464 = vsel %vm5443, %v5431, %v4588
        %v5465 = vsel %vm5443, %v5432, %v4590
        %v5466 = vsel %vm5443, %v5433, %v4592
        %v5467 = vsel %vm5443, %v5434, %v4594
        %v5468 = vsel %vm5443, %v5435, %v4596
        %v5469 = vsel %vm5443, %v5436, %v4598
        %v5470 = vsel %vm5443, %v5437, %v4600
        %v5471 = vsel %vm5443, %v5438, %v4602
        %v5472 = vsel %vm5443, %v5439, %v4604
        %v5473 = vsel %vm5443, %v5440, %v4606
        %v5474 = vsel %vm5443, %v5441, %v4608
        %v5475 = vsel %vm5443, %v5442, %v4610
        %vm5476 = vcmask 220160
        %v5477 = vsel %vm5476, %v5444, %v4676
        %v5478 = vsel %vm5476, %v5445, %v4678
        %v5479 = vsel %vm5476, %v5446, %v4680
        %v5480 = vsel %vm5476, %v5447, %v4682
        %v5481 = vsel %vm5476, %v5448, %v4684
        %v5482 = vsel %vm5476, %v5449, %v4686
        %v5483 = vsel %vm5476, %v5450, %v4688
        %v5484 = vsel %vm5476, %v5451, %v4690
        %v5485 = vsel %vm5476, %v5452, %v4692
        %v5486 = vsel %vm5476, %v5453, %v4694
        %v5487 = vsel %vm5476, %v5454, %v4696
        %v5488 = vsel %vm5476, %v5455, %v4698
        %v5489 = vsel %vm5476, %v5456, %v4700
        %v5490 = vsel %vm5476, %v5457, %v4702
        %v5491 = vsel %vm5476, %v5458, %v4704
        %v5492 = vsel %vm5476, %v5459, %v4706
        %v5493 = vsel %vm5476, %v5460, %v4708
        %v5494 = vsel %vm5476, %v5461, %v4710
        %v5495 = vsel %vm5476, %v5462, %v4712
        %v5496 = vsel %vm5476, %v5463, %v4714
        %v5497 = vsel %vm5476, %v5464, %v4716
        %v5498 = vsel %vm5476, %v5465, %v4718
        %v5499 = vsel %vm5476, %v5466, %v4720
        %v5500 = vsel %vm5476, %v5467, %v4722
        %v5501 = vsel %vm5476, %v5468, %v4724
        %v5502 = vsel %vm5476, %v5469, %v4726
        %v5503 = vsel %vm5476, %v5470, %v4728
        %v5504 = vsel %vm5476, %v5471, %v4730
        %v5505 = vsel %vm5476, %v5472, %v4732
        %v5506 = vsel %vm5476, %v5473, %v4734
        %v5507 = vsel %vm5476, %v5474, %v4736
        %v5508 = vsel %vm5476, %v5475, %v4738
        %vm5509 = vcmask 293888
        %v5510 = vsel %vm5509, %v5477, %v4804
        %v5511 = vsel %vm5509, %v5478, %v4806
        %v5512 = vsel %vm5509, %v5479, %v4808
        %v5513 = vsel %vm5509, %v5480, %v4810
        %v5514 = vsel %vm5509, %v5481, %v4812
        %v5515 = vsel %vm5509, %v5482, %v4814
        %v5516 = vsel %vm5509, %v5483, %v4816
        %v5517 = vsel %vm5509, %v5484, %v4818
        %v5518 = vsel %vm5509, %v5485, %v4820
        %v5519 = vsel %vm5509, %v5486, %v4822
        %v5520 = vsel %vm5509, %v5487, %v4824
        %v5521 = vsel %vm5509, %v5488, %v4826
        %v5522 = vsel %vm5509, %v5489, %v4828
        %v5523 = vsel %vm5509, %v5490, %v4830
        %v5524 = vsel %vm5509, %v5491, %v4832
        %v5525 = vsel %vm5509, %v5492, %v4834
        %v5526 = vsel %vm5509, %v5493, %v4836
        %v5527 = vsel %vm5509, %v5494, %v4838
        %v5528 = vsel %vm5509, %v5495, %v4840
        %v5529 = vsel %vm5509, %v5496, %v4842
        %v5530 = vsel %vm5509, %v5497, %v4844
        %v5531 = vsel %vm5509, %v5498, %v4846
        %v5532 = vsel %vm5509, %v5499, %v4848
        %v5533 = vsel %vm5509, %v5500, %v4850
        %v5534 = vsel %vm5509, %v5501, %v4852
        %v5535 = vsel %vm5509, %v5502, %v4854
        %v5536 = vsel %vm5509, %v5503, %v4856
        %v5537 = vsel %vm5509, %v5504, %v4858
        %v5538 = vsel %vm5509, %v5505, %v4860
        %v5539 = vsel %vm5509, %v5506, %v4862
        %v5540 = vsel %vm5509, %v5507, %v4864
        %v5541 = vsel %vm5509, %v5508, %v4866
        %v5542 = vsel %vm2481, %v5510, %v4932
        %v5543 = vsel %vm2481, %v5511, %v4934
        %v5544 = vsel %vm2481, %v5512, %v4936
        %v5545 = vsel %vm2481, %v5513, %v4938
        %v5546 = vsel %vm2481, %v5514, %v4940
        %v5547 = vsel %vm2481, %v5515, %v4942
        %v5548 = vsel %vm2481, %v5516, %v4944
        %v5549 = vsel %vm2481, %v5517, %v4946
        %v5550 = vsel %vm2481, %v5518, %v4948
        %v5551 = vsel %vm2481, %v5519, %v4950
        %v5552 = vsel %vm2481, %v5520, %v4952
        %v5553 = vsel %vm2481, %v5521, %v4954
        %v5554 = vsel %vm2481, %v5522, %v4956
        %v5555 = vsel %vm2481, %v5523, %v4958
        %v5556 = vsel %vm2481, %v5524, %v4960
        %v5557 = vsel %vm2481, %v5525, %v4962
        %v5558 = vsel %vm2481, %v5526, %v4964
        %v5559 = vsel %vm2481, %v5527, %v4966
        %v5560 = vsel %vm2481, %v5528, %v4968
        %v5561 = vsel %vm2481, %v5529, %v4970
        %v5562 = vsel %vm2481, %v5530, %v4972
        %v5563 = vsel %vm2481, %v5531, %v4974
        %v5564 = vsel %vm2481, %v5532, %v4976
        %v5565 = vsel %vm2481, %v5533, %v4978
        %v5566 = vsel %vm2481, %v5534, %v4980
        %v5567 = vsel %vm2481, %v5535, %v4982
        %v5568 = vsel %vm2481, %v5536, %v4984
        %v5569 = vsel %vm2481, %v5537, %v4986
        %v5570 = vsel %vm2481, %v5538, %v4988
        %v5571 = vsel %vm2481, %v5539, %v4990
        %v5572 = vsel %vm2481, %v5540, %v4992
        %v5573 = vsel %vm2481, %v5541, %v4994
        %vm5574 = vcmask 441344
        %v5575 = vsel %vm5574, %v5542, %v5060
        %v5576 = vsel %vm5574, %v5543, %v5062
        %v5577 = vsel %vm5574, %v5544, %v5064
        %v5578 = vsel %vm5574, %v5545, %v5066
        %v5579 = vsel %vm5574, %v5546, %v5068
        %v5580 = vsel %vm5574, %v5547, %v5070
        %v5581 = vsel %vm5574, %v5548, %v5072
        %v5582 = vsel %vm5574, %v5549, %v5074
        %v5583 = vsel %vm5574, %v5550, %v5076
        %v5584 = vsel %vm5574, %v5551, %v5078
        %v5585 = vsel %vm5574, %v5552, %v5080
        %v5586 = vsel %vm5574, %v5553, %v5082
        %v5587 = vsel %vm5574, %v5554, %v5084
        %v5588 = vsel %vm5574, %v5555, %v5086
        %v5589 = vsel %vm5574, %v5556, %v5088
        %v5590 = vsel %vm5574, %v5557, %v5090
        %v5591 = vsel %vm5574, %v5558, %v5092
        %v5592 = vsel %vm5574, %v5559, %v5094
        %v5593 = vsel %vm5574, %v5560, %v5096
        %v5594 = vsel %vm5574, %v5561, %v5098
        %v5595 = vsel %vm5574, %v5562, %v5100
        %v5596 = vsel %vm5574, %v5563, %v5102
        %v5597 = vsel %vm5574, %v5564, %v5104
        %v5598 = vsel %vm5574, %v5565, %v5106
        %v5599 = vsel %vm5574, %v5566, %v5108
        %v5600 = vsel %vm5574, %v5567, %v5110
        %v5601 = vsel %vm5574, %v5568, %v5112
        %v5602 = vsel %vm5574, %v5569, %v5114
        %v5603 = vsel %vm5574, %v5570, %v5116
        %v5604 = vsel %vm5574, %v5571, %v5118
        %v5605 = vsel %vm5574, %v5572, %v5120
        %v5606 = vsel %vm5574, %v5573, %v5122
        %vm5607 = vcmask 515072
        %v5608 = vsel %vm5607, %v5575, %v5188
        %v5609 = vsel %vm5607, %v5576, %v5190
        %v5610 = vsel %vm5607, %v5577, %v5192
        %v5611 = vsel %vm5607, %v5578, %v5194
        %v5612 = vsel %vm5607, %v5579, %v5196
        %v5613 = vsel %vm5607, %v5580, %v5198
        %v5614 = vsel %vm5607, %v5581, %v5200
        %v5615 = vsel %vm5607, %v5582, %v5202
        %v5616 = vsel %vm5607, %v5583, %v5204
        %v5617 = vsel %vm5607, %v5584, %v5206
        %v5618 = vsel %vm5607, %v5585, %v5208
        %v5619 = vsel %vm5607, %v5586, %v5210
        %v5620 = vsel %vm5607, %v5587, %v5212
        %v5621 = vsel %vm5607, %v5588, %v5214
        %v5622 = vsel %vm5607, %v5589, %v5216
        %v5623 = vsel %vm5607, %v5590, %v5218
        %v5624 = vsel %vm5607, %v5591, %v5220
        %v5625 = vsel %vm5607, %v5592, %v5222
        %v5626 = vsel %vm5607, %v5593, %v5224
        %v5627 = vsel %vm5607, %v5594, %v5226
        %v5628 = vsel %vm5607, %v5595, %v5228
        %v5629 = vsel %vm5607, %v5596, %v5230
        %v5630 = vsel %vm5607, %v5597, %v5232
        %v5631 = vsel %vm5607, %v5598, %v5234
        %v5632 = vsel %vm5607, %v5599, %v5236
        %v5633 = vsel %vm5607, %v5600, %v5238
        %v5634 = vsel %vm5607, %v5601, %v5240
        %v5635 = vsel %vm5607, %v5602, %v5242
        %v5636 = vsel %vm5607, %v5603, %v5244
        %v5637 = vsel %vm5607, %v5604, %v5246
        %v5638 = vsel %vm5607, %v5605, %v5248
        %v5639 = vsel %vm5607, %v5606, %v5250
        %vm5640 = vcmask 588800
        %v5641 = vsel %vm5640, %v5608, %v5316
        %v5642 = vsel %vm5640, %v5609, %v5318
        %v5643 = vsel %vm5640, %v5610, %v5320
        %v5644 = vsel %vm5640, %v5611, %v5322
        %v5645 = vsel %vm5640, %v5612, %v5324
        %v5646 = vsel %vm5640, %v5613, %v5326
        %v5647 = vsel %vm5640, %v5614, %v5328
        %v5648 = vsel %vm5640, %v5615, %v5330
        %v5649 = vsel %vm5640, %v5616, %v5332
        %v5650 = vsel %vm5640, %v5617, %v5334
        %v5651 = vsel %vm5640, %v5618, %v5336
        %v5652 = vsel %vm5640, %v5619, %v5338
        %v5653 = vsel %vm5640, %v5620, %v5340
        %v5654 = vsel %vm5640, %v5621, %v5342
        %v5655 = vsel %vm5640, %v5622, %v5344
        %v5656 = vsel %vm5640, %v5623, %v5346
        %v5657 = vsel %vm5640, %v5624, %v5348
        %v5658 = vsel %vm5640, %v5625, %v5350
        %v5659 = vsel %vm5640, %v5626, %v5352
        %v5660 = vsel %vm5640, %v5627, %v5354
        %v5661 = vsel %vm5640, %v5628, %v5356
        %v5662 = vsel %vm5640, %v5629, %v5358
        %v5663 = vsel %vm5640, %v5630, %v5360
        %v5664 = vsel %vm5640, %v5631, %v5362
        %v5665 = vsel %vm5640, %v5632, %v5364
        %v5666 = vsel %vm5640, %v5633, %v5366
        %v5667 = vsel %vm5640, %v5634, %v5368
        %v5668 = vsel %vm5640, %v5635, %v5370
        %v5669 = vsel %vm5640, %v5636, %v5372
        %v5670 = vsel %vm5640, %v5637, %v5374
        %v5671 = vsel %vm5640, %v5638, %v5376
        %v5672 = vsel %vm5640, %v5639, %v5378
        %v5673 = vpack.c.bf16 %v5642, %v5641
        %v5674 = vpack.c.bf16 %v5644, %v5643
        %v5675 = vpack.c.bf16 %v5646, %v5645
        %v5676 = vpack.c.bf16 %v5648, %v5647
        %v5677 = vpack.c.bf16 %v5650, %v5649
        %v5678 = vpack.c.bf16 %v5652, %v5651
        %v5679 = vpack.c.bf16 %v5654, %v5653
        %v5680 = vpack.c.bf16 %v5656, %v5655
        %v5681 = vpack.c.bf16 %v5658, %v5657
        %v5682 = vpack.c.bf16 %v5660, %v5659
        %v5683 = vpack.c.bf16 %v5662, %v5661
        %v5684 = vpack.c.bf16 %v5664, %v5663
        %v5685 = vpack.c.bf16 %v5666, %v5665
        %v5686 = vpack.c.bf16 %v5668, %v5667
        %v5687 = vpack.c.bf16 %v5670, %v5669
        %v5688 = vpack.c.bf16 %v5672, %v5671
        %v5689 = vld [vmem:[%s7] sm:$0xf]
        %v5690 = vld [vmem:[%s7 + $0x4] sm:$0xf]
        %v5691 = vld [vmem:[%s7 + $0x8] sm:$0xf]
        %v5692 = vld [vmem:[%s7 + $0xc] sm:$0xf]
        %v5693 = vld [vmem:[%s7 + $0x10] sm:$0xf]
        %v5694 = vld [vmem:[%s7 + $0x14] sm:$0xf]
        %v5695 = vld [vmem:[%s7 + $0x18] sm:$0xf]
        %v5696 = vld [vmem:[%s7 + $0x1c] sm:$0xf]
        %v5697 = vld [vmem:[%s7 + $0x20] sm:$0xf]
        %v5698 = vld [vmem:[%s7 + $0x24] sm:$0xf]
        %v5699 = vld [vmem:[%s7 + $0x28] sm:$0x1]
        %v5711 = vunpack.c.l.b16 %v5689
        %v5712 = vunpack.c.l.b16 %v5690
        %v5713 = vunpack.c.l.b16 %v5691
        %v5714 = vunpack.c.l.b16 %v5692
        %v5715 = vunpack.c.l.b16 %v5693
        %v5716 = vunpack.c.l.b16 %v5694
        %v5717 = vunpack.c.l.b16 %v5695
        %v5718 = vunpack.c.l.b16 %v5696
        %v5719 = vunpack.c.l.b16 %v5697
        %v5720 = vunpack.c.l.b16 %v5698
        %v5721 = vunpack.c.l.b16 %v5699
        %v5722 = vpack.c.b16 %v5712, %v5711
        %v5723 = vpack.c.b16 %v5714, %v5713
        %v5724 = vpack.c.b16 %v5716, %v5715
        %v5725 = vpack.c.b16 %v5718, %v5717
        %v5726 = vpack.c.b16 %v5720, %v5719
        %v5727 = vpack.c.b16 %v5721, %v5721
        %vm5733 = vcmask 662528
        %v5735 = vsel %vm5733, %v5673, 0
        %v5738 = vsel %vm5733, %v5674, 0
        %v5741 = vsel %vm5733, %v5675, 0
        %v5744 = vsel %vm5733, %v5676, 0
        %v5747 = vsel %vm5733, %v5677, 0
        %v5750 = vsel %vm5733, %v5678, 0
        %v5753 = vsel %vm5733, %v5679, 0
        %v5756 = vsel %vm5733, %v5680, 0
        %v5759 = vsel %vm5733, %v5681, 0
        %v5762 = vsel %vm5733, %v5682, 0
        %v5765 = vsel %vm5733, %v5683, 0
        %v5768 = vsel %vm5733, %v5684, 0
        %v5771 = vsel %vm5733, %v5685, 0
        %v5774 = vsel %vm5733, %v5686, 0
        %v5777 = vsel %vm5733, %v5687, 0
        %v5780 = vsel %vm5733, %v5688, 0
        %vm5782 = vcmask 1040384
        %v5783 = vsel 0, 4294967295, 65535
        %v5784 = vsel %vm5782, %v5783, 0
        %v5786 = vand.u32 %v5727, %v5784
        %5788 = vmatprep.subr.bf16.mxu0 0
        %5789 = vmatpush1.bf16.msra.mxu0 0
        %5790 = vmatprep.subr.bf16.mxu0 0
        %5791 = vmatpush1.bf16.msra.mxu0 0
        %5792 = vmatprep.subr.bf16.mxu0 0
        %5793 = vmatpush1.bf16.msra.mxu0 %v5786
        %5794 = vmatprep.subr.bf16.mxu0 0
        %5795 = vmatpush1.bf16.msra.mxu0 %v5726
        %5796 = vmatprep.subr.bf16.mxu0 0
        %5797 = vmatpush1.bf16.msra.mxu0 %v5725
        %5798 = vmatprep.subr.bf16.mxu0 0
        %5799 = vmatpush1.bf16.msra.mxu0 %v5724
        %5800 = vmatprep.subr.bf16.mxu0 0
        %5801 = vmatpush1.bf16.msra.mxu0 %v5723
        %5802 = vmatprep.subr.bf16.mxu0 0
        %5803 = vmatpush1.bf16.msra.mxu0 %v5722
        %5804 = vmatprep.subr.bf16.mxu0 0
        %5805 = vmatpush2.bf16.msra.mxu0 0
        %5806 = vmatprep.subr.bf16.mxu0 0
        %5807 = vmatpush2.bf16.msra.mxu0 0
        %5808 = vmatprep.subr.bf16.mxu0 0
        %5809 = vmatpush2.bf16.msra.mxu0 0
        %5810 = vmatprep.subr.bf16.mxu0 0
        %5811 = vmatpush2.bf16.msra.mxu0 0
        %5812 = vmatprep.subr.bf16.mxu0 0
        %5813 = vmatpush2.bf16.msra.mxu0 0
        %5814 = vmatprep.subr.bf16.mxu0 0
        %5815 = vmatpush2.bf16.msra.mxu0 0
        %5816 = vmatprep.subr.bf16.mxu0 0
        %5817 = vmatpush2.bf16.msra.mxu0 0
        %5818 = vmatprep.subr.bf16.mxu0 0
        %5819 = vmatpush2.bf16.msra.mxu0 0
        %5820 = vmatprep.mubr.bf16.mxu0 0
        %5821 = vmatmul.mubr.bf16.gmra.mxu0 %v5735
        %v5822 = vpop.f32.mrf.mxu0
        %v5823 = vadd.f32 0.0, %v5822
        %v5824 = vpop.f32.mrf.mxu0
        %v5825 = vpop.f32.mrf.mxu0
        %v5826 = vadd.f32 0.0, %v5825
        %v5827 = vpop.f32.mrf.mxu0
        %5828 = vmatprep.mubr.bf16.mxu0 0
        %5829 = vmatmul.mubr.bf16.gmra.mxu0 %v5738
        %v5830 = vpop.f32.mrf.mxu0
        %v5831 = vadd.f32 0.0, %v5830
        %v5832 = vpop.f32.mrf.mxu0
        %v5833 = vpop.f32.mrf.mxu0
        %v5834 = vadd.f32 0.0, %v5833
        %v5835 = vpop.f32.mrf.mxu0
        %5836 = vmatprep.mubr.bf16.mxu0 0
        %5837 = vmatmul.mubr.bf16.gmra.mxu0 %v5741
        %v5838 = vpop.f32.mrf.mxu0
        %v5839 = vadd.f32 0.0, %v5838
        %v5840 = vpop.f32.mrf.mxu0
        %v5841 = vpop.f32.mrf.mxu0
        %v5842 = vadd.f32 0.0, %v5841
        %v5843 = vpop.f32.mrf.mxu0
        %5844 = vmatprep.mubr.bf16.mxu0 0
        %5845 = vmatmul.mubr.bf16.gmra.mxu0 %v5744
        %v5846 = vpop.f32.mrf.mxu0
        %v5847 = vadd.f32 0.0, %v5846
        %v5848 = vpop.f32.mrf.mxu0
        %v5849 = vpop.f32.mrf.mxu0
        %v5850 = vadd.f32 0.0, %v5849
        %v5851 = vpop.f32.mrf.mxu0
        %5852 = vmatprep.mubr.bf16.mxu0 0
        %5853 = vmatmul.mubr.bf16.gmra.mxu0 %v5747
        %v5854 = vpop.f32.mrf.mxu0
        %v5855 = vadd.f32 0.0, %v5854
        %v5856 = vpop.f32.mrf.mxu0
        %v5857 = vpop.f32.mrf.mxu0
        %v5858 = vadd.f32 0.0, %v5857
        %v5859 = vpop.f32.mrf.mxu0
        %5860 = vmatprep.mubr.bf16.mxu0 0
        %5861 = vmatmul.mubr.bf16.gmra.mxu0 %v5750
        %v5862 = vpop.f32.mrf.mxu0
        %v5863 = vadd.f32 0.0, %v5862
        %v5864 = vpop.f32.mrf.mxu0
        %v5865 = vpop.f32.mrf.mxu0
        %v5866 = vadd.f32 0.0, %v5865
        %v5867 = vpop.f32.mrf.mxu0
        %5868 = vmatprep.mubr.bf16.mxu0 0
        %5869 = vmatmul.mubr.bf16.gmra.mxu0 %v5753
        %v5870 = vpop.f32.mrf.mxu0
        %v5871 = vadd.f32 0.0, %v5870
        %v5872 = vpop.f32.mrf.mxu0
        %v5873 = vpop.f32.mrf.mxu0
        %v5874 = vadd.f32 0.0, %v5873
        %v5875 = vpop.f32.mrf.mxu0
        %5876 = vmatprep.mubr.bf16.mxu0 0
        %5877 = vmatmul.mubr.bf16.gmra.mxu0 %v5756
        %v5878 = vpop.f32.mrf.mxu0
        %v5879 = vadd.f32 0.0, %v5878
        %v5880 = vpop.f32.mrf.mxu0
        %v5881 = vpop.f32.mrf.mxu0
        %v5882 = vadd.f32 0.0, %v5881
        %v5883 = vpop.f32.mrf.mxu0
        %5884 = vmatprep.mubr.bf16.mxu0 0
        %5885 = vmatmul.mubr.bf16.gmra.mxu0 %v5759
        %v5886 = vpop.f32.mrf.mxu0
        %v5887 = vadd.f32 0.0, %v5886
        %v5888 = vpop.f32.mrf.mxu0
        %v5889 = vpop.f32.mrf.mxu0
        %v5890 = vadd.f32 0.0, %v5889
        %v5891 = vpop.f32.mrf.mxu0
        %5892 = vmatprep.mubr.bf16.mxu0 0
        %5893 = vmatmul.mubr.bf16.gmra.mxu0 %v5762
        %v5894 = vpop.f32.mrf.mxu0
        %v5895 = vadd.f32 0.0, %v5894
        %v5896 = vpop.f32.mrf.mxu0
        %v5897 = vpop.f32.mrf.mxu0
        %v5898 = vadd.f32 0.0, %v5897
        %v5899 = vpop.f32.mrf.mxu0
        %5900 = vmatprep.mubr.bf16.mxu0 0
        %5901 = vmatmul.mubr.bf16.gmra.mxu0 %v5765
        %v5902 = vpop.f32.mrf.mxu0
        %v5903 = vadd.f32 0.0, %v5902
        %v5904 = vpop.f32.mrf.mxu0
        %v5905 = vpop.f32.mrf.mxu0
        %v5906 = vadd.f32 0.0, %v5905
        %v5907 = vpop.f32.mrf.mxu0
        %5908 = vmatprep.mubr.bf16.mxu0 0
        %5909 = vmatmul.mubr.bf16.gmra.mxu0 %v5768
        %v5910 = vpop.f32.mrf.mxu0
        %v5911 = vadd.f32 0.0, %v5910
        %v5912 = vpop.f32.mrf.mxu0
        %v5913 = vpop.f32.mrf.mxu0
        %v5914 = vadd.f32 0.0, %v5913
        %v5915 = vpop.f32.mrf.mxu0
        %5916 = vmatprep.mubr.bf16.mxu0 0
        %5917 = vmatmul.mubr.bf16.gmra.mxu0 %v5771
        %v5918 = vpop.f32.mrf.mxu0
        %v5919 = vadd.f32 0.0, %v5918
        %v5920 = vpop.f32.mrf.mxu0
        %v5921 = vpop.f32.mrf.mxu0
        %v5922 = vadd.f32 0.0, %v5921
        %v5923 = vpop.f32.mrf.mxu0
        %5924 = vmatprep.mubr.bf16.mxu0 0
        %5925 = vmatmul.mubr.bf16.gmra.mxu0 %v5774
        %v5926 = vpop.f32.mrf.mxu0
        %v5927 = vadd.f32 0.0, %v5926
        %v5928 = vpop.f32.mrf.mxu0
        %v5929 = vpop.f32.mrf.mxu0
        %v5930 = vadd.f32 0.0, %v5929
        %v5931 = vpop.f32.mrf.mxu0
        %5932 = vmatprep.mubr.bf16.mxu0 0
        %5933 = vmatmul.mubr.bf16.gmra.mxu0 %v5777
        %v5934 = vpop.f32.mrf.mxu0
        %v5935 = vadd.f32 0.0, %v5934
        %v5936 = vpop.f32.mrf.mxu0
        %v5937 = vpop.f32.mrf.mxu0
        %v5938 = vadd.f32 0.0, %v5937
        %v5939 = vpop.f32.mrf.mxu0
        %5940 = vmatprep.mubr.bf16.mxu0 0
        %5941 = vmatmul.mubr.bf16.gmra.mxu0 %v5780
        %v5942 = vpop.f32.mrf.mxu0
        %v5943 = vadd.f32 0.0, %v5942
        %v5944 = vpop.f32.mrf.mxu0
        %v5945 = vpop.f32.mrf.mxu0
        %v5946 = vadd.f32 0.0, %v5945
        %v5947 = vpop.f32.mrf.mxu0
        %5948 = vdwg.mxu0
        %v5949 = vmul.f32 %v5823, 0.11111111
        %v5950 = vmul.f32 %v5826, 0.11111111
        %v5951 = vmul.f32 %v5831, 0.11111111
        %v5952 = vmul.f32 %v5834, 0.11111111
        %v5953 = vmul.f32 %v5839, 0.11111111
        %v5954 = vmul.f32 %v5842, 0.11111111
        %v5955 = vmul.f32 %v5847, 0.11111111
        %v5956 = vmul.f32 %v5850, 0.11111111
        %v5957 = vmul.f32 %v5855, 0.11111111
        %v5958 = vmul.f32 %v5858, 0.11111111
        %v5959 = vmul.f32 %v5863, 0.11111111
        %v5960 = vmul.f32 %v5866, 0.11111111
        %v5961 = vmul.f32 %v5871, 0.11111111
        %v5962 = vmul.f32 %v5874, 0.11111111
        %v5963 = vmul.f32 %v5879, 0.11111111
        %v5964 = vmul.f32 %v5882, 0.11111111
        %v5965 = vmul.f32 %v5887, 0.11111111
        %v5966 = vmul.f32 %v5890, 0.11111111
        %v5967 = vmul.f32 %v5895, 0.11111111
        %v5968 = vmul.f32 %v5898, 0.11111111
        %v5969 = vmul.f32 %v5903, 0.11111111
        %v5970 = vmul.f32 %v5906, 0.11111111
        %v5971 = vmul.f32 %v5911, 0.11111111
        %v5972 = vmul.f32 %v5914, 0.11111111
        %v5973 = vmul.f32 %v5919, 0.11111111
        %v5974 = vmul.f32 %v5922, 0.11111111
        %v5975 = vmul.f32 %v5927, 0.11111111
        %v5976 = vmul.f32 %v5930, 0.11111111
        %v5977 = vmul.f32 %v5935, 0.11111111
        %v5978 = vmul.f32 %v5938, 0.11111111
        %v5979 = vmul.f32 %v5943, 0.11111111
        %v5980 = vmul.f32 %v5946, 0.11111111
        %vm5981 = vcmp.ge.f32.partialorder %v5949, 0.01
        %vm5982 = vcmp.ge.f32.partialorder %v5950, 0.01
        %vm5983 = vcmp.ge.f32.partialorder %v5951, 0.01
        %vm5984 = vcmp.ge.f32.partialorder %v5952, 0.01
        %vm5985 = vcmp.ge.f32.partialorder %v5953, 0.01
        %vm5986 = vcmp.ge.f32.partialorder %v5954, 0.01
        %vm5987 = vcmp.ge.f32.partialorder %v5955, 0.01
        %vm5988 = vcmp.ge.f32.partialorder %v5956, 0.01
        %vm5989 = vcmp.ge.f32.partialorder %v5957, 0.01
        %vm5990 = vcmp.ge.f32.partialorder %v5958, 0.01
        %vm5991 = vcmp.ge.f32.partialorder %v5959, 0.01
        %vm5992 = vcmp.ge.f32.partialorder %v5960, 0.01
        %vm5993 = vcmp.ge.f32.partialorder %v5961, 0.01
        %vm5994 = vcmp.ge.f32.partialorder %v5962, 0.01
        %vm5995 = vcmp.ge.f32.partialorder %v5963, 0.01
        %vm5996 = vcmp.ge.f32.partialorder %v5964, 0.01
        %vm5997 = vcmp.ge.f32.partialorder %v5965, 0.01
        %vm5998 = vcmp.ge.f32.partialorder %v5966, 0.01
        %vm5999 = vcmp.ge.f32.partialorder %v5967, 0.01
        %vm6000 = vcmp.ge.f32.partialorder %v5968, 0.01
        %vm6001 = vcmp.ge.f32.partialorder %v5969, 0.01
        %vm6002 = vcmp.ge.f32.partialorder %v5970, 0.01
        %vm6003 = vcmp.ge.f32.partialorder %v5971, 0.01
        %vm6004 = vcmp.ge.f32.partialorder %v5972, 0.01
        %vm6005 = vcmp.ge.f32.partialorder %v5973, 0.01
        %vm6006 = vcmp.ge.f32.partialorder %v5974, 0.01
        %vm6007 = vcmp.ge.f32.partialorder %v5975, 0.01
        %vm6008 = vcmp.ge.f32.partialorder %v5976, 0.01
        %vm6009 = vcmp.ge.f32.partialorder %v5977, 0.01
        %vm6010 = vcmp.ge.f32.partialorder %v5978, 0.01
        %vm6011 = vcmp.ge.f32.partialorder %v5979, 0.01
        %vm6012 = vcmp.ge.f32.partialorder %v5980, 0.01
        %v6013 = vsel %vm5981, 1, 0
        %v6014 = vsel %vm5982, 1, 0
        %v6015 = vsel %vm5983, 1, 0
        %v6016 = vsel %vm5984, 1, 0
        %v6017 = vsel %vm5985, 1, 0
        %v6018 = vsel %vm5986, 1, 0
        %v6019 = vsel %vm5987, 1, 0
        %v6020 = vsel %vm5988, 1, 0
        %v6021 = vsel %vm5989, 1, 0
        %v6022 = vsel %vm5990, 1, 0
        %v6023 = vsel %vm5991, 1, 0
        %v6024 = vsel %vm5992, 1, 0
        %v6025 = vsel %vm5993, 1, 0
        %v6026 = vsel %vm5994, 1, 0
        %v6027 = vsel %vm5995, 1, 0
        %v6028 = vsel %vm5996, 1, 0
        %v6029 = vsel %vm5997, 1, 0
        %v6030 = vsel %vm5998, 1, 0
        %v6031 = vsel %vm5999, 1, 0
        %v6032 = vsel %vm6000, 1, 0
        %v6033 = vsel %vm6001, 1, 0
        %v6034 = vsel %vm6002, 1, 0
        %v6035 = vsel %vm6003, 1, 0
        %v6036 = vsel %vm6004, 1, 0
        %v6037 = vsel %vm6005, 1, 0
        %v6038 = vsel %vm6006, 1, 0
        %v6039 = vsel %vm6007, 1, 0
        %v6040 = vsel %vm6008, 1, 0
        %v6041 = vsel %vm6009, 1, 0
        %v6042 = vsel %vm6010, 1, 0
        %v6043 = vsel %vm6011, 1, 0
        %v6044 = vsel %vm6012, 1, 0
        %v6045 = vcvt.s32.f32 %v6013
        %v6046 = vcvt.s32.f32 %v6014
        %v6047 = vcvt.s32.f32 %v6015
        %v6048 = vcvt.s32.f32 %v6016
        %v6049 = vcvt.s32.f32 %v6017
        %v6050 = vcvt.s32.f32 %v6018
        %v6051 = vcvt.s32.f32 %v6019
        %v6052 = vcvt.s32.f32 %v6020
        %v6053 = vcvt.s32.f32 %v6021
        %v6054 = vcvt.s32.f32 %v6022
        %v6055 = vcvt.s32.f32 %v6023
        %v6056 = vcvt.s32.f32 %v6024
        %v6057 = vcvt.s32.f32 %v6025
        %v6058 = vcvt.s32.f32 %v6026
        %v6059 = vcvt.s32.f32 %v6027
        %v6060 = vcvt.s32.f32 %v6028
        %v6061 = vcvt.s32.f32 %v6029
        %v6062 = vcvt.s32.f32 %v6030
        %v6063 = vcvt.s32.f32 %v6031
        %v6064 = vcvt.s32.f32 %v6032
        %v6065 = vcvt.s32.f32 %v6033
        %v6066 = vcvt.s32.f32 %v6034
        %v6067 = vcvt.s32.f32 %v6035
        %v6068 = vcvt.s32.f32 %v6036
        %v6069 = vcvt.s32.f32 %v6037
        %v6070 = vcvt.s32.f32 %v6038
        %v6071 = vcvt.s32.f32 %v6039
        %v6072 = vcvt.s32.f32 %v6040
        %v6073 = vcvt.s32.f32 %v6041
        %v6074 = vcvt.s32.f32 %v6042
        %v6075 = vcvt.s32.f32 %v6043
        %v6076 = vcvt.s32.f32 %v6044
        %v6077 = vadd.f32 %v5949, 1e-08
        %v6078 = vadd.f32 %v5950, 1e-08
        %v6079 = vadd.f32 %v5951, 1e-08
        %v6080 = vadd.f32 %v5952, 1e-08
        %v6081 = vadd.f32 %v5953, 1e-08
        %v6082 = vadd.f32 %v5954, 1e-08
        %v6083 = vadd.f32 %v5955, 1e-08
        %v6084 = vadd.f32 %v5956, 1e-08
        %v6085 = vadd.f32 %v5957, 1e-08
        %v6086 = vadd.f32 %v5958, 1e-08
        %v6087 = vadd.f32 %v5959, 1e-08
        %v6088 = vadd.f32 %v5960, 1e-08
        %v6089 = vadd.f32 %v5961, 1e-08
        %v6090 = vadd.f32 %v5962, 1e-08
        %v6091 = vadd.f32 %v5963, 1e-08
        %v6092 = vadd.f32 %v5964, 1e-08
        %v6093 = vadd.f32 %v5965, 1e-08
        %v6094 = vadd.f32 %v5966, 1e-08
        %v6095 = vadd.f32 %v5967, 1e-08
        %v6096 = vadd.f32 %v5968, 1e-08
        %v6097 = vadd.f32 %v5969, 1e-08
        %v6098 = vadd.f32 %v5970, 1e-08
        %v6099 = vadd.f32 %v5971, 1e-08
        %v6100 = vadd.f32 %v5972, 1e-08
        %v6101 = vadd.f32 %v5973, 1e-08
        %v6102 = vadd.f32 %v5974, 1e-08
        %v6103 = vadd.f32 %v5975, 1e-08
        %v6104 = vadd.f32 %v5976, 1e-08
        %v6105 = vadd.f32 %v5977, 1e-08
        %v6106 = vadd.f32 %v5978, 1e-08
        %v6107 = vadd.f32 %v5979, 1e-08
        %v6108 = vadd.f32 %v5980, 1e-08
        %v6109 = vrcp.pop %v6077
        %v6110 = vrcp.pop %v6078
        %v6111 = vrcp.pop %v6079
        %v6112 = vrcp.pop %v6080
        %v6113 = vrcp.pop %v6081
        %v6114 = vrcp.pop %v6082
        %v6115 = vrcp.pop %v6083
        %v6116 = vrcp.pop %v6084
        %v6117 = vrcp.pop %v6085
        %v6118 = vrcp.pop %v6086
        %v6119 = vrcp.pop %v6087
        %v6120 = vrcp.pop %v6088
        %v6121 = vrcp.pop %v6089
        %v6122 = vrcp.pop %v6090
        %v6123 = vrcp.pop %v6091
        %v6124 = vrcp.pop %v6092
        %v6125 = vrcp.pop %v6093
        %v6126 = vrcp.pop %v6094
        %v6127 = vrcp.pop %v6095
        %v6128 = vrcp.pop %v6096
        %v6129 = vrcp.pop %v6097
        %v6130 = vrcp.pop %v6098
        %v6131 = vrcp.pop %v6099
        %v6132 = vrcp.pop %v6100
        %v6133 = vrcp.pop %v6101
        %v6134 = vrcp.pop %v6102
        %v6135 = vrcp.pop %v6103
        %v6136 = vrcp.pop %v6104
        %v6137 = vrcp.pop %v6105
        %v6138 = vrcp.pop %v6106
        %v6139 = vrcp.pop %v6107
        %v6140 = vrcp.pop %v6108
        %v6141 = vmul.f32 %v6077, %v6109
        %v6142 = vmul.f32 %v6078, %v6110
        %v6143 = vmul.f32 %v6079, %v6111
        %v6144 = vmul.f32 %v6080, %v6112
        %v6145 = vmul.f32 %v6081, %v6113
        %v6146 = vmul.f32 %v6082, %v6114
        %v6147 = vmul.f32 %v6083, %v6115
        %v6148 = vmul.f32 %v6084, %v6116
        %v6149 = vmul.f32 %v6085, %v6117
        %v6150 = vmul.f32 %v6086, %v6118
        %v6151 = vmul.f32 %v6087, %v6119
        %v6152 = vmul.f32 %v6088, %v6120
        %v6153 = vmul.f32 %v6089, %v6121
        %v6154 = vmul.f32 %v6090, %v6122
        %v6155 = vmul.f32 %v6091, %v6123
        %v6156 = vmul.f32 %v6092, %v6124
        %v6157 = vmul.f32 %v6093, %v6125
        %v6158 = vmul.f32 %v6094, %v6126
        %v6159 = vmul.f32 %v6095, %v6127
        %v6160 = vmul.f32 %v6096, %v6128
        %v6161 = vmul.f32 %v6097, %v6129
        %v6162 = vmul.f32 %v6098, %v6130
        %v6163 = vmul.f32 %v6099, %v6131
        %v6164 = vmul.f32 %v6100, %v6132
        %v6165 = vmul.f32 %v6101, %v6133
        %v6166 = vmul.f32 %v6102, %v6134
        %v6167 = vmul.f32 %v6103, %v6135
        %v6168 = vmul.f32 %v6104, %v6136
        %v6169 = vmul.f32 %v6105, %v6137
        %v6170 = vmul.f32 %v6106, %v6138
        %v6171 = vmul.f32 %v6107, %v6139
        %v6172 = vmul.f32 %v6108, %v6140
        %v6173 = vsub.f32 2.0, %v6141
        %v6174 = vsub.f32 2.0, %v6142
        %v6175 = vsub.f32 2.0, %v6143
        %v6176 = vsub.f32 2.0, %v6144
        %v6177 = vsub.f32 2.0, %v6145
        %v6178 = vsub.f32 2.0, %v6146
        %v6179 = vsub.f32 2.0, %v6147
        %v6180 = vsub.f32 2.0, %v6148
        %v6181 = vsub.f32 2.0, %v6149
        %v6182 = vsub.f32 2.0, %v6150
        %v6183 = vsub.f32 2.0, %v6151
        %v6184 = vsub.f32 2.0, %v6152
        %v6185 = vsub.f32 2.0, %v6153
        %v6186 = vsub.f32 2.0, %v6154
        %v6187 = vsub.f32 2.0, %v6155
        %v6188 = vsub.f32 2.0, %v6156
        %v6189 = vsub.f32 2.0, %v6157
        %v6190 = vsub.f32 2.0, %v6158
        %v6191 = vsub.f32 2.0, %v6159
        %v6192 = vsub.f32 2.0, %v6160
        %v6193 = vsub.f32 2.0, %v6161
        %v6194 = vsub.f32 2.0, %v6162
        %v6195 = vsub.f32 2.0, %v6163
        %v6196 = vsub.f32 2.0, %v6164
        %v6197 = vsub.f32 2.0, %v6165
        %v6198 = vsub.f32 2.0, %v6166
        %v6199 = vsub.f32 2.0, %v6167
        %v6200 = vsub.f32 2.0, %v6168
        %v6201 = vsub.f32 2.0, %v6169
        %v6202 = vsub.f32 2.0, %v6170
        %v6203 = vsub.f32 2.0, %v6171
        %v6204 = vsub.f32 2.0, %v6172
        %v6205 = vmul.f32 %v6109, %v6173
        %v6206 = vmul.f32 %v6110, %v6174
        %v6207 = vmul.f32 %v6111, %v6175
        %v6208 = vmul.f32 %v6112, %v6176
        %v6209 = vmul.f32 %v6113, %v6177
        %v6210 = vmul.f32 %v6114, %v6178
        %v6211 = vmul.f32 %v6115, %v6179
        %v6212 = vmul.f32 %v6116, %v6180
        %v6213 = vmul.f32 %v6117, %v6181
        %v6214 = vmul.f32 %v6118, %v6182
        %v6215 = vmul.f32 %v6119, %v6183
        %v6216 = vmul.f32 %v6120, %v6184
        %v6217 = vmul.f32 %v6121, %v6185
        %v6218 = vmul.f32 %v6122, %v6186
        %v6219 = vmul.f32 %v6123, %v6187
        %v6220 = vmul.f32 %v6124, %v6188
        %v6221 = vmul.f32 %v6125, %v6189
        %v6222 = vmul.f32 %v6126, %v6190
        %v6223 = vmul.f32 %v6127, %v6191
        %v6224 = vmul.f32 %v6128, %v6192
        %v6225 = vmul.f32 %v6129, %v6193
        %v6226 = vmul.f32 %v6130, %v6194
        %v6227 = vmul.f32 %v6131, %v6195
        %v6228 = vmul.f32 %v6132, %v6196
        %v6229 = vmul.f32 %v6133, %v6197
        %v6230 = vmul.f32 %v6134, %v6198
        %v6231 = vmul.f32 %v6135, %v6199
        %v6232 = vmul.f32 %v6136, %v6200
        %v6233 = vmul.f32 %v6137, %v6201
        %v6234 = vmul.f32 %v6138, %v6202
        %v6235 = vmul.f32 %v6139, %v6203
        %v6236 = vmul.f32 %v6140, %v6204
        %v6237 = vmul.f32 %v6205, %v6045
        %v6238 = vmul.f32 %v6206, %v6046
        %v6239 = vmul.f32 %v6207, %v6047
        %v6240 = vmul.f32 %v6208, %v6048
        %v6241 = vmul.f32 %v6209, %v6049
        %v6242 = vmul.f32 %v6210, %v6050
        %v6243 = vmul.f32 %v6211, %v6051
        %v6244 = vmul.f32 %v6212, %v6052
        %v6245 = vmul.f32 %v6213, %v6053
        %v6246 = vmul.f32 %v6214, %v6054
        %v6247 = vmul.f32 %v6215, %v6055
        %v6248 = vmul.f32 %v6216, %v6056
        %v6249 = vmul.f32 %v6217, %v6057
        %v6250 = vmul.f32 %v6218, %v6058
        %v6251 = vmul.f32 %v6219, %v6059
        %v6252 = vmul.f32 %v6220, %v6060
        %v6253 = vmul.f32 %v6221, %v6061
        %v6254 = vmul.f32 %v6222, %v6062
        %v6255 = vmul.f32 %v6223, %v6063
        %v6256 = vmul.f32 %v6224, %v6064
        %v6257 = vmul.f32 %v6225, %v6065
        %v6258 = vmul.f32 %v6226, %v6066
        %v6259 = vmul.f32 %v6227, %v6067
        %v6260 = vmul.f32 %v6228, %v6068
        %v6261 = vmul.f32 %v6229, %v6069
        %v6262 = vmul.f32 %v6230, %v6070
        %v6263 = vmul.f32 %v6231, %v6071
        %v6264 = vmul.f32 %v6232, %v6072
        %v6265 = vmul.f32 %v6233, %v6073
        %v6266 = vmul.f32 %v6234, %v6074
        %v6267 = vmul.f32 %v6235, %v6075
        %v6268 = vmul.f32 %v6236, %v6076
        %6270 = vset.pattern.permute.xlu0 8
        %6271 = vperm.xlu0 %6270, %v6237
        %v6272 = vpop.permute.xlu0 %6271
        %6275 = vset.pattern.permute.xlu0 8
        %6276 = vperm.xlu0 %6275, %v6238
        %v6277 = vpop.permute.xlu0 %6276
        %6280 = vset.pattern.permute.xlu0 8
        %6281 = vperm.xlu0 %6280, %v6239
        %v6282 = vpop.permute.xlu0 %6281
        %6285 = vset.pattern.permute.xlu0 8
        %6286 = vperm.xlu0 %6285, %v6240
        %v6287 = vpop.permute.xlu0 %6286
        %6290 = vset.pattern.permute.xlu0 8
        %6291 = vperm.xlu0 %6290, %v6241
        %v6292 = vpop.permute.xlu0 %6291
        %6295 = vset.pattern.permute.xlu0 8
        %6296 = vperm.xlu0 %6295, %v6242
        %v6297 = vpop.permute.xlu0 %6296
        %6300 = vset.pattern.permute.xlu0 8
        %6301 = vperm.xlu0 %6300, %v6243
        %v6302 = vpop.permute.xlu0 %6301
        %6305 = vset.pattern.permute.xlu0 8
        %6306 = vperm.xlu0 %6305, %v6244
        %v6307 = vpop.permute.xlu0 %6306
        %6310 = vset.pattern.permute.xlu0 8
        %6311 = vperm.xlu0 %6310, %v6245
        %v6312 = vpop.permute.xlu0 %6311
        %6315 = vset.pattern.permute.xlu0 8
        %6316 = vperm.xlu0 %6315, %v6246
        %v6317 = vpop.permute.xlu0 %6316
        %6320 = vset.pattern.permute.xlu0 8
        %6321 = vperm.xlu0 %6320, %v6247
        %v6322 = vpop.permute.xlu0 %6321
        %6325 = vset.pattern.permute.xlu0 8
        %6326 = vperm.xlu0 %6325, %v6248
        %v6327 = vpop.permute.xlu0 %6326
        %6330 = vset.pattern.permute.xlu0 8
        %6331 = vperm.xlu0 %6330, %v6249
        %v6332 = vpop.permute.xlu0 %6331
        %6335 = vset.pattern.permute.xlu0 8
        %6336 = vperm.xlu0 %6335, %v6250
        %v6337 = vpop.permute.xlu0 %6336
        %6340 = vset.pattern.permute.xlu0 8
        %6341 = vperm.xlu0 %6340, %v6251
        %v6342 = vpop.permute.xlu0 %6341
        %6345 = vset.pattern.permute.xlu0 8
        %6346 = vperm.xlu0 %6345, %v6252
        %v6347 = vpop.permute.xlu0 %6346
        %6350 = vset.pattern.permute.xlu0 8
        %6351 = vperm.xlu0 %6350, %v6253
        %v6352 = vpop.permute.xlu0 %6351
        %6355 = vset.pattern.permute.xlu0 8
        %6356 = vperm.xlu0 %6355, %v6254
        %v6357 = vpop.permute.xlu0 %6356
        %6360 = vset.pattern.permute.xlu0 8
        %6361 = vperm.xlu0 %6360, %v6255
        %v6362 = vpop.permute.xlu0 %6361
        %6365 = vset.pattern.permute.xlu0 8
        %6366 = vperm.xlu0 %6365, %v6256
        %v6367 = vpop.permute.xlu0 %6366
        %6370 = vset.pattern.permute.xlu0 8
        %6371 = vperm.xlu0 %6370, %v6257
        %v6372 = vpop.permute.xlu0 %6371
        %6375 = vset.pattern.permute.xlu0 8
        %6376 = vperm.xlu0 %6375, %v6258
        %v6377 = vpop.permute.xlu0 %6376
        %6380 = vset.pattern.permute.xlu0 8
        %6381 = vperm.xlu0 %6380, %v6259
        %v6382 = vpop.permute.xlu0 %6381
        %6385 = vset.pattern.permute.xlu0 8
        %6386 = vperm.xlu0 %6385, %v6260
        %v6387 = vpop.permute.xlu0 %6386
        %6390 = vset.pattern.permute.xlu0 8
        %6391 = vperm.xlu0 %6390, %v6261
        %v6392 = vpop.permute.xlu0 %6391
        %6395 = vset.pattern.permute.xlu0 8
        %6396 = vperm.xlu0 %6395, %v6262
        %v6397 = vpop.permute.xlu0 %6396
        %6400 = vset.pattern.permute.xlu0 8
        %6401 = vperm.xlu0 %6400, %v6263
        %v6402 = vpop.permute.xlu0 %6401
        %6405 = vset.pattern.permute.xlu0 8
        %6406 = vperm.xlu0 %6405, %v6264
        %v6407 = vpop.permute.xlu0 %6406
        %6410 = vset.pattern.permute.xlu0 8
        %6411 = vperm.xlu0 %6410, %v6265
        %v6412 = vpop.permute.xlu0 %6411
        %6415 = vset.pattern.permute.xlu0 8
        %6416 = vperm.xlu0 %6415, %v6266
        %v6417 = vpop.permute.xlu0 %6416
        %6420 = vset.pattern.permute.xlu0 8
        %6421 = vperm.xlu0 %6420, %v6267
        %v6422 = vpop.permute.xlu0 %6421
        %6425 = vset.pattern.permute.xlu0 8
        %6426 = vperm.xlu0 %6425, %v6268
        %v6427 = vpop.permute.xlu0 %6426
        %v6429 = vmul.f32 %v5823, %v6272
        %v6430 = vmul.f32 %v5826, %v6277
        %v6431 = vmul.f32 %v5831, %v6282
        %v6432 = vmul.f32 %v5834, %v6287
        %v6433 = vmul.f32 %v5839, %v6292
        %v6434 = vmul.f32 %v5842, %v6297
        %v6435 = vmul.f32 %v5847, %v6302
        %v6436 = vmul.f32 %v5850, %v6307
        %v6437 = vmul.f32 %v5855, %v6312
        %v6438 = vmul.f32 %v5858, %v6317
        %v6439 = vmul.f32 %v5863, %v6322
        %v6440 = vmul.f32 %v5866, %v6327
        %v6441 = vmul.f32 %v5871, %v6332
        %v6442 = vmul.f32 %v5874, %v6337
        %v6443 = vmul.f32 %v5879, %v6342
        %v6444 = vmul.f32 %v5882, %v6347
        %v6445 = vmul.f32 %v5887, %v6352
        %v6446 = vmul.f32 %v5890, %v6357
        %v6447 = vmul.f32 %v5895, %v6362
        %v6448 = vmul.f32 %v5898, %v6367
        %v6449 = vmul.f32 %v5903, %v6372
        %v6450 = vmul.f32 %v5906, %v6377
        %v6451 = vmul.f32 %v5911, %v6382
        %v6452 = vmul.f32 %v5914, %v6387
        %v6453 = vmul.f32 %v5919, %v6392
        %v6454 = vmul.f32 %v5922, %v6397
        %v6455 = vmul.f32 %v5927, %v6402
        %v6456 = vmul.f32 %v5930, %v6407
        %v6457 = vmul.f32 %v5935, %v6412
        %v6458 = vmul.f32 %v5938, %v6417
        %v6459 = vmul.f32 %v5943, %v6422
        %v6460 = vmul.f32 %v5946, %v6427
        %v6461 = vld [vmem:[%s8] sm:$0x1]
        %v6463 = vlaneseq
        %v6464 = vshrl.u32 %v6463, 7
        %v6465 = vsub.s32 0, %v6464
        %v6466 = vrot.slane %v6461, %v6465
        %6469 = vset.pattern.permute.xlu0 8
        %6470 = vperm.xlu0 %6469, %v6045
        %v6471 = vpop.permute.xlu0 %6470
        %6474 = vset.pattern.permute.xlu0 8
        %6475 = vperm.xlu0 %6474, %v6046
        %v6476 = vpop.permute.xlu0 %6475
        %6479 = vset.pattern.permute.xlu0 8
        %6480 = vperm.xlu0 %6479, %v6047
        %v6481 = vpop.permute.xlu0 %6480
        %6484 = vset.pattern.permute.xlu0 8
        %6485 = vperm.xlu0 %6484, %v6048
        %v6486 = vpop.permute.xlu0 %6485
        %6489 = vset.pattern.permute.xlu0 8
        %6490 = vperm.xlu0 %6489, %v6049
        %v6491 = vpop.permute.xlu0 %6490
        %6494 = vset.pattern.permute.xlu0 8
        %6495 = vperm.xlu0 %6494, %v6050
        %v6496 = vpop.permute.xlu0 %6495
        %6499 = vset.pattern.permute.xlu0 8
        %6500 = vperm.xlu0 %6499, %v6051
        %v6501 = vpop.permute.xlu0 %6500
        %6504 = vset.pattern.permute.xlu0 8
        %6505 = vperm.xlu0 %6504, %v6052
        %v6506 = vpop.permute.xlu0 %6505
        %6509 = vset.pattern.permute.xlu0 8
        %6510 = vperm.xlu0 %6509, %v6053
        %v6511 = vpop.permute.xlu0 %6510
        %6514 = vset.pattern.permute.xlu0 8
        %6515 = vperm.xlu0 %6514, %v6054
        %v6516 = vpop.permute.xlu0 %6515
        %6519 = vset.pattern.permute.xlu0 8
        %6520 = vperm.xlu0 %6519, %v6055
        %v6521 = vpop.permute.xlu0 %6520
        %6524 = vset.pattern.permute.xlu0 8
        %6525 = vperm.xlu0 %6524, %v6056
        %v6526 = vpop.permute.xlu0 %6525
        %6529 = vset.pattern.permute.xlu0 8
        %6530 = vperm.xlu0 %6529, %v6057
        %v6531 = vpop.permute.xlu0 %6530
        %6534 = vset.pattern.permute.xlu0 8
        %6535 = vperm.xlu0 %6534, %v6058
        %v6536 = vpop.permute.xlu0 %6535
        %6539 = vset.pattern.permute.xlu0 8
        %6540 = vperm.xlu0 %6539, %v6059
        %v6541 = vpop.permute.xlu0 %6540
        %6544 = vset.pattern.permute.xlu0 8
        %6545 = vperm.xlu0 %6544, %v6060
        %v6546 = vpop.permute.xlu0 %6545
        %6549 = vset.pattern.permute.xlu0 8
        %6550 = vperm.xlu0 %6549, %v6061
        %v6551 = vpop.permute.xlu0 %6550
        %6554 = vset.pattern.permute.xlu0 8
        %6555 = vperm.xlu0 %6554, %v6062
        %v6556 = vpop.permute.xlu0 %6555
        %6559 = vset.pattern.permute.xlu0 8
        %6560 = vperm.xlu0 %6559, %v6063
        %v6561 = vpop.permute.xlu0 %6560
        %6564 = vset.pattern.permute.xlu0 8
        %6565 = vperm.xlu0 %6564, %v6064
        %v6566 = vpop.permute.xlu0 %6565
        %6569 = vset.pattern.permute.xlu0 8
        %6570 = vperm.xlu0 %6569, %v6065
        %v6571 = vpop.permute.xlu0 %6570
        %6574 = vset.pattern.permute.xlu0 8
        %6575 = vperm.xlu0 %6574, %v6066
        %v6576 = vpop.permute.xlu0 %6575
        %6579 = vset.pattern.permute.xlu0 8
        %6580 = vperm.xlu0 %6579, %v6067
        %v6581 = vpop.permute.xlu0 %6580
        %6584 = vset.pattern.permute.xlu0 8
        %6585 = vperm.xlu0 %6584, %v6068
        %v6586 = vpop.permute.xlu0 %6585
        %6589 = vset.pattern.permute.xlu0 8
        %6590 = vperm.xlu0 %6589, %v6069
        %v6591 = vpop.permute.xlu0 %6590
        %6594 = vset.pattern.permute.xlu0 8
        %6595 = vperm.xlu0 %6594, %v6070
        %v6596 = vpop.permute.xlu0 %6595
        %6599 = vset.pattern.permute.xlu0 8
        %6600 = vperm.xlu0 %6599, %v6071
        %v6601 = vpop.permute.xlu0 %6600
        %6604 = vset.pattern.permute.xlu0 8
        %6605 = vperm.xlu0 %6604, %v6072
        %v6606 = vpop.permute.xlu0 %6605
        %6609 = vset.pattern.permute.xlu0 8
        %6610 = vperm.xlu0 %6609, %v6073
        %v6611 = vpop.permute.xlu0 %6610
        %6614 = vset.pattern.permute.xlu0 8
        %6615 = vperm.xlu0 %6614, %v6074
        %v6616 = vpop.permute.xlu0 %6615
        %6619 = vset.pattern.permute.xlu0 8
        %6620 = vperm.xlu0 %6619, %v6075
        %v6621 = vpop.permute.xlu0 %6620
        %6624 = vset.pattern.permute.xlu0 8
        %6625 = vperm.xlu0 %6624, %v6076
        %v6626 = vpop.permute.xlu0 %6625
        %v6628 = vmul.f32 %v6466, %v6471
        %v6629 = vmul.f32 %v6466, %v6476
        %v6630 = vmul.f32 %v6466, %v6481
        %v6631 = vmul.f32 %v6466, %v6486
        %v6632 = vmul.f32 %v6466, %v6491
        %v6633 = vmul.f32 %v6466, %v6496
        %v6634 = vmul.f32 %v6466, %v6501
        %v6635 = vmul.f32 %v6466, %v6506
        %v6636 = vmul.f32 %v6466, %v6511
        %v6637 = vmul.f32 %v6466, %v6516
        %v6638 = vmul.f32 %v6466, %v6521
        %v6639 = vmul.f32 %v6466, %v6526
        %v6640 = vmul.f32 %v6466, %v6531
        %v6641 = vmul.f32 %v6466, %v6536
        %v6642 = vmul.f32 %v6466, %v6541
        %v6643 = vmul.f32 %v6466, %v6546
        %v6644 = vmul.f32 %v6466, %v6551
        %v6645 = vmul.f32 %v6466, %v6556
        %v6646 = vmul.f32 %v6466, %v6561
        %v6647 = vmul.f32 %v6466, %v6566
        %v6648 = vmul.f32 %v6466, %v6571
        %v6649 = vmul.f32 %v6466, %v6576
        %v6650 = vmul.f32 %v6466, %v6581
        %v6651 = vmul.f32 %v6466, %v6586
        %v6652 = vmul.f32 %v6466, %v6591
        %v6653 = vmul.f32 %v6466, %v6596
        %v6654 = vmul.f32 %v6466, %v6601
        %v6655 = vmul.f32 %v6466, %v6606
        %v6656 = vmul.f32 %v6466, %v6611
        %v6657 = vmul.f32 %v6466, %v6616
        %v6658 = vmul.f32 %v6466, %v6621
        %v6659 = vmul.f32 %v6466, %v6626
        %v6660 = vadd.f32 %v6429, %v6628
        %v6661 = vadd.f32 %v6430, %v6629
        %v6662 = vadd.f32 %v6431, %v6630
        %v6663 = vadd.f32 %v6432, %v6631
        %v6664 = vadd.f32 %v6433, %v6632
        %v6665 = vadd.f32 %v6434, %v6633
        %v6666 = vadd.f32 %v6435, %v6634
        %v6667 = vadd.f32 %v6436, %v6635
        %v6668 = vadd.f32 %v6437, %v6636
        %v6669 = vadd.f32 %v6438, %v6637
        %v6670 = vadd.f32 %v6439, %v6638
        %v6671 = vadd.f32 %v6440, %v6639
        %v6672 = vadd.f32 %v6441, %v6640
        %v6673 = vadd.f32 %v6442, %v6641
        %v6674 = vadd.f32 %v6443, %v6642
        %v6675 = vadd.f32 %v6444, %v6643
        %v6676 = vadd.f32 %v6445, %v6644
        %v6677 = vadd.f32 %v6446, %v6645
        %v6678 = vadd.f32 %v6447, %v6646
        %v6679 = vadd.f32 %v6448, %v6647
        %v6680 = vadd.f32 %v6449, %v6648
        %v6681 = vadd.f32 %v6450, %v6649
        %v6682 = vadd.f32 %v6451, %v6650
        %v6683 = vadd.f32 %v6452, %v6651
        %v6684 = vadd.f32 %v6453, %v6652
        %v6685 = vadd.f32 %v6454, %v6653
        %v6686 = vadd.f32 %v6455, %v6654
        %v6687 = vadd.f32 %v6456, %v6655
        %v6688 = vadd.f32 %v6457, %v6656
        %v6689 = vadd.f32 %v6458, %v6657
        %v6690 = vadd.f32 %v6459, %v6658
        %v6691 = vadd.f32 %v6460, %v6659
        %v6692 = vmax.f32 %v6660, 0.0
        %v6693 = vmax.f32 %v6661, 0.0
        %v6694 = vmax.f32 %v6662, 0.0
        %v6695 = vmax.f32 %v6663, 0.0
        %v6696 = vmax.f32 %v6664, 0.0
        %v6697 = vmax.f32 %v6665, 0.0
        %v6698 = vmax.f32 %v6666, 0.0
        %v6699 = vmax.f32 %v6667, 0.0
        %v6700 = vmax.f32 %v6668, 0.0
        %v6701 = vmax.f32 %v6669, 0.0
        %v6702 = vmax.f32 %v6670, 0.0
        %v6703 = vmax.f32 %v6671, 0.0
        %v6704 = vmax.f32 %v6672, 0.0
        %v6705 = vmax.f32 %v6673, 0.0
        %v6706 = vmax.f32 %v6674, 0.0
        %v6707 = vmax.f32 %v6675, 0.0
        %v6708 = vmax.f32 %v6676, 0.0
        %v6709 = vmax.f32 %v6677, 0.0
        %v6710 = vmax.f32 %v6678, 0.0
        %v6711 = vmax.f32 %v6679, 0.0
        %v6712 = vmax.f32 %v6680, 0.0
        %v6713 = vmax.f32 %v6681, 0.0
        %v6714 = vmax.f32 %v6682, 0.0
        %v6715 = vmax.f32 %v6683, 0.0
        %v6716 = vmax.f32 %v6684, 0.0
        %v6717 = vmax.f32 %v6685, 0.0
        %v6718 = vmax.f32 %v6686, 0.0
        %v6719 = vmax.f32 %v6687, 0.0
        %v6720 = vmax.f32 %v6688, 0.0
        %v6721 = vmax.f32 %v6689, 0.0
        %v6722 = vmax.f32 %v6690, 0.0
        %v6723 = vmax.f32 %v6691, 0.0
        %6724 = vst.msk [vmem:[#allocation4] sm:$0xff] %vm3441, %v6692
        %6725 = vst.msk [vmem:[#allocation4 + $0x8] sm:$0xff] %vm3441, %v6693
        %6726 = vst.msk [vmem:[#allocation4 + $0x10] sm:$0xff] %vm3441, %v6694
        %6727 = vst.msk [vmem:[#allocation4 + $0x18] sm:$0xff] %vm3441, %v6695
        %6728 = vst.msk [vmem:[#allocation4 + $0x20] sm:$0xff] %vm3441, %v6696
        %6729 = vst.msk [vmem:[#allocation4 + $0x28] sm:$0xff] %vm3441, %v6697
        %6730 = vst.msk [vmem:[#allocation4 + $0x30] sm:$0xff] %vm3441, %v6698
        %6731 = vst.msk [vmem:[#allocation4 + $0x38] sm:$0xff] %vm3441, %v6699
        %6732 = vst.msk [vmem:[#allocation4 + $0x40] sm:$0xff] %vm3441, %v6700
        %6733 = vst.msk [vmem:[#allocation4 + $0x48] sm:$0xff] %vm3441, %v6701
        %6734 = vst.msk [vmem:[#allocation4 + $0x50] sm:$0xff] %vm3441, %v6702
        %6735 = vst.msk [vmem:[#allocation4 + $0x58] sm:$0xff] %vm3441, %v6703
        %6736 = vst.msk [vmem:[#allocation4 + $0x60] sm:$0xff] %vm3441, %v6704
        %6737 = vst.msk [vmem:[#allocation4 + $0x68] sm:$0xff] %vm3441, %v6705
        %6738 = vst.msk [vmem:[#allocation4 + $0x70] sm:$0xff] %vm3441, %v6706
        %6739 = vst.msk [vmem:[#allocation4 + $0x78] sm:$0xff] %vm3441, %v6707
        %6740 = vst.msk [vmem:[#allocation4 + $0x80] sm:$0xff] %vm3441, %v6708
        %6741 = vst.msk [vmem:[#allocation4 + $0x88] sm:$0xff] %vm3441, %v6709
        %6742 = vst.msk [vmem:[#allocation4 + $0x90] sm:$0xff] %vm3441, %v6710
        %6743 = vst.msk [vmem:[#allocation4 + $0x98] sm:$0xff] %vm3441, %v6711
        %6744 = vst.msk [vmem:[#allocation4 + $0xa0] sm:$0xff] %vm3441, %v6712
        %6745 = vst.msk [vmem:[#allocation4 + $0xa8] sm:$0xff] %vm3441, %v6713
        %6746 = vst.msk [vmem:[#allocation4 + $0xb0] sm:$0xff] %vm3441, %v6714
        %6747 = vst.msk [vmem:[#allocation4 + $0xb8] sm:$0xff] %vm3441, %v6715
        %6748 = vst.msk [vmem:[#allocation4 + $0xc0] sm:$0xff] %vm3441, %v6716
        %6749 = vst.msk [vmem:[#allocation4 + $0xc8] sm:$0xff] %vm3441, %v6717
        %6750 = vst.msk [vmem:[#allocation4 + $0xd0] sm:$0xff] %vm3441, %v6718
        %6751 = vst.msk [vmem:[#allocation4 + $0xd8] sm:$0xff] %vm3441, %v6719
        %6752 = vst.msk [vmem:[#allocation4 + $0xe0] sm:$0xff] %vm3441, %v6720
        %6753 = vst.msk [vmem:[#allocation4 + $0xe8] sm:$0xff] %vm3441, %v6721
        %6754 = vst.msk [vmem:[#allocation4 + $0xf0] sm:$0xff] %vm3441, %v6722
        %6755 = vst.msk [vmem:[#allocation4 + $0xf8] sm:$0xff] %vm3441, %v6723
        %6756 = vrot.lane.b32.xlu0 %v6045, 120
        %v6757 = vpop.permute.xlu0 %6756
        %6758 = vrot.lane.b32.xlu0 %v6046, 120
        %v6759 = vpop.permute.xlu0 %6758
        %6760 = vrot.lane.b32.xlu0 %v6047, 120
        %v6761 = vpop.permute.xlu0 %6760
        %6762 = vrot.lane.b32.xlu0 %v6048, 120
        %v6763 = vpop.permute.xlu0 %6762
        %6764 = vrot.lane.b32.xlu0 %v6049, 120
        %v6765 = vpop.permute.xlu0 %6764
        %6766 = vrot.lane.b32.xlu0 %v6050, 120
        %v6767 = vpop.permute.xlu0 %6766
        %6768 = vrot.lane.b32.xlu0 %v6051, 120
        %v6769 = vpop.permute.xlu0 %6768
        %6770 = vrot.lane.b32.xlu0 %v6052, 120
        %v6771 = vpop.permute.xlu0 %6770
        %6772 = vrot.lane.b32.xlu0 %v6053, 120
        %v6773 = vpop.permute.xlu0 %6772
        %6774 = vrot.lane.b32.xlu0 %v6054, 120
        %v6775 = vpop.permute.xlu0 %6774
        %6776 = vrot.lane.b32.xlu0 %v6055, 120
        %v6777 = vpop.permute.xlu0 %6776
        %6778 = vrot.lane.b32.xlu0 %v6056, 120
        %v6779 = vpop.permute.xlu0 %6778
        %6780 = vrot.lane.b32.xlu0 %v6057, 120
        %v6781 = vpop.permute.xlu0 %6780
        %6782 = vrot.lane.b32.xlu0 %v6058, 120
        %v6783 = vpop.permute.xlu0 %6782
        %6784 = vrot.lane.b32.xlu0 %v6059, 120
        %v6785 = vpop.permute.xlu0 %6784
        %6786 = vrot.lane.b32.xlu0 %v6060, 120
        %v6787 = vpop.permute.xlu0 %6786
        %6788 = vrot.lane.b32.xlu0 %v6061, 120
        %v6789 = vpop.permute.xlu0 %6788
        %6790 = vrot.lane.b32.xlu0 %v6062, 120
        %v6791 = vpop.permute.xlu0 %6790
        %6792 = vrot.lane.b32.xlu0 %v6063, 120
        %v6793 = vpop.permute.xlu0 %6792
        %6794 = vrot.lane.b32.xlu0 %v6064, 120
        %v6795 = vpop.permute.xlu0 %6794
        %6796 = vrot.lane.b32.xlu0 %v6065, 120
        %v6797 = vpop.permute.xlu0 %6796
        %6798 = vrot.lane.b32.xlu0 %v6066, 120
        %v6799 = vpop.permute.xlu0 %6798
        %6800 = vrot.lane.b32.xlu0 %v6067, 120
        %v6801 = vpop.permute.xlu0 %6800
        %6802 = vrot.lane.b32.xlu0 %v6068, 120
        %v6803 = vpop.permute.xlu0 %6802
        %6804 = vrot.lane.b32.xlu0 %v6069, 120
        %v6805 = vpop.permute.xlu0 %6804
        %6806 = vrot.lane.b32.xlu0 %v6070, 120
        %v6807 = vpop.permute.xlu0 %6806
        %6808 = vrot.lane.b32.xlu0 %v6071, 120
        %v6809 = vpop.permute.xlu0 %6808
        %6810 = vrot.lane.b32.xlu0 %v6072, 120
        %v6811 = vpop.permute.xlu0 %6810
        %6812 = vrot.lane.b32.xlu0 %v6073, 120
        %v6813 = vpop.permute.xlu0 %6812
        %6814 = vrot.lane.b32.xlu0 %v6074, 120
        %v6815 = vpop.permute.xlu0 %6814
        %6816 = vrot.lane.b32.xlu0 %v6075, 120
        %v6817 = vpop.permute.xlu0 %6816
        %6818 = vrot.lane.b32.xlu0 %v6076, 120
        %v6819 = vpop.permute.xlu0 %6818
        %vm6852 = vcmask 7168
        %6853 = vst.msk [vmem:[#allocation5] sm:$0xff] %vm6852, %v6757
        %6854 = vst.msk [vmem:[#allocation5 + $0x8] sm:$0xff] %vm6852, %v6759
        %6855 = vst.msk [vmem:[#allocation5 + $0x10] sm:$0xff] %vm6852, %v6761
        %6856 = vst.msk [vmem:[#allocation5 + $0x18] sm:$0xff] %vm6852, %v6763
        %6857 = vst.msk [vmem:[#allocation5 + $0x20] sm:$0xff] %vm6852, %v6765
        %6858 = vst.msk [vmem:[#allocation5 + $0x28] sm:$0xff] %vm6852, %v6767
        %6859 = vst.msk [vmem:[#allocation5 + $0x30] sm:$0xff] %vm6852, %v6769
        %6860 = vst.msk [vmem:[#allocation5 + $0x38] sm:$0xff] %vm6852, %v6771
        %6861 = vst.msk [vmem:[#allocation5 + $0x40] sm:$0xff] %vm6852, %v6773
        %6862 = vst.msk [vmem:[#allocation5 + $0x48] sm:$0xff] %vm6852, %v6775
        %6863 = vst.msk [vmem:[#allocation5 + $0x50] sm:$0xff] %vm6852, %v6777
        %6864 = vst.msk [vmem:[#allocation5 + $0x58] sm:$0xff] %vm6852, %v6779
        %6865 = vst.msk [vmem:[#allocation5 + $0x60] sm:$0xff] %vm6852, %v6781
        %6866 = vst.msk [vmem:[#allocation5 + $0x68] sm:$0xff] %vm6852, %v6783
        %6867 = vst.msk [vmem:[#allocation5 + $0x70] sm:$0xff] %vm6852, %v6785
        %6868 = vst.msk [vmem:[#allocation5 + $0x78] sm:$0xff] %vm6852, %v6787
        %6869 = vst.msk [vmem:[#allocation5 + $0x80] sm:$0xff] %vm6852, %v6789
        %6870 = vst.msk [vmem:[#allocation5 + $0x88] sm:$0xff] %vm6852, %v6791
        %6871 = vst.msk [vmem:[#allocation5 + $0x90] sm:$0xff] %vm6852, %v6793
        %6872 = vst.msk [vmem:[#allocation5 + $0x98] sm:$0xff] %vm6852, %v6795
        %6873 = vst.msk [vmem:[#allocation5 + $0xa0] sm:$0xff] %vm6852, %v6797
        %6874 = vst.msk [vmem:[#allocation5 + $0xa8] sm:$0xff] %vm6852, %v6799
        %6875 = vst.msk [vmem:[#allocation5 + $0xb0] sm:$0xff] %vm6852, %v6801
        %6876 = vst.msk [vmem:[#allocation5 + $0xb8] sm:$0xff] %vm6852, %v6803
        %6877 = vst.msk [vmem:[#allocation5 + $0xc0] sm:$0xff] %vm6852, %v6805
        %6878 = vst.msk [vmem:[#allocation5 + $0xc8] sm:$0xff] %vm6852, %v6807
        %6879 = vst.msk [vmem:[#allocation5 + $0xd0] sm:$0xff] %vm6852, %v6809
        %6880 = vst.msk [vmem:[#allocation5 + $0xd8] sm:$0xff] %vm6852, %v6811
        %6881 = vst.msk [vmem:[#allocation5 + $0xe0] sm:$0xff] %vm6852, %v6813
        %6882 = vst.msk [vmem:[#allocation5 + $0xe8] sm:$0xff] %vm6852, %v6815
        %6883 = vst.msk [vmem:[#allocation5 + $0xf0] sm:$0xff] %vm6852, %v6817
        %6884 = vst.msk [vmem:[#allocation5 + $0xf8] sm:$0xff] %vm6852, %v6819
        %v6885 = vld [vmem:[#allocation4] ss:$2 sm:$0xff]
        %s6886 = scalar_lea.vmem [#allocation4], 16
        %v6887 = vld [vmem:[%s6886] ss:$2 sm:$0xff]
        %s6888 = scalar_lea.vmem [#allocation4], 32
        %v6889 = vld [vmem:[%s6888] ss:$2 sm:$0xff]
        %s6890 = scalar_lea.vmem [#allocation4], 48
        %v6891 = vld [vmem:[%s6890] ss:$2 sm:$0xff]
        %s6892 = scalar_lea.vmem [#allocation4], 64
        %v6893 = vld [vmem:[%s6892] ss:$2 sm:$0xff]
        %s6894 = scalar_lea.vmem [#allocation4], 80
        %v6895 = vld [vmem:[%s6894] ss:$2 sm:$0xff]
        %s6896 = scalar_lea.vmem [#allocation4], 96
        %v6897 = vld [vmem:[%s6896] ss:$2 sm:$0xff]
        %s6898 = scalar_lea.vmem [#allocation4], 112
        %v6899 = vld [vmem:[%s6898] ss:$2 sm:$0xff]
        %s6900 = scalar_lea.vmem [#allocation4], 128
        %v6901 = vld [vmem:[%s6900] ss:$2 sm:$0xff]
        %s6902 = scalar_lea.vmem [#allocation4], 144
        %v6903 = vld [vmem:[%s6902] ss:$2 sm:$0xff]
        %s6904 = scalar_lea.vmem [#allocation4], 160
        %v6905 = vld [vmem:[%s6904] ss:$2 sm:$0xff]
        %s6906 = scalar_lea.vmem [#allocation4], 176
        %v6907 = vld [vmem:[%s6906] ss:$2 sm:$0xff]
        %s6908 = scalar_lea.vmem [#allocation4], 192
        %v6909 = vld [vmem:[%s6908] ss:$2 sm:$0xff]
        %s6910 = scalar_lea.vmem [#allocation4], 208
        %v6911 = vld [vmem:[%s6910] ss:$2 sm:$0xff]
        %s6912 = scalar_lea.vmem [#allocation4], 224
        %v6913 = vld [vmem:[%s6912] ss:$2 sm:$0xff]
        %s6914 = scalar_lea.vmem [#allocation4], 240
        %v6915 = vld [vmem:[%s6914] ss:$2 sm:$0xff]
        %s6916 = scalar_lea.vmem [#allocation4], 1
        %v6917 = vld [vmem:[%s6916] ss:$2 sm:$0xff]
        %s6918 = scalar_lea.vmem [#allocation4], 17
        %v6919 = vld [vmem:[%s6918] ss:$2 sm:$0xff]
        %s6920 = scalar_lea.vmem [#allocation4], 33
        %v6921 = vld [vmem:[%s6920] ss:$2 sm:$0xff]
        %s6922 = scalar_lea.vmem [#allocation4], 49
        %v6923 = vld [vmem:[%s6922] ss:$2 sm:$0xff]
        %s6924 = scalar_lea.vmem [#allocation4], 65
        %v6925 = vld [vmem:[%s6924] ss:$2 sm:$0xff]
        %s6926 = scalar_lea.vmem [#allocation4], 81
        %v6927 = vld [vmem:[%s6926] ss:$2 sm:$0xff]
        %s6928 = scalar_lea.vmem [#allocation4], 97
        %v6929 = vld [vmem:[%s6928] ss:$2 sm:$0xff]
        %s6930 = scalar_lea.vmem [#allocation4], 113
        %v6931 = vld [vmem:[%s6930] ss:$2 sm:$0xff]
        %s6932 = scalar_lea.vmem [#allocation4], 129
        %v6933 = vld [vmem:[%s6932] ss:$2 sm:$0xff]
        %s6934 = scalar_lea.vmem [#allocation4], 145
        %v6935 = vld [vmem:[%s6934] ss:$2 sm:$0xff]
        %s6936 = scalar_lea.vmem [#allocation4], 161
        %v6937 = vld [vmem:[%s6936] ss:$2 sm:$0xff]
        %s6938 = scalar_lea.vmem [#allocation4], 177
        %v6939 = vld [vmem:[%s6938] ss:$2 sm:$0xff]
        %s6940 = scalar_lea.vmem [#allocation4], 193
        %v6941 = vld [vmem:[%s6940] ss:$2 sm:$0xff]
        %s6942 = scalar_lea.vmem [#allocation4], 209
        %v6943 = vld [vmem:[%s6942] ss:$2 sm:$0xff]
        %s6944 = scalar_lea.vmem [#allocation4], 225
        %v6945 = vld [vmem:[%s6944] ss:$2 sm:$0xff]
        %s6946 = scalar_lea.vmem [#allocation4], 241
        %v6947 = vld [vmem:[%s6946] ss:$2 sm:$0xff]
        %v6948 = vmax.f32 %v6885, %v6917
        %v6949 = vmax.f32 %v6887, %v6919
        %v6950 = vmax.f32 %v6889, %v6921
        %v6951 = vmax.f32 %v6891, %v6923
        %v6952 = vmax.f32 %v6893, %v6925
        %v6953 = vmax.f32 %v6895, %v6927
        %v6954 = vmax.f32 %v6897, %v6929
        %v6955 = vmax.f32 %v6899, %v6931
        %v6956 = vmax.f32 %v6901, %v6933
        %v6957 = vmax.f32 %v6903, %v6935
        %v6958 = vmax.f32 %v6905, %v6937
        %v6959 = vmax.f32 %v6907, %v6939
        %v6960 = vmax.f32 %v6909, %v6941
        %v6961 = vmax.f32 %v6911, %v6943
        %v6962 = vmax.f32 %v6913, %v6945
        %v6963 = vmax.f32 %v6915, %v6947
        %v6964 = vld [vmem:[#allocation5] ss:$2 sm:$0xff]
        %s6965 = scalar_lea.vmem [#allocation5], 16
        %v6966 = vld [vmem:[%s6965] ss:$2 sm:$0xff]
        %s6967 = scalar_lea.vmem [#allocation5], 32
        %v6968 = vld [vmem:[%s6967] ss:$2 sm:$0xff]
        %s6969 = scalar_lea.vmem [#allocation5], 48
        %v6970 = vld [vmem:[%s6969] ss:$2 sm:$0xff]
        %s6971 = scalar_lea.vmem [#allocation5], 64
        %v6972 = vld [vmem:[%s6971] ss:$2 sm:$0xff]
        %s6973 = scalar_lea.vmem [#allocation5], 80
        %v6974 = vld [vmem:[%s6973] ss:$2 sm:$0xff]
        %s6975 = scalar_lea.vmem [#allocation5], 96
        %v6976 = vld [vmem:[%s6975] ss:$2 sm:$0xff]
        %s6977 = scalar_lea.vmem [#allocation5], 112
        %v6978 = vld [vmem:[%s6977] ss:$2 sm:$0xff]
        %s6979 = scalar_lea.vmem [#allocation5], 128
        %v6980 = vld [vmem:[%s6979] ss:$2 sm:$0xff]
        %s6981 = scalar_lea.vmem [#allocation5], 144
        %v6982 = vld [vmem:[%s6981] ss:$2 sm:$0xff]
        %s6983 = scalar_lea.vmem [#allocation5], 160
        %v6984 = vld [vmem:[%s6983] ss:$2 sm:$0xff]
        %s6985 = scalar_lea.vmem [#allocation5], 176
        %v6986 = vld [vmem:[%s6985] ss:$2 sm:$0xff]
        %s6987 = scalar_lea.vmem [#allocation5], 192
        %v6988 = vld [vmem:[%s6987] ss:$2 sm:$0xff]
        %s6989 = scalar_lea.vmem [#allocation5], 208
        %v6990 = vld [vmem:[%s6989] ss:$2 sm:$0xff]
        %s6991 = scalar_lea.vmem [#allocation5], 224
        %v6992 = vld [vmem:[%s6991] ss:$2 sm:$0xff]
        %s6993 = scalar_lea.vmem [#allocation5], 240
        %v6994 = vld [vmem:[%s6993] ss:$2 sm:$0xff]
        %s6995 = scalar_lea.vmem [#allocation5], 1
        %v6996 = vld [vmem:[%s6995] ss:$2 sm:$0xff]
        %s6997 = scalar_lea.vmem [#allocation5], 17
        %v6998 = vld [vmem:[%s6997] ss:$2 sm:$0xff]
        %s6999 = scalar_lea.vmem [#allocation5], 33
        %v7000 = vld [vmem:[%s6999] ss:$2 sm:$0xff]
        %s7001 = scalar_lea.vmem [#allocation5], 49
        %v7002 = vld [vmem:[%s7001] ss:$2 sm:$0xff]
        %s7003 = scalar_lea.vmem [#allocation5], 65
        %v7004 = vld [vmem:[%s7003] ss:$2 sm:$0xff]
        %s7005 = scalar_lea.vmem [#allocation5], 81
        %v7006 = vld [vmem:[%s7005] ss:$2 sm:$0xff]
        %s7007 = scalar_lea.vmem [#allocation5], 97
        %v7008 = vld [vmem:[%s7007] ss:$2 sm:$0xff]
        %s7009 = scalar_lea.vmem [#allocation5], 113
        %v7010 = vld [vmem:[%s7009] ss:$2 sm:$0xff]
        %s7011 = scalar_lea.vmem [#allocation5], 129
        %v7012 = vld [vmem:[%s7011] ss:$2 sm:$0xff]
        %s7013 = scalar_lea.vmem [#allocation5], 145
        %v7014 = vld [vmem:[%s7013] ss:$2 sm:$0xff]
        %s7015 = scalar_lea.vmem [#allocation5], 161
        %v7016 = vld [vmem:[%s7015] ss:$2 sm:$0xff]
        %s7017 = scalar_lea.vmem [#allocation5], 177
        %v7018 = vld [vmem:[%s7017] ss:$2 sm:$0xff]
        %s7019 = scalar_lea.vmem [#allocation5], 193
        %v7020 = vld [vmem:[%s7019] ss:$2 sm:$0xff]
        %s7021 = scalar_lea.vmem [#allocation5], 209
        %v7022 = vld [vmem:[%s7021] ss:$2 sm:$0xff]
        %s7023 = scalar_lea.vmem [#allocation5], 225
        %v7024 = vld [vmem:[%s7023] ss:$2 sm:$0xff]
        %s7025 = scalar_lea.vmem [#allocation5], 241
        %v7026 = vld [vmem:[%s7025] ss:$2 sm:$0xff]
        %v7027 = vmax.f32 %v6964, %v6996
        %v7028 = vmax.f32 %v6966, %v6998
        %v7029 = vmax.f32 %v6968, %v7000
        %v7030 = vmax.f32 %v6970, %v7002
        %v7031 = vmax.f32 %v6972, %v7004
        %v7032 = vmax.f32 %v6974, %v7006
        %v7033 = vmax.f32 %v6976, %v7008
        %v7034 = vmax.f32 %v6978, %v7010
        %v7035 = vmax.f32 %v6980, %v7012
        %v7036 = vmax.f32 %v6982, %v7014
        %v7037 = vmax.f32 %v6984, %v7016
        %v7038 = vmax.f32 %v6986, %v7018
        %v7039 = vmax.f32 %v6988, %v7020
        %v7040 = vmax.f32 %v6990, %v7022
        %v7041 = vmax.f32 %v6992, %v7024
        %v7042 = vmax.f32 %v6994, %v7026
        %v7043 = vmax.f32 %v6948, %v6949
        %v7044 = vmax.f32 %v6950, %v6951
        %v7045 = vmax.f32 %v6952, %v6953
        %v7046 = vmax.f32 %v6954, %v6955
        %v7047 = vmax.f32 %v6956, %v6957
        %v7048 = vmax.f32 %v6958, %v6959
        %v7049 = vmax.f32 %v6960, %v6961
        %v7050 = vmax.f32 %v6962, %v6963
        %7051 = vst.msk [vmem:[%s368] sm:$0xff] %vm3441, %v7043
        %7052 = vst.msk [vmem:[%s368 + $0x8] sm:$0xff] %vm3441, %v7044
        %7053 = vst.msk [vmem:[%s368 + $0x10] sm:$0xff] %vm3441, %v7045
        %7054 = vst.msk [vmem:[%s368 + $0x18] sm:$0xff] %vm3441, %v7046
        %7055 = vst.msk [vmem:[%s368 + $0x20] sm:$0xff] %vm3441, %v7047
        %7056 = vst.msk [vmem:[%s368 + $0x28] sm:$0xff] %vm3441, %v7048
        %7057 = vst.msk [vmem:[%s368 + $0x30] sm:$0xff] %vm3441, %v7049
        %7058 = vst.msk [vmem:[%s368 + $0x38] sm:$0xff] %vm3441, %v7050
        %v7059 = vmax.f32 %v7027, %v7028
        %v7060 = vmax.f32 %v7029, %v7030
        %v7061 = vmax.f32 %v7031, %v7032
        %v7062 = vmax.f32 %v7033, %v7034
        %v7063 = vmax.f32 %v7035, %v7036
        %v7064 = vmax.f32 %v7037, %v7038
        %v7065 = vmax.f32 %v7039, %v7040
        %v7066 = vmax.f32 %v7041, %v7042
        %7067 = vst.msk [vmem:[%s390] sm:$0xff] %vm6852, %v7059
        %7068 = vst.msk [vmem:[%s390 + $0x8] sm:$0xff] %vm6852, %v7060
        %7069 = vst.msk [vmem:[%s390 + $0x10] sm:$0xff] %vm6852, %v7061
        %7070 = vst.msk [vmem:[%s390 + $0x18] sm:$0xff] %vm6852, %v7062
        %7071 = vst.msk [vmem:[%s390 + $0x20] sm:$0xff] %vm6852, %v7063
        %7072 = vst.msk [vmem:[%s390 + $0x28] sm:$0xff] %vm6852, %v7064
        %7073 = vst.msk [vmem:[%s390 + $0x30] sm:$0xff] %vm6852, %v7065
        %7074 = vst.msk [vmem:[%s390 + $0x38] sm:$0xff] %vm6852, %v7066
        %s7075 = sand.u32 %s232, 1
        %s7076 = scalar_lea.sflag [#allocation7], %s7075
        %s7077 = sand.u32 %s232, 1
        %s7078 = smul.addr %s7077, 64
        %s7079 = scalar_lea.vmem [#allocation6], %s7078
        %p7080 = scmp.lt.s32.totalorder %s25, 1
        %s7081 = scalar_select %p7080, %s25, 1
        %s7082 = smul.addr %s7081, 8
        %s7083 = smul.addr %s7082, 8
        %s7084 = scalar_lea.vmem %s10, %s7083
        // Predicated region
        $region57: #{tpu_custom_call.1} parent=55 // pred_check
          %p7085 = pneg %p242
        $region58: #{tpu_custom_call.1} parent=55 // pred_check_branch
          %7087 = sbr.rel (%p7085) target = $region60
        $region59: #{tpu_custom_call.1} parent=55 // pred_region
          %s7089 = ssub.s32 1024, 1024
          %7090 = vsyncadd %s7076, %s7089
          %s7091 = smul.addr %s25, 8
          %s7092 = smul.addr %s7091, 128
          %s7093 = scalar_lea.hbm %s9, %s7092
          %s7094 = sshll.u32 %s7079, 4
          %s7095 = int_to_ptr.vmem [resolvable:$true] %s7094
          %7100 = dma.vmem_to_hbm [thread:$0]  %s7095, 1024, %s7093, %s7076, 128, 128, 8
        $region60: #{tpu_custom_call.1} parent=55 // pred_fallthru
          _
        // Predicated region
        $region61: #{tpu_custom_call.1} parent=55 // pred_check
          %p7101 = pneg %p268
        $region62: #{tpu_custom_call.1} parent=55 // pred_check_branch
          %7103 = sbr.rel (%p7101) target = $region64
        $region63: #{tpu_custom_call.1} parent=55 // pred_region
          _
        $region64: #{tpu_custom_call.1} parent=55 // pred_fallthru
          _
      $region56: #{tpu_custom_call.1} parent=5 // pred_fallthru
        _
      %p7104 = scmp.le.s32.totalorder 2, %s20
      // Predicated region
      $region65: #{tpu_custom_call.1} parent=5 // pred_check
        %p7105 = pneg %p7104
      $region66: #{tpu_custom_call.1} parent=5 // pred_check_branch
        %7107 = sbr.rel (%p7105) target = $region68
      $region67: #{tpu_custom_call.1} parent=5 // pred_region
        %s7108 = ssub.s32 %s20, 2
        // Predicated region
        $region69: #{tpu_custom_call.1} parent=67 // pred_check
          %p7109 = pneg %p248
        $region70: #{tpu_custom_call.1} parent=67 // pred_check_branch
          %7111 = sbr.rel (%p7109) target = $region72
        $region71: #{tpu_custom_call.1} parent=67 // pred_region
          %s7112 = sand.u32 %s233, 1
          %s7113 = scalar_lea.sflag [#allocation7], %s7112
          %s7114 = sand.u32 %s233, 1
          %s7115 = smul.addr %s7114, 64
          %s7116 = scalar_lea.vmem [#allocation6], %s7115
          %7117 = dma.done %s7113, 1024
        $region72: #{tpu_custom_call.1} parent=67 // pred_fallthru
          _
        // Predicated region
        $region73: #{tpu_custom_call.1} parent=67 // pred_check
          %p7118 = pneg %p274
        $region74: #{tpu_custom_call.1} parent=67 // pred_check_branch
          %7120 = sbr.rel (%p7118) target = $region76
        $region75: #{tpu_custom_call.1} parent=67 // pred_region
          %p7121 = scmp.lt.s32.totalorder %s26, 1
          %s7122 = scalar_select %p7121, %s26, 1
          %s7123 = smul.addr %s7122, 8
          %s7124 = smul.addr %s7123, 8
          %s7125 = scalar_lea.vmem %s10, %s7124
        $region76: #{tpu_custom_call.1} parent=67 // pred_fallthru
          _
      $region68: #{tpu_custom_call.1} parent=5 // pred_fallthru
        _
    $region6: #{tpu_custom_call.1} parent=1 // loop_footer
      %s24 = sadd.s32 1, %s20
    $region7: #{tpu_custom_call.1} parent=1 // loop_footer_branch
      %19 = sbr.rel target = $region3
    $region8: #{tpu_custom_call.1} parent=1 // loop_exit
      _
    %7126 = vsyncpa [#allocation7], 1
    %s7127 = scalar_lea.sflag [#allocation7], 1
    %7128 = vsyncpa %s7127, 1

</llo_original>
